<compile_context>
chip_gen: v7x
topology: tpu7x:2x2x1
jax: 0.10.0
libtpu: 0.0.40
codegen_flags: <defaults>
</compile_context>

<pallas_src>
import numpy as np

import jax
import jax.numpy as jnp
from jax.experimental import pallas as pl
from jax.experimental.pallas import tpu as pltpu


# ---------------------------------------------------------------------------
# Static configuration helpers
# ---------------------------------------------------------------------------
def _get_deconv_cfg(deconv_kernel):
    if deconv_kernel == 4:
        return 4, 1, 0
    if deconv_kernel == 3:
        return 3, 1, 1
    if deconv_kernel == 2:
        return 2, 0, 0
    raise ValueError(f"unsupported deconv kernel {deconv_kernel}")


def _deconv_row_taps(k, p):
    """Row taps of a stride-2 transposed conv, split by output row phase.

    Output row (2a + dy) = sum over (ty, off) in taps[dy] of x[a + off] @ Col_ty.
    """
    taps = []
    for dy in (0, 1):
        t = []
        for ty in range(k):
            if (dy + p - ty) % 2 == 0:
                off = (dy + p - ty) // 2
                assert -1 <= off <= 1, "row tap offset outside padded range"
                t.append((ty, off))
        assert t, "every output phase needs at least one row tap"
        taps.append(tuple(t))
    return tuple(taps)


def _fold_bn(gamma, beta, mean, var, eps=1e-5):
    scale = gamma / jnp.sqrt(var + eps)
    shift = beta - mean * scale
    return scale, shift


# ---------------------------------------------------------------------------
# Wrapper-side lowering of (de)conv weights to banded row-operator matrices
# ---------------------------------------------------------------------------
def _deconv_col_mats(wt, scale, k, p, w_in, w_out):
    """Per row-tap ty: Col_ty[(ix*Cin+ci),(ox*Cout+co)] = wt[ci,co,ty,tx]*scale[co],
    tx = ox + p - 2*ix.  wt: (Cin, Cout, k, k) PyTorch layout."""
    tx = np.arange(w_out)[None, :] + p - 2 * np.arange(w_in)[:, None]
    valid = (tx >= 0) & (tx < k)
    txc = np.clip(tx, 0, k - 1)
    cin, cout = wt.shape[0], wt.shape[1]
    mats = []
    for ty in range(k):
        wty = wt[:, :, ty, :]                      # (Cin, Cout, k)
        m = wty[:, :, txc] * valid[None, None]     # (Cin, Cout, W_in, W_out)
        m = m * scale[None, :, None, None]
        m = jnp.transpose(m, (2, 0, 3, 1))         # (W_in, Cin, W_out, Cout)
        mats.append(m.reshape(w_in * cin, w_out * cout))
    return jnp.stack(mats, axis=0)                 # (k, W_in*Cin, W_out*Cout)


def _conv_row_mats(w, k, p, w_in, w_out):
    """Per row-tap ki: M_ki[(ix*Cin+ci),(ox*Cout+co)] = w[co,ci,ki,kj],
    kj = ix - ox + p.  w: (Cout, Cin, k, k) PyTorch layout."""
    kj = np.arange(w_in)[:, None] - np.arange(w_out)[None, :] + p
    valid = (kj >= 0) & (kj < k)
    kjc = np.clip(kj, 0, k - 1)
    cout, cin = w.shape[0], w.shape[1]
    mats = []
    for ki in range(k):
        wki = w[:, :, ki, :]                       # (Cout, Cin, k)
        m = wki[:, :, kjc] * valid[None, None]     # (Cout, Cin, W_in, W_out)
        m = jnp.transpose(m, (2, 1, 3, 0))         # (W_in, Cin, W_out, Cout)
        mats.append(m.reshape(w_in * cin, w_out * cout))
    return jnp.stack(mats, axis=0)                 # (k, W_in*Cin, W_out*Cout)


def _lower_simple_head(params, c0, h0, w0, kp_pad):
    """Precompute lane-dense row operators (BN folded, bf16) + static geometry.

    Per-image padded row frame: layer l input has S_l = top_l + h_l + bot_l rows
    per image (top/bot zero rows); padding doubles with the spatial rows, so the
    interleaved layer output is exactly the next layer's padded frame.
    """
    deconv_low, statics = [], []
    h, w = h0, w0
    top, bot = 1, 1
    for layer in params["deconv"]:
        k, p, op = layer["k"], layer["p"], layer["op"]
        wt = layer["wt"]
        cout = wt.shape[1]
        scale, shift = _fold_bn(layer["gamma"], layer["beta"],
                                layer["mean"], layer["var"])
        h_out = (h - 1) * 2 - 2 * p + k + op
        w_out = (w - 1) * 2 - 2 * p + k + op
        assert h_out == 2 * h and w_out == 2 * w, "unsupported deconv cfg"
        w_mats = _deconv_col_mats(wt, scale, k, p, w, w_out).astype(jnp.bfloat16)
        s_row = jnp.tile(shift, w_out).reshape(1, w_out * cout).astype(jnp.float32)
        statics.append(dict(s_in=h + top + bot, top_in=top, h_in=h,
                            taps=_deconv_row_taps(k, p)))
        deconv_low.append(dict(w=w_mats, s=s_row, wc_out=w_out * cout))
        h, w = h_out, w_out
        top, bot = 2 * top, 2 * bot

    fin = params["final"]
    kf, pf = fin["k"], fin["p"]
    assert kf in (1, 3), "final conv kernel must be 1 or 3"
    kp = fin["w"].shape[0]
    assert kp <= kp_pad
    wf_pad = jnp.pad(fin["w"], ((0, kp_pad - kp), (0, 0), (0, 0), (0, 0)))
    bf_pad = jnp.pad(fin["b"], ((0, kp_pad - kp),))
    h_f = h + 2 * pf - kf + 1
    w_f = w + 2 * pf - kf + 1
    assert h_f == h and w_f == w, "final conv must preserve spatial size"
    for ki in range(kf):
        assert -1 <= ki - pf <= 1, "final conv row offset outside padded range"
    assert top >= 1 and bot >= 1
    wf = _conv_row_mats(wf_pad, kf, pf, w, w_f).astype(jnp.bfloat16)
    bfr = jnp.tile(bf_pad, w_f).reshape(1, w_f * kp_pad).astype(jnp.float32)
    final_low = dict(w=wf, b=bfr)
    final_static = dict(k=kf, p=pf, s_in=h + top + bot, top_in=top, h_in=h)
    return deconv_low, final_low, statics, final_static, (h_f, w_f)


# ---------------------------------------------------------------------------
# Fused whole-head Pallas kernel (one grid step = one block of images)
# ---------------------------------------------------------------------------
def _make_head_kernel(statics, final_static):
    n_layers = len(statics)

    def kernel(*refs):
        x_ref = refs[0]
        w_refs = [refs[1 + 2 * i] for i in range(n_layers)]
        s_refs = [refs[2 + 2 * i] for i in range(n_layers)]
        wf_ref = refs[1 + 2 * n_layers]
        bf_ref = refs[2 + 2 * n_layers]
        o_ref = refs[3 + 2 * n_layers]
        act_refs = list(refs[4 + 2 * n_layers:])

        # (B*S0 + 2, W0*C0) bf16 rows: stacked per-image padded blocks plus one
        # global zero row at each end (so +/-1 row shifts are static slices).
        cur = x_ref[0]

        # ---- deconv (stride 2) + folded BN + ReLU stack ----
        for li, st in enumerate(statics):
            m_rows = st["m_rows"]
            s_in, top, h = st["s_in"], st["top_in"], st["h_in"]
            w_ref, sh_ref, a_ref = w_refs[li], s_refs[li], act_refs[li]
            wc_out = a_ref.shape[1]
            shift = sh_ref[...]                               # (1, Wc_out) f32

            # Mask: rows of the computed frame that sit on per-image pad rows
            # must become zero (they are the next layer's zero padding).
            rr = jax.lax.broadcasted_iota(jnp.int32, (m_rows, wc_out), 0) % s_in
            valid = jnp.logical_and(rr >= top, rr < top + h)

            phases = []
            for taps in st["taps"]:
                acc = None
                for (ty, off) in taps:
                    xs = cur[1 + off:1 + off + m_rows, :]     # bf16, no recast
                    d = jnp.dot(xs, w_ref[ty],
                                preferred_element_type=jnp.float32)
                    acc = d if acc is None else acc + d
                phases.append(jnp.where(valid,
                                        jnp.maximum(acc + shift, 0.0), 0.0))

            # Interleave even/odd output rows once and store contiguously.
            inter = jnp.stack(phases, axis=1).reshape(2 * m_rows, wc_out)
            zrow = jnp.zeros((1, wc_out), a_ref.dtype)
            a_ref[0:1, :] = zrow                              # global top pad
            a_ref[1:1 + 2 * m_rows, :] = inter.astype(a_ref.dtype)
            a_ref[1 + 2 * m_rows:2 + 2 * m_rows, :] = zrow    # global bottom pad
            cur = a_ref[...]                                  # bf16 scratch

        # ---- final Conv2d (stride 1) + bias ----
        kf, pf, m_rows = final_static["k"], final_static["p"], final_static["m_rows"]
        acc = None
        for ki in range(kf):
            off = ki - pf
            xs = cur[1 + off:1 + off + m_rows, :]
            d = jnp.dot(xs, wf_ref[ki], preferred_element_type=jnp.float32)
            acc = d if acc is None else acc + d
        o_ref[0] = acc + bf_ref[...]                          # (M_f, W_f*KPpad) f32

    return kernel


# ---------------------------------------------------------------------------
# SimpleHead forward
# ---------------------------------------------------------------------------
def simple_head_forward(x_nchw, params, *, batch_block=None):
    n, c0, h0, w0 = x_nchw.shape
    kp = params["final"]["w"].shape[0]
    kp_pad = max(8, ((kp + 7) // 8) * 8)     # lane-dense final output channels

    deconv_low, final_low, statics, final_static, (h_f, w_f) = \
        _lower_simple_head(params, c0, h0, w0, kp_pad)

    s0 = statics[0]["s_in"]
    top0 = statics[0]["top_in"]
    bot0 = s0 - top0 - h0

    # Batch blocking: B_blk images share one grid step (stacked along M).
    if batch_block is None:
        batch_block = 1
        for d in range(1, n + 1):
            if n % d == 0 and d * s0 <= 256:
                batch_block = d
    assert n % batch_block == 0, "batch must be divisible by batch_block"
    nb = n // batch_block

    kstat = []
    for st, lay in zip(statics, deconv_low):
        m_rows = batch_block * st["s_in"]
        kstat.append(dict(st, m_rows=m_rows))
        lay["buf_shape"] = (2 * m_rows + 2, lay["wc_out"])
    m_rows_f = batch_block * final_static["s_in"]
    kfinal = dict(final_static, m_rows=m_rows_f)
    assert deconv_low[-1]["buf_shape"][0] == m_rows_f + 2

    # NCHW -> lane-dense (rows, W*C) bf16; per-image zero pad rows + 1 global
    # zero row at the top/bottom of each stacked block.
    wc0 = w0 * c0
    x_rows = jnp.transpose(x_nchw, (0, 2, 3, 1)).reshape(n, h0, wc0)
    x_img = jnp.pad(x_rows, ((0, 0), (top0, bot0), (0, 0)))
    x_blk = x_img.reshape(nb, batch_block * s0, wc0)
    x_blk = jnp.pad(x_blk, ((0, 0), (1, 1), (0, 0))).astype(jnp.bfloat16)

    r0 = batch_block * s0 + 2
    inputs = [x_blk]
    in_specs = [pl.BlockSpec((1, r0, wc0), lambda i: (i, 0, 0))]
    for lay in deconv_low:
        inputs += [lay["w"], lay["s"]]
        in_specs += [pl.BlockSpec(lay["w"].shape, lambda i: (0, 0, 0)),
                     pl.BlockSpec(lay["s"].shape, lambda i: (0, 0))]
    inputs += [final_low["w"], final_low["b"]]
    in_specs += [pl.BlockSpec(final_low["w"].shape, lambda i: (0, 0, 0)),
                 pl.BlockSpec(final_low["b"].shape, lambda i: (0, 0))]

    wcf = w_f * kp_pad
    out_shape = jax.ShapeDtypeStruct((nb, m_rows_f, wcf), jnp.float32)
    out_spec = pl.BlockSpec((1, m_rows_f, wcf), lambda i: (i, 0, 0))
    scratch = [pltpu.VMEM(lay["buf_shape"], jnp.bfloat16) for lay in deconv_low]

    y = pl.pallas_call(
        _make_head_kernel(kstat, kfinal),
        out_shape=out_shape,
        grid=(nb,),
        in_specs=in_specs,
        out_specs=out_spec,
        scratch_shapes=scratch,
        compiler_params=pltpu.CompilerParams(
            dimension_semantics=("parallel",),
            vmem_limit_bytes=32 * 1024 * 1024),
    )(*inputs)

    # Drop the frame pad rows and the padded keypoint channels; back to NCHW.
    top_f = final_static["top_in"]
    y = y.reshape(nb, batch_block, final_static["s_in"], w_f, kp_pad)
    y = y[:, :, top_f:top_f + h_f, :, :kp]
    y = y.reshape(n, h_f, w_f, kp)
    return jnp.transpose(y, (0, 3, 1, 2))


# ---------------------------------------------------------------------------
# Pure-JAX reference (XLA convs) for a numerical sanity check
# ---------------------------------------------------------------------------
def reference_forward(x_nchw, params):
    x = jnp.transpose(x_nchw, (0, 2, 3, 1)).astype(jnp.float32)       # NHWC
    for layer in params["deconv"]:
        k, p, op = layer["k"], layer["p"], layer["op"]
        wt = layer["wt"]
        w = jnp.transpose(wt[:, :, ::-1, ::-1], (2, 3, 0, 1))         # HWIO, flipped
        x = jax.lax.conv_general_dilated(
            x, w, window_strides=(1, 1),
            padding=[(k - 1 - p, k - 1 - p + op)] * 2,
            lhs_dilation=(2, 2),
            dimension_numbers=("NHWC", "HWIO", "NHWC"),
            precision=jax.lax.Precision.HIGHEST)
        scale, shift = _fold_bn(layer["gamma"], layer["beta"],
                                layer["mean"], layer["var"])
        x = jnp.maximum(x * scale + shift, 0.0)
    fin = params["final"]
    k, p = fin["k"], fin["p"]
    w = jnp.transpose(fin["w"], (2, 3, 1, 0))                         # HWIO
    x = jax.lax.conv_general_dilated(
        x, w, window_strides=(1, 1), padding=[(p, p)] * 2,
        dimension_numbers=("NHWC", "HWIO", "NHWC"),
        precision=jax.lax.Precision.HIGHEST)
    x = x + fin["b"]
    return jnp.transpose(x, (0, 3, 1, 2))                             # NCHW


# ---------------------------------------------------------------------------
# Deterministic synthetic parameters (no checkpoint)
# ---------------------------------------------------------------------------
def init_params(key, neck_channels, deconv_filters, deconv_kernels,
                num_keypoints, final_kernel):
    params = {"deconv": []}
    inplanes = neck_channels
    for planes, dk in zip(deconv_filters, deconv_kernels):
        k, p, op = _get_deconv_cfg(dk)
        key, kw, kg, kb = jax.random.split(key, 4)
        wt = 0.05 * jax.random.normal(kw, (inplanes, planes, k, k), jnp.float32)
        gamma = 1.0 + 0.1 * jax.random.normal(kg, (planes,), jnp.float32)
        beta = 0.1 * jax.random.normal(kb, (planes,), jnp.float32)
        params["deconv"].append(dict(
            wt=wt, gamma=gamma, beta=beta,
            mean=jnp.zeros((planes,), jnp.float32),
            var=jnp.ones((planes,), jnp.float32),
            k=k, p=p, op=op))
        inplanes = planes
    key, kw, kb = jax.random.split(key, 3)
    w_final = 0.05 * jax.random.normal(
        kw, (num_keypoints, inplanes, final_kernel, final_kernel), jnp.float32)
    b_final = 0.1 * jax.random.normal(kb, (num_keypoints,), jnp.float32)
    params["final"] = dict(w=w_final, b=b_final, k=final_kernel,
                           p=1 if final_kernel == 3 else 0)
    return params


if __name__ == "__main__":
    # SimpleHead(args) with: neck_channels=4, deconv_num_layers=2,
    # deconv_num_filters=[8, 8], deconv_num_kernels=[4, 4],
    # final_conv_kernel=3, num_keypoints=5.
    key = jax.random.PRNGKey(0)
    key, kx = jax.random.split(key)
    x = jax.random.normal(kx, (8, 4, 8, 8), jnp.float32)      # NCHW input

    params = init_params(key,
                         neck_channels=4,
                         deconv_filters=[8, 8],
                         deconv_kernels=[4, 4],
                         num_keypoints=5,
                         final_kernel=3)

    # batch_block=4 -> grid=(2,), so both v7x TensorCores get a block and each
    # matmul sees M = 40/80/160 rows instead of 8-32.
    out = jax.block_until_ready(
        simple_head_forward(x, params, batch_block=4))
    assert out.shape == (8, 5, 32, 32), out.shape     # two stride-2 deconvs 8x8 -> 32x32
    assert out.dtype == jnp.float32

    ref = jax.block_until_ready(reference_forward(x, params))
    max_err = float(jnp.max(jnp.abs(out - ref)))
    assert max_err < 3e-2, f"max |kernel - reference| = {max_err}"

    print("KERNEL_OK")
</pallas_src>

<mosaic_0001>
module attributes {stable_mosaic.version = 11 : i64} {
  func.func @kernel(%arg0: i32, %arg1: memref<1x42x32xbf16, #tpu.memory_space<vmem>>, %arg2: memref<4x32x128xbf16, #tpu.memory_space<vmem>>, %arg3: memref<1x128xf32, #tpu.memory_space<vmem>>, %arg4: memref<4x128x256xbf16, #tpu.memory_space<vmem>>, %arg5: memref<1x256xf32, #tpu.memory_space<vmem>>, %arg6: memref<3x256x256xbf16, #tpu.memory_space<vmem>>, %arg7: memref<1x256xf32, #tpu.memory_space<vmem>>, %arg8: memref<1x160x256xf32, #tpu.memory_space<vmem>>, %arg9: memref<82x128xbf16, #tpu.memory_space<vmem>>, %arg10: memref<162x256xbf16, #tpu.memory_space<vmem>>) attributes {dimension_semantics = [#tpu.dimension_semantics<parallel>], iteration_bounds = array<i64: 2>, scalar_prefetch = 0 : i64, scratch_operands = 2 : i64, tpu.core_type = #tpu.core_type<tc>, window_params = [{transform_indices = @transform_0, window_bounds = array<i64: 1, 42, 32>}, {pipeline_mode = #tpu.pipeline_mode<synchronous>, transform_indices = @transform_1, window_bounds = array<i64: 4, 32, 128>}, {pipeline_mode = #tpu.pipeline_mode<synchronous>, transform_indices = @transform_2, window_bounds = array<i64: 1, 128>}, {pipeline_mode = #tpu.pipeline_mode<synchronous>, transform_indices = @transform_3, window_bounds = array<i64: 4, 128, 256>}, {pipeline_mode = #tpu.pipeline_mode<synchronous>, transform_indices = @transform_4, window_bounds = array<i64: 1, 256>}, {pipeline_mode = #tpu.pipeline_mode<synchronous>, transform_indices = @transform_5, window_bounds = array<i64: 3, 256, 256>}, {pipeline_mode = #tpu.pipeline_mode<synchronous>, transform_indices = @transform_6, window_bounds = array<i64: 1, 256>}, {transform_indices = @transform_7, window_bounds = array<i64: 1, 160, 256>}]} {
    %c0 = arith.constant 0 : index
    %c0_0 = arith.constant 0 : index
    %c0_1 = arith.constant 0 : index
    %0 = vector.load %arg1[%c0, %c0_0, %c0_1] : memref<1x42x32xbf16, #tpu.memory_space<vmem>>, vector<1x42x32xbf16>
    %1 = vector.shape_cast %0 : vector<1x42x32xbf16> to vector<42x32xbf16>
    %c0_2 = arith.constant 0 : index
    %c0_3 = arith.constant 0 : index
    %2 = vector.load %arg3[%c0_2, %c0_3] : memref<1x128xf32, #tpu.memory_space<vmem>>, vector<1x128xf32>
    %3 = tpu.iota {dimensions = array<i32: 0>} : vector<40x128xi32>
    %c10_i32 = arith.constant 10 : i32
    %c0_i32 = arith.constant 0 : i32
    %4 = arith.cmpi eq, %c10_i32, %c0_i32 : i32
    %c1_i32 = arith.constant 1 : i32
    %5 = arith.select %4, %c1_i32, %c10_i32 : i32
    %6 = vector.broadcast %5 : i32 to vector<40x128xi32>
    %7 = arith.remsi %3, %6 : vector<40x128xi32>
    %c0_i32_4 = arith.constant 0 : i32
    %8 = vector.broadcast %c0_i32_4 : i32 to vector<40x128xi32>
    %9 = arith.cmpi ne, %7, %8 : vector<40x128xi32>
    %c0_i32_5 = arith.constant 0 : i32
    %10 = vector.broadcast %c0_i32_5 : i32 to vector<40x128xi32>
    %11 = arith.cmpi slt, %7, %10 : vector<40x128xi32>
    %c0_i32_6 = arith.constant 0 : i32
    %12 = arith.cmpi slt, %5, %c0_i32_6 : i32
    %13 = vector.broadcast %12 : i1 to vector<40x128xi1>
    %14 = vector.broadcast %13 : vector<40x128xi1> to vector<40x128xi1>
    %15 = arith.xori %11, %14 : vector<40x128xi1>
    %16 = arith.andi %15, %9 : vector<40x128xi1>
    %17 = vector.broadcast %5 : i32 to vector<40x128xi32>
    %18 = arith.addi %7, %17 : vector<40x128xi32>
    %19 = arith.select %16, %18, %7 : vector<40x128xi1>, vector<40x128xi32>
    %c1_i32_7 = arith.constant 1 : i32
    %20 = vector.broadcast %c1_i32_7 : i32 to vector<40x128xi32>
    %21 = arith.cmpi sge, %19, %20 : vector<40x128xi32>
    %c9_i32 = arith.constant 9 : i32
    %22 = vector.broadcast %c9_i32 : i32 to vector<40x128xi32>
    %23 = arith.cmpi slt, %19, %22 : vector<40x128xi32>
    %24 = arith.andi %21, %23 : vector<40x128xi1>
    %25 = vector.extract_strided_slice %1 {offsets = [1, 0], sizes = [40, 32], strides = [1, 1]} : vector<42x32xbf16> to vector<40x32xbf16>
    %c1 = arith.constant 1 : index
    %c0_8 = arith.constant 0 : index
    %c0_9 = arith.constant 0 : index
    %26 = vector.load %arg2[%c1, %c0_8, %c0_9] : memref<4x32x128xbf16, #tpu.memory_space<vmem>>, vector<1x32x128xbf16>
    %27 = vector.shape_cast %26 : vector<1x32x128xbf16> to vector<32x128xbf16>
    %cst = arith.constant dense<0.000000e+00> : vector<40x128xf32>
    %28 = tpu.matmul %25, %27, %cst {dimension_numbers = #tpu.dot_dimension_numbers<[1], [0], [0], [1], [0, 0, 1, 1], [], []>} : vector<40x32xbf16>, vector<32x128xbf16>, vector<40x128xf32> -> vector<40x128xf32>
    %29 = vector.extract_strided_slice %1 {offsets = [0, 0], sizes = [40, 32], strides = [1, 1]} : vector<42x32xbf16> to vector<40x32xbf16>
    %c3 = arith.constant 3 : index
    %c0_10 = arith.constant 0 : index
    %c0_11 = arith.constant 0 : index
    %30 = vector.load %arg2[%c3, %c0_10, %c0_11] : memref<4x32x128xbf16, #tpu.memory_space<vmem>>, vector<1x32x128xbf16>
    %31 = vector.shape_cast %30 : vector<1x32x128xbf16> to vector<32x128xbf16>
    %cst_12 = arith.constant dense<0.000000e+00> : vector<40x128xf32>
    %32 = tpu.matmul %29, %31, %cst_12 {dimension_numbers = #tpu.dot_dimension_numbers<[1], [0], [0], [1], [0, 0, 1, 1], [], []>} : vector<40x32xbf16>, vector<32x128xbf16>, vector<40x128xf32> -> vector<40x128xf32>
    %33 = arith.addf %28, %32 : vector<40x128xf32>
    %34 = vector.broadcast %2 : vector<1x128xf32> to vector<40x128xf32>
    %35 = arith.addf %33, %34 : vector<40x128xf32>
    %cst_13 = arith.constant 0.000000e+00 : f32
    %36 = vector.broadcast %cst_13 : f32 to vector<40x128xf32>
    %37 = arith.maximumf %35, %36 : vector<40x128xf32>
    %cst_14 = arith.constant 0.000000e+00 : f32
    %38 = vector.broadcast %cst_14 : f32 to vector<40x128xf32>
    %39 = arith.select %24, %37, %38 : vector<40x128xi1>, vector<40x128xf32>
    %40 = vector.extract_strided_slice %1 {offsets = [2, 0], sizes = [40, 32], strides = [1, 1]} : vector<42x32xbf16> to vector<40x32xbf16>
    %c0_15 = arith.constant 0 : index
    %c0_16 = arith.constant 0 : index
    %c0_17 = arith.constant 0 : index
    %41 = vector.load %arg2[%c0_15, %c0_16, %c0_17] : memref<4x32x128xbf16, #tpu.memory_space<vmem>>, vector<1x32x128xbf16>
    %42 = vector.shape_cast %41 : vector<1x32x128xbf16> to vector<32x128xbf16>
    %cst_18 = arith.constant dense<0.000000e+00> : vector<40x128xf32>
    %43 = tpu.matmul %40, %42, %cst_18 {dimension_numbers = #tpu.dot_dimension_numbers<[1], [0], [0], [1], [0, 0, 1, 1], [], []>} : vector<40x32xbf16>, vector<32x128xbf16>, vector<40x128xf32> -> vector<40x128xf32>
    %44 = vector.extract_strided_slice %1 {offsets = [1, 0], sizes = [40, 32], strides = [1, 1]} : vector<42x32xbf16> to vector<40x32xbf16>
    %c2 = arith.constant 2 : index
    %c0_19 = arith.constant 0 : index
    %c0_20 = arith.constant 0 : index
    %45 = vector.load %arg2[%c2, %c0_19, %c0_20] : memref<4x32x128xbf16, #tpu.memory_space<vmem>>, vector<1x32x128xbf16>
    %46 = vector.shape_cast %45 : vector<1x32x128xbf16> to vector<32x128xbf16>
    %cst_21 = arith.constant dense<0.000000e+00> : vector<40x128xf32>
    %47 = tpu.matmul %44, %46, %cst_21 {dimension_numbers = #tpu.dot_dimension_numbers<[1], [0], [0], [1], [0, 0, 1, 1], [], []>} : vector<40x32xbf16>, vector<32x128xbf16>, vector<40x128xf32> -> vector<40x128xf32>
    %48 = arith.addf %43, %47 : vector<40x128xf32>
    %49 = vector.broadcast %2 : vector<1x128xf32> to vector<40x128xf32>
    %50 = arith.addf %48, %49 : vector<40x128xf32>
    %cst_22 = arith.constant 0.000000e+00 : f32
    %51 = vector.broadcast %cst_22 : f32 to vector<40x128xf32>
    %52 = arith.maximumf %50, %51 : vector<40x128xf32>
    %cst_23 = arith.constant 0.000000e+00 : f32
    %53 = vector.broadcast %cst_23 : f32 to vector<40x128xf32>
    %54 = arith.select %24, %52, %53 : vector<40x128xi1>, vector<40x128xf32>
    %55 = vector.shape_cast %39 : vector<40x128xf32> to vector<40x1x128xf32>
    %56 = vector.shape_cast %54 : vector<40x128xf32> to vector<40x1x128xf32>
    %57 = tpu.concatenate %55, %56 in 1 : vector<40x1x128xf32>, vector<40x1x128xf32> -> vector<40x2x128xf32>
    %58 = vector.shape_cast %57 : vector<40x2x128xf32> to vector<80x128xf32>
    %cst_24 = arith.constant 0.000000e+00 : bf16
    %59 = vector.broadcast %cst_24 : bf16 to vector<1x128xbf16>
    %c0_25 = arith.constant 0 : index
    %c0_26 = arith.constant 0 : index
    %60 = vector.load %arg9[%c0_25, %c0_26] : memref<82x128xbf16, #tpu.memory_space<vmem>>, vector<1x128xbf16>
    tpu.vector_store %arg9[%c0_25, %c0_26], %59 {strides = array<i32>} : memref<82x128xbf16, #tpu.memory_space<vmem>>, vector<1x128xbf16>,
    %61 = arith.truncf %58 : vector<80x128xf32> to vector<80x128xbf16>
    %c1_27 = arith.constant 1 : index
    %c0_28 = arith.constant 0 : index
    %62 = vector.load %arg9[%c1_27, %c0_28] : memref<82x128xbf16, #tpu.memory_space<vmem>>, vector<80x128xbf16>
    tpu.vector_store %arg9[%c1_27, %c0_28], %61 {strides = array<i32>} : memref<82x128xbf16, #tpu.memory_space<vmem>>, vector<80x128xbf16>,
    %c81 = arith.constant 81 : index
    %c0_29 = arith.constant 0 : index
    %63 = vector.load %arg9[%c81, %c0_29] : memref<82x128xbf16, #tpu.memory_space<vmem>>, vector<1x128xbf16>
    tpu.vector_store %arg9[%c81, %c0_29], %59 {strides = array<i32>} : memref<82x128xbf16, #tpu.memory_space<vmem>>, vector<1x128xbf16>,
    %c0_30 = arith.constant 0 : index
    %c0_31 = arith.constant 0 : index
    %64 = vector.load %arg9[%c0_30, %c0_31] : memref<82x128xbf16, #tpu.memory_space<vmem>>, vector<82x128xbf16>
    %c0_32 = arith.constant 0 : index
    %c0_33 = arith.constant 0 : index
    %65 = vector.load %arg5[%c0_32, %c0_33] : memref<1x256xf32, #tpu.memory_space<vmem>>, vector<1x256xf32>
    %66 = tpu.iota {dimensions = array<i32: 0>} : vector<80x256xi32>
    %c20_i32 = arith.constant 20 : i32
    %c0_i32_34 = arith.constant 0 : i32
    %67 = arith.cmpi eq, %c20_i32, %c0_i32_34 : i32
    %c1_i32_35 = arith.constant 1 : i32
    %68 = arith.select %67, %c1_i32_35, %c20_i32 : i32
    %69 = vector.broadcast %68 : i32 to vector<80x256xi32>
    %70 = arith.remsi %66, %69 : vector<80x256xi32>
    %c0_i32_36 = arith.constant 0 : i32
    %71 = vector.broadcast %c0_i32_36 : i32 to vector<80x256xi32>
    %72 = arith.cmpi ne, %70, %71 : vector<80x256xi32>
    %c0_i32_37 = arith.constant 0 : i32
    %73 = vector.broadcast %c0_i32_37 : i32 to vector<80x256xi32>
    %74 = arith.cmpi slt, %70, %73 : vector<80x256xi32>
    %c0_i32_38 = arith.constant 0 : i32
    %75 = arith.cmpi slt, %68, %c0_i32_38 : i32
    %76 = vector.broadcast %75 : i1 to vector<80x256xi1>
    %77 = vector.broadcast %76 : vector<80x256xi1> to vector<80x256xi1>
    %78 = arith.xori %74, %77 : vector<80x256xi1>
    %79 = arith.andi %78, %72 : vector<80x256xi1>
    %80 = vector.broadcast %68 : i32 to vector<80x256xi32>
    %81 = arith.addi %70, %80 : vector<80x256xi32>
    %82 = arith.select %79, %81, %70 : vector<80x256xi1>, vector<80x256xi32>
    %c2_i32 = arith.constant 2 : i32
    %83 = vector.broadcast %c2_i32 : i32 to vector<80x256xi32>
    %84 = arith.cmpi sge, %82, %83 : vector<80x256xi32>
    %c18_i32 = arith.constant 18 : i32
    %85 = vector.broadcast %c18_i32 : i32 to vector<80x256xi32>
    %86 = arith.cmpi slt, %82, %85 : vector<80x256xi32>
    %87 = arith.andi %84, %86 : vector<80x256xi1>
    %88 = vector.extract_strided_slice %64 {offsets = [1, 0], sizes = [80, 128], strides = [1, 1]} : vector<82x128xbf16> to vector<80x128xbf16>
    %c1_39 = arith.constant 1 : index
    %c0_40 = arith.constant 0 : index
    %c0_41 = arith.constant 0 : index
    %89 = vector.load %arg4[%c1_39, %c0_40, %c0_41] : memref<4x128x256xbf16, #tpu.memory_space<vmem>>, vector<1x128x256xbf16>
    %90 = vector.shape_cast %89 : vector<1x128x256xbf16> to vector<128x256xbf16>
    %cst_42 = arith.constant dense<0.000000e+00> : vector<80x256xf32>
    %91 = tpu.matmul %88, %90, %cst_42 {dimension_numbers = #tpu.dot_dimension_numbers<[1], [0], [0], [1], [0, 0, 1, 1], [], []>} : vector<80x128xbf16>, vector<128x256xbf16>, vector<80x256xf32> -> vector<80x256xf32>
    %92 = vector.extract_strided_slice %64 {offsets = [0, 0], sizes = [80, 128], strides = [1, 1]} : vector<82x128xbf16> to vector<80x128xbf16>
    %c3_43 = arith.constant 3 : index
    %c0_44 = arith.constant 0 : index
    %c0_45 = arith.constant 0 : index
    %93 = vector.load %arg4[%c3_43, %c0_44, %c0_45] : memref<4x128x256xbf16, #tpu.memory_space<vmem>>, vector<1x128x256xbf16>
    %94 = vector.shape_cast %93 : vector<1x128x256xbf16> to vector<128x256xbf16>
    %cst_46 = arith.constant dense<0.000000e+00> : vector<80x256xf32>
    %95 = tpu.matmul %92, %94, %cst_46 {dimension_numbers = #tpu.dot_dimension_numbers<[1], [0], [0], [1], [0, 0, 1, 1], [], []>} : vector<80x128xbf16>, vector<128x256xbf16>, vector<80x256xf32> -> vector<80x256xf32>
    %96 = arith.addf %91, %95 : vector<80x256xf32>
    %97 = vector.broadcast %65 : vector<1x256xf32> to vector<80x256xf32>
    %98 = arith.addf %96, %97 : vector<80x256xf32>
    %cst_47 = arith.constant 0.000000e+00 : f32
    %99 = vector.broadcast %cst_47 : f32 to vector<80x256xf32>
    %100 = arith.maximumf %98, %99 : vector<80x256xf32>
    %cst_48 = arith.constant 0.000000e+00 : f32
    %101 = vector.broadcast %cst_48 : f32 to vector<80x256xf32>
    %102 = arith.select %87, %100, %101 : vector<80x256xi1>, vector<80x256xf32>
    %103 = vector.extract_strided_slice %64 {offsets = [2, 0], sizes = [80, 128], strides = [1, 1]} : vector<82x128xbf16> to vector<80x128xbf16>
    %c0_49 = arith.constant 0 : index
    %c0_50 = arith.constant 0 : index
    %c0_51 = arith.constant 0 : index
    %104 = vector.load %arg4[%c0_49, %c0_50, %c0_51] : memref<4x128x256xbf16, #tpu.memory_space<vmem>>, vector<1x128x256xbf16>
    %105 = vector.shape_cast %104 : vector<1x128x256xbf16> to vector<128x256xbf16>
    %cst_52 = arith.constant dense<0.000000e+00> : vector<80x256xf32>
    %106 = tpu.matmul %103, %105, %cst_52 {dimension_numbers = #tpu.dot_dimension_numbers<[1], [0], [0], [1], [0, 0, 1, 1], [], []>} : vector<80x128xbf16>, vector<128x256xbf16>, vector<80x256xf32> -> vector<80x256xf32>
    %107 = vector.extract_strided_slice %64 {offsets = [1, 0], sizes = [80, 128], strides = [1, 1]} : vector<82x128xbf16> to vector<80x128xbf16>
    %c2_53 = arith.constant 2 : index
    %c0_54 = arith.constant 0 : index
    %c0_55 = arith.constant 0 : index
    %108 = vector.load %arg4[%c2_53, %c0_54, %c0_55] : memref<4x128x256xbf16, #tpu.memory_space<vmem>>, vector<1x128x256xbf16>
    %109 = vector.shape_cast %108 : vector<1x128x256xbf16> to vector<128x256xbf16>
    %cst_56 = arith.constant dense<0.000000e+00> : vector<80x256xf32>
    %110 = tpu.matmul %107, %109, %cst_56 {dimension_numbers = #tpu.dot_dimension_numbers<[1], [0], [0], [1], [0, 0, 1, 1], [], []>} : vector<80x128xbf16>, vector<128x256xbf16>, vector<80x256xf32> -> vector<80x256xf32>
    %111 = arith.addf %106, %110 : vector<80x256xf32>
    %112 = vector.broadcast %65 : vector<1x256xf32> to vector<80x256xf32>
    %113 = arith.addf %111, %112 : vector<80x256xf32>
    %cst_57 = arith.constant 0.000000e+00 : f32
    %114 = vector.broadcast %cst_57 : f32 to vector<80x256xf32>
    %115 = arith.maximumf %113, %114 : vector<80x256xf32>
    %cst_58 = arith.constant 0.000000e+00 : f32
    %116 = vector.broadcast %cst_58 : f32 to vector<80x256xf32>
    %117 = arith.select %87, %115, %116 : vector<80x256xi1>, vector<80x256xf32>
    %118 = vector.shape_cast %102 : vector<80x256xf32> to vector<80x1x256xf32>
    %119 = vector.shape_cast %117 : vector<80x256xf32> to vector<80x1x256xf32>
    %120 = tpu.concatenate %118, %119 in 1 : vector<80x1x256xf32>, vector<80x1x256xf32> -> vector<80x2x256xf32>
    %121 = vector.shape_cast %120 : vector<80x2x256xf32> to vector<160x256xf32>
    %cst_59 = arith.constant 0.000000e+00 : bf16
    %122 = vector.broadcast %cst_59 : bf16 to vector<1x256xbf16>
    %c0_60 = arith.constant 0 : index
    %c0_61 = arith.constant 0 : index
    %123 = vector.load %arg10[%c0_60, %c0_61] : memref<162x256xbf16, #tpu.memory_space<vmem>>, vector<1x256xbf16>
    tpu.vector_store %arg10[%c0_60, %c0_61], %122 {strides = array<i32>} : memref<162x256xbf16, #tpu.memory_space<vmem>>, vector<1x256xbf16>,
    %124 = arith.truncf %121 : vector<160x256xf32> to vector<160x256xbf16>
    %c1_62 = arith.constant 1 : index
    %c0_63 = arith.constant 0 : index
    %125 = vector.load %arg10[%c1_62, %c0_63] : memref<162x256xbf16, #tpu.memory_space<vmem>>, vector<160x256xbf16>
    tpu.vector_store %arg10[%c1_62, %c0_63], %124 {strides = array<i32>} : memref<162x256xbf16, #tpu.memory_space<vmem>>, vector<160x256xbf16>,
    %c161 = arith.constant 161 : index
    %c0_64 = arith.constant 0 : index
    %126 = vector.load %arg10[%c161, %c0_64] : memref<162x256xbf16, #tpu.memory_space<vmem>>, vector<1x256xbf16>
    tpu.vector_store %arg10[%c161, %c0_64], %122 {strides = array<i32>} : memref<162x256xbf16, #tpu.memory_space<vmem>>, vector<1x256xbf16>,
    %c0_65 = arith.constant 0 : index
    %c0_66 = arith.constant 0 : index
    %127 = vector.load %arg10[%c0_65, %c0_66] : memref<162x256xbf16, #tpu.memory_space<vmem>>, vector<162x256xbf16>
    %128 = vector.extract_strided_slice %127 {offsets = [0, 0], sizes = [160, 256], strides = [1, 1]} : vector<162x256xbf16> to vector<160x256xbf16>
    %c0_67 = arith.constant 0 : index
    %c0_68 = arith.constant 0 : index
    %c0_69 = arith.constant 0 : index
    %129 = vector.load %arg6[%c0_67, %c0_68, %c0_69] : memref<3x256x256xbf16, #tpu.memory_space<vmem>>, vector<1x256x256xbf16>
    %130 = vector.shape_cast %129 : vector<1x256x256xbf16> to vector<256x256xbf16>
    %cst_70 = arith.constant dense<0.000000e+00> : vector<160x256xf32>
    %131 = tpu.matmul %128, %130, %cst_70 {dimension_numbers = #tpu.dot_dimension_numbers<[1], [0], [0], [1], [0, 0, 1, 1], [], []>} : vector<160x256xbf16>, vector<256x256xbf16>, vector<160x256xf32> -> vector<160x256xf32>
    %132 = vector.extract_strided_slice %127 {offsets = [1, 0], sizes = [160, 256], strides = [1, 1]} : vector<162x256xbf16> to vector<160x256xbf16>
    %c1_71 = arith.constant 1 : index
    %c0_72 = arith.constant 0 : index
    %c0_73 = arith.constant 0 : index
    %133 = vector.load %arg6[%c1_71, %c0_72, %c0_73] : memref<3x256x256xbf16, #tpu.memory_space<vmem>>, vector<1x256x256xbf16>
    %134 = vector.shape_cast %133 : vector<1x256x256xbf16> to vector<256x256xbf16>
    %cst_74 = arith.constant dense<0.000000e+00> : vector<160x256xf32>
    %135 = tpu.matmul %132, %134, %cst_74 {dimension_numbers = #tpu.dot_dimension_numbers<[1], [0], [0], [1], [0, 0, 1, 1], [], []>} : vector<160x256xbf16>, vector<256x256xbf16>, vector<160x256xf32> -> vector<160x256xf32>
    %136 = arith.addf %131, %135 : vector<160x256xf32>
    %137 = vector.extract_strided_slice %127 {offsets = [2, 0], sizes = [160, 256], strides = [1, 1]} : vector<162x256xbf16> to vector<160x256xbf16>
    %c2_75 = arith.constant 2 : index
    %c0_76 = arith.constant 0 : index
    %c0_77 = arith.constant 0 : index
    %138 = vector.load %arg6[%c2_75, %c0_76, %c0_77] : memref<3x256x256xbf16, #tpu.memory_space<vmem>>, vector<1x256x256xbf16>
    %139 = vector.shape_cast %138 : vector<1x256x256xbf16> to vector<256x256xbf16>
    %cst_78 = arith.constant dense<0.000000e+00> : vector<160x256xf32>
    %140 = tpu.matmul %137, %139, %cst_78 {dimension_numbers = #tpu.dot_dimension_numbers<[1], [0], [0], [1], [0, 0, 1, 1], [], []>} : vector<160x256xbf16>, vector<256x256xbf16>, vector<160x256xf32> -> vector<160x256xf32>
    %141 = arith.addf %136, %140 : vector<160x256xf32>
    %c0_79 = arith.constant 0 : index
    %c0_80 = arith.constant 0 : index
    %142 = vector.load %arg7[%c0_79, %c0_80] : memref<1x256xf32, #tpu.memory_space<vmem>>, vector<1x256xf32>
    %143 = vector.broadcast %142 : vector<1x256xf32> to vector<160x256xf32>
    %144 = arith.addf %141, %143 : vector<160x256xf32>
    %c0_81 = arith.constant 0 : index
    %c0_82 = arith.constant 0 : index
    %c0_83 = arith.constant 0 : index
    %145 = vector.load %arg8[%c0_81, %c0_82, %c0_83] : memref<1x160x256xf32, #tpu.memory_space<vmem>>, vector<1x160x256xf32>
    %146 = vector.shape_cast %145 : vector<1x160x256xf32> to vector<160x256xf32>
    %147 = vector.shape_cast %144 : vector<160x256xf32> to vector<1x160x256xf32>
    tpu.vector_store %arg8[%c0_81, %c0_82, %c0_83], %147 {strides = array<i32>} : memref<1x160x256xf32, #tpu.memory_space<vmem>>, vector<1x160x256xf32>,
    return
  }
  func.func @transform_0(%arg0: i32) -> (i32, i32, i32) {
    %c0_i32 = arith.constant 0 : i32
    %c0_i32_0 = arith.constant 0 : i32
    %c0_i32_1 = arith.constant 0 : i32
    return %arg0, %c0_i32, %c0_i32_0 : i32, i32, i32
  }
  func.func @transform_1(%arg0: i32) -> (i32, i32, i32) {
    %c0_i32 = arith.constant 0 : i32
    %c0_i32_0 = arith.constant 0 : i32
    %c0_i32_1 = arith.constant 0 : i32
    %c0_i32_2 = arith.constant 0 : i32
    return %c0_i32, %c0_i32_0, %c0_i32_1 : i32, i32, i32
  }
  func.func @transform_2(%arg0: i32) -> (i32, i32) {
    %c0_i32 = arith.constant 0 : i32
    %c0_i32_0 = arith.constant 0 : i32
    %c0_i32_1 = arith.constant 0 : i32
    return %c0_i32, %c0_i32_0 : i32, i32
  }
  func.func @transform_3(%arg0: i32) -> (i32, i32, i32) {
    %c0_i32 = arith.constant 0 : i32
    %c0_i32_0 = arith.constant 0 : i32
    %c0_i32_1 = arith.constant 0 : i32
    %c0_i32_2 = arith.constant 0 : i32
    return %c0_i32, %c0_i32_0, %c0_i32_1 : i32, i32, i32
  }
  func.func @transform_4(%arg0: i32) -> (i32, i32) {
    %c0_i32 = arith.constant 0 : i32
    %c0_i32_0 = arith.constant 0 : i32
    %c0_i32_1 = arith.constant 0 : i32
    return %c0_i32, %c0_i32_0 : i32, i32
  }
  func.func @transform_5(%arg0: i32) -> (i32, i32, i32) {
    %c0_i32 = arith.constant 0 : i32
    %c0_i32_0 = arith.constant 0 : i32
    %c0_i32_1 = arith.constant 0 : i32
    %c0_i32_2 = arith.constant 0 : i32
    return %c0_i32, %c0_i32_0, %c0_i32_1 : i32, i32, i32
  }
  func.func @transform_6(%arg0: i32) -> (i32, i32) {
    %c0_i32 = arith.constant 0 : i32
    %c0_i32_0 = arith.constant 0 : i32
    %c0_i32_1 = arith.constant 0 : i32
    return %c0_i32, %c0_i32_0 : i32, i32
  }
  func.func @transform_7(%arg0: i32) -> (i32, i32, i32) {
    %c0_i32 = arith.constant 0 : i32
    %c0_i32_0 = arith.constant 0 : i32
    %c0_i32_1 = arith.constant 0 : i32
    return %arg0, %c0_i32, %c0_i32_0 : i32, i32, i32
  }
}

</mosaic_0001>

<llo_original>
// kernel: tpu_custom_call.1
$region0: #{tpu_custom_call.1}
  #allocation0 [shape = 'u32[]', space=smem, size = 0x4, offset = 0x4, fixed_abs, tag = 'smem constant byte address 0x4 - core index']
  #allocation1 [shape = 'u32[144,128]{1,0:T(1,128)}', space=vmem, size = 0x12000, scoped, tag = 'internal scratch']
  #allocation2 [shape = 'bf16[82,128]{1,0:T(8,128)(2,1)}', space=vmem, size = 0x5800, scoped, tag = 'scratch operand']
  #allocation3 [shape = 'bf16[162,256]{1,0:T(8,128)(2,1)}', space=vmem, size = 0x15000, scoped, tag = 'scratch operand']
  %s0 = inlined_call_operand.vmem [shape: bf16[2,42,32], index: 0, kind: input, shape index: {}]
  %s1 = inlined_call_operand.vmem [shape: bf16[4,32,128], index: 1, kind: input, shape index: {}]
  %s2 = inlined_call_operand.vmem [shape: f32[1,128], index: 2, kind: input, shape index: {}]
  %s3 = inlined_call_operand.hbm [shape: bf16[4,128,256], index: 3, kind: input, shape index: {}]
  %s4 = inlined_call_operand.vmem [shape: f32[1,256], index: 4, kind: input, shape index: {}]
  %s5 = inlined_call_operand.hbm [shape: bf16[3,256,256], index: 5, kind: input, shape index: {}]
  %s6 = inlined_call_operand.vmem [shape: f32[1,256], index: 6, kind: input, shape index: {}]
  %s7 = inlined_call_operand.hbm [shape: f32[2,160,256], index: 7, kind: output, shape index: {}]
  %s8 = sld [smem:[#allocation0]]
  $region69: #{tpu_custom_call.1} parent=0
    _
  %s10 = ssub.s32 1, %s8
  %s11 = scalar_select 0, %s10, %s8
  $region1: #{tpu_custom_call.1} parent=0
    #allocation4 [shape = 'u8[262144]{0}', space=vmem, size = 0x40000, scoped, tag = 'input window, operand 3, single buffered']
    #allocation5 [shape = 's32[2]{0}', space=sflag, size = 0x8, scoped, tag = 'scoped memory for tpu_custom_call.1']
    #allocation6 [shape = 's32[2]{0}', space=sflag, size = 0x8, scoped, tag = 'scoped memory for tpu_custom_call.1']
    #allocation7 [shape = 'u8[393216]{0}', space=vmem, size = 0x60000, scoped, tag = 'input window, operand 5, single buffered']
    #allocation8 [shape = 's32[1]{0}', space=sflag, size = 0x4, scoped, tag = 'scoped memory for tpu_custom_call.1']
    #allocation9 [shape = 'u8[327680]{0}', space=vmem, size = 0x50000, scoped, tag = 'output window, operand 0']
    %12 = vsyncpa [#allocation5], 0
    %13 = vsyncpa [#allocation8], 0
    %14 = vsyncpa [#allocation6], 0
    %s15 = scalar_lea.sflag [#allocation6], 1
    %16 = vsyncpa %s15, 0
    loop: start=0, step=1, limit=4
    $region2: #{tpu_custom_call.1} parent=1 // loop_pre_header
      _
    $region3: #{tpu_custom_call.1} parent=1 // loop_header
      %s18 = sphi 0, %s22
      %p19 = scmp.ge.s32.totalorder %s18, 4
      %s28 = sphi 0, %s30
      %s31 = sphi 0, %s28
      %s32 = sphi 0, %s31
      %s48 = sphi 0, %s32
      %s52 = sphi 0, %s52
      %s54 = sphi 0, %s52
      %s55 = sphi 0, %s54
      %s69 = sphi 0, %s55
      %s73 = sphi 0, %s73
      %s75 = sphi 0, %s73
      %s76 = sphi 0, %s75
      %s90 = sphi 0, %s76
      %s94 = sphi 0, %s94
      %s96 = sphi 0, %s94
      %s97 = sphi 0, %s96
      %s111 = sphi 0, %s97
      %s115 = sphi 0, %s115
      %s117 = sphi 0, %s115
      %s118 = sphi 0, %s117
      %s132 = sphi 0, %s118
      %s136 = sphi 0, %s136
      %s138 = sphi 0, %s136
      %s139 = sphi 0, %s138
      %s153 = sphi 0, %s139
      %s157 = sphi 0, %s157
      %s159 = sphi 0, %s157
      %s160 = sphi 0, %s159
      %s174 = sphi 0, %s160
      %s180 = sphi 0, %s182
      %s183 = sphi 0, %s180
      %s184 = sphi 0, %s183
      %s200 = sphi 0, %s184
    $region4: #{tpu_custom_call.1} parent=1 // loop_header_branch
      %21 = sbr.rel (%p19) target = $region8
    $region5: #{tpu_custom_call.1} parent=1 // loop_body
      %s23 = ssub.s32 %s18, 1
      %s24 = ssub.s32 %s18, 2
      %s25 = sadd.s32 %s18, 1
      %s26 = ssub.s32 %s18, %s25
      %p27 = scmp.eq.s32.totalorder %s26, 0
      %s29 = sadd.s32 %s28, 1
      %s30 = scalar_select %p27, %s28, %s29
      %p33 = pneg %p27
      %p34 = scmp.eq.s32.totalorder %s18, 1
      %p35 = por %p33, %p34
      %p36 = scmp.ne.s32.totalorder %s28, %s31
      %p37 = scmp.eq.s32.totalorder %s18, 0
      %p38 = por %p36, %p37
      %p39 = scmp.ne.s32.totalorder %s28, %s31
      %p40 = scmp.eq.s32.totalorder %s23, 1
      %p41 = por %p39, %p40
      %p42 = scmp.ne.s32.totalorder %s31, %s32
      %p43 = scmp.eq.s32.totalorder %s23, 0
      %p44 = por %p42, %p43
      %p45 = scmp.ne.s32.totalorder %s31, %s32
      %p46 = scmp.eq.s32.totalorder %s24, 1
      %p47 = por %p45, %p46
      %p49 = scmp.ne.s32.totalorder %s32, %s48
      %p50 = scmp.eq.s32.totalorder %s24, 0
      %p51 = por %p49, %p50
      %s53 = sadd.s32 %s52, 1
      %p56 = scmp.eq.s32.totalorder %s18, 1
      %p57 = scmp.ne.s32.totalorder %s52, %s54
      %p58 = scmp.eq.s32.totalorder %s18, 0
      %p59 = por %p57, %p58
      %p60 = scmp.ne.s32.totalorder %s52, %s54
      %p61 = scmp.eq.s32.totalorder %s23, 1
      %p62 = por %p60, %p61
      %p63 = scmp.ne.s32.totalorder %s54, %s55
      %p64 = scmp.eq.s32.totalorder %s23, 0
      %p65 = por %p63, %p64
      %p66 = scmp.ne.s32.totalorder %s54, %s55
      %p67 = scmp.eq.s32.totalorder %s24, 1
      %p68 = por %p66, %p67
      %p70 = scmp.ne.s32.totalorder %s55, %s69
      %p71 = scmp.eq.s32.totalorder %s24, 0
      %p72 = por %p70, %p71
      %s74 = sadd.s32 %s73, 1
      %p77 = scmp.eq.s32.totalorder %s18, 1
      %p78 = scmp.ne.s32.totalorder %s73, %s75
      %p79 = scmp.eq.s32.totalorder %s18, 0
      %p80 = por %p78, %p79
      %p81 = scmp.ne.s32.totalorder %s73, %s75
      %p82 = scmp.eq.s32.totalorder %s23, 1
      %p83 = por %p81, %p82
      %p84 = scmp.ne.s32.totalorder %s75, %s76
      %p85 = scmp.eq.s32.totalorder %s23, 0
      %p86 = por %p84, %p85
      %p87 = scmp.ne.s32.totalorder %s75, %s76
      %p88 = scmp.eq.s32.totalorder %s24, 1
      %p89 = por %p87, %p88
      %p91 = scmp.ne.s32.totalorder %s76, %s90
      %p92 = scmp.eq.s32.totalorder %s24, 0
      %p93 = por %p91, %p92
      %s95 = sadd.s32 %s94, 1
      %p98 = scmp.eq.s32.totalorder %s18, 1
      %p99 = scmp.ne.s32.totalorder %s94, %s96
      %p100 = scmp.eq.s32.totalorder %s18, 0
      %p101 = por %p99, %p100
      %p102 = scmp.ne.s32.totalorder %s94, %s96
      %p103 = scmp.eq.s32.totalorder %s23, 1
      %p104 = por %p102, %p103
      %p105 = scmp.ne.s32.totalorder %s96, %s97
      %p106 = scmp.eq.s32.totalorder %s23, 0
      %p107 = por %p105, %p106
      %p108 = scmp.ne.s32.totalorder %s96, %s97
      %p109 = scmp.eq.s32.totalorder %s24, 1
      %p110 = por %p108, %p109
      %p112 = scmp.ne.s32.totalorder %s97, %s111
      %p113 = scmp.eq.s32.totalorder %s24, 0
      %p114 = por %p112, %p113
      %s116 = sadd.s32 %s115, 1
      %p119 = scmp.eq.s32.totalorder %s18, 1
      %p120 = scmp.ne.s32.totalorder %s115, %s117
      %p121 = scmp.eq.s32.totalorder %s18, 0
      %p122 = por %p120, %p121
      %p123 = scmp.ne.s32.totalorder %s115, %s117
      %p124 = scmp.eq.s32.totalorder %s23, 1
      %p125 = por %p123, %p124
      %p126 = scmp.ne.s32.totalorder %s117, %s118
      %p127 = scmp.eq.s32.totalorder %s23, 0
      %p128 = por %p126, %p127
      %p129 = scmp.ne.s32.totalorder %s117, %s118
      %p130 = scmp.eq.s32.totalorder %s24, 1
      %p131 = por %p129, %p130
      %p133 = scmp.ne.s32.totalorder %s118, %s132
      %p134 = scmp.eq.s32.totalorder %s24, 0
      %p135 = por %p133, %p134
      %s137 = sadd.s32 %s136, 1
      %p140 = scmp.eq.s32.totalorder %s18, 1
      %p141 = scmp.ne.s32.totalorder %s136, %s138
      %p142 = scmp.eq.s32.totalorder %s18, 0
      %p143 = por %p141, %p142
      %p144 = scmp.ne.s32.totalorder %s136, %s138
      %p145 = scmp.eq.s32.totalorder %s23, 1
      %p146 = por %p144, %p145
      %p147 = scmp.ne.s32.totalorder %s138, %s139
      %p148 = scmp.eq.s32.totalorder %s23, 0
      %p149 = por %p147, %p148
      %p150 = scmp.ne.s32.totalorder %s138, %s139
      %p151 = scmp.eq.s32.totalorder %s24, 1
      %p152 = por %p150, %p151
      %p154 = scmp.ne.s32.totalorder %s139, %s153
      %p155 = scmp.eq.s32.totalorder %s24, 0
      %p156 = por %p154, %p155
      %s158 = sadd.s32 %s157, 1
      %p161 = scmp.eq.s32.totalorder %s18, 1
      %p162 = scmp.ne.s32.totalorder %s157, %s159
      %p163 = scmp.eq.s32.totalorder %s18, 0
      %p164 = por %p162, %p163
      %p165 = scmp.ne.s32.totalorder %s157, %s159
      %p166 = scmp.eq.s32.totalorder %s23, 1
      %p167 = por %p165, %p166
      %p168 = scmp.ne.s32.totalorder %s159, %s160
      %p169 = scmp.eq.s32.totalorder %s23, 0
      %p170 = por %p168, %p169
      %p171 = scmp.ne.s32.totalorder %s159, %s160
      %p172 = scmp.eq.s32.totalorder %s24, 1
      %p173 = por %p171, %p172
      %p175 = scmp.ne.s32.totalorder %s160, %s174
      %p176 = scmp.eq.s32.totalorder %s24, 0
      %p177 = por %p175, %p176
      %s178 = ssub.s32 %s18, %s25
      %p179 = scmp.eq.s32.totalorder %s178, 0
      %s181 = sadd.s32 %s180, 1
      %s182 = scalar_select %p179, %s180, %s181
      %p185 = pneg %p179
      %p186 = scmp.eq.s32.totalorder %s18, 1
      %p187 = por %p185, %p186
      %p188 = scmp.ne.s32.totalorder %s180, %s183
      %p189 = scmp.eq.s32.totalorder %s18, 0
      %p190 = por %p188, %p189
      %p191 = scmp.ne.s32.totalorder %s180, %s183
      %p192 = scmp.eq.s32.totalorder %s23, 1
      %p193 = por %p191, %p192
      %p194 = scmp.ne.s32.totalorder %s183, %s184
      %p195 = scmp.eq.s32.totalorder %s23, 0
      %p196 = por %p194, %p195
      %p197 = scmp.ne.s32.totalorder %s183, %s184
      %p198 = scmp.eq.s32.totalorder %s24, 1
      %p199 = por %p197, %p198
      %p201 = scmp.ne.s32.totalorder %s184, %s200
      %p202 = scmp.eq.s32.totalorder %s24, 0
      %p203 = por %p201, %p202
      %p204 = scmp.le.s32.totalorder 1, %s18
      %p205 = scmp.lt.s32.totalorder %s18, 3
      %p206 = pnand %p204, %p205
      %p207 = pneg %p206
      // Predicated region
      $region9: #{tpu_custom_call.1} parent=5 // pred_check
        _
      $region10: #{tpu_custom_call.1} parent=5 // pred_check_branch
        %209 = sbr.rel (%p206) target = $region12
      $region11: #{tpu_custom_call.1} parent=5 // pred_region
        %s210 = ssub.s32 %s18, 1
        // Predicated region
        $region13: #{tpu_custom_call.1} parent=11 // pred_check
          %p211 = pneg %p65
        $region14: #{tpu_custom_call.1} parent=11 // pred_check_branch
          %213 = sbr.rel (%p211) target = $region16
        $region15: #{tpu_custom_call.1} parent=11 // pred_region
          _
        $region16: #{tpu_custom_call.1} parent=11 // pred_fallthru
          _
        // Predicated region
        $region17: #{tpu_custom_call.1} parent=11 // pred_check
          %p214 = pneg %p86
        $region18: #{tpu_custom_call.1} parent=11 // pred_check_branch
          %216 = sbr.rel (%p214) target = $region20
        $region19: #{tpu_custom_call.1} parent=11 // pred_region
          _
        $region20: #{tpu_custom_call.1} parent=11 // pred_fallthru
          _
        // Predicated region
        $region21: #{tpu_custom_call.1} parent=11 // pred_check
          %p217 = pneg %p107
        $region22: #{tpu_custom_call.1} parent=11 // pred_check_branch
          %219 = sbr.rel (%p217) target = $region24
        $region23: #{tpu_custom_call.1} parent=11 // pred_region
          %s221 = ssub.s32 8192, 8192
          %222 = vsyncadd [#allocation5], %s221
          %s223 = sshll.u32 [#allocation4], 4
          %s224 = int_to_ptr.vmem [resolvable:$true] %s223
          %229 = dma.hbm_to_vmem [thread:$0]  %s3, 8192, %s224, [#allocation5], 128, 128, 8
        $region24: #{tpu_custom_call.1} parent=11 // pred_fallthru
          _
        // Predicated region
        $region25: #{tpu_custom_call.1} parent=11 // pred_check
          %p230 = pneg %p128
        $region26: #{tpu_custom_call.1} parent=11 // pred_check_branch
          %232 = sbr.rel (%p230) target = $region28
        $region27: #{tpu_custom_call.1} parent=11 // pred_region
          _
        $region28: #{tpu_custom_call.1} parent=11 // pred_fallthru
          _
        // Predicated region
        $region29: #{tpu_custom_call.1} parent=11 // pred_check
          %p233 = pneg %p149
        $region30: #{tpu_custom_call.1} parent=11 // pred_check_branch
          %235 = sbr.rel (%p233) target = $region32
        $region31: #{tpu_custom_call.1} parent=11 // pred_region
          %s237 = ssub.s32 12288, 12288
          %238 = vsyncadd [#allocation8], %s237
          %s239 = sshll.u32 [#allocation7], 4
          %s240 = int_to_ptr.vmem [resolvable:$true] %s239
          %245 = dma.hbm_to_vmem [thread:$0]  %s5, 12288, %s240, [#allocation8], 128, 128, 8
        $region32: #{tpu_custom_call.1} parent=11 // pred_fallthru
          _
        // Predicated region
        $region33: #{tpu_custom_call.1} parent=11 // pred_check
          %p246 = pneg %p170
        $region34: #{tpu_custom_call.1} parent=11 // pred_check_branch
          %248 = sbr.rel (%p246) target = $region36
        $region35: #{tpu_custom_call.1} parent=11 // pred_region
          _
        $region36: #{tpu_custom_call.1} parent=11 // pred_fallthru
          _
      $region12: #{tpu_custom_call.1} parent=5 // pred_fallthru
        _
      %p249 = scmp.lt.s32.totalorder %s18, 2
      // Predicated region
      $region37: #{tpu_custom_call.1} parent=5 // pred_check
        %p250 = pneg %p249
      $region38: #{tpu_custom_call.1} parent=5 // pred_check_branch
        %252 = sbr.rel (%p250) target = $region40
      $region39: #{tpu_custom_call.1} parent=5 // pred_region
        // Predicated region
        $region41: #{tpu_custom_call.1} parent=39 // pred_check
          %p253 = pneg %p38
        $region42: #{tpu_custom_call.1} parent=39 // pred_check_branch
          %255 = sbr.rel (%p253) target = $region44
        $region43: #{tpu_custom_call.1} parent=39 // pred_region
          %p256 = scmp.lt.s32.totalorder %s18, 1
          %s257 = scalar_select %p256, %s18, 1
          %s258 = smul.addr %s257, 6
          %s259 = smul.addr %s258, 4
          %s260 = scalar_lea.vmem %s0, %s259
        $region44: #{tpu_custom_call.1} parent=39 // pred_fallthru
          _
      $region40: #{tpu_custom_call.1} parent=5 // pred_fallthru
        _
      %p261 = scmp.le.s32.totalorder 1, %s18
      %p262 = scmp.lt.s32.totalorder %s18, 3
      %p263 = pnand %p261, %p262
      %p264 = pneg %p263
      // Predicated region
      $region45: #{tpu_custom_call.1} parent=5 // pred_check
        _
      $region46: #{tpu_custom_call.1} parent=5 // pred_check_branch
        %266 = sbr.rel (%p263) target = $region48
      $region47: #{tpu_custom_call.1} parent=5 // pred_region
        %s267 = ssub.s32 %s18, 1
        // Predicated region
        $region49: #{tpu_custom_call.1} parent=47 // pred_check
          %p268 = pneg %p107
        $region50: #{tpu_custom_call.1} parent=47 // pred_check_branch
          %270 = sbr.rel (%p268) target = $region52
        $region51: #{tpu_custom_call.1} parent=47 // pred_region
          %271 = dma.done [#allocation5], 8192
        $region52: #{tpu_custom_call.1} parent=47 // pred_fallthru
          _
        // Predicated region
        $region53: #{tpu_custom_call.1} parent=47 // pred_check
          %p272 = pneg %p149
        $region54: #{tpu_custom_call.1} parent=47 // pred_check_branch
          %274 = sbr.rel (%p272) target = $region56
        $region55: #{tpu_custom_call.1} parent=47 // pred_region
          %275 = dma.done [#allocation8], 12288
        $region56: #{tpu_custom_call.1} parent=47 // pred_fallthru
          _
        %p276 = scmp.lt.s32.totalorder %s23, 1
        %s277 = scalar_select %p276, %s23, 1
        %s278 = smul.addr %s277, 6
        %s279 = smul.addr %s278, 4
        %s280 = scalar_lea.vmem %s0, %s279
        %p281 = pneg %p44
        %p282 = pneg %p41
        %p283 = pneg %p65
        %p284 = pneg %p62
        %p285 = pneg %p86
        %p286 = pneg %p83
        %p287 = pneg %p107
        %p288 = pneg %p104
        %p289 = pneg %p128
        %p290 = pneg %p125
        %p291 = pneg %p149
        %p292 = pneg %p146
        %p293 = pneg %p170
        %p294 = pneg %p167
        %p295 = pneg %p196
        %p296 = pneg %p193
        %s297 = sand.u32 %s183, 1
        %s298 = scalar_lea.sflag [#allocation6], %s297
        %s299 = sand.u32 %s183, 1
        %s300 = smul.addr %s299, 320
        %s301 = scalar_lea.vmem [#allocation9], %s300
        %p302 = scmp.lt.s32.totalorder %s23, 1
        %s303 = scalar_select %p302, %s23, 1
        %s304 = smul.addr %s303, 6
        %s305 = smul.addr %s304, 4
        %s306 = scalar_lea.vmem %s0, %s305
        %v308 = vld [vmem:[%s306] sm:$0xf]
        %v309 = vld [vmem:[%s306 + $0x4] sm:$0xf]
        %v310 = vld [vmem:[%s306 + $0x8] sm:$0xf]
        %v311 = vld [vmem:[%s306 + $0xc] sm:$0xf]
        %v312 = vld [vmem:[%s306 + $0x10] sm:$0xf]
        %v313 = vld [vmem:[%s306 + $0x14] sm:$0x1]
        %v314 = vld [vmem:[%s2] sm:$0x1]
        %v315 = vlaneseq
        %v316 = vshrl.u32 %v315, 7
        %v317 = vadd.s32 %v316, 8
        %v318 = vadd.s32 %v316, 16
        %v319 = vadd.s32 %v316, 24
        %v320 = vadd.s32 %v316, 32
        %vm321 = vcmp.lt.s32.totalorder %v316, 0
        %v322 = vsub.s32 0, %v316
        %v323 = vsel %vm321, %v322, %v316
        %v324 = vmul.u32.u64.compose %v323, 3435973837
        %v325 = vextract.low.u32 %v324
        %v326 = vextract.high.u32 %v324
        %v327 = vshrl.u32 %v326, 3
        %v328 = vmul.u32 %v327, 10
        %v329 = vsub.s32 %v323, %v328
        %v330 = vsub.s32 0, %v329
        %v331 = vsel %vm321, %v330, %v329
        %vm332 = vcmp.lt.s32.totalorder %v317, 0
        %v333 = vsub.s32 0, %v317
        %v334 = vsel %vm332, %v333, %v317
        %v335 = vmul.u32.u64.compose %v334, 3435973837
        %v336 = vextract.low.u32 %v335
        %v337 = vextract.high.u32 %v335
        %v338 = vshrl.u32 %v337, 3
        %v339 = vmul.u32 %v338, 10
        %v340 = vsub.s32 %v334, %v339
        %v341 = vsub.s32 0, %v340
        %v342 = vsel %vm332, %v341, %v340
        %vm343 = vcmp.lt.s32.totalorder %v318, 0
        %v344 = vsub.s32 0, %v318
        %v345 = vsel %vm343, %v344, %v318
        %v346 = vmul.u32.u64.compose %v345, 3435973837
        %v347 = vextract.low.u32 %v346
        %v348 = vextract.high.u32 %v346
        %v349 = vshrl.u32 %v348, 3
        %v350 = vmul.u32 %v349, 10
        %v351 = vsub.s32 %v345, %v350
        %v352 = vsub.s32 0, %v351
        %v353 = vsel %vm343, %v352, %v351
        %vm354 = vcmp.lt.s32.totalorder %v319, 0
        %v355 = vsub.s32 0, %v319
        %v356 = vsel %vm354, %v355, %v319
        %v357 = vmul.u32.u64.compose %v356, 3435973837
        %v358 = vextract.low.u32 %v357
        %v359 = vextract.high.u32 %v357
        %v360 = vshrl.u32 %v359, 3
        %v361 = vmul.u32 %v360, 10
        %v362 = vsub.s32 %v356, %v361
        %v363 = vsub.s32 0, %v362
        %v364 = vsel %vm354, %v363, %v362
        %vm365 = vcmp.lt.s32.totalorder %v320, 0
        %v366 = vsub.s32 0, %v320
        %v367 = vsel %vm365, %v366, %v320
        %v368 = vmul.u32.u64.compose %v367, 3435973837
        %v369 = vextract.low.u32 %v368
        %v370 = vextract.high.u32 %v368
        %v371 = vshrl.u32 %v370, 3
        %v372 = vmul.u32 %v371, 10
        %v373 = vsub.s32 %v367, %v372
        %v374 = vsub.s32 0, %v373
        %v375 = vsel %vm365, %v374, %v373
        %vm376 = vcmp.ne.s32.totalorder %v331, 0
        %vm377 = vcmp.ne.s32.totalorder %v342, 0
        %vm378 = vcmp.ne.s32.totalorder %v353, 0
        %vm379 = vcmp.ne.s32.totalorder %v364, 0
        %vm380 = vcmp.ne.s32.totalorder %v375, 0
        %vm381 = vcmp.lt.s32.totalorder %v331, 0
        %vm382 = vcmp.lt.s32.totalorder %v342, 0
        %vm383 = vcmp.lt.s32.totalorder %v353, 0
        %vm384 = vcmp.lt.s32.totalorder %v364, 0
        %vm385 = vcmp.lt.s32.totalorder %v375, 0
        %vm386 = vmand %vm381, %vm376
        %vm387 = vmand %vm382, %vm377
        %vm388 = vmand %vm383, %vm378
        %vm389 = vmand %vm384, %vm379
        %vm390 = vmand %vm385, %vm380
        %v391 = vadd.s32 %v331, 10
        %v392 = vadd.s32 %v342, 10
        %v393 = vadd.s32 %v353, 10
        %v394 = vadd.s32 %v364, 10
        %v395 = vadd.s32 %v375, 10
        %v396 = vsel %vm386, %v391, %v331
        %v397 = vsel %vm387, %v392, %v342
        %v398 = vsel %vm388, %v393, %v353
        %v399 = vsel %vm389, %v394, %v364
        %v400 = vsel %vm390, %v395, %v375
        %vm401 = vcmp.ge.s32.totalorder %v396, 1
        %vm402 = vcmp.ge.s32.totalorder %v397, 1
        %vm403 = vcmp.ge.s32.totalorder %v398, 1
        %vm404 = vcmp.ge.s32.totalorder %v399, 1
        %vm405 = vcmp.ge.s32.totalorder %v400, 1
        %vm406 = vcmp.lt.s32.totalorder %v396, 9
        %vm407 = vcmp.lt.s32.totalorder %v397, 9
        %vm408 = vcmp.lt.s32.totalorder %v398, 9
        %vm409 = vcmp.lt.s32.totalorder %v399, 9
        %vm410 = vcmp.lt.s32.totalorder %v400, 9
        %vm411 = vmand %vm401, %vm406
        %vm412 = vmand %vm402, %vm407
        %vm413 = vmand %vm403, %vm408
        %vm414 = vmand %vm404, %vm409
        %vm415 = vmand %vm405, %vm410
        %s416 = scalar_lea.vmem %s1, 16
        %v417 = vld [vmem:[%s416] sm:$0xf]
        %v418 = vld [vmem:[%s416 + $0x4] sm:$0xf]
        %v419 = vld [vmem:[%s416 + $0x8] sm:$0xf]
        %v420 = vld [vmem:[%s416 + $0xc] sm:$0xf]
        %s421 = scalar_lea.vmem %s1, 48
        %v422 = vld [vmem:[%s421] sm:$0xf]
        %v423 = vld [vmem:[%s421 + $0x4] sm:$0xf]
        %v424 = vld [vmem:[%s421 + $0x8] sm:$0xf]
        %v425 = vld [vmem:[%s421 + $0xc] sm:$0xf]
        %v431 = vunpack.c.l.b16 %v308
        %v432 = vunpack.c.l.b16 %v309
        %v433 = vunpack.c.l.b16 %v310
        %v434 = vunpack.c.l.b16 %v311
        %v435 = vunpack.c.l.b16 %v312
        %v436 = vpack.c.b16 %v432, %v431
        %v437 = vpack.c.b16 %v434, %v433
        %v438 = vpack.c.b16 %v435, %v435
        %v443 = vunpack.c.l.b16 %v422
        %v444 = vunpack.c.l.b16 %v423
        %v445 = vunpack.c.l.b16 %v424
        %v446 = vunpack.c.l.b16 %v425
        %v447 = vpack.c.b16 %v444, %v443
        %v448 = vpack.c.b16 %v446, %v445
        %vm451 = vcmask 261120
        %v453 = vsel %vm451, %v436, 0
        %v456 = vsel %vm451, %v437, 0
        %v459 = vsel %vm451, %v438, 0
        %461 = vmatprep.subr.bf16.mxu0 0
        %462 = vmatpush1.bf16.msra.mxu0 %v447
        %463 = vmatprep.subr.bf16.mxu0 0
        %464 = vmatpush1.bf16.msra.mxu0 %v448
        %465 = vmatprep.subr.bf16.mxu0 0
        %466 = vmatpush1.bf16.msra.mxu0 0
        %467 = vmatprep.subr.bf16.mxu0 0
        %468 = vmatpush1.bf16.msra.mxu0 0
        %469 = vmatprep.subr.bf16.mxu0 0
        %470 = vmatpush1.bf16.msra.mxu0 0
        %471 = vmatprep.subr.bf16.mxu0 0
        %472 = vmatpush1.bf16.msra.mxu0 0
        %473 = vmatprep.subr.bf16.mxu0 0
        %474 = vmatpush1.bf16.msra.mxu0 0
        %475 = vmatprep.subr.bf16.mxu0 0
        %476 = vmatpush1.bf16.msra.mxu0 0
        %477 = vmatprep.subr.bf16.mxu0 0
        %478 = vmatpush1.bf16.msra.mxu0 0
        %479 = vmatprep.subr.bf16.mxu0 0
        %480 = vmatpush1.bf16.msra.mxu0 0
        %481 = vmatprep.subr.bf16.mxu0 0
        %482 = vmatpush1.bf16.msra.mxu0 0
        %483 = vmatprep.subr.bf16.mxu0 0
        %484 = vmatpush1.bf16.msra.mxu0 0
        %485 = vmatprep.subr.bf16.mxu0 0
        %486 = vmatpush1.bf16.msra.mxu0 0
        %487 = vmatprep.subr.bf16.mxu0 0
        %488 = vmatpush1.bf16.msra.mxu0 0
        %489 = vmatprep.subr.bf16.mxu0 0
        %490 = vmatpush1.bf16.msra.mxu0 0
        %491 = vmatprep.subr.bf16.mxu0 0
        %492 = vmatpush1.bf16.msra.mxu0 0
        %493 = vmatprep.mubr.bf16.mxu0 0
        %494 = vmatmul.mubr.bf16.gmra.mrb[0].mxu0 %v453
        %v495 = vpop.f32.mrb[0].mxu0
        %v496 = vadd.f32 0.0, %v495
        %v497 = vpop.f32.mrb[0].mxu0
        %v498 = vpop.f32.mrb[0].mxu0
        %v499 = vadd.f32 0.0, %v498
        %v500 = vpop.f32.mrb[0].mxu0
        %501 = vmatprep.mubr.bf16.mxu0 0
        %502 = vmatmul.mubr.bf16.gmra.mrb[0].mxu0 %v456
        %v503 = vpop.f32.mrb[0].mxu0
        %v504 = vadd.f32 0.0, %v503
        %v505 = vpop.f32.mrb[0].mxu0
        %v506 = vpop.f32.mrb[0].mxu0
        %v507 = vadd.f32 0.0, %v506
        %v508 = vpop.f32.mrb[0].mxu0
        %509 = vmatprep.mubr.bf16.mxu0 0
        %510 = vmatmul.mubr.bf16.gmra.mrb[0].mxu0 %v459
        %v511 = vpop.f32.mrb[0].mxu0
        %v512 = vadd.f32 0.0, %v511
        %v513 = vpop.f32.mrb[0].mxu0
        %v514 = vpop.f32.mrb[0].mxu0
        %v515 = vpop.f32.mrb[0].mxu0
        %516 = vdwg.mxu0
        %v518 = vunpack.c.l.b16 %v313
        %v519 = vpack.c.b16 %v518, %v435
        %vm520 = vsmask.f32 7424
        %v521 = vshrl.u32 %v436, 16
        %v523 = vshll.u32 %v436, 16
        %v525 = vrot.slane %v523, 1
        %v526 = vor.u32 %v521, %v525
        %v527 = vshll.u32 %v437, 16
        %v529 = vrot.slane %v527, 1
        %v530 = vsel %vm520, %v526, %v529
        %v531 = vshrl.u32 %v437, 16
        %v533 = vor.u32 %v531, %v529
        %v535 = vshll.u32 %v519, 16
        %v537 = vrot.slane %v535, 1
        %v538 = vsel %vm520, %v533, %v537
        %v539 = vshrl.u32 %v519, 16
        %v541 = vor.u32 %v539, %v537
        %v546 = vunpack.c.l.b16 %v417
        %v547 = vunpack.c.l.b16 %v418
        %v548 = vunpack.c.l.b16 %v419
        %v549 = vunpack.c.l.b16 %v420
        %v550 = vpack.c.b16 %v547, %v546
        %v551 = vpack.c.b16 %v549, %v548
        %v555 = vsel %vm451, %v530, 0
        %v558 = vsel %vm451, %v538, 0
        %v561 = vsel %vm451, %v541, 0
        %563 = vmatprep.subr.bf16.mxu0 0
        %564 = vmatpush1.bf16.msra.mxu0 %v550
        %565 = vmatprep.subr.bf16.mxu0 0
        %566 = vmatpush1.bf16.msra.mxu0 %v551
        %567 = vmatprep.subr.bf16.mxu0 0
        %568 = vmatpush1.bf16.msra.mxu0 0
        %569 = vmatprep.subr.bf16.mxu0 0
        %570 = vmatpush1.bf16.msra.mxu0 0
        %571 = vmatprep.subr.bf16.mxu0 0
        %572 = vmatpush1.bf16.msra.mxu0 0
        %573 = vmatprep.subr.bf16.mxu0 0
        %574 = vmatpush1.bf16.msra.mxu0 0
        %575 = vmatprep.subr.bf16.mxu0 0
        %576 = vmatpush1.bf16.msra.mxu0 0
        %577 = vmatprep.subr.bf16.mxu0 0
        %578 = vmatpush1.bf16.msra.mxu0 0
        %579 = vmatprep.subr.bf16.mxu0 0
        %580 = vmatpush1.bf16.msra.mxu0 0
        %581 = vmatprep.subr.bf16.mxu0 0
        %582 = vmatpush1.bf16.msra.mxu0 0
        %583 = vmatprep.subr.bf16.mxu0 0
        %584 = vmatpush1.bf16.msra.mxu0 0
        %585 = vmatprep.subr.bf16.mxu0 0
        %586 = vmatpush1.bf16.msra.mxu0 0
        %587 = vmatprep.subr.bf16.mxu0 0
        %588 = vmatpush1.bf16.msra.mxu0 0
        %589 = vmatprep.subr.bf16.mxu0 0
        %590 = vmatpush1.bf16.msra.mxu0 0
        %591 = vmatprep.subr.bf16.mxu0 0
        %592 = vmatpush1.bf16.msra.mxu0 0
        %593 = vmatprep.subr.bf16.mxu0 0
        %594 = vmatpush1.bf16.msra.mxu0 0
        %595 = vmatprep.mubr.bf16.mxu0 0
        %596 = vmatmul.mubr.bf16.gmra.mrb[0].mxu0 %v555
        %v597 = vpop.f32.mrb[0].mxu0
        %v598 = vadd.f32 %v496, %v597
        %v599 = vpop.f32.mrb[0].mxu0
        %v600 = vpop.f32.mrb[0].mxu0
        %v601 = vadd.f32 %v499, %v600
        %v602 = vpop.f32.mrb[0].mxu0
        %603 = vmatprep.mubr.bf16.mxu0 0
        %604 = vmatmul.mubr.bf16.gmra.mrb[0].mxu0 %v558
        %v605 = vpop.f32.mrb[0].mxu0
        %v606 = vadd.f32 %v504, %v605
        %v607 = vpop.f32.mrb[0].mxu0
        %v608 = vpop.f32.mrb[0].mxu0
        %v609 = vadd.f32 %v507, %v608
        %v610 = vpop.f32.mrb[0].mxu0
        %611 = vmatprep.mubr.bf16.mxu0 0
        %612 = vmatmul.mubr.bf16.gmra.mrb[0].mxu0 %v561
        %v613 = vpop.f32.mrb[0].mxu0
        %v614 = vadd.f32 %v512, %v613
        %v615 = vpop.f32.mrb[0].mxu0
        %v616 = vpop.f32.mrb[0].mxu0
        %v617 = vpop.f32.mrb[0].mxu0
        %618 = vdwg.mxu0
        %v620 = vlaneseq
        %v621 = vshrl.u32 %v620, 7
        %v622 = vsub.s32 0, %v621
        %v623 = vrot.slane %v314, %v622
        %v625 = vadd.f32 %v598, %v623
        %v626 = vadd.f32 %v601, %v623
        %v627 = vadd.f32 %v606, %v623
        %v628 = vadd.f32 %v609, %v623
        %v629 = vadd.f32 %v614, %v623
        %v630 = vmax.f32 %v625, 0.0
        %v631 = vmax.f32 %v626, 0.0
        %v632 = vmax.f32 %v627, 0.0
        %v633 = vmax.f32 %v628, 0.0
        %v634 = vmax.f32 %v629, 0.0
        %v635 = vsel %vm411, %v630, 0.0
        %v636 = vsel %vm412, %v631, 0.0
        %v637 = vsel %vm413, %v632, 0.0
        %v638 = vsel %vm414, %v633, 0.0
        %v639 = vsel %vm415, %v634, 0.0
        %v640 = vld [vmem:[%s1] sm:$0xf]
        %v641 = vld [vmem:[%s1 + $0x4] sm:$0xf]
        %v642 = vld [vmem:[%s1 + $0x8] sm:$0xf]
        %v643 = vld [vmem:[%s1 + $0xc] sm:$0xf]
        %s644 = scalar_lea.vmem %s1, 32
        %v645 = vld [vmem:[%s644] sm:$0xf]
        %v646 = vld [vmem:[%s644 + $0x4] sm:$0xf]
        %v647 = vld [vmem:[%s644 + $0x8] sm:$0xf]
        %v648 = vld [vmem:[%s644 + $0xc] sm:$0xf]
        %v653 = vunpack.c.l.b16 %v645
        %v654 = vunpack.c.l.b16 %v646
        %v655 = vunpack.c.l.b16 %v647
        %v656 = vunpack.c.l.b16 %v648
        %v657 = vpack.c.b16 %v654, %v653
        %v658 = vpack.c.b16 %v656, %v655
        %661 = vmatprep.subr.bf16.mxu0 0
        %662 = vmatpush1.bf16.msra.mxu0 %v657
        %663 = vmatprep.subr.bf16.mxu0 0
        %664 = vmatpush1.bf16.msra.mxu0 %v658
        %665 = vmatprep.subr.bf16.mxu0 0
        %666 = vmatpush1.bf16.msra.mxu0 0
        %667 = vmatprep.subr.bf16.mxu0 0
        %668 = vmatpush1.bf16.msra.mxu0 0
        %669 = vmatprep.subr.bf16.mxu0 0
        %670 = vmatpush1.bf16.msra.mxu0 0
        %671 = vmatprep.subr.bf16.mxu0 0
        %672 = vmatpush1.bf16.msra.mxu0 0
        %673 = vmatprep.subr.bf16.mxu0 0
        %674 = vmatpush1.bf16.msra.mxu0 0
        %675 = vmatprep.subr.bf16.mxu0 0
        %676 = vmatpush1.bf16.msra.mxu0 0
        %677 = vmatprep.subr.bf16.mxu0 0
        %678 = vmatpush1.bf16.msra.mxu0 0
        %679 = vmatprep.subr.bf16.mxu0 0
        %680 = vmatpush1.bf16.msra.mxu0 0
        %681 = vmatprep.subr.bf16.mxu0 0
        %682 = vmatpush1.bf16.msra.mxu0 0
        %683 = vmatprep.subr.bf16.mxu0 0
        %684 = vmatpush1.bf16.msra.mxu0 0
        %685 = vmatprep.subr.bf16.mxu0 0
        %686 = vmatpush1.bf16.msra.mxu0 0
        %687 = vmatprep.subr.bf16.mxu0 0
        %688 = vmatpush1.bf16.msra.mxu0 0
        %689 = vmatprep.subr.bf16.mxu0 0
        %690 = vmatpush1.bf16.msra.mxu0 0
        %691 = vmatprep.subr.bf16.mxu0 0
        %692 = vmatpush1.bf16.msra.mxu0 0
        %693 = vmatprep.mubr.bf16.mxu0 0
        %694 = vmatmul.mubr.bf16.gmra.mrb[0].mxu0 %v555
        %v695 = vpop.f32.mrb[0].mxu0
        %v696 = vadd.f32 0.0, %v695
        %v697 = vpop.f32.mrb[0].mxu0
        %v698 = vpop.f32.mrb[0].mxu0
        %v699 = vadd.f32 0.0, %v698
        %v700 = vpop.f32.mrb[0].mxu0
        %701 = vmatprep.mubr.bf16.mxu0 0
        %702 = vmatmul.mubr.bf16.gmra.mrb[0].mxu0 %v558
        %v703 = vpop.f32.mrb[0].mxu0
        %v704 = vadd.f32 0.0, %v703
        %v705 = vpop.f32.mrb[0].mxu0
        %v706 = vpop.f32.mrb[0].mxu0
        %v707 = vadd.f32 0.0, %v706
        %v708 = vpop.f32.mrb[0].mxu0
        %709 = vmatprep.mubr.bf16.mxu0 0
        %710 = vmatmul.mubr.bf16.gmra.mrb[0].mxu0 %v561
        %v711 = vpop.f32.mrb[0].mxu0
        %v712 = vadd.f32 0.0, %v711
        %v713 = vpop.f32.mrb[0].mxu0
        %v714 = vpop.f32.mrb[0].mxu0
        %v715 = vpop.f32.mrb[0].mxu0
        %716 = vdwg.mxu0
        %vm717 = vcmask 1046528
        %v718 = vrot.slane %v436, 1
        %v719 = vrot.slane %v437, 1
        %v720 = vsel %vm717, %v718, %v719
        %v721 = vrot.slane %v519, 1
        %v722 = vsel %vm717, %v719, %v721
        %v727 = vunpack.c.l.b16 %v640
        %v728 = vunpack.c.l.b16 %v641
        %v729 = vunpack.c.l.b16 %v642
        %v730 = vunpack.c.l.b16 %v643
        %v731 = vpack.c.b16 %v728, %v727
        %v732 = vpack.c.b16 %v730, %v729
        %v736 = vsel %vm451, %v720, 0
        %v739 = vsel %vm451, %v722, 0
        %v742 = vsel %vm451, %v721, 0
        %744 = vmatprep.subr.bf16.mxu0 0
        %745 = vmatpush1.bf16.msra.mxu0 %v731
        %746 = vmatprep.subr.bf16.mxu0 0
        %747 = vmatpush1.bf16.msra.mxu0 %v732
        %748 = vmatprep.subr.bf16.mxu0 0
        %749 = vmatpush1.bf16.msra.mxu0 0
        %750 = vmatprep.subr.bf16.mxu0 0
        %751 = vmatpush1.bf16.msra.mxu0 0
        %752 = vmatprep.subr.bf16.mxu0 0
        %753 = vmatpush1.bf16.msra.mxu0 0
        %754 = vmatprep.subr.bf16.mxu0 0
        %755 = vmatpush1.bf16.msra.mxu0 0
        %756 = vmatprep.subr.bf16.mxu0 0
        %757 = vmatpush1.bf16.msra.mxu0 0
        %758 = vmatprep.subr.bf16.mxu0 0
        %759 = vmatpush1.bf16.msra.mxu0 0
        %760 = vmatprep.subr.bf16.mxu0 0
        %761 = vmatpush1.bf16.msra.mxu0 0
        %762 = vmatprep.subr.bf16.mxu0 0
        %763 = vmatpush1.bf16.msra.mxu0 0
        %764 = vmatprep.subr.bf16.mxu0 0
        %765 = vmatpush1.bf16.msra.mxu0 0
        %766 = vmatprep.subr.bf16.mxu0 0
        %767 = vmatpush1.bf16.msra.mxu0 0
        %768 = vmatprep.subr.bf16.mxu0 0
        %769 = vmatpush1.bf16.msra.mxu0 0
        %770 = vmatprep.subr.bf16.mxu0 0
        %771 = vmatpush1.bf16.msra.mxu0 0
        %772 = vmatprep.subr.bf16.mxu0 0
        %773 = vmatpush1.bf16.msra.mxu0 0
        %774 = vmatprep.subr.bf16.mxu0 0
        %775 = vmatpush1.bf16.msra.mxu0 0
        %776 = vmatprep.mubr.bf16.mxu0 0
        %777 = vmatmul.mubr.bf16.gmra.mrb[0].mxu0 %v736
        %v778 = vpop.f32.mrb[0].mxu0
        %v779 = vadd.f32 %v696, %v778
        %v780 = vpop.f32.mrb[0].mxu0
        %v781 = vpop.f32.mrb[0].mxu0
        %v782 = vadd.f32 %v699, %v781
        %v783 = vpop.f32.mrb[0].mxu0
        %784 = vmatprep.mubr.bf16.mxu0 0
        %785 = vmatmul.mubr.bf16.gmra.mrb[0].mxu0 %v739
        %v786 = vpop.f32.mrb[0].mxu0
        %v787 = vadd.f32 %v704, %v786
        %v788 = vpop.f32.mrb[0].mxu0
        %v789 = vpop.f32.mrb[0].mxu0
        %v790 = vadd.f32 %v707, %v789
        %v791 = vpop.f32.mrb[0].mxu0
        %792 = vmatprep.mubr.bf16.mxu0 0
        %793 = vmatmul.mubr.bf16.gmra.mrb[0].mxu0 %v742
        %v794 = vpop.f32.mrb[0].mxu0
        %v795 = vadd.f32 %v712, %v794
        %v796 = vpop.f32.mrb[0].mxu0
        %v797 = vpop.f32.mrb[0].mxu0
        %v798 = vpop.f32.mrb[0].mxu0
        %799 = vdwg.mxu0
        %v800 = vadd.f32 %v779, %v623
        %v801 = vadd.f32 %v782, %v623
        %v802 = vadd.f32 %v787, %v623
        %v803 = vadd.f32 %v790, %v623
        %v804 = vadd.f32 %v795, %v623
        %v805 = vmax.f32 %v800, 0.0
        %v806 = vmax.f32 %v801, 0.0
        %v807 = vmax.f32 %v802, 0.0
        %v808 = vmax.f32 %v803, 0.0
        %v809 = vmax.f32 %v804, 0.0
        %v810 = vsel %vm411, %v805, 0.0
        %v811 = vsel %vm412, %v806, 0.0
        %v812 = vsel %vm413, %v807, 0.0
        %v813 = vsel %vm414, %v808, 0.0
        %v814 = vsel %vm415, %v809, 0.0
        %v820 = vcombine.high %v635, %v635
        %v822 = vunpack.c.l.s4 1966171168
        %v823 = vunpack.c.0.s8 %v822
        %v824 = vlaneseq
        %v825 = vshrl.u32 %v824, 7
        %v826 = vsub.s32 %v823, %v825
        %v827 = vrot.slane %v635, %v826
        %v829 = vunpack.c.l.s4 1966171168
        %v830 = vunpack.c.0.s8 %v829
        %v831 = vlaneseq
        %v832 = vshrl.u32 %v831, 7
        %v833 = vsub.s32 %v830, %v832
        %v834 = vrot.slane %v820, %v833
        %v835 = vcombine.high %v827, %v827
        %v836 = vcombine.high %v834, %v834
        %v838 = vunpack.c.l.s4 1966171168
        %v839 = vunpack.c.0.s8 %v838
        %v840 = vlaneseq
        %v841 = vshrl.u32 %v840, 7
        %v842 = vsub.s32 %v839, %v841
        %v843 = vrot.slane %v827, %v842
        %v845 = vunpack.c.l.s4 1966171168
        %v846 = vunpack.c.0.s8 %v845
        %v847 = vlaneseq
        %v848 = vshrl.u32 %v847, 7
        %v849 = vsub.s32 %v846, %v848
        %v850 = vrot.slane %v834, %v849
        %v852 = vunpack.c.l.s4 1966171168
        %v853 = vunpack.c.0.s8 %v852
        %v854 = vlaneseq
        %v855 = vshrl.u32 %v854, 7
        %v856 = vsub.s32 %v853, %v855
        %v857 = vrot.slane %v835, %v856
        %v859 = vunpack.c.l.s4 1966171168
        %v860 = vunpack.c.0.s8 %v859
        %v861 = vlaneseq
        %v862 = vshrl.u32 %v861, 7
        %v863 = vsub.s32 %v860, %v862
        %v864 = vrot.slane %v836, %v863
        %v865 = vcombine.high %v843, %v843
        %v866 = vcombine.high %v850, %v850
        %v867 = vcombine.high %v857, %v857
        %v868 = vcombine.high %v864, %v864
        %v869 = vcombine.high %v636, %v636
        %v871 = vunpack.c.l.s4 1966171168
        %v872 = vunpack.c.0.s8 %v871
        %v873 = vlaneseq
        %v874 = vshrl.u32 %v873, 7
        %v875 = vsub.s32 %v872, %v874
        %v876 = vrot.slane %v636, %v875
        %v878 = vunpack.c.l.s4 1966171168
        %v879 = vunpack.c.0.s8 %v878
        %v880 = vlaneseq
        %v881 = vshrl.u32 %v880, 7
        %v882 = vsub.s32 %v879, %v881
        %v883 = vrot.slane %v869, %v882
        %v884 = vcombine.high %v876, %v876
        %v885 = vcombine.high %v883, %v883
        %v887 = vunpack.c.l.s4 1966171168
        %v888 = vunpack.c.0.s8 %v887
        %v889 = vlaneseq
        %v890 = vshrl.u32 %v889, 7
        %v891 = vsub.s32 %v888, %v890
        %v892 = vrot.slane %v876, %v891
        %v894 = vunpack.c.l.s4 1966171168
        %v895 = vunpack.c.0.s8 %v894
        %v896 = vlaneseq
        %v897 = vshrl.u32 %v896, 7
        %v898 = vsub.s32 %v895, %v897
        %v899 = vrot.slane %v883, %v898
        %v901 = vunpack.c.l.s4 1966171168
        %v902 = vunpack.c.0.s8 %v901
        %v903 = vlaneseq
        %v904 = vshrl.u32 %v903, 7
        %v905 = vsub.s32 %v902, %v904
        %v906 = vrot.slane %v884, %v905
        %v908 = vunpack.c.l.s4 1966171168
        %v909 = vunpack.c.0.s8 %v908
        %v910 = vlaneseq
        %v911 = vshrl.u32 %v910, 7
        %v912 = vsub.s32 %v909, %v911
        %v913 = vrot.slane %v885, %v912
        %v914 = vcombine.high %v892, %v892
        %v915 = vcombine.high %v899, %v899
        %v916 = vcombine.high %v906, %v906
        %v917 = vcombine.high %v913, %v913
        %v918 = vcombine.high %v637, %v637
        %v920 = vunpack.c.l.s4 1966171168
        %v921 = vunpack.c.0.s8 %v920
        %v922 = vlaneseq
        %v923 = vshrl.u32 %v922, 7
        %v924 = vsub.s32 %v921, %v923
        %v925 = vrot.slane %v637, %v924
        %v927 = vunpack.c.l.s4 1966171168
        %v928 = vunpack.c.0.s8 %v927
        %v929 = vlaneseq
        %v930 = vshrl.u32 %v929, 7
        %v931 = vsub.s32 %v928, %v930
        %v932 = vrot.slane %v918, %v931
        %v933 = vcombine.high %v925, %v925
        %v934 = vcombine.high %v932, %v932
        %v936 = vunpack.c.l.s4 1966171168
        %v937 = vunpack.c.0.s8 %v936
        %v938 = vlaneseq
        %v939 = vshrl.u32 %v938, 7
        %v940 = vsub.s32 %v937, %v939
        %v941 = vrot.slane %v925, %v940
        %v943 = vunpack.c.l.s4 1966171168
        %v944 = vunpack.c.0.s8 %v943
        %v945 = vlaneseq
        %v946 = vshrl.u32 %v945, 7
        %v947 = vsub.s32 %v944, %v946
        %v948 = vrot.slane %v932, %v947
        %v950 = vunpack.c.l.s4 1966171168
        %v951 = vunpack.c.0.s8 %v950
        %v952 = vlaneseq
        %v953 = vshrl.u32 %v952, 7
        %v954 = vsub.s32 %v951, %v953
        %v955 = vrot.slane %v933, %v954
        %v957 = vunpack.c.l.s4 1966171168
        %v958 = vunpack.c.0.s8 %v957
        %v959 = vlaneseq
        %v960 = vshrl.u32 %v959, 7
        %v961 = vsub.s32 %v958, %v960
        %v962 = vrot.slane %v934, %v961
        %v963 = vcombine.high %v941, %v941
        %v964 = vcombine.high %v948, %v948
        %v965 = vcombine.high %v955, %v955
        %v966 = vcombine.high %v962, %v962
        %v967 = vcombine.high %v638, %v638
        %v969 = vunpack.c.l.s4 1966171168
        %v970 = vunpack.c.0.s8 %v969
        %v971 = vlaneseq
        %v972 = vshrl.u32 %v971, 7
        %v973 = vsub.s32 %v970, %v972
        %v974 = vrot.slane %v638, %v973
        %v976 = vunpack.c.l.s4 1966171168
        %v977 = vunpack.c.0.s8 %v976
        %v978 = vlaneseq
        %v979 = vshrl.u32 %v978, 7
        %v980 = vsub.s32 %v977, %v979
        %v981 = vrot.slane %v967, %v980
        %v982 = vcombine.high %v974, %v974
        %v983 = vcombine.high %v981, %v981
        %v985 = vunpack.c.l.s4 1966171168
        %v986 = vunpack.c.0.s8 %v985
        %v987 = vlaneseq
        %v988 = vshrl.u32 %v987, 7
        %v989 = vsub.s32 %v986, %v988
        %v990 = vrot.slane %v974, %v989
        %v992 = vunpack.c.l.s4 1966171168
        %v993 = vunpack.c.0.s8 %v992
        %v994 = vlaneseq
        %v995 = vshrl.u32 %v994, 7
        %v996 = vsub.s32 %v993, %v995
        %v997 = vrot.slane %v981, %v996
        %v999 = vunpack.c.l.s4 1966171168
        %v1000 = vunpack.c.0.s8 %v999
        %v1001 = vlaneseq
        %v1002 = vshrl.u32 %v1001, 7
        %v1003 = vsub.s32 %v1000, %v1002
        %v1004 = vrot.slane %v982, %v1003
        %v1006 = vunpack.c.l.s4 1966171168
        %v1007 = vunpack.c.0.s8 %v1006
        %v1008 = vlaneseq
        %v1009 = vshrl.u32 %v1008, 7
        %v1010 = vsub.s32 %v1007, %v1009
        %v1011 = vrot.slane %v983, %v1010
        %v1012 = vcombine.high %v990, %v990
        %v1013 = vcombine.high %v997, %v997
        %v1014 = vcombine.high %v1004, %v1004
        %v1015 = vcombine.high %v1011, %v1011
        %v1016 = vcombine.high %v639, %v639
        %v1018 = vunpack.c.l.s4 1966171168
        %v1019 = vunpack.c.0.s8 %v1018
        %v1020 = vlaneseq
        %v1021 = vshrl.u32 %v1020, 7
        %v1022 = vsub.s32 %v1019, %v1021
        %v1023 = vrot.slane %v639, %v1022
        %v1025 = vunpack.c.l.s4 1966171168
        %v1026 = vunpack.c.0.s8 %v1025
        %v1027 = vlaneseq
        %v1028 = vshrl.u32 %v1027, 7
        %v1029 = vsub.s32 %v1026, %v1028
        %v1030 = vrot.slane %v1016, %v1029
        %v1031 = vcombine.high %v1023, %v1023
        %v1032 = vcombine.high %v1030, %v1030
        %v1034 = vunpack.c.l.s4 1966171168
        %v1035 = vunpack.c.0.s8 %v1034
        %v1036 = vlaneseq
        %v1037 = vshrl.u32 %v1036, 7
        %v1038 = vsub.s32 %v1035, %v1037
        %v1039 = vrot.slane %v1023, %v1038
        %v1041 = vunpack.c.l.s4 1966171168
        %v1042 = vunpack.c.0.s8 %v1041
        %v1043 = vlaneseq
        %v1044 = vshrl.u32 %v1043, 7
        %v1045 = vsub.s32 %v1042, %v1044
        %v1046 = vrot.slane %v1030, %v1045
        %v1048 = vunpack.c.l.s4 1966171168
        %v1049 = vunpack.c.0.s8 %v1048
        %v1050 = vlaneseq
        %v1051 = vshrl.u32 %v1050, 7
        %v1052 = vsub.s32 %v1049, %v1051
        %v1053 = vrot.slane %v1031, %v1052
        %v1055 = vunpack.c.l.s4 1966171168
        %v1056 = vunpack.c.0.s8 %v1055
        %v1057 = vlaneseq
        %v1058 = vshrl.u32 %v1057, 7
        %v1059 = vsub.s32 %v1056, %v1058
        %v1060 = vrot.slane %v1032, %v1059
        %v1061 = vcombine.high %v1039, %v1039
        %v1062 = vcombine.high %v1046, %v1046
        %v1063 = vcombine.high %v1053, %v1053
        %v1064 = vcombine.high %v1060, %v1060
        %v1110 = vcombine.high %v810, %v810
        %v1112 = vunpack.c.l.s4 1966171168
        %v1113 = vunpack.c.0.s8 %v1112
        %v1114 = vlaneseq
        %v1115 = vshrl.u32 %v1114, 7
        %v1116 = vsub.s32 %v1113, %v1115
        %v1117 = vrot.slane %v810, %v1116
        %v1119 = vunpack.c.l.s4 1966171168
        %v1120 = vunpack.c.0.s8 %v1119
        %v1121 = vlaneseq
        %v1122 = vshrl.u32 %v1121, 7
        %v1123 = vsub.s32 %v1120, %v1122
        %v1124 = vrot.slane %v1110, %v1123
        %v1125 = vcombine.high %v1117, %v1117
        %v1126 = vcombine.high %v1124, %v1124
        %v1128 = vunpack.c.l.s4 1966171168
        %v1129 = vunpack.c.0.s8 %v1128
        %v1130 = vlaneseq
        %v1131 = vshrl.u32 %v1130, 7
        %v1132 = vsub.s32 %v1129, %v1131
        %v1133 = vrot.slane %v1117, %v1132
        %v1135 = vunpack.c.l.s4 1966171168
        %v1136 = vunpack.c.0.s8 %v1135
        %v1137 = vlaneseq
        %v1138 = vshrl.u32 %v1137, 7
        %v1139 = vsub.s32 %v1136, %v1138
        %v1140 = vrot.slane %v1124, %v1139
        %v1142 = vunpack.c.l.s4 1966171168
        %v1143 = vunpack.c.0.s8 %v1142
        %v1144 = vlaneseq
        %v1145 = vshrl.u32 %v1144, 7
        %v1146 = vsub.s32 %v1143, %v1145
        %v1147 = vrot.slane %v1125, %v1146
        %v1149 = vunpack.c.l.s4 1966171168
        %v1150 = vunpack.c.0.s8 %v1149
        %v1151 = vlaneseq
        %v1152 = vshrl.u32 %v1151, 7
        %v1153 = vsub.s32 %v1150, %v1152
        %v1154 = vrot.slane %v1126, %v1153
        %v1155 = vcombine.high %v1133, %v1133
        %v1156 = vcombine.high %v1140, %v1140
        %v1157 = vcombine.high %v1147, %v1147
        %v1158 = vcombine.high %v1154, %v1154
        %v1159 = vcombine.high %v811, %v811
        %v1161 = vunpack.c.l.s4 1966171168
        %v1162 = vunpack.c.0.s8 %v1161
        %v1163 = vlaneseq
        %v1164 = vshrl.u32 %v1163, 7
        %v1165 = vsub.s32 %v1162, %v1164
        %v1166 = vrot.slane %v811, %v1165
        %v1168 = vunpack.c.l.s4 1966171168
        %v1169 = vunpack.c.0.s8 %v1168
        %v1170 = vlaneseq
        %v1171 = vshrl.u32 %v1170, 7
        %v1172 = vsub.s32 %v1169, %v1171
        %v1173 = vrot.slane %v1159, %v1172
        %v1174 = vcombine.high %v1166, %v1166
        %v1175 = vcombine.high %v1173, %v1173
        %v1177 = vunpack.c.l.s4 1966171168
        %v1178 = vunpack.c.0.s8 %v1177
        %v1179 = vlaneseq
        %v1180 = vshrl.u32 %v1179, 7
        %v1181 = vsub.s32 %v1178, %v1180
        %v1182 = vrot.slane %v1166, %v1181
        %v1184 = vunpack.c.l.s4 1966171168
        %v1185 = vunpack.c.0.s8 %v1184
        %v1186 = vlaneseq
        %v1187 = vshrl.u32 %v1186, 7
        %v1188 = vsub.s32 %v1185, %v1187
        %v1189 = vrot.slane %v1173, %v1188
        %v1191 = vunpack.c.l.s4 1966171168
        %v1192 = vunpack.c.0.s8 %v1191
        %v1193 = vlaneseq
        %v1194 = vshrl.u32 %v1193, 7
        %v1195 = vsub.s32 %v1192, %v1194
        %v1196 = vrot.slane %v1174, %v1195
        %v1198 = vunpack.c.l.s4 1966171168
        %v1199 = vunpack.c.0.s8 %v1198
        %v1200 = vlaneseq
        %v1201 = vshrl.u32 %v1200, 7
        %v1202 = vsub.s32 %v1199, %v1201
        %v1203 = vrot.slane %v1175, %v1202
        %v1204 = vcombine.high %v1182, %v1182
        %v1205 = vcombine.high %v1189, %v1189
        %v1206 = vcombine.high %v1196, %v1196
        %v1207 = vcombine.high %v1203, %v1203
        %v1208 = vcombine.high %v812, %v812
        %v1210 = vunpack.c.l.s4 1966171168
        %v1211 = vunpack.c.0.s8 %v1210
        %v1212 = vlaneseq
        %v1213 = vshrl.u32 %v1212, 7
        %v1214 = vsub.s32 %v1211, %v1213
        %v1215 = vrot.slane %v812, %v1214
        %v1217 = vunpack.c.l.s4 1966171168
        %v1218 = vunpack.c.0.s8 %v1217
        %v1219 = vlaneseq
        %v1220 = vshrl.u32 %v1219, 7
        %v1221 = vsub.s32 %v1218, %v1220
        %v1222 = vrot.slane %v1208, %v1221
        %v1223 = vcombine.high %v1215, %v1215
        %v1224 = vcombine.high %v1222, %v1222
        %v1226 = vunpack.c.l.s4 1966171168
        %v1227 = vunpack.c.0.s8 %v1226
        %v1228 = vlaneseq
        %v1229 = vshrl.u32 %v1228, 7
        %v1230 = vsub.s32 %v1227, %v1229
        %v1231 = vrot.slane %v1215, %v1230
        %v1233 = vunpack.c.l.s4 1966171168
        %v1234 = vunpack.c.0.s8 %v1233
        %v1235 = vlaneseq
        %v1236 = vshrl.u32 %v1235, 7
        %v1237 = vsub.s32 %v1234, %v1236
        %v1238 = vrot.slane %v1222, %v1237
        %v1240 = vunpack.c.l.s4 1966171168
        %v1241 = vunpack.c.0.s8 %v1240
        %v1242 = vlaneseq
        %v1243 = vshrl.u32 %v1242, 7
        %v1244 = vsub.s32 %v1241, %v1243
        %v1245 = vrot.slane %v1223, %v1244
        %v1247 = vunpack.c.l.s4 1966171168
        %v1248 = vunpack.c.0.s8 %v1247
        %v1249 = vlaneseq
        %v1250 = vshrl.u32 %v1249, 7
        %v1251 = vsub.s32 %v1248, %v1250
        %v1252 = vrot.slane %v1224, %v1251
        %v1253 = vcombine.high %v1231, %v1231
        %v1254 = vcombine.high %v1238, %v1238
        %v1255 = vcombine.high %v1245, %v1245
        %v1256 = vcombine.high %v1252, %v1252
        %v1257 = vcombine.high %v813, %v813
        %v1259 = vunpack.c.l.s4 1966171168
        %v1260 = vunpack.c.0.s8 %v1259
        %v1261 = vlaneseq
        %v1262 = vshrl.u32 %v1261, 7
        %v1263 = vsub.s32 %v1260, %v1262
        %v1264 = vrot.slane %v813, %v1263
        %v1266 = vunpack.c.l.s4 1966171168
        %v1267 = vunpack.c.0.s8 %v1266
        %v1268 = vlaneseq
        %v1269 = vshrl.u32 %v1268, 7
        %v1270 = vsub.s32 %v1267, %v1269
        %v1271 = vrot.slane %v1257, %v1270
        %v1272 = vcombine.high %v1264, %v1264
        %v1273 = vcombine.high %v1271, %v1271
        %v1275 = vunpack.c.l.s4 1966171168
        %v1276 = vunpack.c.0.s8 %v1275
        %v1277 = vlaneseq
        %v1278 = vshrl.u32 %v1277, 7
        %v1279 = vsub.s32 %v1276, %v1278
        %v1280 = vrot.slane %v1264, %v1279
        %v1282 = vunpack.c.l.s4 1966171168
        %v1283 = vunpack.c.0.s8 %v1282
        %v1284 = vlaneseq
        %v1285 = vshrl.u32 %v1284, 7
        %v1286 = vsub.s32 %v1283, %v1285
        %v1287 = vrot.slane %v1271, %v1286
        %v1289 = vunpack.c.l.s4 1966171168
        %v1290 = vunpack.c.0.s8 %v1289
        %v1291 = vlaneseq
        %v1292 = vshrl.u32 %v1291, 7
        %v1293 = vsub.s32 %v1290, %v1292
        %v1294 = vrot.slane %v1272, %v1293
        %v1296 = vunpack.c.l.s4 1966171168
        %v1297 = vunpack.c.0.s8 %v1296
        %v1298 = vlaneseq
        %v1299 = vshrl.u32 %v1298, 7
        %v1300 = vsub.s32 %v1297, %v1299
        %v1301 = vrot.slane %v1273, %v1300
        %v1302 = vcombine.high %v1280, %v1280
        %v1303 = vcombine.high %v1287, %v1287
        %v1304 = vcombine.high %v1294, %v1294
        %v1305 = vcombine.high %v1301, %v1301
        %v1306 = vcombine.high %v814, %v814
        %v1308 = vunpack.c.l.s4 1966171168
        %v1309 = vunpack.c.0.s8 %v1308
        %v1310 = vlaneseq
        %v1311 = vshrl.u32 %v1310, 7
        %v1312 = vsub.s32 %v1309, %v1311
        %v1313 = vrot.slane %v814, %v1312
        %v1315 = vunpack.c.l.s4 1966171168
        %v1316 = vunpack.c.0.s8 %v1315
        %v1317 = vlaneseq
        %v1318 = vshrl.u32 %v1317, 7
        %v1319 = vsub.s32 %v1316, %v1318
        %v1320 = vrot.slane %v1306, %v1319
        %v1321 = vcombine.high %v1313, %v1313
        %v1322 = vcombine.high %v1320, %v1320
        %v1324 = vunpack.c.l.s4 1966171168
        %v1325 = vunpack.c.0.s8 %v1324
        %v1326 = vlaneseq
        %v1327 = vshrl.u32 %v1326, 7
        %v1328 = vsub.s32 %v1325, %v1327
        %v1329 = vrot.slane %v1313, %v1328
        %v1331 = vunpack.c.l.s4 1966171168
        %v1332 = vunpack.c.0.s8 %v1331
        %v1333 = vlaneseq
        %v1334 = vshrl.u32 %v1333, 7
        %v1335 = vsub.s32 %v1332, %v1334
        %v1336 = vrot.slane %v1320, %v1335
        %v1338 = vunpack.c.l.s4 1966171168
        %v1339 = vunpack.c.0.s8 %v1338
        %v1340 = vlaneseq
        %v1341 = vshrl.u32 %v1340, 7
        %v1342 = vsub.s32 %v1339, %v1341
        %v1343 = vrot.slane %v1321, %v1342
        %v1345 = vunpack.c.l.s4 1966171168
        %v1346 = vunpack.c.0.s8 %v1345
        %v1347 = vlaneseq
        %v1348 = vshrl.u32 %v1347, 7
        %v1349 = vsub.s32 %v1346, %v1348
        %v1350 = vrot.slane %v1322, %v1349
        %v1351 = vcombine.high %v1329, %v1329
        %v1352 = vcombine.high %v1336, %v1336
        %v1353 = vcombine.high %v1343, %v1343
        %v1354 = vcombine.high %v1350, %v1350
        %v1355 = vlaneseq
        %v1356 = vshrl.u32 %v1355, 7
        %v1357 = vsub.s32 0, %v1356
        %v1358 = vrot.slane %v1133, %v1357
        %v1359 = vlaneseq
        %v1360 = vshrl.u32 %v1359, 7
        %v1361 = vsub.s32 0, %v1360
        %v1362 = vrot.slane %v1147, %v1361
        %v1363 = vlaneseq
        %v1364 = vshrl.u32 %v1363, 7
        %v1365 = vsub.s32 0, %v1364
        %v1366 = vrot.slane %v1155, %v1365
        %v1367 = vlaneseq
        %v1368 = vshrl.u32 %v1367, 7
        %v1369 = vsub.s32 0, %v1368
        %v1370 = vrot.slane %v1157, %v1369
        %v1371 = vlaneseq
        %v1372 = vshrl.u32 %v1371, 7
        %v1373 = vsub.s32 0, %v1372
        %v1374 = vrot.slane %v1140, %v1373
        %v1375 = vlaneseq
        %v1376 = vshrl.u32 %v1375, 7
        %v1377 = vsub.s32 0, %v1376
        %v1378 = vrot.slane %v1154, %v1377
        %v1379 = vlaneseq
        %v1380 = vshrl.u32 %v1379, 7
        %v1381 = vsub.s32 0, %v1380
        %v1382 = vrot.slane %v1156, %v1381
        %v1383 = vlaneseq
        %v1384 = vshrl.u32 %v1383, 7
        %v1385 = vsub.s32 0, %v1384
        %v1386 = vrot.slane %v1158, %v1385
        %v1387 = vlaneseq
        %v1388 = vshrl.u32 %v1387, 7
        %v1389 = vsub.s32 0, %v1388
        %v1390 = vrot.slane %v1182, %v1389
        %v1391 = vlaneseq
        %v1392 = vshrl.u32 %v1391, 7
        %v1393 = vsub.s32 0, %v1392
        %v1394 = vrot.slane %v1196, %v1393
        %v1395 = vlaneseq
        %v1396 = vshrl.u32 %v1395, 7
        %v1397 = vsub.s32 0, %v1396
        %v1398 = vrot.slane %v1204, %v1397
        %v1399 = vlaneseq
        %v1400 = vshrl.u32 %v1399, 7
        %v1401 = vsub.s32 0, %v1400
        %v1402 = vrot.slane %v1206, %v1401
        %v1403 = vlaneseq
        %v1404 = vshrl.u32 %v1403, 7
        %v1405 = vsub.s32 0, %v1404
        %v1406 = vrot.slane %v1189, %v1405
        %v1407 = vlaneseq
        %v1408 = vshrl.u32 %v1407, 7
        %v1409 = vsub.s32 0, %v1408
        %v1410 = vrot.slane %v1203, %v1409
        %v1411 = vlaneseq
        %v1412 = vshrl.u32 %v1411, 7
        %v1413 = vsub.s32 0, %v1412
        %v1414 = vrot.slane %v1205, %v1413
        %v1415 = vlaneseq
        %v1416 = vshrl.u32 %v1415, 7
        %v1417 = vsub.s32 0, %v1416
        %v1418 = vrot.slane %v1207, %v1417
        %v1419 = vlaneseq
        %v1420 = vshrl.u32 %v1419, 7
        %v1421 = vsub.s32 0, %v1420
        %v1422 = vrot.slane %v1231, %v1421
        %v1423 = vlaneseq
        %v1424 = vshrl.u32 %v1423, 7
        %v1425 = vsub.s32 0, %v1424
        %v1426 = vrot.slane %v1245, %v1425
        %v1427 = vlaneseq
        %v1428 = vshrl.u32 %v1427, 7
        %v1429 = vsub.s32 0, %v1428
        %v1430 = vrot.slane %v1253, %v1429
        %v1431 = vlaneseq
        %v1432 = vshrl.u32 %v1431, 7
        %v1433 = vsub.s32 0, %v1432
        %v1434 = vrot.slane %v1255, %v1433
        %v1435 = vlaneseq
        %v1436 = vshrl.u32 %v1435, 7
        %v1437 = vsub.s32 0, %v1436
        %v1438 = vrot.slane %v1238, %v1437
        %v1439 = vlaneseq
        %v1440 = vshrl.u32 %v1439, 7
        %v1441 = vsub.s32 0, %v1440
        %v1442 = vrot.slane %v1252, %v1441
        %v1443 = vlaneseq
        %v1444 = vshrl.u32 %v1443, 7
        %v1445 = vsub.s32 0, %v1444
        %v1446 = vrot.slane %v1254, %v1445
        %v1447 = vlaneseq
        %v1448 = vshrl.u32 %v1447, 7
        %v1449 = vsub.s32 0, %v1448
        %v1450 = vrot.slane %v1256, %v1449
        %v1451 = vlaneseq
        %v1452 = vshrl.u32 %v1451, 7
        %v1453 = vsub.s32 0, %v1452
        %v1454 = vrot.slane %v1280, %v1453
        %v1455 = vlaneseq
        %v1456 = vshrl.u32 %v1455, 7
        %v1457 = vsub.s32 0, %v1456
        %v1458 = vrot.slane %v1294, %v1457
        %v1459 = vlaneseq
        %v1460 = vshrl.u32 %v1459, 7
        %v1461 = vsub.s32 0, %v1460
        %v1462 = vrot.slane %v1302, %v1461
        %v1463 = vlaneseq
        %v1464 = vshrl.u32 %v1463, 7
        %v1465 = vsub.s32 0, %v1464
        %v1466 = vrot.slane %v1304, %v1465
        %v1467 = vlaneseq
        %v1468 = vshrl.u32 %v1467, 7
        %v1469 = vsub.s32 0, %v1468
        %v1470 = vrot.slane %v1287, %v1469
        %v1471 = vlaneseq
        %v1472 = vshrl.u32 %v1471, 7
        %v1473 = vsub.s32 0, %v1472
        %v1474 = vrot.slane %v1301, %v1473
        %v1475 = vlaneseq
        %v1476 = vshrl.u32 %v1475, 7
        %v1477 = vsub.s32 0, %v1476
        %v1478 = vrot.slane %v1303, %v1477
        %v1479 = vlaneseq
        %v1480 = vshrl.u32 %v1479, 7
        %v1481 = vsub.s32 0, %v1480
        %v1482 = vrot.slane %v1305, %v1481
        %v1483 = vlaneseq
        %v1484 = vshrl.u32 %v1483, 7
        %v1485 = vsub.s32 0, %v1484
        %v1486 = vrot.slane %v1329, %v1485
        %v1487 = vlaneseq
        %v1488 = vshrl.u32 %v1487, 7
        %v1489 = vsub.s32 0, %v1488
        %v1490 = vrot.slane %v1343, %v1489
        %v1491 = vlaneseq
        %v1492 = vshrl.u32 %v1491, 7
        %v1493 = vsub.s32 0, %v1492
        %v1494 = vrot.slane %v1351, %v1493
        %v1495 = vlaneseq
        %v1496 = vshrl.u32 %v1495, 7
        %v1497 = vsub.s32 0, %v1496
        %v1498 = vrot.slane %v1353, %v1497
        %v1499 = vlaneseq
        %v1500 = vshrl.u32 %v1499, 7
        %v1501 = vsub.s32 0, %v1500
        %v1502 = vrot.slane %v1336, %v1501
        %v1503 = vlaneseq
        %v1504 = vshrl.u32 %v1503, 7
        %v1505 = vsub.s32 0, %v1504
        %v1506 = vrot.slane %v1350, %v1505
        %v1507 = vlaneseq
        %v1508 = vshrl.u32 %v1507, 7
        %v1509 = vsub.s32 0, %v1508
        %v1510 = vrot.slane %v1352, %v1509
        %v1511 = vlaneseq
        %v1512 = vshrl.u32 %v1511, 7
        %v1513 = vsub.s32 0, %v1512
        %v1514 = vrot.slane %v1354, %v1513
        %vm1555 = vcmask 1040384
        %v1556 = vsel %vm1555, %v843, %v1358
        %v1557 = vsel %vm1555, %v857, %v1362
        %v1558 = vsel %vm1555, %v865, %v1366
        %v1559 = vsel %vm1555, %v867, %v1370
        %v1560 = vsel %vm1555, %v850, %v1374
        %v1561 = vsel %vm1555, %v864, %v1378
        %v1562 = vsel %vm1555, %v866, %v1382
        %v1563 = vsel %vm1555, %v868, %v1386
        %v1564 = vsel %vm1555, %v892, %v1390
        %v1565 = vsel %vm1555, %v906, %v1394
        %v1566 = vsel %vm1555, %v914, %v1398
        %v1567 = vsel %vm1555, %v916, %v1402
        %v1568 = vsel %vm1555, %v899, %v1406
        %v1569 = vsel %vm1555, %v913, %v1410
        %v1570 = vsel %vm1555, %v915, %v1414
        %v1571 = vsel %vm1555, %v917, %v1418
        %v1572 = vsel %vm1555, %v941, %v1422
        %v1573 = vsel %vm1555, %v955, %v1426
        %v1574 = vsel %vm1555, %v963, %v1430
        %v1575 = vsel %vm1555, %v965, %v1434
        %v1576 = vsel %vm1555, %v948, %v1438
        %v1577 = vsel %vm1555, %v962, %v1442
        %v1578 = vsel %vm1555, %v964, %v1446
        %v1579 = vsel %vm1555, %v966, %v1450
        %v1580 = vsel %vm1555, %v990, %v1454
        %v1581 = vsel %vm1555, %v1004, %v1458
        %v1582 = vsel %vm1555, %v1012, %v1462
        %v1583 = vsel %vm1555, %v1014, %v1466
        %v1584 = vsel %vm1555, %v997, %v1470
        %v1585 = vsel %vm1555, %v1011, %v1474
        %v1586 = vsel %vm1555, %v1013, %v1478
        %v1587 = vsel %vm1555, %v1015, %v1482
        %v1588 = vsel %vm1555, %v1039, %v1486
        %v1589 = vsel %vm1555, %v1053, %v1490
        %v1590 = vsel %vm1555, %v1061, %v1494
        %v1591 = vsel %vm1555, %v1063, %v1498
        %v1592 = vsel %vm1555, %v1046, %v1502
        %v1593 = vsel %vm1555, %v1060, %v1506
        %v1594 = vsel %vm1555, %v1062, %v1510
        %v1595 = vsel %vm1555, %v1064, %v1514
        %vm1596 = vcmask 1040384
        %vm1597 = vsmask.f32 256
        %vm1598 = vmand %vm1596, %vm1597
        %v1599 = vld [vmem:[#allocation2] sm:$0x1]
        %v1600 = vsel %vm1598, 0, %v1599
        %1601 = vst [vmem:[#allocation2] sm:$0x1] %v1600
        %v1642 = vcombine.low %v1556, %v1557
        %v1643 = vcombine.low %v1558, %v1559
        %v1645 = vunpack.c.l.s4 1983009808
        %v1646 = vunpack.c.0.s8 %v1645
        %v1647 = vlaneseq
        %v1648 = vshrl.u32 %v1647, 7
        %v1649 = vsub.s32 %v1646, %v1648
        %v1650 = vrot.slane %v1642, %v1649
        %v1652 = vunpack.c.l.s4 1983009808
        %v1653 = vunpack.c.0.s8 %v1652
        %v1654 = vlaneseq
        %v1655 = vshrl.u32 %v1654, 7
        %v1656 = vsub.s32 %v1653, %v1655
        %v1657 = vrot.slane %v1643, %v1656
        %v1658 = vcombine.low %v1650, %v1657
        %v1659 = vcombine.low %v1560, %v1561
        %v1660 = vcombine.low %v1562, %v1563
        %v1662 = vunpack.c.l.s4 1983009808
        %v1663 = vunpack.c.0.s8 %v1662
        %v1664 = vlaneseq
        %v1665 = vshrl.u32 %v1664, 7
        %v1666 = vsub.s32 %v1663, %v1665
        %v1667 = vrot.slane %v1659, %v1666
        %v1669 = vunpack.c.l.s4 1983009808
        %v1670 = vunpack.c.0.s8 %v1669
        %v1671 = vlaneseq
        %v1672 = vshrl.u32 %v1671, 7
        %v1673 = vsub.s32 %v1670, %v1672
        %v1674 = vrot.slane %v1660, %v1673
        %v1675 = vcombine.low %v1667, %v1674
        %v1676 = vcombine.low %v1564, %v1565
        %v1677 = vcombine.low %v1566, %v1567
        %v1679 = vunpack.c.l.s4 1983009808
        %v1680 = vunpack.c.0.s8 %v1679
        %v1681 = vlaneseq
        %v1682 = vshrl.u32 %v1681, 7
        %v1683 = vsub.s32 %v1680, %v1682
        %v1684 = vrot.slane %v1676, %v1683
        %v1686 = vunpack.c.l.s4 1983009808
        %v1687 = vunpack.c.0.s8 %v1686
        %v1688 = vlaneseq
        %v1689 = vshrl.u32 %v1688, 7
        %v1690 = vsub.s32 %v1687, %v1689
        %v1691 = vrot.slane %v1677, %v1690
        %v1692 = vcombine.low %v1684, %v1691
        %v1693 = vcombine.low %v1568, %v1569
        %v1694 = vcombine.low %v1570, %v1571
        %v1696 = vunpack.c.l.s4 1983009808
        %v1697 = vunpack.c.0.s8 %v1696
        %v1698 = vlaneseq
        %v1699 = vshrl.u32 %v1698, 7
        %v1700 = vsub.s32 %v1697, %v1699
        %v1701 = vrot.slane %v1693, %v1700
        %v1703 = vunpack.c.l.s4 1983009808
        %v1704 = vunpack.c.0.s8 %v1703
        %v1705 = vlaneseq
        %v1706 = vshrl.u32 %v1705, 7
        %v1707 = vsub.s32 %v1704, %v1706
        %v1708 = vrot.slane %v1694, %v1707
        %v1709 = vcombine.low %v1701, %v1708
        %v1710 = vcombine.low %v1572, %v1573
        %v1711 = vcombine.low %v1574, %v1575
        %v1713 = vunpack.c.l.s4 1983009808
        %v1714 = vunpack.c.0.s8 %v1713
        %v1715 = vlaneseq
        %v1716 = vshrl.u32 %v1715, 7
        %v1717 = vsub.s32 %v1714, %v1716
        %v1718 = vrot.slane %v1710, %v1717
        %v1720 = vunpack.c.l.s4 1983009808
        %v1721 = vunpack.c.0.s8 %v1720
        %v1722 = vlaneseq
        %v1723 = vshrl.u32 %v1722, 7
        %v1724 = vsub.s32 %v1721, %v1723
        %v1725 = vrot.slane %v1711, %v1724
        %v1726 = vcombine.low %v1718, %v1725
        %v1727 = vcombine.low %v1576, %v1577
        %v1728 = vcombine.low %v1578, %v1579
        %v1730 = vunpack.c.l.s4 1983009808
        %v1731 = vunpack.c.0.s8 %v1730
        %v1732 = vlaneseq
        %v1733 = vshrl.u32 %v1732, 7
        %v1734 = vsub.s32 %v1731, %v1733
        %v1735 = vrot.slane %v1727, %v1734
        %v1737 = vunpack.c.l.s4 1983009808
        %v1738 = vunpack.c.0.s8 %v1737
        %v1739 = vlaneseq
        %v1740 = vshrl.u32 %v1739, 7
        %v1741 = vsub.s32 %v1738, %v1740
        %v1742 = vrot.slane %v1728, %v1741
        %v1743 = vcombine.low %v1735, %v1742
        %v1744 = vcombine.low %v1580, %v1581
        %v1745 = vcombine.low %v1582, %v1583
        %v1747 = vunpack.c.l.s4 1983009808
        %v1748 = vunpack.c.0.s8 %v1747
        %v1749 = vlaneseq
        %v1750 = vshrl.u32 %v1749, 7
        %v1751 = vsub.s32 %v1748, %v1750
        %v1752 = vrot.slane %v1744, %v1751
        %v1754 = vunpack.c.l.s4 1983009808
        %v1755 = vunpack.c.0.s8 %v1754
        %v1756 = vlaneseq
        %v1757 = vshrl.u32 %v1756, 7
        %v1758 = vsub.s32 %v1755, %v1757
        %v1759 = vrot.slane %v1745, %v1758
        %v1760 = vcombine.low %v1752, %v1759
        %v1761 = vcombine.low %v1584, %v1585
        %v1762 = vcombine.low %v1586, %v1587
        %v1764 = vunpack.c.l.s4 1983009808
        %v1765 = vunpack.c.0.s8 %v1764
        %v1766 = vlaneseq
        %v1767 = vshrl.u32 %v1766, 7
        %v1768 = vsub.s32 %v1765, %v1767
        %v1769 = vrot.slane %v1761, %v1768
        %v1771 = vunpack.c.l.s4 1983009808
        %v1772 = vunpack.c.0.s8 %v1771
        %v1773 = vlaneseq
        %v1774 = vshrl.u32 %v1773, 7
        %v1775 = vsub.s32 %v1772, %v1774
        %v1776 = vrot.slane %v1762, %v1775
        %v1777 = vcombine.low %v1769, %v1776
        %v1778 = vcombine.low %v1588, %v1589
        %v1779 = vcombine.low %v1590, %v1591
        %v1781 = vunpack.c.l.s4 1983009808
        %v1782 = vunpack.c.0.s8 %v1781
        %v1783 = vlaneseq
        %v1784 = vshrl.u32 %v1783, 7
        %v1785 = vsub.s32 %v1782, %v1784
        %v1786 = vrot.slane %v1778, %v1785
        %v1788 = vunpack.c.l.s4 1983009808
        %v1789 = vunpack.c.0.s8 %v1788
        %v1790 = vlaneseq
        %v1791 = vshrl.u32 %v1790, 7
        %v1792 = vsub.s32 %v1789, %v1791
        %v1793 = vrot.slane %v1779, %v1792
        %v1794 = vcombine.low %v1786, %v1793
        %v1795 = vcombine.low %v1592, %v1593
        %v1796 = vcombine.low %v1594, %v1595
        %v1798 = vunpack.c.l.s4 1983009808
        %v1799 = vunpack.c.0.s8 %v1798
        %v1800 = vlaneseq
        %v1801 = vshrl.u32 %v1800, 7
        %v1802 = vsub.s32 %v1799, %v1801
        %v1803 = vrot.slane %v1795, %v1802
        %v1805 = vunpack.c.l.s4 1983009808
        %v1806 = vunpack.c.0.s8 %v1805
        %v1807 = vlaneseq
        %v1808 = vshrl.u32 %v1807, 7
        %v1809 = vsub.s32 %v1806, %v1808
        %v1810 = vrot.slane %v1796, %v1809
        %v1811 = vcombine.low %v1803, %v1810
        %v1822 = vpack.c.bf16 %v1675, %v1658
        %v1823 = vpack.c.bf16 %v1709, %v1692
        %v1824 = vpack.c.bf16 %v1743, %v1726
        %v1825 = vpack.c.bf16 %v1777, %v1760
        %v1826 = vpack.c.bf16 %v1811, %v1794
        %v1832 = vunpack.c.l.b16 %v1822
        %v1833 = vunpack.c.h.b16 %v1822
        %v1834 = vunpack.c.l.b16 %v1823
        %v1835 = vunpack.c.h.b16 %v1823
        %v1836 = vunpack.c.l.b16 %v1824
        %v1837 = vunpack.c.h.b16 %v1824
        %v1838 = vunpack.c.l.b16 %v1825
        %v1839 = vunpack.c.h.b16 %v1825
        %v1840 = vunpack.c.l.b16 %v1826
        %v1841 = vunpack.c.h.b16 %v1826
        %v1842 = vpack.c.b16 %v1832, %v1832
        %v1843 = vpack.c.b16 %v1833, %v1833
        %v1844 = vpack.c.b16 %v1834, %v1834
        %v1845 = vpack.c.b16 %v1835, %v1835
        %v1846 = vpack.c.b16 %v1836, %v1836
        %v1847 = vpack.c.b16 %v1837, %v1837
        %v1848 = vpack.c.b16 %v1838, %v1838
        %v1849 = vpack.c.b16 %v1839, %v1839
        %v1850 = vpack.c.b16 %v1840, %v1840
        %v1851 = vpack.c.b16 %v1841, %v1841
        %vm1852 = vsmask.f32 4368
        %vm1853 = vmor %vm1597, %vm1852
        %v1855 = vshrl.u32 %v1842, 16
        %v1857 = vrot.slane %v1855, 7
        %v1858 = vshll.u32 %v1842, 16
        %v1860 = vor.u32 %v1857, %v1858
        %v1861 = vrot.slane %v1857, 4
        %v1863 = vshrl.u32 %v1843, 16
        %v1865 = vrot.slane %v1863, 7
        %v1866 = vshll.u32 %v1843, 16
        %v1868 = vor.u32 %v1865, %v1866
        %v1869 = vsel %vm1853, %v1861, %v1868
        %v1870 = vrot.slane %v1865, 4
        %v1872 = vshrl.u32 %v1844, 16
        %v1874 = vrot.slane %v1872, 7
        %v1875 = vshll.u32 %v1844, 16
        %v1877 = vor.u32 %v1874, %v1875
        %v1878 = vsel %vm1853, %v1870, %v1877
        %v1879 = vrot.slane %v1874, 4
        %v1881 = vshrl.u32 %v1845, 16
        %v1883 = vrot.slane %v1881, 7
        %v1884 = vshll.u32 %v1845, 16
        %v1886 = vor.u32 %v1883, %v1884
        %v1887 = vsel %vm1853, %v1879, %v1886
        %v1888 = vrot.slane %v1883, 4
        %v1890 = vshrl.u32 %v1846, 16
        %v1892 = vrot.slane %v1890, 7
        %v1893 = vshll.u32 %v1846, 16
        %v1895 = vor.u32 %v1892, %v1893
        %v1896 = vsel %vm1853, %v1888, %v1895
        %v1897 = vrot.slane %v1892, 4
        %v1899 = vshrl.u32 %v1847, 16
        %v1901 = vrot.slane %v1899, 7
        %v1902 = vshll.u32 %v1847, 16
        %v1904 = vor.u32 %v1901, %v1902
        %v1905 = vsel %vm1853, %v1897, %v1904
        %v1906 = vrot.slane %v1901, 4
        %v1908 = vshrl.u32 %v1848, 16
        %v1910 = vrot.slane %v1908, 7
        %v1911 = vshll.u32 %v1848, 16
        %v1913 = vor.u32 %v1910, %v1911
        %v1914 = vsel %vm1853, %v1906, %v1913
        %v1915 = vrot.slane %v1910, 4
        %v1917 = vshrl.u32 %v1849, 16
        %v1919 = vrot.slane %v1917, 7
        %v1920 = vshll.u32 %v1849, 16
        %v1922 = vor.u32 %v1919, %v1920
        %v1923 = vsel %vm1853, %v1915, %v1922
        %v1924 = vrot.slane %v1919, 4
        %v1926 = vshrl.u32 %v1850, 16
        %v1928 = vrot.slane %v1926, 7
        %v1929 = vshll.u32 %v1850, 16
        %v1931 = vor.u32 %v1928, %v1929
        %v1932 = vsel %vm1853, %v1924, %v1931
        %v1933 = vrot.slane %v1928, 4
        %v1935 = vshrl.u32 %v1851, 16
        %v1937 = vrot.slane %v1935, 7
        %v1938 = vshll.u32 %v1851, 16
        %v1940 = vor.u32 %v1937, %v1938
        %v1941 = vsel %vm1853, %v1933, %v1940
        %v1942 = vrot.slane %v1937, 4
        %vm1954 = vcmask 1043456
        %vm1955 = vsmask.f32 7938
        %vm1956 = vmand %vm1954, %vm1955
        %v1957 = vld [vmem:[#allocation2] sm:$0xf]
        %v1958 = vsel %vm1956, %v1860, %v1957
        %1959 = vst [vmem:[#allocation2] sm:$0xf] %v1958
        %1960 = vst [vmem:[#allocation2 + $0x4] sm:$0xf] %v1869
        %1961 = vst [vmem:[#allocation2 + $0x8] sm:$0xf] %v1878
        %1962 = vst [vmem:[#allocation2 + $0xc] sm:$0xf] %v1887
        %1963 = vst [vmem:[#allocation2 + $0x10] sm:$0xf] %v1896
        %1964 = vst [vmem:[#allocation2 + $0x14] sm:$0xf] %v1905
        %1965 = vst [vmem:[#allocation2 + $0x18] sm:$0xf] %v1914
        %1966 = vst [vmem:[#allocation2 + $0x1c] sm:$0xf] %v1923
        %1967 = vst [vmem:[#allocation2 + $0x20] sm:$0xf] %v1932
        %1968 = vst [vmem:[#allocation2 + $0x24] sm:$0xf] %v1941
        %v1969 = vld [vmem:[#allocation2 + $0x28] sm:$0x1]
        %v1970 = vsel %vm1598, %v1942, %v1969
        %1971 = vst [vmem:[#allocation2 + $0x28] sm:$0x1] %v1970
        %vm1972 = vmand %vm1596, %vm1955
        %v1973 = vld [vmem:[#allocation2 + $0x28] sm:$0x1]
        %v1974 = vsel %vm1972, 0, %v1973
        %1975 = vst [vmem:[#allocation2 + $0x28] sm:$0x1] %v1974
        %v1976 = vld [vmem:[#allocation2] sm:$0xf]
        %v1977 = vld [vmem:[#allocation2 + $0x4] sm:$0xf]
        %v1978 = vld [vmem:[#allocation2 + $0x8] sm:$0xf]
        %v1979 = vld [vmem:[#allocation2 + $0xc] sm:$0xf]
        %v1980 = vld [vmem:[#allocation2 + $0x10] sm:$0xf]
        %v1981 = vld [vmem:[#allocation2 + $0x14] sm:$0xf]
        %v1982 = vld [vmem:[#allocation2 + $0x18] sm:$0xf]
        %v1983 = vld [vmem:[#allocation2 + $0x1c] sm:$0xf]
        %v1984 = vld [vmem:[#allocation2 + $0x20] sm:$0xf]
        %v1985 = vld [vmem:[#allocation2 + $0x24] sm:$0xf]
        %v1986 = vld [vmem:[#allocation2 + $0x28] sm:$0x1]
        %v1987 = vld [vmem:[%s4] sm:$0x3]
        %v1988 = vadd.s32 %v316, 40
        %v1989 = vadd.s32 %v316, 48
        %v1990 = vadd.s32 %v316, 56
        %v1991 = vadd.s32 %v316, 64
        %v1992 = vadd.s32 %v316, 72
        %vm1993 = vcmp.lt.s32.totalorder %v316, 0
        %v1994 = vsub.s32 0, %v316
        %v1995 = vsel %vm1993, %v1994, %v316
        %v1996 = vmul.u32.u64.compose %v1995, 3435973837
        %v1997 = vextract.low.u32 %v1996
        %v1998 = vextract.high.u32 %v1996
        %v1999 = vshrl.u32 %v1998, 4
        %v2000 = vmul.u32 %v1999, 20
        %v2001 = vsub.s32 %v1995, %v2000
        %v2002 = vsub.s32 0, %v2001
        %v2003 = vsel %vm1993, %v2002, %v2001
        %vm2004 = vcmp.lt.s32.totalorder %v317, 0
        %v2005 = vsub.s32 0, %v317
        %v2006 = vsel %vm2004, %v2005, %v317
        %v2007 = vmul.u32.u64.compose %v2006, 3435973837
        %v2008 = vextract.low.u32 %v2007
        %v2009 = vextract.high.u32 %v2007
        %v2010 = vshrl.u32 %v2009, 4
        %v2011 = vmul.u32 %v2010, 20
        %v2012 = vsub.s32 %v2006, %v2011
        %v2013 = vsub.s32 0, %v2012
        %v2014 = vsel %vm2004, %v2013, %v2012
        %vm2015 = vcmp.lt.s32.totalorder %v318, 0
        %v2016 = vsub.s32 0, %v318
        %v2017 = vsel %vm2015, %v2016, %v318
        %v2018 = vmul.u32.u64.compose %v2017, 3435973837
        %v2019 = vextract.low.u32 %v2018
        %v2020 = vextract.high.u32 %v2018
        %v2021 = vshrl.u32 %v2020, 4
        %v2022 = vmul.u32 %v2021, 20
        %v2023 = vsub.s32 %v2017, %v2022
        %v2024 = vsub.s32 0, %v2023
        %v2025 = vsel %vm2015, %v2024, %v2023
        %vm2026 = vcmp.lt.s32.totalorder %v319, 0
        %v2027 = vsub.s32 0, %v319
        %v2028 = vsel %vm2026, %v2027, %v319
        %v2029 = vmul.u32.u64.compose %v2028, 3435973837
        %v2030 = vextract.low.u32 %v2029
        %v2031 = vextract.high.u32 %v2029
        %v2032 = vshrl.u32 %v2031, 4
        %v2033 = vmul.u32 %v2032, 20
        %v2034 = vsub.s32 %v2028, %v2033
        %v2035 = vsub.s32 0, %v2034
        %v2036 = vsel %vm2026, %v2035, %v2034
        %vm2037 = vcmp.lt.s32.totalorder %v320, 0
        %v2038 = vsub.s32 0, %v320
        %v2039 = vsel %vm2037, %v2038, %v320
        %v2040 = vmul.u32.u64.compose %v2039, 3435973837
        %v2041 = vextract.low.u32 %v2040
        %v2042 = vextract.high.u32 %v2040
        %v2043 = vshrl.u32 %v2042, 4
        %v2044 = vmul.u32 %v2043, 20
        %v2045 = vsub.s32 %v2039, %v2044
        %v2046 = vsub.s32 0, %v2045
        %v2047 = vsel %vm2037, %v2046, %v2045
        %vm2048 = vcmp.lt.s32.totalorder %v1988, 0
        %v2049 = vsub.s32 0, %v1988
        %v2050 = vsel %vm2048, %v2049, %v1988
        %v2051 = vmul.u32.u64.compose %v2050, 3435973837
        %v2052 = vextract.low.u32 %v2051
        %v2053 = vextract.high.u32 %v2051
        %v2054 = vshrl.u32 %v2053, 4
        %v2055 = vmul.u32 %v2054, 20
        %v2056 = vsub.s32 %v2050, %v2055
        %v2057 = vsub.s32 0, %v2056
        %v2058 = vsel %vm2048, %v2057, %v2056
        %vm2059 = vcmp.lt.s32.totalorder %v1989, 0
        %v2060 = vsub.s32 0, %v1989
        %v2061 = vsel %vm2059, %v2060, %v1989
        %v2062 = vmul.u32.u64.compose %v2061, 3435973837
        %v2063 = vextract.low.u32 %v2062
        %v2064 = vextract.high.u32 %v2062
        %v2065 = vshrl.u32 %v2064, 4
        %v2066 = vmul.u32 %v2065, 20
        %v2067 = vsub.s32 %v2061, %v2066
        %v2068 = vsub.s32 0, %v2067
        %v2069 = vsel %vm2059, %v2068, %v2067
        %vm2070 = vcmp.lt.s32.totalorder %v1990, 0
        %v2071 = vsub.s32 0, %v1990
        %v2072 = vsel %vm2070, %v2071, %v1990
        %v2073 = vmul.u32.u64.compose %v2072, 3435973837
        %v2074 = vextract.low.u32 %v2073
        %v2075 = vextract.high.u32 %v2073
        %v2076 = vshrl.u32 %v2075, 4
        %v2077 = vmul.u32 %v2076, 20
        %v2078 = vsub.s32 %v2072, %v2077
        %v2079 = vsub.s32 0, %v2078
        %v2080 = vsel %vm2070, %v2079, %v2078
        %vm2081 = vcmp.lt.s32.totalorder %v1991, 0
        %v2082 = vsub.s32 0, %v1991
        %v2083 = vsel %vm2081, %v2082, %v1991
        %v2084 = vmul.u32.u64.compose %v2083, 3435973837
        %v2085 = vextract.low.u32 %v2084
        %v2086 = vextract.high.u32 %v2084
        %v2087 = vshrl.u32 %v2086, 4
        %v2088 = vmul.u32 %v2087, 20
        %v2089 = vsub.s32 %v2083, %v2088
        %v2090 = vsub.s32 0, %v2089
        %v2091 = vsel %vm2081, %v2090, %v2089
        %vm2092 = vcmp.lt.s32.totalorder %v1992, 0
        %v2093 = vsub.s32 0, %v1992
        %v2094 = vsel %vm2092, %v2093, %v1992
        %v2095 = vmul.u32.u64.compose %v2094, 3435973837
        %v2096 = vextract.low.u32 %v2095
        %v2097 = vextract.high.u32 %v2095
        %v2098 = vshrl.u32 %v2097, 4
        %v2099 = vmul.u32 %v2098, 20
        %v2100 = vsub.s32 %v2094, %v2099
        %v2101 = vsub.s32 0, %v2100
        %v2102 = vsel %vm2092, %v2101, %v2100
        %vm2103 = vcmp.ne.s32.totalorder %v2003, 0
        %vm2104 = vcmp.ne.s32.totalorder %v2014, 0
        %vm2105 = vcmp.ne.s32.totalorder %v2025, 0
        %vm2106 = vcmp.ne.s32.totalorder %v2036, 0
        %vm2107 = vcmp.ne.s32.totalorder %v2047, 0
        %vm2108 = vcmp.ne.s32.totalorder %v2058, 0
        %vm2109 = vcmp.ne.s32.totalorder %v2069, 0
        %vm2110 = vcmp.ne.s32.totalorder %v2080, 0
        %vm2111 = vcmp.ne.s32.totalorder %v2091, 0
        %vm2112 = vcmp.ne.s32.totalorder %v2102, 0
        %vm2113 = vcmp.lt.s32.totalorder %v2003, 0
        %vm2114 = vcmp.lt.s32.totalorder %v2014, 0
        %vm2115 = vcmp.lt.s32.totalorder %v2025, 0
        %vm2116 = vcmp.lt.s32.totalorder %v2036, 0
        %vm2117 = vcmp.lt.s32.totalorder %v2047, 0
        %vm2118 = vcmp.lt.s32.totalorder %v2058, 0
        %vm2119 = vcmp.lt.s32.totalorder %v2069, 0
        %vm2120 = vcmp.lt.s32.totalorder %v2080, 0
        %vm2121 = vcmp.lt.s32.totalorder %v2091, 0
        %vm2122 = vcmp.lt.s32.totalorder %v2102, 0
        %vm2123 = vmand %vm2113, %vm2103
        %vm2124 = vmand %vm2114, %vm2104
        %vm2125 = vmand %vm2115, %vm2105
        %vm2126 = vmand %vm2116, %vm2106
        %vm2127 = vmand %vm2117, %vm2107
        %vm2128 = vmand %vm2118, %vm2108
        %vm2129 = vmand %vm2119, %vm2109
        %vm2130 = vmand %vm2120, %vm2110
        %vm2131 = vmand %vm2121, %vm2111
        %vm2132 = vmand %vm2122, %vm2112
        %v2133 = vadd.s32 %v2003, 20
        %v2134 = vadd.s32 %v2014, 20
        %v2135 = vadd.s32 %v2025, 20
        %v2136 = vadd.s32 %v2036, 20
        %v2137 = vadd.s32 %v2047, 20
        %v2138 = vadd.s32 %v2058, 20
        %v2139 = vadd.s32 %v2069, 20
        %v2140 = vadd.s32 %v2080, 20
        %v2141 = vadd.s32 %v2091, 20
        %v2142 = vadd.s32 %v2102, 20
        %v2143 = vsel %vm2123, %v2133, %v2003
        %v2144 = vsel %vm2124, %v2134, %v2014
        %v2145 = vsel %vm2125, %v2135, %v2025
        %v2146 = vsel %vm2126, %v2136, %v2036
        %v2147 = vsel %vm2127, %v2137, %v2047
        %v2148 = vsel %vm2128, %v2138, %v2058
        %v2149 = vsel %vm2129, %v2139, %v2069
        %v2150 = vsel %vm2130, %v2140, %v2080
        %v2151 = vsel %vm2131, %v2141, %v2091
        %v2152 = vsel %vm2132, %v2142, %v2102
        %vm2153 = vcmp.ge.s32.totalorder %v2143, 2
        %vm2154 = vcmp.ge.s32.totalorder %v2144, 2
        %vm2155 = vcmp.ge.s32.totalorder %v2145, 2
        %vm2156 = vcmp.ge.s32.totalorder %v2146, 2
        %vm2157 = vcmp.ge.s32.totalorder %v2147, 2
        %vm2158 = vcmp.ge.s32.totalorder %v2148, 2
        %vm2159 = vcmp.ge.s32.totalorder %v2149, 2
        %vm2160 = vcmp.ge.s32.totalorder %v2150, 2
        %vm2161 = vcmp.ge.s32.totalorder %v2151, 2
        %vm2162 = vcmp.ge.s32.totalorder %v2152, 2
        %vm2163 = vcmp.lt.s32.totalorder %v2143, 18
        %vm2164 = vcmp.lt.s32.totalorder %v2144, 18
        %vm2165 = vcmp.lt.s32.totalorder %v2145, 18
        %vm2166 = vcmp.lt.s32.totalorder %v2146, 18
        %vm2167 = vcmp.lt.s32.totalorder %v2147, 18
        %vm2168 = vcmp.lt.s32.totalorder %v2148, 18
        %vm2169 = vcmp.lt.s32.totalorder %v2149, 18
        %vm2170 = vcmp.lt.s32.totalorder %v2150, 18
        %vm2171 = vcmp.lt.s32.totalorder %v2151, 18
        %vm2172 = vcmp.lt.s32.totalorder %v2152, 18
        %vm2173 = vmand %vm2153, %vm2163
        %vm2174 = vmand %vm2154, %vm2164
        %vm2175 = vmand %vm2155, %vm2165
        %vm2176 = vmand %vm2156, %vm2166
        %vm2177 = vmand %vm2157, %vm2167
        %vm2178 = vmand %vm2158, %vm2168
        %vm2179 = vmand %vm2159, %vm2169
        %vm2180 = vmand %vm2160, %vm2170
        %vm2181 = vmand %vm2161, %vm2171
        %vm2182 = vmand %vm2162, %vm2172
        %s2183 = scalar_lea.vmem [#allocation4], 128
        %v2184 = vld [vmem:[%s2183] sm:$0xff]
        %v2185 = vld [vmem:[%s2183 + $0x8] sm:$0xff]
        %v2186 = vld [vmem:[%s2183 + $0x10] sm:$0xff]
        %v2187 = vld [vmem:[%s2183 + $0x18] sm:$0xff]
        %v2188 = vld [vmem:[%s2183 + $0x20] sm:$0xff]
        %v2189 = vld [vmem:[%s2183 + $0x28] sm:$0xff]
        %v2190 = vld [vmem:[%s2183 + $0x30] sm:$0xff]
        %v2191 = vld [vmem:[%s2183 + $0x38] sm:$0xff]
        %v2192 = vld [vmem:[%s2183 + $0x40] sm:$0xff]
        %v2193 = vld [vmem:[%s2183 + $0x48] sm:$0xff]
        %v2194 = vld [vmem:[%s2183 + $0x50] sm:$0xff]
        %v2195 = vld [vmem:[%s2183 + $0x58] sm:$0xff]
        %v2196 = vld [vmem:[%s2183 + $0x60] sm:$0xff]
        %v2197 = vld [vmem:[%s2183 + $0x68] sm:$0xff]
        %v2198 = vld [vmem:[%s2183 + $0x70] sm:$0xff]
        %v2199 = vld [vmem:[%s2183 + $0x78] sm:$0xff]
        %s2200 = scalar_lea.vmem [#allocation4], 384
        %v2201 = vld [vmem:[%s2200] sm:$0xff]
        %v2202 = vld [vmem:[%s2200 + $0x8] sm:$0xff]
        %v2203 = vld [vmem:[%s2200 + $0x10] sm:$0xff]
        %v2204 = vld [vmem:[%s2200 + $0x18] sm:$0xff]
        %v2205 = vld [vmem:[%s2200 + $0x20] sm:$0xff]
        %v2206 = vld [vmem:[%s2200 + $0x28] sm:$0xff]
        %v2207 = vld [vmem:[%s2200 + $0x30] sm:$0xff]
        %v2208 = vld [vmem:[%s2200 + $0x38] sm:$0xff]
        %v2209 = vld [vmem:[%s2200 + $0x40] sm:$0xff]
        %v2210 = vld [vmem:[%s2200 + $0x48] sm:$0xff]
        %v2211 = vld [vmem:[%s2200 + $0x50] sm:$0xff]
        %v2212 = vld [vmem:[%s2200 + $0x58] sm:$0xff]
        %v2213 = vld [vmem:[%s2200 + $0x60] sm:$0xff]
        %v2214 = vld [vmem:[%s2200 + $0x68] sm:$0xff]
        %v2215 = vld [vmem:[%s2200 + $0x70] sm:$0xff]
        %v2216 = vld [vmem:[%s2200 + $0x78] sm:$0xff]
        %v2227 = vunpack.c.l.b16 %v1976
        %v2228 = vunpack.c.l.b16 %v1977
        %v2229 = vunpack.c.l.b16 %v1978
        %v2230 = vunpack.c.l.b16 %v1979
        %v2231 = vunpack.c.l.b16 %v1980
        %v2232 = vunpack.c.l.b16 %v1981
        %v2233 = vunpack.c.l.b16 %v1982
        %v2234 = vunpack.c.l.b16 %v1983
        %v2235 = vunpack.c.l.b16 %v1984
        %v2236 = vunpack.c.l.b16 %v1985
        %v2237 = vpack.c.b16 %v2228, %v2227
        %v2238 = vpack.c.b16 %v2230, %v2229
        %v2239 = vpack.c.b16 %v2232, %v2231
        %v2240 = vpack.c.b16 %v2234, %v2233
        %v2241 = vpack.c.b16 %v2236, %v2235
        %v2263 = vunpack.c.l.b16 %v2201
        %v2264 = vunpack.c.h.b16 %v2201
        %v2265 = vunpack.c.l.b16 %v2202
        %v2266 = vunpack.c.h.b16 %v2202
        %v2267 = vunpack.c.l.b16 %v2203
        %v2268 = vunpack.c.h.b16 %v2203
        %v2269 = vunpack.c.l.b16 %v2204
        %v2270 = vunpack.c.h.b16 %v2204
        %v2271 = vunpack.c.l.b16 %v2205
        %v2272 = vunpack.c.h.b16 %v2205
        %v2273 = vunpack.c.l.b16 %v2206
        %v2274 = vunpack.c.h.b16 %v2206
        %v2275 = vunpack.c.l.b16 %v2207
        %v2276 = vunpack.c.h.b16 %v2207
        %v2277 = vunpack.c.l.b16 %v2208
        %v2278 = vunpack.c.h.b16 %v2208
        %v2279 = vunpack.c.l.b16 %v2209
        %v2280 = vunpack.c.h.b16 %v2209
        %v2281 = vunpack.c.l.b16 %v2210
        %v2282 = vunpack.c.h.b16 %v2210
        %v2283 = vunpack.c.l.b16 %v2211
        %v2284 = vunpack.c.h.b16 %v2211
        %v2285 = vunpack.c.l.b16 %v2212
        %v2286 = vunpack.c.h.b16 %v2212
        %v2287 = vunpack.c.l.b16 %v2213
        %v2288 = vunpack.c.h.b16 %v2213
        %v2289 = vunpack.c.l.b16 %v2214
        %v2290 = vunpack.c.h.b16 %v2214
        %v2291 = vunpack.c.l.b16 %v2215
        %v2292 = vunpack.c.h.b16 %v2215
        %v2293 = vunpack.c.l.b16 %v2216
        %v2294 = vunpack.c.h.b16 %v2216
        %v2295 = vpack.c.b16 %v2265, %v2263
        %v2296 = vpack.c.b16 %v2266, %v2264
        %v2297 = vpack.c.b16 %v2269, %v2267
        %v2298 = vpack.c.b16 %v2270, %v2268
        %v2299 = vpack.c.b16 %v2273, %v2271
        %v2300 = vpack.c.b16 %v2274, %v2272
        %v2301 = vpack.c.b16 %v2277, %v2275
        %v2302 = vpack.c.b16 %v2278, %v2276
        %v2303 = vpack.c.b16 %v2281, %v2279
        %v2304 = vpack.c.b16 %v2282, %v2280
        %v2305 = vpack.c.b16 %v2285, %v2283
        %v2306 = vpack.c.b16 %v2286, %v2284
        %v2307 = vpack.c.b16 %v2289, %v2287
        %v2308 = vpack.c.b16 %v2290, %v2288
        %v2309 = vpack.c.b16 %v2293, %v2291
        %v2310 = vpack.c.b16 %v2294, %v2292
        %2327 = vmatprep.subr.bf16.mxu0 %v2296
        %2328 = vmatpush1.bf16.msra.mxu0 %v2295
        %2329 = vmatprep.subr.bf16.mxu0 %v2298
        %2330 = vmatpush1.bf16.msra.mxu0 %v2297
        %2331 = vmatprep.subr.bf16.mxu0 %v2300
        %2332 = vmatpush1.bf16.msra.mxu0 %v2299
        %2333 = vmatprep.subr.bf16.mxu0 %v2302
        %2334 = vmatpush1.bf16.msra.mxu0 %v2301
        %2335 = vmatprep.subr.bf16.mxu0 %v2304
        %2336 = vmatpush1.bf16.msra.mxu0 %v2303
        %2337 = vmatprep.subr.bf16.mxu0 %v2306
        %2338 = vmatpush1.bf16.msra.mxu0 %v2305
        %2339 = vmatprep.subr.bf16.mxu0 %v2308
        %2340 = vmatpush1.bf16.msra.mxu0 %v2307
        %2341 = vmatprep.subr.bf16.mxu0 %v2310
        %2342 = vmatpush1.bf16.msra.mxu0 %v2309
        %2343 = vmatprep.subr.bf16.mxu0 0
        %2344 = vmatpush1.bf16.msra.mxu0 0
        %2345 = vmatprep.subr.bf16.mxu0 0
        %2346 = vmatpush1.bf16.msra.mxu0 0
        %2347 = vmatprep.subr.bf16.mxu0 0
        %2348 = vmatpush1.bf16.msra.mxu0 0
        %2349 = vmatprep.subr.bf16.mxu0 0
        %2350 = vmatpush1.bf16.msra.mxu0 0
        %2351 = vmatprep.subr.bf16.mxu0 0
        %2352 = vmatpush1.bf16.msra.mxu0 0
        %2353 = vmatprep.subr.bf16.mxu0 0
        %2354 = vmatpush1.bf16.msra.mxu0 0
        %2355 = vmatprep.subr.bf16.mxu0 0
        %2356 = vmatpush1.bf16.msra.mxu0 0
        %2357 = vmatprep.subr.bf16.mxu0 0
        %2358 = vmatpush1.bf16.msra.mxu0 0
        %2359 = vmatprep.mubr.bf16.mxu0 0
        %2360 = vmatmul.mubr.bf16.gmra.mrb[0].mxu0 %v2237
        %v2361 = vpop.f32.mrb[0].mxu0
        %v2362 = vadd.f32 0.0, %v2361
        %v2363 = vpop.f32.mrb[0].mxu0
        %v2364 = vadd.f32 0.0, %v2363
        %v2365 = vpop.f32.mrb[0].mxu0
        %v2366 = vadd.f32 0.0, %v2365
        %v2367 = vpop.f32.mrb[0].mxu0
        %v2368 = vadd.f32 0.0, %v2367
        %2369 = vmatprep.mubr.bf16.mxu0 0
        %2370 = vmatmul.mubr.bf16.gmra.mrb[0].mxu0 %v2238
        %v2371 = vpop.f32.mrb[0].mxu0
        %v2372 = vadd.f32 0.0, %v2371
        %v2373 = vpop.f32.mrb[0].mxu0
        %v2374 = vadd.f32 0.0, %v2373
        %v2375 = vpop.f32.mrb[0].mxu0
        %v2376 = vadd.f32 0.0, %v2375
        %v2377 = vpop.f32.mrb[0].mxu0
        %v2378 = vadd.f32 0.0, %v2377
        %2379 = vmatprep.mubr.bf16.mxu0 0
        %2380 = vmatmul.mubr.bf16.gmra.mrb[0].mxu0 %v2239
        %v2381 = vpop.f32.mrb[0].mxu0
        %v2382 = vadd.f32 0.0, %v2381
        %v2383 = vpop.f32.mrb[0].mxu0
        %v2384 = vadd.f32 0.0, %v2383
        %v2385 = vpop.f32.mrb[0].mxu0
        %v2386 = vadd.f32 0.0, %v2385
        %v2387 = vpop.f32.mrb[0].mxu0
        %v2388 = vadd.f32 0.0, %v2387
        %2389 = vmatprep.mubr.bf16.mxu0 0
        %2390 = vmatmul.mubr.bf16.gmra.mrb[0].mxu0 %v2240
        %v2391 = vpop.f32.mrb[0].mxu0
        %v2392 = vadd.f32 0.0, %v2391
        %v2393 = vpop.f32.mrb[0].mxu0
        %v2394 = vadd.f32 0.0, %v2393
        %v2395 = vpop.f32.mrb[0].mxu0
        %v2396 = vadd.f32 0.0, %v2395
        %v2397 = vpop.f32.mrb[0].mxu0
        %v2398 = vadd.f32 0.0, %v2397
        %2399 = vmatprep.mubr.bf16.mxu0 0
        %2400 = vmatmul.mubr.bf16.gmra.mrb[0].mxu0 %v2241
        %v2401 = vpop.f32.mrb[0].mxu0
        %v2402 = vadd.f32 0.0, %v2401
        %v2403 = vpop.f32.mrb[0].mxu0
        %v2404 = vadd.f32 0.0, %v2403
        %v2405 = vpop.f32.mrb[0].mxu0
        %v2406 = vadd.f32 0.0, %v2405
        %v2407 = vpop.f32.mrb[0].mxu0
        %v2408 = vadd.f32 0.0, %v2407
        %2409 = vdwg.mxu0
        %v2411 = vunpack.c.l.b16 %v1986
        %v2412 = vpack.c.b16 %v2411, %v2411
        %v2414 = vshrl.u32 %v2237, 16
        %v2416 = vshll.u32 %v2237, 16
        %v2418 = vrot.slane %v2416, 1
        %v2419 = vor.u32 %v2414, %v2418
        %v2421 = vshll.u32 %v2238, 16
        %v2423 = vrot.slane %v2421, 1
        %v2424 = vsel %vm520, %v2419, %v2423
        %v2425 = vshrl.u32 %v2238, 16
        %v2427 = vor.u32 %v2425, %v2423
        %v2429 = vshll.u32 %v2239, 16
        %v2431 = vrot.slane %v2429, 1
        %v2432 = vsel %vm520, %v2427, %v2431
        %v2433 = vshrl.u32 %v2239, 16
        %v2435 = vor.u32 %v2433, %v2431
        %v2437 = vshll.u32 %v2240, 16
        %v2439 = vrot.slane %v2437, 1
        %v2440 = vsel %vm520, %v2435, %v2439
        %v2441 = vshrl.u32 %v2240, 16
        %v2443 = vor.u32 %v2441, %v2439
        %v2445 = vshll.u32 %v2241, 16
        %v2447 = vrot.slane %v2445, 1
        %v2448 = vsel %vm520, %v2443, %v2447
        %v2449 = vshrl.u32 %v2241, 16
        %v2451 = vor.u32 %v2449, %v2447
        %v2453 = vshll.u32 %v2412, 16
        %v2455 = vrot.slane %v2453, 1
        %v2456 = vsel %vm520, %v2451, %v2455
        %v2478 = vunpack.c.l.b16 %v2184
        %v2479 = vunpack.c.h.b16 %v2184
        %v2480 = vunpack.c.l.b16 %v2185
        %v2481 = vunpack.c.h.b16 %v2185
        %v2482 = vunpack.c.l.b16 %v2186
        %v2483 = vunpack.c.h.b16 %v2186
        %v2484 = vunpack.c.l.b16 %v2187
        %v2485 = vunpack.c.h.b16 %v2187
        %v2486 = vunpack.c.l.b16 %v2188
        %v2487 = vunpack.c.h.b16 %v2188
        %v2488 = vunpack.c.l.b16 %v2189
        %v2489 = vunpack.c.h.b16 %v2189
        %v2490 = vunpack.c.l.b16 %v2190
        %v2491 = vunpack.c.h.b16 %v2190
        %v2492 = vunpack.c.l.b16 %v2191
        %v2493 = vunpack.c.h.b16 %v2191
        %v2494 = vunpack.c.l.b16 %v2192
        %v2495 = vunpack.c.h.b16 %v2192
        %v2496 = vunpack.c.l.b16 %v2193
        %v2497 = vunpack.c.h.b16 %v2193
        %v2498 = vunpack.c.l.b16 %v2194
        %v2499 = vunpack.c.h.b16 %v2194
        %v2500 = vunpack.c.l.b16 %v2195
        %v2501 = vunpack.c.h.b16 %v2195
        %v2502 = vunpack.c.l.b16 %v2196
        %v2503 = vunpack.c.h.b16 %v2196
        %v2504 = vunpack.c.l.b16 %v2197
        %v2505 = vunpack.c.h.b16 %v2197
        %v2506 = vunpack.c.l.b16 %v2198
        %v2507 = vunpack.c.h.b16 %v2198
        %v2508 = vunpack.c.l.b16 %v2199
        %v2509 = vunpack.c.h.b16 %v2199
        %v2510 = vpack.c.b16 %v2480, %v2478
        %v2511 = vpack.c.b16 %v2481, %v2479
        %v2512 = vpack.c.b16 %v2484, %v2482
        %v2513 = vpack.c.b16 %v2485, %v2483
        %v2514 = vpack.c.b16 %v2488, %v2486
        %v2515 = vpack.c.b16 %v2489, %v2487
        %v2516 = vpack.c.b16 %v2492, %v2490
        %v2517 = vpack.c.b16 %v2493, %v2491
        %v2518 = vpack.c.b16 %v2496, %v2494
        %v2519 = vpack.c.b16 %v2497, %v2495
        %v2520 = vpack.c.b16 %v2500, %v2498
        %v2521 = vpack.c.b16 %v2501, %v2499
        %v2522 = vpack.c.b16 %v2504, %v2502
        %v2523 = vpack.c.b16 %v2505, %v2503
        %v2524 = vpack.c.b16 %v2508, %v2506
        %v2525 = vpack.c.b16 %v2509, %v2507
        %2542 = vmatprep.subr.bf16.mxu0 %v2511
        %2543 = vmatpush1.bf16.msra.mxu0 %v2510
        %2544 = vmatprep.subr.bf16.mxu0 %v2513
        %2545 = vmatpush1.bf16.msra.mxu0 %v2512
        %2546 = vmatprep.subr.bf16.mxu0 %v2515
        %2547 = vmatpush1.bf16.msra.mxu0 %v2514
        %2548 = vmatprep.subr.bf16.mxu0 %v2517
        %2549 = vmatpush1.bf16.msra.mxu0 %v2516
        %2550 = vmatprep.subr.bf16.mxu0 %v2519
        %2551 = vmatpush1.bf16.msra.mxu0 %v2518
        %2552 = vmatprep.subr.bf16.mxu0 %v2521
        %2553 = vmatpush1.bf16.msra.mxu0 %v2520
        %2554 = vmatprep.subr.bf16.mxu0 %v2523
        %2555 = vmatpush1.bf16.msra.mxu0 %v2522
        %2556 = vmatprep.subr.bf16.mxu0 %v2525
        %2557 = vmatpush1.bf16.msra.mxu0 %v2524
        %2558 = vmatprep.subr.bf16.mxu0 0
        %2559 = vmatpush1.bf16.msra.mxu0 0
        %2560 = vmatprep.subr.bf16.mxu0 0
        %2561 = vmatpush1.bf16.msra.mxu0 0
        %2562 = vmatprep.subr.bf16.mxu0 0
        %2563 = vmatpush1.bf16.msra.mxu0 0
        %2564 = vmatprep.subr.bf16.mxu0 0
        %2565 = vmatpush1.bf16.msra.mxu0 0
        %2566 = vmatprep.subr.bf16.mxu0 0
        %2567 = vmatpush1.bf16.msra.mxu0 0
        %2568 = vmatprep.subr.bf16.mxu0 0
        %2569 = vmatpush1.bf16.msra.mxu0 0
        %2570 = vmatprep.subr.bf16.mxu0 0
        %2571 = vmatpush1.bf16.msra.mxu0 0
        %2572 = vmatprep.subr.bf16.mxu0 0
        %2573 = vmatpush1.bf16.msra.mxu0 0
        %2574 = vmatprep.mubr.bf16.mxu0 0
        %2575 = vmatmul.mubr.bf16.gmra.mrb[0].mxu0 %v2424
        %v2576 = vpop.f32.mrb[0].mxu0
        %v2577 = vadd.f32 %v2362, %v2576
        %v2578 = vpop.f32.mrb[0].mxu0
        %v2579 = vadd.f32 %v2364, %v2578
        %v2580 = vpop.f32.mrb[0].mxu0
        %v2581 = vadd.f32 %v2366, %v2580
        %v2582 = vpop.f32.mrb[0].mxu0
        %v2583 = vadd.f32 %v2368, %v2582
        %2584 = vmatprep.mubr.bf16.mxu0 0
        %2585 = vmatmul.mubr.bf16.gmra.mrb[0].mxu0 %v2432
        %v2586 = vpop.f32.mrb[0].mxu0
        %v2587 = vadd.f32 %v2372, %v2586
        %v2588 = vpop.f32.mrb[0].mxu0
        %v2589 = vadd.f32 %v2374, %v2588
        %v2590 = vpop.f32.mrb[0].mxu0
        %v2591 = vadd.f32 %v2376, %v2590
        %v2592 = vpop.f32.mrb[0].mxu0
        %v2593 = vadd.f32 %v2378, %v2592
        %2594 = vmatprep.mubr.bf16.mxu0 0
        %2595 = vmatmul.mubr.bf16.gmra.mrb[0].mxu0 %v2440
        %v2596 = vpop.f32.mrb[0].mxu0
        %v2597 = vadd.f32 %v2382, %v2596
        %v2598 = vpop.f32.mrb[0].mxu0
        %v2599 = vadd.f32 %v2384, %v2598
        %v2600 = vpop.f32.mrb[0].mxu0
        %v2601 = vadd.f32 %v2386, %v2600
        %v2602 = vpop.f32.mrb[0].mxu0
        %v2603 = vadd.f32 %v2388, %v2602
        %2604 = vmatprep.mubr.bf16.mxu0 0
        %2605 = vmatmul.mubr.bf16.gmra.mrb[0].mxu0 %v2448
        %v2606 = vpop.f32.mrb[0].mxu0
        %v2607 = vadd.f32 %v2392, %v2606
        %v2608 = vpop.f32.mrb[0].mxu0
        %v2609 = vadd.f32 %v2394, %v2608
        %v2610 = vpop.f32.mrb[0].mxu0
        %v2611 = vadd.f32 %v2396, %v2610
        %v2612 = vpop.f32.mrb[0].mxu0
        %v2613 = vadd.f32 %v2398, %v2612
        %2614 = vmatprep.mubr.bf16.mxu0 0
        %2615 = vmatmul.mubr.bf16.gmra.mrb[0].mxu0 %v2456
        %v2616 = vpop.f32.mrb[0].mxu0
        %v2617 = vadd.f32 %v2402, %v2616
        %v2618 = vpop.f32.mrb[0].mxu0
        %v2619 = vadd.f32 %v2404, %v2618
        %v2620 = vpop.f32.mrb[0].mxu0
        %v2621 = vadd.f32 %v2406, %v2620
        %v2622 = vpop.f32.mrb[0].mxu0
        %v2623 = vadd.f32 %v2408, %v2622
        %2624 = vdwg.mxu0
        %v2626 = vlaneseq
        %v2627 = vshrl.u32 %v2626, 7
        %v2628 = vsub.s32 0, %v2627
        %v2629 = vrot.slane %v1987, %v2628
        %v2630 = vlaneseq
        %v2631 = vshrl.u32 %v2630, 7
        %v2632 = vsub.s32 1, %v2631
        %v2633 = vrot.slane %v1987, %v2632
        %v2636 = vadd.f32 %v2577, %v2629
        %v2637 = vadd.f32 %v2579, %v2633
        %v2638 = vadd.f32 %v2581, %v2629
        %v2639 = vadd.f32 %v2583, %v2633
        %v2640 = vadd.f32 %v2587, %v2629
        %v2641 = vadd.f32 %v2589, %v2633
        %v2642 = vadd.f32 %v2591, %v2629
        %v2643 = vadd.f32 %v2593, %v2633
        %v2644 = vadd.f32 %v2597, %v2629
        %v2645 = vadd.f32 %v2599, %v2633
        %v2646 = vadd.f32 %v2601, %v2629
        %v2647 = vadd.f32 %v2603, %v2633
        %v2648 = vadd.f32 %v2607, %v2629
        %v2649 = vadd.f32 %v2609, %v2633
        %v2650 = vadd.f32 %v2611, %v2629
        %v2651 = vadd.f32 %v2613, %v2633
        %v2652 = vadd.f32 %v2617, %v2629
        %v2653 = vadd.f32 %v2619, %v2633
        %v2654 = vadd.f32 %v2621, %v2629
        %v2655 = vadd.f32 %v2623, %v2633
        %v2656 = vmax.f32 %v2636, 0.0
        %v2657 = vmax.f32 %v2637, 0.0
        %v2658 = vmax.f32 %v2638, 0.0
        %v2659 = vmax.f32 %v2639, 0.0
        %v2660 = vmax.f32 %v2640, 0.0
        %v2661 = vmax.f32 %v2641, 0.0
        %v2662 = vmax.f32 %v2642, 0.0
        %v2663 = vmax.f32 %v2643, 0.0
        %v2664 = vmax.f32 %v2644, 0.0
        %v2665 = vmax.f32 %v2645, 0.0
        %v2666 = vmax.f32 %v2646, 0.0
        %v2667 = vmax.f32 %v2647, 0.0
        %v2668 = vmax.f32 %v2648, 0.0
        %v2669 = vmax.f32 %v2649, 0.0
        %v2670 = vmax.f32 %v2650, 0.0
        %v2671 = vmax.f32 %v2651, 0.0
        %v2672 = vmax.f32 %v2652, 0.0
        %v2673 = vmax.f32 %v2653, 0.0
        %v2674 = vmax.f32 %v2654, 0.0
        %v2675 = vmax.f32 %v2655, 0.0
        %v2676 = vsel %vm2173, %v2656, 0.0
        %v2677 = vsel %vm2173, %v2657, 0.0
        %v2678 = vsel %vm2174, %v2658, 0.0
        %v2679 = vsel %vm2174, %v2659, 0.0
        %v2680 = vsel %vm2175, %v2660, 0.0
        %v2681 = vsel %vm2175, %v2661, 0.0
        %v2682 = vsel %vm2176, %v2662, 0.0
        %v2683 = vsel %vm2176, %v2663, 0.0
        %v2684 = vsel %vm2177, %v2664, 0.0
        %v2685 = vsel %vm2177, %v2665, 0.0
        %v2686 = vsel %vm2178, %v2666, 0.0
        %v2687 = vsel %vm2178, %v2667, 0.0
        %v2688 = vsel %vm2179, %v2668, 0.0
        %v2689 = vsel %vm2179, %v2669, 0.0
        %v2690 = vsel %vm2180, %v2670, 0.0
        %v2691 = vsel %vm2180, %v2671, 0.0
        %v2692 = vsel %vm2181, %v2672, 0.0
        %v2693 = vsel %vm2181, %v2673, 0.0
        %v2694 = vsel %vm2182, %v2674, 0.0
        %v2695 = vsel %vm2182, %v2675, 0.0
        %v2696 = vld [vmem:[#allocation4] sm:$0xff]
        %v2697 = vld [vmem:[#allocation4 + $0x8] sm:$0xff]
        %v2698 = vld [vmem:[#allocation4 + $0x10] sm:$0xff]
        %v2699 = vld [vmem:[#allocation4 + $0x18] sm:$0xff]
        %v2700 = vld [vmem:[#allocation4 + $0x20] sm:$0xff]
        %v2701 = vld [vmem:[#allocation4 + $0x28] sm:$0xff]
        %v2702 = vld [vmem:[#allocation4 + $0x30] sm:$0xff]
        %v2703 = vld [vmem:[#allocation4 + $0x38] sm:$0xff]
        %v2704 = vld [vmem:[#allocation4 + $0x40] sm:$0xff]
        %v2705 = vld [vmem:[#allocation4 + $0x48] sm:$0xff]
        %v2706 = vld [vmem:[#allocation4 + $0x50] sm:$0xff]
        %v2707 = vld [vmem:[#allocation4 + $0x58] sm:$0xff]
        %v2708 = vld [vmem:[#allocation4 + $0x60] sm:$0xff]
        %v2709 = vld [vmem:[#allocation4 + $0x68] sm:$0xff]
        %v2710 = vld [vmem:[#allocation4 + $0x70] sm:$0xff]
        %v2711 = vld [vmem:[#allocation4 + $0x78] sm:$0xff]
        %s2712 = scalar_lea.vmem [#allocation4], 256
        %v2713 = vld [vmem:[%s2712] sm:$0xff]
        %v2714 = vld [vmem:[%s2712 + $0x8] sm:$0xff]
        %v2715 = vld [vmem:[%s2712 + $0x10] sm:$0xff]
        %v2716 = vld [vmem:[%s2712 + $0x18] sm:$0xff]
        %v2717 = vld [vmem:[%s2712 + $0x20] sm:$0xff]
        %v2718 = vld [vmem:[%s2712 + $0x28] sm:$0xff]
        %v2719 = vld [vmem:[%s2712 + $0x30] sm:$0xff]
        %v2720 = vld [vmem:[%s2712 + $0x38] sm:$0xff]
        %v2721 = vld [vmem:[%s2712 + $0x40] sm:$0xff]
        %v2722 = vld [vmem:[%s2712 + $0x48] sm:$0xff]
        %v2723 = vld [vmem:[%s2712 + $0x50] sm:$0xff]
        %v2724 = vld [vmem:[%s2712 + $0x58] sm:$0xff]
        %v2725 = vld [vmem:[%s2712 + $0x60] sm:$0xff]
        %v2726 = vld [vmem:[%s2712 + $0x68] sm:$0xff]
        %v2727 = vld [vmem:[%s2712 + $0x70] sm:$0xff]
        %v2728 = vld [vmem:[%s2712 + $0x78] sm:$0xff]
        %v2745 = vunpack.c.l.b16 %v2713
        %v2746 = vunpack.c.h.b16 %v2713
        %v2747 = vunpack.c.l.b16 %v2714
        %v2748 = vunpack.c.h.b16 %v2714
        %v2749 = vunpack.c.l.b16 %v2715
        %v2750 = vunpack.c.h.b16 %v2715
        %v2751 = vunpack.c.l.b16 %v2716
        %v2752 = vunpack.c.h.b16 %v2716
        %v2753 = vunpack.c.l.b16 %v2717
        %v2754 = vunpack.c.h.b16 %v2717
        %v2755 = vunpack.c.l.b16 %v2718
        %v2756 = vunpack.c.h.b16 %v2718
        %v2757 = vunpack.c.l.b16 %v2719
        %v2758 = vunpack.c.h.b16 %v2719
        %v2759 = vunpack.c.l.b16 %v2720
        %v2760 = vunpack.c.h.b16 %v2720
        %v2761 = vunpack.c.l.b16 %v2721
        %v2762 = vunpack.c.h.b16 %v2721
        %v2763 = vunpack.c.l.b16 %v2722
        %v2764 = vunpack.c.h.b16 %v2722
        %v2765 = vunpack.c.l.b16 %v2723
        %v2766 = vunpack.c.h.b16 %v2723
        %v2767 = vunpack.c.l.b16 %v2724
        %v2768 = vunpack.c.h.b16 %v2724
        %v2769 = vunpack.c.l.b16 %v2725
        %v2770 = vunpack.c.h.b16 %v2725
        %v2771 = vunpack.c.l.b16 %v2726
        %v2772 = vunpack.c.h.b16 %v2726
        %v2773 = vunpack.c.l.b16 %v2727
        %v2774 = vunpack.c.h.b16 %v2727
        %v2775 = vunpack.c.l.b16 %v2728
        %v2776 = vunpack.c.h.b16 %v2728
        %v2777 = vpack.c.b16 %v2747, %v2745
        %v2778 = vpack.c.b16 %v2748, %v2746
        %v2779 = vpack.c.b16 %v2751, %v2749
        %v2780 = vpack.c.b16 %v2752, %v2750
        %v2781 = vpack.c.b16 %v2755, %v2753
        %v2782 = vpack.c.b16 %v2756, %v2754
        %v2783 = vpack.c.b16 %v2759, %v2757
        %v2784 = vpack.c.b16 %v2760, %v2758
        %v2785 = vpack.c.b16 %v2763, %v2761
        %v2786 = vpack.c.b16 %v2764, %v2762
        %v2787 = vpack.c.b16 %v2767, %v2765
        %v2788 = vpack.c.b16 %v2768, %v2766
        %v2789 = vpack.c.b16 %v2771, %v2769
        %v2790 = vpack.c.b16 %v2772, %v2770
        %v2791 = vpack.c.b16 %v2775, %v2773
        %v2792 = vpack.c.b16 %v2776, %v2774
        %2809 = vmatprep.subr.bf16.mxu0 %v2778
        %2810 = vmatpush1.bf16.msra.mxu0 %v2777
        %2811 = vmatprep.subr.bf16.mxu0 %v2780
        %2812 = vmatpush1.bf16.msra.mxu0 %v2779
        %2813 = vmatprep.subr.bf16.mxu0 %v2782
        %2814 = vmatpush1.bf16.msra.mxu0 %v2781
        %2815 = vmatprep.subr.bf16.mxu0 %v2784
        %2816 = vmatpush1.bf16.msra.mxu0 %v2783
        %2817 = vmatprep.subr.bf16.mxu0 %v2786
        %2818 = vmatpush1.bf16.msra.mxu0 %v2785
        %2819 = vmatprep.subr.bf16.mxu0 %v2788
        %2820 = vmatpush1.bf16.msra.mxu0 %v2787
        %2821 = vmatprep.subr.bf16.mxu0 %v2790
        %2822 = vmatpush1.bf16.msra.mxu0 %v2789
        %2823 = vmatprep.subr.bf16.mxu0 %v2792
        %2824 = vmatpush1.bf16.msra.mxu0 %v2791
        %2825 = vmatprep.subr.bf16.mxu0 0
        %2826 = vmatpush1.bf16.msra.mxu0 0
        %2827 = vmatprep.subr.bf16.mxu0 0
        %2828 = vmatpush1.bf16.msra.mxu0 0
        %2829 = vmatprep.subr.bf16.mxu0 0
        %2830 = vmatpush1.bf16.msra.mxu0 0
        %2831 = vmatprep.subr.bf16.mxu0 0
        %2832 = vmatpush1.bf16.msra.mxu0 0
        %2833 = vmatprep.subr.bf16.mxu0 0
        %2834 = vmatpush1.bf16.msra.mxu0 0
        %2835 = vmatprep.subr.bf16.mxu0 0
        %2836 = vmatpush1.bf16.msra.mxu0 0
        %2837 = vmatprep.subr.bf16.mxu0 0
        %2838 = vmatpush1.bf16.msra.mxu0 0
        %2839 = vmatprep.subr.bf16.mxu0 0
        %2840 = vmatpush1.bf16.msra.mxu0 0
        %2841 = vmatprep.mubr.bf16.mxu0 0
        %2842 = vmatmul.mubr.bf16.gmra.mrb[0].mxu0 %v2424
        %v2843 = vpop.f32.mrb[0].mxu0
        %v2844 = vadd.f32 0.0, %v2843
        %v2845 = vpop.f32.mrb[0].mxu0
        %v2846 = vadd.f32 0.0, %v2845
        %v2847 = vpop.f32.mrb[0].mxu0
        %v2848 = vadd.f32 0.0, %v2847
        %v2849 = vpop.f32.mrb[0].mxu0
        %v2850 = vadd.f32 0.0, %v2849
        %2851 = vmatprep.mubr.bf16.mxu0 0
        %2852 = vmatmul.mubr.bf16.gmra.mrb[0].mxu0 %v2432
        %v2853 = vpop.f32.mrb[0].mxu0
        %v2854 = vadd.f32 0.0, %v2853
        %v2855 = vpop.f32.mrb[0].mxu0
        %v2856 = vadd.f32 0.0, %v2855
        %v2857 = vpop.f32.mrb[0].mxu0
        %v2858 = vadd.f32 0.0, %v2857
        %v2859 = vpop.f32.mrb[0].mxu0
        %v2860 = vadd.f32 0.0, %v2859
        %2861 = vmatprep.mubr.bf16.mxu0 0
        %2862 = vmatmul.mubr.bf16.gmra.mrb[0].mxu0 %v2440
        %v2863 = vpop.f32.mrb[0].mxu0
        %v2864 = vadd.f32 0.0, %v2863
        %v2865 = vpop.f32.mrb[0].mxu0
        %v2866 = vadd.f32 0.0, %v2865
        %v2867 = vpop.f32.mrb[0].mxu0
        %v2868 = vadd.f32 0.0, %v2867
        %v2869 = vpop.f32.mrb[0].mxu0
        %v2870 = vadd.f32 0.0, %v2869
        %2871 = vmatprep.mubr.bf16.mxu0 0
        %2872 = vmatmul.mubr.bf16.gmra.mrb[0].mxu0 %v2448
        %v2873 = vpop.f32.mrb[0].mxu0
        %v2874 = vadd.f32 0.0, %v2873
        %v2875 = vpop.f32.mrb[0].mxu0
        %v2876 = vadd.f32 0.0, %v2875
        %v2877 = vpop.f32.mrb[0].mxu0
        %v2878 = vadd.f32 0.0, %v2877
        %v2879 = vpop.f32.mrb[0].mxu0
        %v2880 = vadd.f32 0.0, %v2879
        %2881 = vmatprep.mubr.bf16.mxu0 0
        %2882 = vmatmul.mubr.bf16.gmra.mrb[0].mxu0 %v2456
        %v2883 = vpop.f32.mrb[0].mxu0
        %v2884 = vadd.f32 0.0, %v2883
        %v2885 = vpop.f32.mrb[0].mxu0
        %v2886 = vadd.f32 0.0, %v2885
        %v2887 = vpop.f32.mrb[0].mxu0
        %v2888 = vadd.f32 0.0, %v2887
        %v2889 = vpop.f32.mrb[0].mxu0
        %v2890 = vadd.f32 0.0, %v2889
        %2891 = vdwg.mxu0
        %v2892 = vrot.slane %v2237, 1
        %v2893 = vrot.slane %v2238, 1
        %v2894 = vsel %vm717, %v2892, %v2893
        %v2895 = vrot.slane %v2239, 1
        %v2896 = vsel %vm717, %v2893, %v2895
        %v2897 = vrot.slane %v2240, 1
        %v2898 = vsel %vm717, %v2895, %v2897
        %v2899 = vrot.slane %v2241, 1
        %v2900 = vsel %vm717, %v2897, %v2899
        %v2901 = vrot.slane %v2412, 1
        %v2902 = vsel %vm717, %v2899, %v2901
        %v2924 = vunpack.c.l.b16 %v2696
        %v2925 = vunpack.c.h.b16 %v2696
        %v2926 = vunpack.c.l.b16 %v2697
        %v2927 = vunpack.c.h.b16 %v2697
        %v2928 = vunpack.c.l.b16 %v2698
        %v2929 = vunpack.c.h.b16 %v2698
        %v2930 = vunpack.c.l.b16 %v2699
        %v2931 = vunpack.c.h.b16 %v2699
        %v2932 = vunpack.c.l.b16 %v2700
        %v2933 = vunpack.c.h.b16 %v2700
        %v2934 = vunpack.c.l.b16 %v2701
        %v2935 = vunpack.c.h.b16 %v2701
        %v2936 = vunpack.c.l.b16 %v2702
        %v2937 = vunpack.c.h.b16 %v2702
        %v2938 = vunpack.c.l.b16 %v2703
        %v2939 = vunpack.c.h.b16 %v2703
        %v2940 = vunpack.c.l.b16 %v2704
        %v2941 = vunpack.c.h.b16 %v2704
        %v2942 = vunpack.c.l.b16 %v2705
        %v2943 = vunpack.c.h.b16 %v2705
        %v2944 = vunpack.c.l.b16 %v2706
        %v2945 = vunpack.c.h.b16 %v2706
        %v2946 = vunpack.c.l.b16 %v2707
        %v2947 = vunpack.c.h.b16 %v2707
        %v2948 = vunpack.c.l.b16 %v2708
        %v2949 = vunpack.c.h.b16 %v2708
        %v2950 = vunpack.c.l.b16 %v2709
        %v2951 = vunpack.c.h.b16 %v2709
        %v2952 = vunpack.c.l.b16 %v2710
        %v2953 = vunpack.c.h.b16 %v2710
        %v2954 = vunpack.c.l.b16 %v2711
        %v2955 = vunpack.c.h.b16 %v2711
        %v2956 = vpack.c.b16 %v2926, %v2924
        %v2957 = vpack.c.b16 %v2927, %v2925
        %v2958 = vpack.c.b16 %v2930, %v2928
        %v2959 = vpack.c.b16 %v2931, %v2929
        %v2960 = vpack.c.b16 %v2934, %v2932
        %v2961 = vpack.c.b16 %v2935, %v2933
        %v2962 = vpack.c.b16 %v2938, %v2936
        %v2963 = vpack.c.b16 %v2939, %v2937
        %v2964 = vpack.c.b16 %v2942, %v2940
        %v2965 = vpack.c.b16 %v2943, %v2941
        %v2966 = vpack.c.b16 %v2946, %v2944
        %v2967 = vpack.c.b16 %v2947, %v2945
        %v2968 = vpack.c.b16 %v2950, %v2948
        %v2969 = vpack.c.b16 %v2951, %v2949
        %v2970 = vpack.c.b16 %v2954, %v2952
        %v2971 = vpack.c.b16 %v2955, %v2953
        %2988 = vmatprep.subr.bf16.mxu0 %v2957
        %2989 = vmatpush1.bf16.msra.mxu0 %v2956
        %2990 = vmatprep.subr.bf16.mxu0 %v2959
        %2991 = vmatpush1.bf16.msra.mxu0 %v2958
        %2992 = vmatprep.subr.bf16.mxu0 %v2961
        %2993 = vmatpush1.bf16.msra.mxu0 %v2960
        %2994 = vmatprep.subr.bf16.mxu0 %v2963
        %2995 = vmatpush1.bf16.msra.mxu0 %v2962
        %2996 = vmatprep.subr.bf16.mxu0 %v2965
        %2997 = vmatpush1.bf16.msra.mxu0 %v2964
        %2998 = vmatprep.subr.bf16.mxu0 %v2967
        %2999 = vmatpush1.bf16.msra.mxu0 %v2966
        %3000 = vmatprep.subr.bf16.mxu0 %v2969
        %3001 = vmatpush1.bf16.msra.mxu0 %v2968
        %3002 = vmatprep.subr.bf16.mxu0 %v2971
        %3003 = vmatpush1.bf16.msra.mxu0 %v2970
        %3004 = vmatprep.subr.bf16.mxu0 0
        %3005 = vmatpush1.bf16.msra.mxu0 0
        %3006 = vmatprep.subr.bf16.mxu0 0
        %3007 = vmatpush1.bf16.msra.mxu0 0
        %3008 = vmatprep.subr.bf16.mxu0 0
        %3009 = vmatpush1.bf16.msra.mxu0 0
        %3010 = vmatprep.subr.bf16.mxu0 0
        %3011 = vmatpush1.bf16.msra.mxu0 0
        %3012 = vmatprep.subr.bf16.mxu0 0
        %3013 = vmatpush1.bf16.msra.mxu0 0
        %3014 = vmatprep.subr.bf16.mxu0 0
        %3015 = vmatpush1.bf16.msra.mxu0 0
        %3016 = vmatprep.subr.bf16.mxu0 0
        %3017 = vmatpush1.bf16.msra.mxu0 0
        %3018 = vmatprep.subr.bf16.mxu0 0
        %3019 = vmatpush1.bf16.msra.mxu0 0
        %3020 = vmatprep.mubr.bf16.mxu0 0
        %3021 = vmatmul.mubr.bf16.gmra.mrb[0].mxu0 %v2894
        %v3022 = vpop.f32.mrb[0].mxu0
        %v3023 = vadd.f32 %v2844, %v3022
        %v3024 = vpop.f32.mrb[0].mxu0
        %v3025 = vadd.f32 %v2846, %v3024
        %v3026 = vpop.f32.mrb[0].mxu0
        %v3027 = vadd.f32 %v2848, %v3026
        %v3028 = vpop.f32.mrb[0].mxu0
        %v3029 = vadd.f32 %v2850, %v3028
        %3030 = vmatprep.mubr.bf16.mxu0 0
        %3031 = vmatmul.mubr.bf16.gmra.mrb[0].mxu0 %v2896
        %v3032 = vpop.f32.mrb[0].mxu0
        %v3033 = vadd.f32 %v2854, %v3032
        %v3034 = vpop.f32.mrb[0].mxu0
        %v3035 = vadd.f32 %v2856, %v3034
        %v3036 = vpop.f32.mrb[0].mxu0
        %v3037 = vadd.f32 %v2858, %v3036
        %v3038 = vpop.f32.mrb[0].mxu0
        %v3039 = vadd.f32 %v2860, %v3038
        %3040 = vmatprep.mubr.bf16.mxu0 0
        %3041 = vmatmul.mubr.bf16.gmra.mrb[0].mxu0 %v2898
        %v3042 = vpop.f32.mrb[0].mxu0
        %v3043 = vadd.f32 %v2864, %v3042
        %v3044 = vpop.f32.mrb[0].mxu0
        %v3045 = vadd.f32 %v2866, %v3044
        %v3046 = vpop.f32.mrb[0].mxu0
        %v3047 = vadd.f32 %v2868, %v3046
        %v3048 = vpop.f32.mrb[0].mxu0
        %v3049 = vadd.f32 %v2870, %v3048
        %3050 = vmatprep.mubr.bf16.mxu0 0
        %3051 = vmatmul.mubr.bf16.gmra.mrb[0].mxu0 %v2900
        %v3052 = vpop.f32.mrb[0].mxu0
        %v3053 = vadd.f32 %v2874, %v3052
        %v3054 = vpop.f32.mrb[0].mxu0
        %v3055 = vadd.f32 %v2876, %v3054
        %v3056 = vpop.f32.mrb[0].mxu0
        %v3057 = vadd.f32 %v2878, %v3056
        %v3058 = vpop.f32.mrb[0].mxu0
        %v3059 = vadd.f32 %v2880, %v3058
        %3060 = vmatprep.mubr.bf16.mxu0 0
        %3061 = vmatmul.mubr.bf16.gmra.mrb[0].mxu0 %v2902
        %v3062 = vpop.f32.mrb[0].mxu0
        %v3063 = vadd.f32 %v2884, %v3062
        %v3064 = vpop.f32.mrb[0].mxu0
        %v3065 = vadd.f32 %v2886, %v3064
        %v3066 = vpop.f32.mrb[0].mxu0
        %v3067 = vadd.f32 %v2888, %v3066
        %v3068 = vpop.f32.mrb[0].mxu0
        %v3069 = vadd.f32 %v2890, %v3068
        %3070 = vdwg.mxu0
        %v3071 = vadd.f32 %v3023, %v2629
        %v3072 = vadd.f32 %v3025, %v2633
        %v3073 = vadd.f32 %v3027, %v2629
        %v3074 = vadd.f32 %v3029, %v2633
        %v3075 = vadd.f32 %v3033, %v2629
        %v3076 = vadd.f32 %v3035, %v2633
        %v3077 = vadd.f32 %v3037, %v2629
        %v3078 = vadd.f32 %v3039, %v2633
        %v3079 = vadd.f32 %v3043, %v2629
        %v3080 = vadd.f32 %v3045, %v2633
        %v3081 = vadd.f32 %v3047, %v2629
        %v3082 = vadd.f32 %v3049, %v2633
        %v3083 = vadd.f32 %v3053, %v2629
        %v3084 = vadd.f32 %v3055, %v2633
        %v3085 = vadd.f32 %v3057, %v2629
        %v3086 = vadd.f32 %v3059, %v2633
        %v3087 = vadd.f32 %v3063, %v2629
        %v3088 = vadd.f32 %v3065, %v2633
        %v3089 = vadd.f32 %v3067, %v2629
        %v3090 = vadd.f32 %v3069, %v2633
        %v3091 = vmax.f32 %v3071, 0.0
        %v3092 = vmax.f32 %v3072, 0.0
        %v3093 = vmax.f32 %v3073, 0.0
        %v3094 = vmax.f32 %v3074, 0.0
        %v3095 = vmax.f32 %v3075, 0.0
        %v3096 = vmax.f32 %v3076, 0.0
        %v3097 = vmax.f32 %v3077, 0.0
        %v3098 = vmax.f32 %v3078, 0.0
        %v3099 = vmax.f32 %v3079, 0.0
        %v3100 = vmax.f32 %v3080, 0.0
        %v3101 = vmax.f32 %v3081, 0.0
        %v3102 = vmax.f32 %v3082, 0.0
        %v3103 = vmax.f32 %v3083, 0.0
        %v3104 = vmax.f32 %v3084, 0.0
        %v3105 = vmax.f32 %v3085, 0.0
        %v3106 = vmax.f32 %v3086, 0.0
        %v3107 = vmax.f32 %v3087, 0.0
        %v3108 = vmax.f32 %v3088, 0.0
        %v3109 = vmax.f32 %v3089, 0.0
        %v3110 = vmax.f32 %v3090, 0.0
        %v3111 = vsel %vm2173, %v3091, 0.0
        %v3112 = vsel %vm2173, %v3092, 0.0
        %v3113 = vsel %vm2174, %v3093, 0.0
        %v3114 = vsel %vm2174, %v3094, 0.0
        %v3115 = vsel %vm2175, %v3095, 0.0
        %v3116 = vsel %vm2175, %v3096, 0.0
        %v3117 = vsel %vm2176, %v3097, 0.0
        %v3118 = vsel %vm2176, %v3098, 0.0
        %v3119 = vsel %vm2177, %v3099, 0.0
        %v3120 = vsel %vm2177, %v3100, 0.0
        %v3121 = vsel %vm2178, %v3101, 0.0
        %v3122 = vsel %vm2178, %v3102, 0.0
        %v3123 = vsel %vm2179, %v3103, 0.0
        %v3124 = vsel %vm2179, %v3104, 0.0
        %v3125 = vsel %vm2180, %v3105, 0.0
        %v3126 = vsel %vm2180, %v3106, 0.0
        %v3127 = vsel %vm2181, %v3107, 0.0
        %v3128 = vsel %vm2181, %v3108, 0.0
        %v3129 = vsel %vm2182, %v3109, 0.0
        %v3130 = vsel %vm2182, %v3110, 0.0
        %v3151 = vcombine.low %v2676, %v2677
        %v3152 = vcombine.high %v2676, %v2677
        %v3154 = vunpack.c.l.s4 1966171168
        %v3155 = vunpack.c.0.s8 %v3154
        %v3156 = vlaneseq
        %v3157 = vshrl.u32 %v3156, 7
        %v3158 = vsub.s32 %v3155, %v3157
        %v3159 = vrot.slane %v3151, %v3158
        %v3161 = vunpack.c.l.s4 1966171168
        %v3162 = vunpack.c.0.s8 %v3161
        %v3163 = vlaneseq
        %v3164 = vshrl.u32 %v3163, 7
        %v3165 = vsub.s32 %v3162, %v3164
        %v3166 = vrot.slane %v3152, %v3165
        %v3167 = vcombine.high %v3159, %v3159
        %v3168 = vcombine.high %v3166, %v3166
        %v3170 = vunpack.c.l.s4 1966171168
        %v3171 = vunpack.c.0.s8 %v3170
        %v3172 = vlaneseq
        %v3173 = vshrl.u32 %v3172, 7
        %v3174 = vsub.s32 %v3171, %v3173
        %v3175 = vrot.slane %v3159, %v3174
        %v3177 = vunpack.c.l.s4 1966171168
        %v3178 = vunpack.c.0.s8 %v3177
        %v3179 = vlaneseq
        %v3180 = vshrl.u32 %v3179, 7
        %v3181 = vsub.s32 %v3178, %v3180
        %v3182 = vrot.slane %v3166, %v3181
        %v3184 = vunpack.c.l.s4 1966171168
        %v3185 = vunpack.c.0.s8 %v3184
        %v3186 = vlaneseq
        %v3187 = vshrl.u32 %v3186, 7
        %v3188 = vsub.s32 %v3185, %v3187
        %v3189 = vrot.slane %v3167, %v3188
        %v3191 = vunpack.c.l.s4 1966171168
        %v3192 = vunpack.c.0.s8 %v3191
        %v3193 = vlaneseq
        %v3194 = vshrl.u32 %v3193, 7
        %v3195 = vsub.s32 %v3192, %v3194
        %v3196 = vrot.slane %v3168, %v3195
        %v3197 = vcombine.high %v3175, %v3175
        %v3198 = vcombine.high %v3182, %v3182
        %v3199 = vcombine.high %v3189, %v3189
        %v3200 = vcombine.high %v3196, %v3196
        %v3201 = vcombine.low %v2678, %v2679
        %v3202 = vcombine.high %v2678, %v2679
        %v3204 = vunpack.c.l.s4 1966171168
        %v3205 = vunpack.c.0.s8 %v3204
        %v3206 = vlaneseq
        %v3207 = vshrl.u32 %v3206, 7
        %v3208 = vsub.s32 %v3205, %v3207
        %v3209 = vrot.slane %v3201, %v3208
        %v3211 = vunpack.c.l.s4 1966171168
        %v3212 = vunpack.c.0.s8 %v3211
        %v3213 = vlaneseq
        %v3214 = vshrl.u32 %v3213, 7
        %v3215 = vsub.s32 %v3212, %v3214
        %v3216 = vrot.slane %v3202, %v3215
        %v3217 = vcombine.high %v3209, %v3209
        %v3218 = vcombine.high %v3216, %v3216
        %v3220 = vunpack.c.l.s4 1966171168
        %v3221 = vunpack.c.0.s8 %v3220
        %v3222 = vlaneseq
        %v3223 = vshrl.u32 %v3222, 7
        %v3224 = vsub.s32 %v3221, %v3223
        %v3225 = vrot.slane %v3209, %v3224
        %v3227 = vunpack.c.l.s4 1966171168
        %v3228 = vunpack.c.0.s8 %v3227
        %v3229 = vlaneseq
        %v3230 = vshrl.u32 %v3229, 7
        %v3231 = vsub.s32 %v3228, %v3230
        %v3232 = vrot.slane %v3216, %v3231
        %v3234 = vunpack.c.l.s4 1966171168
        %v3235 = vunpack.c.0.s8 %v3234
        %v3236 = vlaneseq
        %v3237 = vshrl.u32 %v3236, 7
        %v3238 = vsub.s32 %v3235, %v3237
        %v3239 = vrot.slane %v3217, %v3238
        %v3241 = vunpack.c.l.s4 1966171168
        %v3242 = vunpack.c.0.s8 %v3241
        %v3243 = vlaneseq
        %v3244 = vshrl.u32 %v3243, 7
        %v3245 = vsub.s32 %v3242, %v3244
        %v3246 = vrot.slane %v3218, %v3245
        %v3247 = vcombine.high %v3225, %v3225
        %v3248 = vcombine.high %v3232, %v3232
        %v3249 = vcombine.high %v3239, %v3239
        %v3250 = vcombine.high %v3246, %v3246
        %v3251 = vcombine.low %v2680, %v2681
        %v3252 = vcombine.high %v2680, %v2681
        %v3254 = vunpack.c.l.s4 1966171168
        %v3255 = vunpack.c.0.s8 %v3254
        %v3256 = vlaneseq
        %v3257 = vshrl.u32 %v3256, 7
        %v3258 = vsub.s32 %v3255, %v3257
        %v3259 = vrot.slane %v3251, %v3258
        %v3261 = vunpack.c.l.s4 1966171168
        %v3262 = vunpack.c.0.s8 %v3261
        %v3263 = vlaneseq
        %v3264 = vshrl.u32 %v3263, 7
        %v3265 = vsub.s32 %v3262, %v3264
        %v3266 = vrot.slane %v3252, %v3265
        %v3267 = vcombine.high %v3259, %v3259
        %v3268 = vcombine.high %v3266, %v3266
        %v3270 = vunpack.c.l.s4 1966171168
        %v3271 = vunpack.c.0.s8 %v3270
        %v3272 = vlaneseq
        %v3273 = vshrl.u32 %v3272, 7
        %v3274 = vsub.s32 %v3271, %v3273
        %v3275 = vrot.slane %v3259, %v3274
        %v3277 = vunpack.c.l.s4 1966171168
        %v3278 = vunpack.c.0.s8 %v3277
        %v3279 = vlaneseq
        %v3280 = vshrl.u32 %v3279, 7
        %v3281 = vsub.s32 %v3278, %v3280
        %v3282 = vrot.slane %v3266, %v3281
        %v3284 = vunpack.c.l.s4 1966171168
        %v3285 = vunpack.c.0.s8 %v3284
        %v3286 = vlaneseq
        %v3287 = vshrl.u32 %v3286, 7
        %v3288 = vsub.s32 %v3285, %v3287
        %v3289 = vrot.slane %v3267, %v3288
        %v3291 = vunpack.c.l.s4 1966171168
        %v3292 = vunpack.c.0.s8 %v3291
        %v3293 = vlaneseq
        %v3294 = vshrl.u32 %v3293, 7
        %v3295 = vsub.s32 %v3292, %v3294
        %v3296 = vrot.slane %v3268, %v3295
        %v3297 = vcombine.high %v3275, %v3275
        %v3298 = vcombine.high %v3282, %v3282
        %v3299 = vcombine.high %v3289, %v3289
        %v3300 = vcombine.high %v3296, %v3296
        %v3301 = vcombine.low %v2682, %v2683
        %v3302 = vcombine.high %v2682, %v2683
        %v3304 = vunpack.c.l.s4 1966171168
        %v3305 = vunpack.c.0.s8 %v3304
        %v3306 = vlaneseq
        %v3307 = vshrl.u32 %v3306, 7
        %v3308 = vsub.s32 %v3305, %v3307
        %v3309 = vrot.slane %v3301, %v3308
        %v3311 = vunpack.c.l.s4 1966171168
        %v3312 = vunpack.c.0.s8 %v3311
        %v3313 = vlaneseq
        %v3314 = vshrl.u32 %v3313, 7
        %v3315 = vsub.s32 %v3312, %v3314
        %v3316 = vrot.slane %v3302, %v3315
        %v3317 = vcombine.high %v3309, %v3309
        %v3318 = vcombine.high %v3316, %v3316
        %v3320 = vunpack.c.l.s4 1966171168
        %v3321 = vunpack.c.0.s8 %v3320
        %v3322 = vlaneseq
        %v3323 = vshrl.u32 %v3322, 7
        %v3324 = vsub.s32 %v3321, %v3323
        %v3325 = vrot.slane %v3309, %v3324
        %v3327 = vunpack.c.l.s4 1966171168
        %v3328 = vunpack.c.0.s8 %v3327
        %v3329 = vlaneseq
        %v3330 = vshrl.u32 %v3329, 7
        %v3331 = vsub.s32 %v3328, %v3330
        %v3332 = vrot.slane %v3316, %v3331
        %v3334 = vunpack.c.l.s4 1966171168
        %v3335 = vunpack.c.0.s8 %v3334
        %v3336 = vlaneseq
        %v3337 = vshrl.u32 %v3336, 7
        %v3338 = vsub.s32 %v3335, %v3337
        %v3339 = vrot.slane %v3317, %v3338
        %v3341 = vunpack.c.l.s4 1966171168
        %v3342 = vunpack.c.0.s8 %v3341
        %v3343 = vlaneseq
        %v3344 = vshrl.u32 %v3343, 7
        %v3345 = vsub.s32 %v3342, %v3344
        %v3346 = vrot.slane %v3318, %v3345
        %v3347 = vcombine.high %v3325, %v3325
        %v3348 = vcombine.high %v3332, %v3332
        %v3349 = vcombine.high %v3339, %v3339
        %v3350 = vcombine.high %v3346, %v3346
        %v3351 = vcombine.low %v2684, %v2685
        %v3352 = vcombine.high %v2684, %v2685
        %v3354 = vunpack.c.l.s4 1966171168
        %v3355 = vunpack.c.0.s8 %v3354
        %v3356 = vlaneseq
        %v3357 = vshrl.u32 %v3356, 7
        %v3358 = vsub.s32 %v3355, %v3357
        %v3359 = vrot.slane %v3351, %v3358
        %v3361 = vunpack.c.l.s4 1966171168
        %v3362 = vunpack.c.0.s8 %v3361
        %v3363 = vlaneseq
        %v3364 = vshrl.u32 %v3363, 7
        %v3365 = vsub.s32 %v3362, %v3364
        %v3366 = vrot.slane %v3352, %v3365
        %v3367 = vcombine.high %v3359, %v3359
        %v3368 = vcombine.high %v3366, %v3366
        %v3370 = vunpack.c.l.s4 1966171168
        %v3371 = vunpack.c.0.s8 %v3370
        %v3372 = vlaneseq
        %v3373 = vshrl.u32 %v3372, 7
        %v3374 = vsub.s32 %v3371, %v3373
        %v3375 = vrot.slane %v3359, %v3374
        %v3377 = vunpack.c.l.s4 1966171168
        %v3378 = vunpack.c.0.s8 %v3377
        %v3379 = vlaneseq
        %v3380 = vshrl.u32 %v3379, 7
        %v3381 = vsub.s32 %v3378, %v3380
        %v3382 = vrot.slane %v3366, %v3381
        %v3384 = vunpack.c.l.s4 1966171168
        %v3385 = vunpack.c.0.s8 %v3384
        %v3386 = vlaneseq
        %v3387 = vshrl.u32 %v3386, 7
        %v3388 = vsub.s32 %v3385, %v3387
        %v3389 = vrot.slane %v3367, %v3388
        %v3391 = vunpack.c.l.s4 1966171168
        %v3392 = vunpack.c.0.s8 %v3391
        %v3393 = vlaneseq
        %v3394 = vshrl.u32 %v3393, 7
        %v3395 = vsub.s32 %v3392, %v3394
        %v3396 = vrot.slane %v3368, %v3395
        %v3397 = vcombine.high %v3375, %v3375
        %v3398 = vcombine.high %v3382, %v3382
        %v3399 = vcombine.high %v3389, %v3389
        %v3400 = vcombine.high %v3396, %v3396
        %v3401 = vcombine.low %v2686, %v2687
        %v3402 = vcombine.high %v2686, %v2687
        %v3404 = vunpack.c.l.s4 1966171168
        %v3405 = vunpack.c.0.s8 %v3404
        %v3406 = vlaneseq
        %v3407 = vshrl.u32 %v3406, 7
        %v3408 = vsub.s32 %v3405, %v3407
        %v3409 = vrot.slane %v3401, %v3408
        %v3411 = vunpack.c.l.s4 1966171168
        %v3412 = vunpack.c.0.s8 %v3411
        %v3413 = vlaneseq
        %v3414 = vshrl.u32 %v3413, 7
        %v3415 = vsub.s32 %v3412, %v3414
        %v3416 = vrot.slane %v3402, %v3415
        %v3417 = vcombine.high %v3409, %v3409
        %v3418 = vcombine.high %v3416, %v3416
        %v3420 = vunpack.c.l.s4 1966171168
        %v3421 = vunpack.c.0.s8 %v3420
        %v3422 = vlaneseq
        %v3423 = vshrl.u32 %v3422, 7
        %v3424 = vsub.s32 %v3421, %v3423
        %v3425 = vrot.slane %v3409, %v3424
        %v3427 = vunpack.c.l.s4 1966171168
        %v3428 = vunpack.c.0.s8 %v3427
        %v3429 = vlaneseq
        %v3430 = vshrl.u32 %v3429, 7
        %v3431 = vsub.s32 %v3428, %v3430
        %v3432 = vrot.slane %v3416, %v3431
        %v3434 = vunpack.c.l.s4 1966171168
        %v3435 = vunpack.c.0.s8 %v3434
        %v3436 = vlaneseq
        %v3437 = vshrl.u32 %v3436, 7
        %v3438 = vsub.s32 %v3435, %v3437
        %v3439 = vrot.slane %v3417, %v3438
        %v3441 = vunpack.c.l.s4 1966171168
        %v3442 = vunpack.c.0.s8 %v3441
        %v3443 = vlaneseq
        %v3444 = vshrl.u32 %v3443, 7
        %v3445 = vsub.s32 %v3442, %v3444
        %v3446 = vrot.slane %v3418, %v3445
        %v3447 = vcombine.high %v3425, %v3425
        %v3448 = vcombine.high %v3432, %v3432
        %v3449 = vcombine.high %v3439, %v3439
        %v3450 = vcombine.high %v3446, %v3446
        %v3451 = vcombine.low %v2688, %v2689
        %v3452 = vcombine.high %v2688, %v2689
        %v3454 = vunpack.c.l.s4 1966171168
        %v3455 = vunpack.c.0.s8 %v3454
        %v3456 = vlaneseq
        %v3457 = vshrl.u32 %v3456, 7
        %v3458 = vsub.s32 %v3455, %v3457
        %v3459 = vrot.slane %v3451, %v3458
        %v3461 = vunpack.c.l.s4 1966171168
        %v3462 = vunpack.c.0.s8 %v3461
        %v3463 = vlaneseq
        %v3464 = vshrl.u32 %v3463, 7
        %v3465 = vsub.s32 %v3462, %v3464
        %v3466 = vrot.slane %v3452, %v3465
        %v3467 = vcombine.high %v3459, %v3459
        %v3468 = vcombine.high %v3466, %v3466
        %v3470 = vunpack.c.l.s4 1966171168
        %v3471 = vunpack.c.0.s8 %v3470
        %v3472 = vlaneseq
        %v3473 = vshrl.u32 %v3472, 7
        %v3474 = vsub.s32 %v3471, %v3473
        %v3475 = vrot.slane %v3459, %v3474
        %v3477 = vunpack.c.l.s4 1966171168
        %v3478 = vunpack.c.0.s8 %v3477
        %v3479 = vlaneseq
        %v3480 = vshrl.u32 %v3479, 7
        %v3481 = vsub.s32 %v3478, %v3480
        %v3482 = vrot.slane %v3466, %v3481
        %v3484 = vunpack.c.l.s4 1966171168
        %v3485 = vunpack.c.0.s8 %v3484
        %v3486 = vlaneseq
        %v3487 = vshrl.u32 %v3486, 7
        %v3488 = vsub.s32 %v3485, %v3487
        %v3489 = vrot.slane %v3467, %v3488
        %v3491 = vunpack.c.l.s4 1966171168
        %v3492 = vunpack.c.0.s8 %v3491
        %v3493 = vlaneseq
        %v3494 = vshrl.u32 %v3493, 7
        %v3495 = vsub.s32 %v3492, %v3494
        %v3496 = vrot.slane %v3468, %v3495
        %v3497 = vcombine.high %v3475, %v3475
        %v3498 = vcombine.high %v3482, %v3482
        %v3499 = vcombine.high %v3489, %v3489
        %v3500 = vcombine.high %v3496, %v3496
        %v3501 = vcombine.low %v2690, %v2691
        %v3502 = vcombine.high %v2690, %v2691
        %v3504 = vunpack.c.l.s4 1966171168
        %v3505 = vunpack.c.0.s8 %v3504
        %v3506 = vlaneseq
        %v3507 = vshrl.u32 %v3506, 7
        %v3508 = vsub.s32 %v3505, %v3507
        %v3509 = vrot.slane %v3501, %v3508
        %v3511 = vunpack.c.l.s4 1966171168
        %v3512 = vunpack.c.0.s8 %v3511
        %v3513 = vlaneseq
        %v3514 = vshrl.u32 %v3513, 7
        %v3515 = vsub.s32 %v3512, %v3514
        %v3516 = vrot.slane %v3502, %v3515
        %v3517 = vcombine.high %v3509, %v3509
        %v3518 = vcombine.high %v3516, %v3516
        %v3520 = vunpack.c.l.s4 1966171168
        %v3521 = vunpack.c.0.s8 %v3520
        %v3522 = vlaneseq
        %v3523 = vshrl.u32 %v3522, 7
        %v3524 = vsub.s32 %v3521, %v3523
        %v3525 = vrot.slane %v3509, %v3524
        %v3527 = vunpack.c.l.s4 1966171168
        %v3528 = vunpack.c.0.s8 %v3527
        %v3529 = vlaneseq
        %v3530 = vshrl.u32 %v3529, 7
        %v3531 = vsub.s32 %v3528, %v3530
        %v3532 = vrot.slane %v3516, %v3531
        %v3534 = vunpack.c.l.s4 1966171168
        %v3535 = vunpack.c.0.s8 %v3534
        %v3536 = vlaneseq
        %v3537 = vshrl.u32 %v3536, 7
        %v3538 = vsub.s32 %v3535, %v3537
        %v3539 = vrot.slane %v3517, %v3538
        %v3541 = vunpack.c.l.s4 1966171168
        %v3542 = vunpack.c.0.s8 %v3541
        %v3543 = vlaneseq
        %v3544 = vshrl.u32 %v3543, 7
        %v3545 = vsub.s32 %v3542, %v3544
        %v3546 = vrot.slane %v3518, %v3545
        %v3547 = vcombine.high %v3525, %v3525
        %v3548 = vcombine.high %v3532, %v3532
        %v3549 = vcombine.high %v3539, %v3539
        %v3550 = vcombine.high %v3546, %v3546
        %v3551 = vcombine.low %v2692, %v2693
        %v3552 = vcombine.high %v2692, %v2693
        %v3554 = vunpack.c.l.s4 1966171168
        %v3555 = vunpack.c.0.s8 %v3554
        %v3556 = vlaneseq
        %v3557 = vshrl.u32 %v3556, 7
        %v3558 = vsub.s32 %v3555, %v3557
        %v3559 = vrot.slane %v3551, %v3558
        %v3561 = vunpack.c.l.s4 1966171168
        %v3562 = vunpack.c.0.s8 %v3561
        %v3563 = vlaneseq
        %v3564 = vshrl.u32 %v3563, 7
        %v3565 = vsub.s32 %v3562, %v3564
        %v3566 = vrot.slane %v3552, %v3565
        %v3567 = vcombine.high %v3559, %v3559
        %v3568 = vcombine.high %v3566, %v3566
        %v3570 = vunpack.c.l.s4 1966171168
        %v3571 = vunpack.c.0.s8 %v3570
        %v3572 = vlaneseq
        %v3573 = vshrl.u32 %v3572, 7
        %v3574 = vsub.s32 %v3571, %v3573
        %v3575 = vrot.slane %v3559, %v3574
        %v3577 = vunpack.c.l.s4 1966171168
        %v3578 = vunpack.c.0.s8 %v3577
        %v3579 = vlaneseq
        %v3580 = vshrl.u32 %v3579, 7
        %v3581 = vsub.s32 %v3578, %v3580
        %v3582 = vrot.slane %v3566, %v3581
        %v3584 = vunpack.c.l.s4 1966171168
        %v3585 = vunpack.c.0.s8 %v3584
        %v3586 = vlaneseq
        %v3587 = vshrl.u32 %v3586, 7
        %v3588 = vsub.s32 %v3585, %v3587
        %v3589 = vrot.slane %v3567, %v3588
        %v3591 = vunpack.c.l.s4 1966171168
        %v3592 = vunpack.c.0.s8 %v3591
        %v3593 = vlaneseq
        %v3594 = vshrl.u32 %v3593, 7
        %v3595 = vsub.s32 %v3592, %v3594
        %v3596 = vrot.slane %v3568, %v3595
        %v3597 = vcombine.high %v3575, %v3575
        %v3598 = vcombine.high %v3582, %v3582
        %v3599 = vcombine.high %v3589, %v3589
        %v3600 = vcombine.high %v3596, %v3596
        %v3601 = vcombine.low %v2694, %v2695
        %v3602 = vcombine.high %v2694, %v2695
        %v3604 = vunpack.c.l.s4 1966171168
        %v3605 = vunpack.c.0.s8 %v3604
        %v3606 = vlaneseq
        %v3607 = vshrl.u32 %v3606, 7
        %v3608 = vsub.s32 %v3605, %v3607
        %v3609 = vrot.slane %v3601, %v3608
        %v3611 = vunpack.c.l.s4 1966171168
        %v3612 = vunpack.c.0.s8 %v3611
        %v3613 = vlaneseq
        %v3614 = vshrl.u32 %v3613, 7
        %v3615 = vsub.s32 %v3612, %v3614
        %v3616 = vrot.slane %v3602, %v3615
        %v3617 = vcombine.high %v3609, %v3609
        %v3618 = vcombine.high %v3616, %v3616
        %v3620 = vunpack.c.l.s4 1966171168
        %v3621 = vunpack.c.0.s8 %v3620
        %v3622 = vlaneseq
        %v3623 = vshrl.u32 %v3622, 7
        %v3624 = vsub.s32 %v3621, %v3623
        %v3625 = vrot.slane %v3609, %v3624
        %v3627 = vunpack.c.l.s4 1966171168
        %v3628 = vunpack.c.0.s8 %v3627
        %v3629 = vlaneseq
        %v3630 = vshrl.u32 %v3629, 7
        %v3631 = vsub.s32 %v3628, %v3630
        %v3632 = vrot.slane %v3616, %v3631
        %v3634 = vunpack.c.l.s4 1966171168
        %v3635 = vunpack.c.0.s8 %v3634
        %v3636 = vlaneseq
        %v3637 = vshrl.u32 %v3636, 7
        %v3638 = vsub.s32 %v3635, %v3637
        %v3639 = vrot.slane %v3617, %v3638
        %v3641 = vunpack.c.l.s4 1966171168
        %v3642 = vunpack.c.0.s8 %v3641
        %v3643 = vlaneseq
        %v3644 = vshrl.u32 %v3643, 7
        %v3645 = vsub.s32 %v3642, %v3644
        %v3646 = vrot.slane %v3618, %v3645
        %v3647 = vcombine.high %v3625, %v3625
        %v3648 = vcombine.high %v3632, %v3632
        %v3649 = vcombine.high %v3639, %v3639
        %v3650 = vcombine.high %v3646, %v3646
        %v3671 = vcombine.low %v3111, %v3112
        %v3672 = vcombine.high %v3111, %v3112
        %v3674 = vunpack.c.l.s4 1966171168
        %v3675 = vunpack.c.0.s8 %v3674
        %v3676 = vlaneseq
        %v3677 = vshrl.u32 %v3676, 7
        %v3678 = vsub.s32 %v3675, %v3677
        %v3679 = vrot.slane %v3671, %v3678
        %v3681 = vunpack.c.l.s4 1966171168
        %v3682 = vunpack.c.0.s8 %v3681
        %v3683 = vlaneseq
        %v3684 = vshrl.u32 %v3683, 7
        %v3685 = vsub.s32 %v3682, %v3684
        %v3686 = vrot.slane %v3672, %v3685
        %v3687 = vcombine.high %v3679, %v3679
        %v3688 = vcombine.high %v3686, %v3686
        %v3690 = vunpack.c.l.s4 1966171168
        %v3691 = vunpack.c.0.s8 %v3690
        %v3692 = vlaneseq
        %v3693 = vshrl.u32 %v3692, 7
        %v3694 = vsub.s32 %v3691, %v3693
        %v3695 = vrot.slane %v3679, %v3694
        %v3697 = vunpack.c.l.s4 1966171168
        %v3698 = vunpack.c.0.s8 %v3697
        %v3699 = vlaneseq
        %v3700 = vshrl.u32 %v3699, 7
        %v3701 = vsub.s32 %v3698, %v3700
        %v3702 = vrot.slane %v3686, %v3701
        %v3704 = vunpack.c.l.s4 1966171168
        %v3705 = vunpack.c.0.s8 %v3704
        %v3706 = vlaneseq
        %v3707 = vshrl.u32 %v3706, 7
        %v3708 = vsub.s32 %v3705, %v3707
        %v3709 = vrot.slane %v3687, %v3708
        %v3711 = vunpack.c.l.s4 1966171168
        %v3712 = vunpack.c.0.s8 %v3711
        %v3713 = vlaneseq
        %v3714 = vshrl.u32 %v3713, 7
        %v3715 = vsub.s32 %v3712, %v3714
        %v3716 = vrot.slane %v3688, %v3715
        %v3717 = vcombine.high %v3695, %v3695
        %v3718 = vcombine.high %v3702, %v3702
        %v3719 = vcombine.high %v3709, %v3709
        %v3720 = vcombine.high %v3716, %v3716
        %v3721 = vcombine.low %v3113, %v3114
        %v3722 = vcombine.high %v3113, %v3114
        %v3724 = vunpack.c.l.s4 1966171168
        %v3725 = vunpack.c.0.s8 %v3724
        %v3726 = vlaneseq
        %v3727 = vshrl.u32 %v3726, 7
        %v3728 = vsub.s32 %v3725, %v3727
        %v3729 = vrot.slane %v3721, %v3728
        %v3731 = vunpack.c.l.s4 1966171168
        %v3732 = vunpack.c.0.s8 %v3731
        %v3733 = vlaneseq
        %v3734 = vshrl.u32 %v3733, 7
        %v3735 = vsub.s32 %v3732, %v3734
        %v3736 = vrot.slane %v3722, %v3735
        %v3737 = vcombine.high %v3729, %v3729
        %v3738 = vcombine.high %v3736, %v3736
        %v3740 = vunpack.c.l.s4 1966171168
        %v3741 = vunpack.c.0.s8 %v3740
        %v3742 = vlaneseq
        %v3743 = vshrl.u32 %v3742, 7
        %v3744 = vsub.s32 %v3741, %v3743
        %v3745 = vrot.slane %v3729, %v3744
        %v3747 = vunpack.c.l.s4 1966171168
        %v3748 = vunpack.c.0.s8 %v3747
        %v3749 = vlaneseq
        %v3750 = vshrl.u32 %v3749, 7
        %v3751 = vsub.s32 %v3748, %v3750
        %v3752 = vrot.slane %v3736, %v3751
        %v3754 = vunpack.c.l.s4 1966171168
        %v3755 = vunpack.c.0.s8 %v3754
        %v3756 = vlaneseq
        %v3757 = vshrl.u32 %v3756, 7
        %v3758 = vsub.s32 %v3755, %v3757
        %v3759 = vrot.slane %v3737, %v3758
        %v3761 = vunpack.c.l.s4 1966171168
        %v3762 = vunpack.c.0.s8 %v3761
        %v3763 = vlaneseq
        %v3764 = vshrl.u32 %v3763, 7
        %v3765 = vsub.s32 %v3762, %v3764
        %v3766 = vrot.slane %v3738, %v3765
        %v3767 = vcombine.high %v3745, %v3745
        %v3768 = vcombine.high %v3752, %v3752
        %v3769 = vcombine.high %v3759, %v3759
        %v3770 = vcombine.high %v3766, %v3766
        %v3771 = vcombine.low %v3115, %v3116
        %v3772 = vcombine.high %v3115, %v3116
        %v3774 = vunpack.c.l.s4 1966171168
        %v3775 = vunpack.c.0.s8 %v3774
        %v3776 = vlaneseq
        %v3777 = vshrl.u32 %v3776, 7
        %v3778 = vsub.s32 %v3775, %v3777
        %v3779 = vrot.slane %v3771, %v3778
        %v3781 = vunpack.c.l.s4 1966171168
        %v3782 = vunpack.c.0.s8 %v3781
        %v3783 = vlaneseq
        %v3784 = vshrl.u32 %v3783, 7
        %v3785 = vsub.s32 %v3782, %v3784
        %v3786 = vrot.slane %v3772, %v3785
        %v3787 = vcombine.high %v3779, %v3779
        %v3788 = vcombine.high %v3786, %v3786
        %v3790 = vunpack.c.l.s4 1966171168
        %v3791 = vunpack.c.0.s8 %v3790
        %v3792 = vlaneseq
        %v3793 = vshrl.u32 %v3792, 7
        %v3794 = vsub.s32 %v3791, %v3793
        %v3795 = vrot.slane %v3779, %v3794
        %v3797 = vunpack.c.l.s4 1966171168
        %v3798 = vunpack.c.0.s8 %v3797
        %v3799 = vlaneseq
        %v3800 = vshrl.u32 %v3799, 7
        %v3801 = vsub.s32 %v3798, %v3800
        %v3802 = vrot.slane %v3786, %v3801
        %v3804 = vunpack.c.l.s4 1966171168
        %v3805 = vunpack.c.0.s8 %v3804
        %v3806 = vlaneseq
        %v3807 = vshrl.u32 %v3806, 7
        %v3808 = vsub.s32 %v3805, %v3807
        %v3809 = vrot.slane %v3787, %v3808
        %v3811 = vunpack.c.l.s4 1966171168
        %v3812 = vunpack.c.0.s8 %v3811
        %v3813 = vlaneseq
        %v3814 = vshrl.u32 %v3813, 7
        %v3815 = vsub.s32 %v3812, %v3814
        %v3816 = vrot.slane %v3788, %v3815
        %v3817 = vcombine.high %v3795, %v3795
        %v3818 = vcombine.high %v3802, %v3802
        %v3819 = vcombine.high %v3809, %v3809
        %v3820 = vcombine.high %v3816, %v3816
        %v3821 = vcombine.low %v3117, %v3118
        %v3822 = vcombine.high %v3117, %v3118
        %v3824 = vunpack.c.l.s4 1966171168
        %v3825 = vunpack.c.0.s8 %v3824
        %v3826 = vlaneseq
        %v3827 = vshrl.u32 %v3826, 7
        %v3828 = vsub.s32 %v3825, %v3827
        %v3829 = vrot.slane %v3821, %v3828
        %v3831 = vunpack.c.l.s4 1966171168
        %v3832 = vunpack.c.0.s8 %v3831
        %v3833 = vlaneseq
        %v3834 = vshrl.u32 %v3833, 7
        %v3835 = vsub.s32 %v3832, %v3834
        %v3836 = vrot.slane %v3822, %v3835
        %v3837 = vcombine.high %v3829, %v3829
        %v3838 = vcombine.high %v3836, %v3836
        %v3840 = vunpack.c.l.s4 1966171168
        %v3841 = vunpack.c.0.s8 %v3840
        %v3842 = vlaneseq
        %v3843 = vshrl.u32 %v3842, 7
        %v3844 = vsub.s32 %v3841, %v3843
        %v3845 = vrot.slane %v3829, %v3844
        %v3847 = vunpack.c.l.s4 1966171168
        %v3848 = vunpack.c.0.s8 %v3847
        %v3849 = vlaneseq
        %v3850 = vshrl.u32 %v3849, 7
        %v3851 = vsub.s32 %v3848, %v3850
        %v3852 = vrot.slane %v3836, %v3851
        %v3854 = vunpack.c.l.s4 1966171168
        %v3855 = vunpack.c.0.s8 %v3854
        %v3856 = vlaneseq
        %v3857 = vshrl.u32 %v3856, 7
        %v3858 = vsub.s32 %v3855, %v3857
        %v3859 = vrot.slane %v3837, %v3858
        %v3861 = vunpack.c.l.s4 1966171168
        %v3862 = vunpack.c.0.s8 %v3861
        %v3863 = vlaneseq
        %v3864 = vshrl.u32 %v3863, 7
        %v3865 = vsub.s32 %v3862, %v3864
        %v3866 = vrot.slane %v3838, %v3865
        %v3867 = vcombine.high %v3845, %v3845
        %v3868 = vcombine.high %v3852, %v3852
        %v3869 = vcombine.high %v3859, %v3859
        %v3870 = vcombine.high %v3866, %v3866
        %v3871 = vcombine.low %v3119, %v3120
        %v3872 = vcombine.high %v3119, %v3120
        %v3874 = vunpack.c.l.s4 1966171168
        %v3875 = vunpack.c.0.s8 %v3874
        %v3876 = vlaneseq
        %v3877 = vshrl.u32 %v3876, 7
        %v3878 = vsub.s32 %v3875, %v3877
        %v3879 = vrot.slane %v3871, %v3878
        %v3881 = vunpack.c.l.s4 1966171168
        %v3882 = vunpack.c.0.s8 %v3881
        %v3883 = vlaneseq
        %v3884 = vshrl.u32 %v3883, 7
        %v3885 = vsub.s32 %v3882, %v3884
        %v3886 = vrot.slane %v3872, %v3885
        %v3887 = vcombine.high %v3879, %v3879
        %v3888 = vcombine.high %v3886, %v3886
        %v3890 = vunpack.c.l.s4 1966171168
        %v3891 = vunpack.c.0.s8 %v3890
        %v3892 = vlaneseq
        %v3893 = vshrl.u32 %v3892, 7
        %v3894 = vsub.s32 %v3891, %v3893
        %v3895 = vrot.slane %v3879, %v3894
        %v3897 = vunpack.c.l.s4 1966171168
        %v3898 = vunpack.c.0.s8 %v3897
        %v3899 = vlaneseq
        %v3900 = vshrl.u32 %v3899, 7
        %v3901 = vsub.s32 %v3898, %v3900
        %v3902 = vrot.slane %v3886, %v3901
        %v3904 = vunpack.c.l.s4 1966171168
        %v3905 = vunpack.c.0.s8 %v3904
        %v3906 = vlaneseq
        %v3907 = vshrl.u32 %v3906, 7
        %v3908 = vsub.s32 %v3905, %v3907
        %v3909 = vrot.slane %v3887, %v3908
        %v3911 = vunpack.c.l.s4 1966171168
        %v3912 = vunpack.c.0.s8 %v3911
        %v3913 = vlaneseq
        %v3914 = vshrl.u32 %v3913, 7
        %v3915 = vsub.s32 %v3912, %v3914
        %v3916 = vrot.slane %v3888, %v3915
        %v3917 = vcombine.high %v3895, %v3895
        %v3918 = vcombine.high %v3902, %v3902
        %v3919 = vcombine.high %v3909, %v3909
        %v3920 = vcombine.high %v3916, %v3916
        %v3921 = vcombine.low %v3121, %v3122
        %v3922 = vcombine.high %v3121, %v3122
        %v3924 = vunpack.c.l.s4 1966171168
        %v3925 = vunpack.c.0.s8 %v3924
        %v3926 = vlaneseq
        %v3927 = vshrl.u32 %v3926, 7
        %v3928 = vsub.s32 %v3925, %v3927
        %v3929 = vrot.slane %v3921, %v3928
        %v3931 = vunpack.c.l.s4 1966171168
        %v3932 = vunpack.c.0.s8 %v3931
        %v3933 = vlaneseq
        %v3934 = vshrl.u32 %v3933, 7
        %v3935 = vsub.s32 %v3932, %v3934
        %v3936 = vrot.slane %v3922, %v3935
        %v3937 = vcombine.high %v3929, %v3929
        %v3938 = vcombine.high %v3936, %v3936
        %v3940 = vunpack.c.l.s4 1966171168
        %v3941 = vunpack.c.0.s8 %v3940
        %v3942 = vlaneseq
        %v3943 = vshrl.u32 %v3942, 7
        %v3944 = vsub.s32 %v3941, %v3943
        %v3945 = vrot.slane %v3929, %v3944
        %v3947 = vunpack.c.l.s4 1966171168
        %v3948 = vunpack.c.0.s8 %v3947
        %v3949 = vlaneseq
        %v3950 = vshrl.u32 %v3949, 7
        %v3951 = vsub.s32 %v3948, %v3950
        %v3952 = vrot.slane %v3936, %v3951
        %v3954 = vunpack.c.l.s4 1966171168
        %v3955 = vunpack.c.0.s8 %v3954
        %v3956 = vlaneseq
        %v3957 = vshrl.u32 %v3956, 7
        %v3958 = vsub.s32 %v3955, %v3957
        %v3959 = vrot.slane %v3937, %v3958
        %v3961 = vunpack.c.l.s4 1966171168
        %v3962 = vunpack.c.0.s8 %v3961
        %v3963 = vlaneseq
        %v3964 = vshrl.u32 %v3963, 7
        %v3965 = vsub.s32 %v3962, %v3964
        %v3966 = vrot.slane %v3938, %v3965
        %v3967 = vcombine.high %v3945, %v3945
        %v3968 = vcombine.high %v3952, %v3952
        %v3969 = vcombine.high %v3959, %v3959
        %v3970 = vcombine.high %v3966, %v3966
        %v3971 = vcombine.low %v3123, %v3124
        %v3972 = vcombine.high %v3123, %v3124
        %v3974 = vunpack.c.l.s4 1966171168
        %v3975 = vunpack.c.0.s8 %v3974
        %v3976 = vlaneseq
        %v3977 = vshrl.u32 %v3976, 7
        %v3978 = vsub.s32 %v3975, %v3977
        %v3979 = vrot.slane %v3971, %v3978
        %v3981 = vunpack.c.l.s4 1966171168
        %v3982 = vunpack.c.0.s8 %v3981
        %v3983 = vlaneseq
        %v3984 = vshrl.u32 %v3983, 7
        %v3985 = vsub.s32 %v3982, %v3984
        %v3986 = vrot.slane %v3972, %v3985
        %v3987 = vcombine.high %v3979, %v3979
        %v3988 = vcombine.high %v3986, %v3986
        %v3990 = vunpack.c.l.s4 1966171168
        %v3991 = vunpack.c.0.s8 %v3990
        %v3992 = vlaneseq
        %v3993 = vshrl.u32 %v3992, 7
        %v3994 = vsub.s32 %v3991, %v3993
        %v3995 = vrot.slane %v3979, %v3994
        %v3997 = vunpack.c.l.s4 1966171168
        %v3998 = vunpack.c.0.s8 %v3997
        %v3999 = vlaneseq
        %v4000 = vshrl.u32 %v3999, 7
        %v4001 = vsub.s32 %v3998, %v4000
        %v4002 = vrot.slane %v3986, %v4001
        %v4004 = vunpack.c.l.s4 1966171168
        %v4005 = vunpack.c.0.s8 %v4004
        %v4006 = vlaneseq
        %v4007 = vshrl.u32 %v4006, 7
        %v4008 = vsub.s32 %v4005, %v4007
        %v4009 = vrot.slane %v3987, %v4008
        %v4011 = vunpack.c.l.s4 1966171168
        %v4012 = vunpack.c.0.s8 %v4011
        %v4013 = vlaneseq
        %v4014 = vshrl.u32 %v4013, 7
        %v4015 = vsub.s32 %v4012, %v4014
        %v4016 = vrot.slane %v3988, %v4015
        %v4017 = vcombine.high %v3995, %v3995
        %v4018 = vcombine.high %v4002, %v4002
        %v4019 = vcombine.high %v4009, %v4009
        %v4020 = vcombine.high %v4016, %v4016
        %v4021 = vcombine.low %v3125, %v3126
        %v4022 = vcombine.high %v3125, %v3126
        %v4024 = vunpack.c.l.s4 1966171168
        %v4025 = vunpack.c.0.s8 %v4024
        %v4026 = vlaneseq
        %v4027 = vshrl.u32 %v4026, 7
        %v4028 = vsub.s32 %v4025, %v4027
        %v4029 = vrot.slane %v4021, %v4028
        %v4031 = vunpack.c.l.s4 1966171168
        %v4032 = vunpack.c.0.s8 %v4031
        %v4033 = vlaneseq
        %v4034 = vshrl.u32 %v4033, 7
        %v4035 = vsub.s32 %v4032, %v4034
        %v4036 = vrot.slane %v4022, %v4035
        %v4037 = vcombine.high %v4029, %v4029
        %v4038 = vcombine.high %v4036, %v4036
        %v4040 = vunpack.c.l.s4 1966171168
        %v4041 = vunpack.c.0.s8 %v4040
        %v4042 = vlaneseq
        %v4043 = vshrl.u32 %v4042, 7
        %v4044 = vsub.s32 %v4041, %v4043
        %v4045 = vrot.slane %v4029, %v4044
        %v4047 = vunpack.c.l.s4 1966171168
        %v4048 = vunpack.c.0.s8 %v4047
        %v4049 = vlaneseq
        %v4050 = vshrl.u32 %v4049, 7
        %v4051 = vsub.s32 %v4048, %v4050
        %v4052 = vrot.slane %v4036, %v4051
        %v4054 = vunpack.c.l.s4 1966171168
        %v4055 = vunpack.c.0.s8 %v4054
        %v4056 = vlaneseq
        %v4057 = vshrl.u32 %v4056, 7
        %v4058 = vsub.s32 %v4055, %v4057
        %v4059 = vrot.slane %v4037, %v4058
        %v4061 = vunpack.c.l.s4 1966171168
        %v4062 = vunpack.c.0.s8 %v4061
        %v4063 = vlaneseq
        %v4064 = vshrl.u32 %v4063, 7
        %v4065 = vsub.s32 %v4062, %v4064
        %v4066 = vrot.slane %v4038, %v4065
        %v4067 = vcombine.high %v4045, %v4045
        %v4068 = vcombine.high %v4052, %v4052
        %v4069 = vcombine.high %v4059, %v4059
        %v4070 = vcombine.high %v4066, %v4066
        %v4071 = vcombine.low %v3127, %v3128
        %v4072 = vcombine.high %v3127, %v3128
        %v4074 = vunpack.c.l.s4 1966171168
        %v4075 = vunpack.c.0.s8 %v4074
        %v4076 = vlaneseq
        %v4077 = vshrl.u32 %v4076, 7
        %v4078 = vsub.s32 %v4075, %v4077
        %v4079 = vrot.slane %v4071, %v4078
        %v4081 = vunpack.c.l.s4 1966171168
        %v4082 = vunpack.c.0.s8 %v4081
        %v4083 = vlaneseq
        %v4084 = vshrl.u32 %v4083, 7
        %v4085 = vsub.s32 %v4082, %v4084
        %v4086 = vrot.slane %v4072, %v4085
        %v4087 = vcombine.high %v4079, %v4079
        %v4088 = vcombine.high %v4086, %v4086
        %v4090 = vunpack.c.l.s4 1966171168
        %v4091 = vunpack.c.0.s8 %v4090
        %v4092 = vlaneseq
        %v4093 = vshrl.u32 %v4092, 7
        %v4094 = vsub.s32 %v4091, %v4093
        %v4095 = vrot.slane %v4079, %v4094
        %v4097 = vunpack.c.l.s4 1966171168
        %v4098 = vunpack.c.0.s8 %v4097
        %v4099 = vlaneseq
        %v4100 = vshrl.u32 %v4099, 7
        %v4101 = vsub.s32 %v4098, %v4100
        %v4102 = vrot.slane %v4086, %v4101
        %v4104 = vunpack.c.l.s4 1966171168
        %v4105 = vunpack.c.0.s8 %v4104
        %v4106 = vlaneseq
        %v4107 = vshrl.u32 %v4106, 7
        %v4108 = vsub.s32 %v4105, %v4107
        %v4109 = vrot.slane %v4087, %v4108
        %v4111 = vunpack.c.l.s4 1966171168
        %v4112 = vunpack.c.0.s8 %v4111
        %v4113 = vlaneseq
        %v4114 = vshrl.u32 %v4113, 7
        %v4115 = vsub.s32 %v4112, %v4114
        %v4116 = vrot.slane %v4088, %v4115
        %v4117 = vcombine.high %v4095, %v4095
        %v4118 = vcombine.high %v4102, %v4102
        %v4119 = vcombine.high %v4109, %v4109
        %v4120 = vcombine.high %v4116, %v4116
        %v4121 = vcombine.low %v3129, %v3130
        %v4122 = vcombine.high %v3129, %v3130
        %v4124 = vunpack.c.l.s4 1966171168
        %v4125 = vunpack.c.0.s8 %v4124
        %v4126 = vlaneseq
        %v4127 = vshrl.u32 %v4126, 7
        %v4128 = vsub.s32 %v4125, %v4127
        %v4129 = vrot.slane %v4121, %v4128
        %v4131 = vunpack.c.l.s4 1966171168
        %v4132 = vunpack.c.0.s8 %v4131
        %v4133 = vlaneseq
        %v4134 = vshrl.u32 %v4133, 7
        %v4135 = vsub.s32 %v4132, %v4134
        %v4136 = vrot.slane %v4122, %v4135
        %v4137 = vcombine.high %v4129, %v4129
        %v4138 = vcombine.high %v4136, %v4136
        %v4140 = vunpack.c.l.s4 1966171168
        %v4141 = vunpack.c.0.s8 %v4140
        %v4142 = vlaneseq
        %v4143 = vshrl.u32 %v4142, 7
        %v4144 = vsub.s32 %v4141, %v4143
        %v4145 = vrot.slane %v4129, %v4144
        %v4147 = vunpack.c.l.s4 1966171168
        %v4148 = vunpack.c.0.s8 %v4147
        %v4149 = vlaneseq
        %v4150 = vshrl.u32 %v4149, 7
        %v4151 = vsub.s32 %v4148, %v4150
        %v4152 = vrot.slane %v4136, %v4151
        %v4154 = vunpack.c.l.s4 1966171168
        %v4155 = vunpack.c.0.s8 %v4154
        %v4156 = vlaneseq
        %v4157 = vshrl.u32 %v4156, 7
        %v4158 = vsub.s32 %v4155, %v4157
        %v4159 = vrot.slane %v4137, %v4158
        %v4161 = vunpack.c.l.s4 1966171168
        %v4162 = vunpack.c.0.s8 %v4161
        %v4163 = vlaneseq
        %v4164 = vshrl.u32 %v4163, 7
        %v4165 = vsub.s32 %v4162, %v4164
        %v4166 = vrot.slane %v4138, %v4165
        %v4167 = vcombine.high %v4145, %v4145
        %v4168 = vcombine.high %v4152, %v4152
        %v4169 = vcombine.high %v4159, %v4159
        %v4170 = vcombine.high %v4166, %v4166
        %v4171 = vlaneseq
        %v4172 = vshrl.u32 %v4171, 7
        %v4173 = vsub.s32 0, %v4172
        %v4174 = vrot.slane %v3175, %v4173
        %v4175 = vlaneseq
        %v4176 = vshrl.u32 %v4175, 7
        %v4177 = vsub.s32 1, %v4176
        %v4178 = vrot.slane %v3175, %v4177
        %v4179 = vlaneseq
        %v4180 = vshrl.u32 %v4179, 7
        %v4181 = vsub.s32 0, %v4180
        %v4182 = vrot.slane %v3189, %v4181
        %v4183 = vlaneseq
        %v4184 = vshrl.u32 %v4183, 7
        %v4185 = vsub.s32 1, %v4184
        %v4186 = vrot.slane %v3189, %v4185
        %v4187 = vlaneseq
        %v4188 = vshrl.u32 %v4187, 7
        %v4189 = vsub.s32 0, %v4188
        %v4190 = vrot.slane %v3197, %v4189
        %v4191 = vlaneseq
        %v4192 = vshrl.u32 %v4191, 7
        %v4193 = vsub.s32 1, %v4192
        %v4194 = vrot.slane %v3197, %v4193
        %v4195 = vlaneseq
        %v4196 = vshrl.u32 %v4195, 7
        %v4197 = vsub.s32 0, %v4196
        %v4198 = vrot.slane %v3199, %v4197
        %v4199 = vlaneseq
        %v4200 = vshrl.u32 %v4199, 7
        %v4201 = vsub.s32 1, %v4200
        %v4202 = vrot.slane %v3199, %v4201
        %v4203 = vlaneseq
        %v4204 = vshrl.u32 %v4203, 7
        %v4205 = vsub.s32 0, %v4204
        %v4206 = vrot.slane %v3182, %v4205
        %v4207 = vlaneseq
        %v4208 = vshrl.u32 %v4207, 7
        %v4209 = vsub.s32 1, %v4208
        %v4210 = vrot.slane %v3182, %v4209
        %v4211 = vlaneseq
        %v4212 = vshrl.u32 %v4211, 7
        %v4213 = vsub.s32 0, %v4212
        %v4214 = vrot.slane %v3196, %v4213
        %v4215 = vlaneseq
        %v4216 = vshrl.u32 %v4215, 7
        %v4217 = vsub.s32 1, %v4216
        %v4218 = vrot.slane %v3196, %v4217
        %v4219 = vlaneseq
        %v4220 = vshrl.u32 %v4219, 7
        %v4221 = vsub.s32 0, %v4220
        %v4222 = vrot.slane %v3198, %v4221
        %v4223 = vlaneseq
        %v4224 = vshrl.u32 %v4223, 7
        %v4225 = vsub.s32 1, %v4224
        %v4226 = vrot.slane %v3198, %v4225
        %v4227 = vlaneseq
        %v4228 = vshrl.u32 %v4227, 7
        %v4229 = vsub.s32 0, %v4228
        %v4230 = vrot.slane %v3200, %v4229
        %v4231 = vlaneseq
        %v4232 = vshrl.u32 %v4231, 7
        %v4233 = vsub.s32 1, %v4232
        %v4234 = vrot.slane %v3200, %v4233
        %v4235 = vlaneseq
        %v4236 = vshrl.u32 %v4235, 7
        %v4237 = vsub.s32 0, %v4236
        %v4238 = vrot.slane %v3225, %v4237
        %v4239 = vlaneseq
        %v4240 = vshrl.u32 %v4239, 7
        %v4241 = vsub.s32 1, %v4240
        %v4242 = vrot.slane %v3225, %v4241
        %v4243 = vlaneseq
        %v4244 = vshrl.u32 %v4243, 7
        %v4245 = vsub.s32 0, %v4244
        %v4246 = vrot.slane %v3239, %v4245
        %v4247 = vlaneseq
        %v4248 = vshrl.u32 %v4247, 7
        %v4249 = vsub.s32 1, %v4248
        %v4250 = vrot.slane %v3239, %v4249
        %v4251 = vlaneseq
        %v4252 = vshrl.u32 %v4251, 7
        %v4253 = vsub.s32 0, %v4252
        %v4254 = vrot.slane %v3247, %v4253
        %v4255 = vlaneseq
        %v4256 = vshrl.u32 %v4255, 7
        %v4257 = vsub.s32 1, %v4256
        %v4258 = vrot.slane %v3247, %v4257
        %v4259 = vlaneseq
        %v4260 = vshrl.u32 %v4259, 7
        %v4261 = vsub.s32 0, %v4260
        %v4262 = vrot.slane %v3249, %v4261
        %v4263 = vlaneseq
        %v4264 = vshrl.u32 %v4263, 7
        %v4265 = vsub.s32 1, %v4264
        %v4266 = vrot.slane %v3249, %v4265
        %v4267 = vlaneseq
        %v4268 = vshrl.u32 %v4267, 7
        %v4269 = vsub.s32 0, %v4268
        %v4270 = vrot.slane %v3232, %v4269
        %v4271 = vlaneseq
        %v4272 = vshrl.u32 %v4271, 7
        %v4273 = vsub.s32 1, %v4272
        %v4274 = vrot.slane %v3232, %v4273
        %v4275 = vlaneseq
        %v4276 = vshrl.u32 %v4275, 7
        %v4277 = vsub.s32 0, %v4276
        %v4278 = vrot.slane %v3246, %v4277
        %v4279 = vlaneseq
        %v4280 = vshrl.u32 %v4279, 7
        %v4281 = vsub.s32 1, %v4280
        %v4282 = vrot.slane %v3246, %v4281
        %v4283 = vlaneseq
        %v4284 = vshrl.u32 %v4283, 7
        %v4285 = vsub.s32 0, %v4284
        %v4286 = vrot.slane %v3248, %v4285
        %v4287 = vlaneseq
        %v4288 = vshrl.u32 %v4287, 7
        %v4289 = vsub.s32 1, %v4288
        %v4290 = vrot.slane %v3248, %v4289
        %v4291 = vlaneseq
        %v4292 = vshrl.u32 %v4291, 7
        %v4293 = vsub.s32 0, %v4292
        %v4294 = vrot.slane %v3250, %v4293
        %v4295 = vlaneseq
        %v4296 = vshrl.u32 %v4295, 7
        %v4297 = vsub.s32 1, %v4296
        %v4298 = vrot.slane %v3250, %v4297
        %v4299 = vlaneseq
        %v4300 = vshrl.u32 %v4299, 7
        %v4301 = vsub.s32 0, %v4300
        %v4302 = vrot.slane %v3275, %v4301
        %v4303 = vlaneseq
        %v4304 = vshrl.u32 %v4303, 7
        %v4305 = vsub.s32 1, %v4304
        %v4306 = vrot.slane %v3275, %v4305
        %v4307 = vlaneseq
        %v4308 = vshrl.u32 %v4307, 7
        %v4309 = vsub.s32 0, %v4308
        %v4310 = vrot.slane %v3289, %v4309
        %v4311 = vlaneseq
        %v4312 = vshrl.u32 %v4311, 7
        %v4313 = vsub.s32 1, %v4312
        %v4314 = vrot.slane %v3289, %v4313
        %v4315 = vlaneseq
        %v4316 = vshrl.u32 %v4315, 7
        %v4317 = vsub.s32 0, %v4316
        %v4318 = vrot.slane %v3297, %v4317
        %v4319 = vlaneseq
        %v4320 = vshrl.u32 %v4319, 7
        %v4321 = vsub.s32 1, %v4320
        %v4322 = vrot.slane %v3297, %v4321
        %v4323 = vlaneseq
        %v4324 = vshrl.u32 %v4323, 7
        %v4325 = vsub.s32 0, %v4324
        %v4326 = vrot.slane %v3299, %v4325
        %v4327 = vlaneseq
        %v4328 = vshrl.u32 %v4327, 7
        %v4329 = vsub.s32 1, %v4328
        %v4330 = vrot.slane %v3299, %v4329
        %v4331 = vlaneseq
        %v4332 = vshrl.u32 %v4331, 7
        %v4333 = vsub.s32 0, %v4332
        %v4334 = vrot.slane %v3282, %v4333
        %v4335 = vlaneseq
        %v4336 = vshrl.u32 %v4335, 7
        %v4337 = vsub.s32 1, %v4336
        %v4338 = vrot.slane %v3282, %v4337
        %v4339 = vlaneseq
        %v4340 = vshrl.u32 %v4339, 7
        %v4341 = vsub.s32 0, %v4340
        %v4342 = vrot.slane %v3296, %v4341
        %v4343 = vlaneseq
        %v4344 = vshrl.u32 %v4343, 7
        %v4345 = vsub.s32 1, %v4344
        %v4346 = vrot.slane %v3296, %v4345
        %v4347 = vlaneseq
        %v4348 = vshrl.u32 %v4347, 7
        %v4349 = vsub.s32 0, %v4348
        %v4350 = vrot.slane %v3298, %v4349
        %v4351 = vlaneseq
        %v4352 = vshrl.u32 %v4351, 7
        %v4353 = vsub.s32 1, %v4352
        %v4354 = vrot.slane %v3298, %v4353
        %v4355 = vlaneseq
        %v4356 = vshrl.u32 %v4355, 7
        %v4357 = vsub.s32 0, %v4356
        %v4358 = vrot.slane %v3300, %v4357
        %v4359 = vlaneseq
        %v4360 = vshrl.u32 %v4359, 7
        %v4361 = vsub.s32 1, %v4360
        %v4362 = vrot.slane %v3300, %v4361
        %v4363 = vlaneseq
        %v4364 = vshrl.u32 %v4363, 7
        %v4365 = vsub.s32 0, %v4364
        %v4366 = vrot.slane %v3325, %v4365
        %v4367 = vlaneseq
        %v4368 = vshrl.u32 %v4367, 7
        %v4369 = vsub.s32 1, %v4368
        %v4370 = vrot.slane %v3325, %v4369
        %v4371 = vlaneseq
        %v4372 = vshrl.u32 %v4371, 7
        %v4373 = vsub.s32 0, %v4372
        %v4374 = vrot.slane %v3339, %v4373
        %v4375 = vlaneseq
        %v4376 = vshrl.u32 %v4375, 7
        %v4377 = vsub.s32 1, %v4376
        %v4378 = vrot.slane %v3339, %v4377
        %v4379 = vlaneseq
        %v4380 = vshrl.u32 %v4379, 7
        %v4381 = vsub.s32 0, %v4380
        %v4382 = vrot.slane %v3347, %v4381
        %v4383 = vlaneseq
        %v4384 = vshrl.u32 %v4383, 7
        %v4385 = vsub.s32 1, %v4384
        %v4386 = vrot.slane %v3347, %v4385
        %v4387 = vlaneseq
        %v4388 = vshrl.u32 %v4387, 7
        %v4389 = vsub.s32 0, %v4388
        %v4390 = vrot.slane %v3349, %v4389
        %v4391 = vlaneseq
        %v4392 = vshrl.u32 %v4391, 7
        %v4393 = vsub.s32 1, %v4392
        %v4394 = vrot.slane %v3349, %v4393
        %v4395 = vlaneseq
        %v4396 = vshrl.u32 %v4395, 7
        %v4397 = vsub.s32 0, %v4396
        %v4398 = vrot.slane %v3332, %v4397
        %v4399 = vlaneseq
        %v4400 = vshrl.u32 %v4399, 7
        %v4401 = vsub.s32 1, %v4400
        %v4402 = vrot.slane %v3332, %v4401
        %v4403 = vlaneseq
        %v4404 = vshrl.u32 %v4403, 7
        %v4405 = vsub.s32 0, %v4404
        %v4406 = vrot.slane %v3346, %v4405
        %v4407 = vlaneseq
        %v4408 = vshrl.u32 %v4407, 7
        %v4409 = vsub.s32 1, %v4408
        %v4410 = vrot.slane %v3346, %v4409
        %v4411 = vlaneseq
        %v4412 = vshrl.u32 %v4411, 7
        %v4413 = vsub.s32 0, %v4412
        %v4414 = vrot.slane %v3348, %v4413
        %v4415 = vlaneseq
        %v4416 = vshrl.u32 %v4415, 7
        %v4417 = vsub.s32 1, %v4416
        %v4418 = vrot.slane %v3348, %v4417
        %v4419 = vlaneseq
        %v4420 = vshrl.u32 %v4419, 7
        %v4421 = vsub.s32 0, %v4420
        %v4422 = vrot.slane %v3350, %v4421
        %v4423 = vlaneseq
        %v4424 = vshrl.u32 %v4423, 7
        %v4425 = vsub.s32 1, %v4424
        %v4426 = vrot.slane %v3350, %v4425
        %v4427 = vlaneseq
        %v4428 = vshrl.u32 %v4427, 7
        %v4429 = vsub.s32 0, %v4428
        %v4430 = vrot.slane %v3375, %v4429
        %v4431 = vlaneseq
        %v4432 = vshrl.u32 %v4431, 7
        %v4433 = vsub.s32 1, %v4432
        %v4434 = vrot.slane %v3375, %v4433
        %v4435 = vlaneseq
        %v4436 = vshrl.u32 %v4435, 7
        %v4437 = vsub.s32 0, %v4436
        %v4438 = vrot.slane %v3389, %v4437
        %v4439 = vlaneseq
        %v4440 = vshrl.u32 %v4439, 7
        %v4441 = vsub.s32 1, %v4440
        %v4442 = vrot.slane %v3389, %v4441
        %v4443 = vlaneseq
        %v4444 = vshrl.u32 %v4443, 7
        %v4445 = vsub.s32 0, %v4444
        %v4446 = vrot.slane %v3397, %v4445
        %v4447 = vlaneseq
        %v4448 = vshrl.u32 %v4447, 7
        %v4449 = vsub.s32 1, %v4448
        %v4450 = vrot.slane %v3397, %v4449
        %v4451 = vlaneseq
        %v4452 = vshrl.u32 %v4451, 7
        %v4453 = vsub.s32 0, %v4452
        %v4454 = vrot.slane %v3399, %v4453
        %v4455 = vlaneseq
        %v4456 = vshrl.u32 %v4455, 7
        %v4457 = vsub.s32 1, %v4456
        %v4458 = vrot.slane %v3399, %v4457
        %v4459 = vlaneseq
        %v4460 = vshrl.u32 %v4459, 7
        %v4461 = vsub.s32 0, %v4460
        %v4462 = vrot.slane %v3382, %v4461
        %v4463 = vlaneseq
        %v4464 = vshrl.u32 %v4463, 7
        %v4465 = vsub.s32 1, %v4464
        %v4466 = vrot.slane %v3382, %v4465
        %v4467 = vlaneseq
        %v4468 = vshrl.u32 %v4467, 7
        %v4469 = vsub.s32 0, %v4468
        %v4470 = vrot.slane %v3396, %v4469
        %v4471 = vlaneseq
        %v4472 = vshrl.u32 %v4471, 7
        %v4473 = vsub.s32 1, %v4472
        %v4474 = vrot.slane %v3396, %v4473
        %v4475 = vlaneseq
        %v4476 = vshrl.u32 %v4475, 7
        %v4477 = vsub.s32 0, %v4476
        %v4478 = vrot.slane %v3398, %v4477
        %v4479 = vlaneseq
        %v4480 = vshrl.u32 %v4479, 7
        %v4481 = vsub.s32 1, %v4480
        %v4482 = vrot.slane %v3398, %v4481
        %v4483 = vlaneseq
        %v4484 = vshrl.u32 %v4483, 7
        %v4485 = vsub.s32 0, %v4484
        %v4486 = vrot.slane %v3400, %v4485
        %v4487 = vlaneseq
        %v4488 = vshrl.u32 %v4487, 7
        %v4489 = vsub.s32 1, %v4488
        %v4490 = vrot.slane %v3400, %v4489
        %v4491 = vlaneseq
        %v4492 = vshrl.u32 %v4491, 7
        %v4493 = vsub.s32 0, %v4492
        %v4494 = vrot.slane %v3425, %v4493
        %v4495 = vlaneseq
        %v4496 = vshrl.u32 %v4495, 7
        %v4497 = vsub.s32 1, %v4496
        %v4498 = vrot.slane %v3425, %v4497
        %v4499 = vlaneseq
        %v4500 = vshrl.u32 %v4499, 7
        %v4501 = vsub.s32 0, %v4500
        %v4502 = vrot.slane %v3439, %v4501
        %v4503 = vlaneseq
        %v4504 = vshrl.u32 %v4503, 7
        %v4505 = vsub.s32 1, %v4504
        %v4506 = vrot.slane %v3439, %v4505
        %v4507 = vlaneseq
        %v4508 = vshrl.u32 %v4507, 7
        %v4509 = vsub.s32 0, %v4508
        %v4510 = vrot.slane %v3447, %v4509
        %v4511 = vlaneseq
        %v4512 = vshrl.u32 %v4511, 7
        %v4513 = vsub.s32 1, %v4512
        %v4514 = vrot.slane %v3447, %v4513
        %v4515 = vlaneseq
        %v4516 = vshrl.u32 %v4515, 7
        %v4517 = vsub.s32 0, %v4516
        %v4518 = vrot.slane %v3449, %v4517
        %v4519 = vlaneseq
        %v4520 = vshrl.u32 %v4519, 7
        %v4521 = vsub.s32 1, %v4520
        %v4522 = vrot.slane %v3449, %v4521
        %v4523 = vlaneseq
        %v4524 = vshrl.u32 %v4523, 7
        %v4525 = vsub.s32 0, %v4524
        %v4526 = vrot.slane %v3432, %v4525
        %v4527 = vlaneseq
        %v4528 = vshrl.u32 %v4527, 7
        %v4529 = vsub.s32 1, %v4528
        %v4530 = vrot.slane %v3432, %v4529
        %v4531 = vlaneseq
        %v4532 = vshrl.u32 %v4531, 7
        %v4533 = vsub.s32 0, %v4532
        %v4534 = vrot.slane %v3446, %v4533
        %v4535 = vlaneseq
        %v4536 = vshrl.u32 %v4535, 7
        %v4537 = vsub.s32 1, %v4536
        %v4538 = vrot.slane %v3446, %v4537
        %v4539 = vlaneseq
        %v4540 = vshrl.u32 %v4539, 7
        %v4541 = vsub.s32 0, %v4540
        %v4542 = vrot.slane %v3448, %v4541
        %v4543 = vlaneseq
        %v4544 = vshrl.u32 %v4543, 7
        %v4545 = vsub.s32 1, %v4544
        %v4546 = vrot.slane %v3448, %v4545
        %v4547 = vlaneseq
        %v4548 = vshrl.u32 %v4547, 7
        %v4549 = vsub.s32 0, %v4548
        %v4550 = vrot.slane %v3450, %v4549
        %v4551 = vlaneseq
        %v4552 = vshrl.u32 %v4551, 7
        %v4553 = vsub.s32 1, %v4552
        %v4554 = vrot.slane %v3450, %v4553
        %v4555 = vlaneseq
        %v4556 = vshrl.u32 %v4555, 7
        %v4557 = vsub.s32 0, %v4556
        %v4558 = vrot.slane %v3475, %v4557
        %v4559 = vlaneseq
        %v4560 = vshrl.u32 %v4559, 7
        %v4561 = vsub.s32 1, %v4560
        %v4562 = vrot.slane %v3475, %v4561
        %v4563 = vlaneseq
        %v4564 = vshrl.u32 %v4563, 7
        %v4565 = vsub.s32 0, %v4564
        %v4566 = vrot.slane %v3489, %v4565
        %v4567 = vlaneseq
        %v4568 = vshrl.u32 %v4567, 7
        %v4569 = vsub.s32 1, %v4568
        %v4570 = vrot.slane %v3489, %v4569
        %v4571 = vlaneseq
        %v4572 = vshrl.u32 %v4571, 7
        %v4573 = vsub.s32 0, %v4572
        %v4574 = vrot.slane %v3497, %v4573
        %v4575 = vlaneseq
        %v4576 = vshrl.u32 %v4575, 7
        %v4577 = vsub.s32 1, %v4576
        %v4578 = vrot.slane %v3497, %v4577
        %v4579 = vlaneseq
        %v4580 = vshrl.u32 %v4579, 7
        %v4581 = vsub.s32 0, %v4580
        %v4582 = vrot.slane %v3499, %v4581
        %v4583 = vlaneseq
        %v4584 = vshrl.u32 %v4583, 7
        %v4585 = vsub.s32 1, %v4584
        %v4586 = vrot.slane %v3499, %v4585
        %v4587 = vlaneseq
        %v4588 = vshrl.u32 %v4587, 7
        %v4589 = vsub.s32 0, %v4588
        %v4590 = vrot.slane %v3482, %v4589
        %v4591 = vlaneseq
        %v4592 = vshrl.u32 %v4591, 7
        %v4593 = vsub.s32 1, %v4592
        %v4594 = vrot.slane %v3482, %v4593
        %v4595 = vlaneseq
        %v4596 = vshrl.u32 %v4595, 7
        %v4597 = vsub.s32 0, %v4596
        %v4598 = vrot.slane %v3496, %v4597
        %v4599 = vlaneseq
        %v4600 = vshrl.u32 %v4599, 7
        %v4601 = vsub.s32 1, %v4600
        %v4602 = vrot.slane %v3496, %v4601
        %v4603 = vlaneseq
        %v4604 = vshrl.u32 %v4603, 7
        %v4605 = vsub.s32 0, %v4604
        %v4606 = vrot.slane %v3498, %v4605
        %v4607 = vlaneseq
        %v4608 = vshrl.u32 %v4607, 7
        %v4609 = vsub.s32 1, %v4608
        %v4610 = vrot.slane %v3498, %v4609
        %v4611 = vlaneseq
        %v4612 = vshrl.u32 %v4611, 7
        %v4613 = vsub.s32 0, %v4612
        %v4614 = vrot.slane %v3500, %v4613
        %v4615 = vlaneseq
        %v4616 = vshrl.u32 %v4615, 7
        %v4617 = vsub.s32 1, %v4616
        %v4618 = vrot.slane %v3500, %v4617
        %v4619 = vlaneseq
        %v4620 = vshrl.u32 %v4619, 7
        %v4621 = vsub.s32 0, %v4620
        %v4622 = vrot.slane %v3525, %v4621
        %v4623 = vlaneseq
        %v4624 = vshrl.u32 %v4623, 7
        %v4625 = vsub.s32 1, %v4624
        %v4626 = vrot.slane %v3525, %v4625
        %v4627 = vlaneseq
        %v4628 = vshrl.u32 %v4627, 7
        %v4629 = vsub.s32 0, %v4628
        %v4630 = vrot.slane %v3539, %v4629
        %v4631 = vlaneseq
        %v4632 = vshrl.u32 %v4631, 7
        %v4633 = vsub.s32 1, %v4632
        %v4634 = vrot.slane %v3539, %v4633
        %v4635 = vlaneseq
        %v4636 = vshrl.u32 %v4635, 7
        %v4637 = vsub.s32 0, %v4636
        %v4638 = vrot.slane %v3547, %v4637
        %v4639 = vlaneseq
        %v4640 = vshrl.u32 %v4639, 7
        %v4641 = vsub.s32 1, %v4640
        %v4642 = vrot.slane %v3547, %v4641
        %v4643 = vlaneseq
        %v4644 = vshrl.u32 %v4643, 7
        %v4645 = vsub.s32 0, %v4644
        %v4646 = vrot.slane %v3549, %v4645
        %v4647 = vlaneseq
        %v4648 = vshrl.u32 %v4647, 7
        %v4649 = vsub.s32 1, %v4648
        %v4650 = vrot.slane %v3549, %v4649
        %v4651 = vlaneseq
        %v4652 = vshrl.u32 %v4651, 7
        %v4653 = vsub.s32 0, %v4652
        %v4654 = vrot.slane %v3532, %v4653
        %v4655 = vlaneseq
        %v4656 = vshrl.u32 %v4655, 7
        %v4657 = vsub.s32 1, %v4656
        %v4658 = vrot.slane %v3532, %v4657
        %v4659 = vlaneseq
        %v4660 = vshrl.u32 %v4659, 7
        %v4661 = vsub.s32 0, %v4660
        %v4662 = vrot.slane %v3546, %v4661
        %v4663 = vlaneseq
        %v4664 = vshrl.u32 %v4663, 7
        %v4665 = vsub.s32 1, %v4664
        %v4666 = vrot.slane %v3546, %v4665
        %v4667 = vlaneseq
        %v4668 = vshrl.u32 %v4667, 7
        %v4669 = vsub.s32 0, %v4668
        %v4670 = vrot.slane %v3548, %v4669
        %v4671 = vlaneseq
        %v4672 = vshrl.u32 %v4671, 7
        %v4673 = vsub.s32 1, %v4672
        %v4674 = vrot.slane %v3548, %v4673
        %v4675 = vlaneseq
        %v4676 = vshrl.u32 %v4675, 7
        %v4677 = vsub.s32 0, %v4676
        %v4678 = vrot.slane %v3550, %v4677
        %v4679 = vlaneseq
        %v4680 = vshrl.u32 %v4679, 7
        %v4681 = vsub.s32 1, %v4680
        %v4682 = vrot.slane %v3550, %v4681
        %v4683 = vlaneseq
        %v4684 = vshrl.u32 %v4683, 7
        %v4685 = vsub.s32 0, %v4684
        %v4686 = vrot.slane %v3575, %v4685
        %v4687 = vlaneseq
        %v4688 = vshrl.u32 %v4687, 7
        %v4689 = vsub.s32 1, %v4688
        %v4690 = vrot.slane %v3575, %v4689
        %v4691 = vlaneseq
        %v4692 = vshrl.u32 %v4691, 7
        %v4693 = vsub.s32 0, %v4692
        %v4694 = vrot.slane %v3589, %v4693
        %v4695 = vlaneseq
        %v4696 = vshrl.u32 %v4695, 7
        %v4697 = vsub.s32 1, %v4696
        %v4698 = vrot.slane %v3589, %v4697
        %v4699 = vlaneseq
        %v4700 = vshrl.u32 %v4699, 7
        %v4701 = vsub.s32 0, %v4700
        %v4702 = vrot.slane %v3597, %v4701
        %v4703 = vlaneseq
        %v4704 = vshrl.u32 %v4703, 7
        %v4705 = vsub.s32 1, %v4704
        %v4706 = vrot.slane %v3597, %v4705
        %v4707 = vlaneseq
        %v4708 = vshrl.u32 %v4707, 7
        %v4709 = vsub.s32 0, %v4708
        %v4710 = vrot.slane %v3599, %v4709
        %v4711 = vlaneseq
        %v4712 = vshrl.u32 %v4711, 7
        %v4713 = vsub.s32 1, %v4712
        %v4714 = vrot.slane %v3599, %v4713
        %v4715 = vlaneseq
        %v4716 = vshrl.u32 %v4715, 7
        %v4717 = vsub.s32 0, %v4716
        %v4718 = vrot.slane %v3582, %v4717
        %v4719 = vlaneseq
        %v4720 = vshrl.u32 %v4719, 7
        %v4721 = vsub.s32 1, %v4720
        %v4722 = vrot.slane %v3582, %v4721
        %v4723 = vlaneseq
        %v4724 = vshrl.u32 %v4723, 7
        %v4725 = vsub.s32 0, %v4724
        %v4726 = vrot.slane %v3596, %v4725
        %v4727 = vlaneseq
        %v4728 = vshrl.u32 %v4727, 7
        %v4729 = vsub.s32 1, %v4728
        %v4730 = vrot.slane %v3596, %v4729
        %v4731 = vlaneseq
        %v4732 = vshrl.u32 %v4731, 7
        %v4733 = vsub.s32 0, %v4732
        %v4734 = vrot.slane %v3598, %v4733
        %v4735 = vlaneseq
        %v4736 = vshrl.u32 %v4735, 7
        %v4737 = vsub.s32 1, %v4736
        %v4738 = vrot.slane %v3598, %v4737
        %v4739 = vlaneseq
        %v4740 = vshrl.u32 %v4739, 7
        %v4741 = vsub.s32 0, %v4740
        %v4742 = vrot.slane %v3600, %v4741
        %v4743 = vlaneseq
        %v4744 = vshrl.u32 %v4743, 7
        %v4745 = vsub.s32 1, %v4744
        %v4746 = vrot.slane %v3600, %v4745
        %v4747 = vlaneseq
        %v4748 = vshrl.u32 %v4747, 7
        %v4749 = vsub.s32 0, %v4748
        %v4750 = vrot.slane %v3625, %v4749
        %v4751 = vlaneseq
        %v4752 = vshrl.u32 %v4751, 7
        %v4753 = vsub.s32 1, %v4752
        %v4754 = vrot.slane %v3625, %v4753
        %v4755 = vlaneseq
        %v4756 = vshrl.u32 %v4755, 7
        %v4757 = vsub.s32 0, %v4756
        %v4758 = vrot.slane %v3639, %v4757
        %v4759 = vlaneseq
        %v4760 = vshrl.u32 %v4759, 7
        %v4761 = vsub.s32 1, %v4760
        %v4762 = vrot.slane %v3639, %v4761
        %v4763 = vlaneseq
        %v4764 = vshrl.u32 %v4763, 7
        %v4765 = vsub.s32 0, %v4764
        %v4766 = vrot.slane %v3647, %v4765
        %v4767 = vlaneseq
        %v4768 = vshrl.u32 %v4767, 7
        %v4769 = vsub.s32 1, %v4768
        %v4770 = vrot.slane %v3647, %v4769
        %v4771 = vlaneseq
        %v4772 = vshrl.u32 %v4771, 7
        %v4773 = vsub.s32 0, %v4772
        %v4774 = vrot.slane %v3649, %v4773
        %v4775 = vlaneseq
        %v4776 = vshrl.u32 %v4775, 7
        %v4777 = vsub.s32 1, %v4776
        %v4778 = vrot.slane %v3649, %v4777
        %v4779 = vlaneseq
        %v4780 = vshrl.u32 %v4779, 7
        %v4781 = vsub.s32 0, %v4780
        %v4782 = vrot.slane %v3632, %v4781
        %v4783 = vlaneseq
        %v4784 = vshrl.u32 %v4783, 7
        %v4785 = vsub.s32 1, %v4784
        %v4786 = vrot.slane %v3632, %v4785
        %v4787 = vlaneseq
        %v4788 = vshrl.u32 %v4787, 7
        %v4789 = vsub.s32 0, %v4788
        %v4790 = vrot.slane %v3646, %v4789
        %v4791 = vlaneseq
        %v4792 = vshrl.u32 %v4791, 7
        %v4793 = vsub.s32 1, %v4792
        %v4794 = vrot.slane %v3646, %v4793
        %v4795 = vlaneseq
        %v4796 = vshrl.u32 %v4795, 7
        %v4797 = vsub.s32 0, %v4796
        %v4798 = vrot.slane %v3648, %v4797
        %v4799 = vlaneseq
        %v4800 = vshrl.u32 %v4799, 7
        %v4801 = vsub.s32 1, %v4800
        %v4802 = vrot.slane %v3648, %v4801
        %v4803 = vlaneseq
        %v4804 = vshrl.u32 %v4803, 7
        %v4805 = vsub.s32 0, %v4804
        %v4806 = vrot.slane %v3650, %v4805
        %v4807 = vlaneseq
        %v4808 = vshrl.u32 %v4807, 7
        %v4809 = vsub.s32 1, %v4808
        %v4810 = vrot.slane %v3650, %v4809
        %v4971 = vlaneseq
        %v4972 = vshrl.u32 %v4971, 7
        %v4973 = vsub.s32 0, %v4972
        %v4974 = vrot.slane %v3695, %v4973
        %v4975 = vlaneseq
        %v4976 = vshrl.u32 %v4975, 7
        %v4977 = vsub.s32 1, %v4976
        %v4978 = vrot.slane %v3695, %v4977
        %v4979 = vlaneseq
        %v4980 = vshrl.u32 %v4979, 7
        %v4981 = vsub.s32 0, %v4980
        %v4982 = vrot.slane %v3709, %v4981
        %v4983 = vlaneseq
        %v4984 = vshrl.u32 %v4983, 7
        %v4985 = vsub.s32 1, %v4984
        %v4986 = vrot.slane %v3709, %v4985
        %v4987 = vlaneseq
        %v4988 = vshrl.u32 %v4987, 7
        %v4989 = vsub.s32 0, %v4988
        %v4990 = vrot.slane %v3717, %v4989
        %v4991 = vlaneseq
        %v4992 = vshrl.u32 %v4991, 7
        %v4993 = vsub.s32 1, %v4992
        %v4994 = vrot.slane %v3717, %v4993
        %v4995 = vlaneseq
        %v4996 = vshrl.u32 %v4995, 7
        %v4997 = vsub.s32 0, %v4996
        %v4998 = vrot.slane %v3719, %v4997
        %v4999 = vlaneseq
        %v5000 = vshrl.u32 %v4999, 7
        %v5001 = vsub.s32 1, %v5000
        %v5002 = vrot.slane %v3719, %v5001
        %v5003 = vlaneseq
        %v5004 = vshrl.u32 %v5003, 7
        %v5005 = vsub.s32 0, %v5004
        %v5006 = vrot.slane %v3702, %v5005
        %v5007 = vlaneseq
        %v5008 = vshrl.u32 %v5007, 7
        %v5009 = vsub.s32 1, %v5008
        %v5010 = vrot.slane %v3702, %v5009
        %v5011 = vlaneseq
        %v5012 = vshrl.u32 %v5011, 7
        %v5013 = vsub.s32 0, %v5012
        %v5014 = vrot.slane %v3716, %v5013
        %v5015 = vlaneseq
        %v5016 = vshrl.u32 %v5015, 7
        %v5017 = vsub.s32 1, %v5016
        %v5018 = vrot.slane %v3716, %v5017
        %v5019 = vlaneseq
        %v5020 = vshrl.u32 %v5019, 7
        %v5021 = vsub.s32 0, %v5020
        %v5022 = vrot.slane %v3718, %v5021
        %v5023 = vlaneseq
        %v5024 = vshrl.u32 %v5023, 7
        %v5025 = vsub.s32 1, %v5024
        %v5026 = vrot.slane %v3718, %v5025
        %v5027 = vlaneseq
        %v5028 = vshrl.u32 %v5027, 7
        %v5029 = vsub.s32 0, %v5028
        %v5030 = vrot.slane %v3720, %v5029
        %v5031 = vlaneseq
        %v5032 = vshrl.u32 %v5031, 7
        %v5033 = vsub.s32 1, %v5032
        %v5034 = vrot.slane %v3720, %v5033
        %v5035 = vlaneseq
        %v5036 = vshrl.u32 %v5035, 7
        %v5037 = vsub.s32 0, %v5036
        %v5038 = vrot.slane %v3745, %v5037
        %v5039 = vlaneseq
        %v5040 = vshrl.u32 %v5039, 7
        %v5041 = vsub.s32 1, %v5040
        %v5042 = vrot.slane %v3745, %v5041
        %v5043 = vlaneseq
        %v5044 = vshrl.u32 %v5043, 7
        %v5045 = vsub.s32 0, %v5044
        %v5046 = vrot.slane %v3759, %v5045
        %v5047 = vlaneseq
        %v5048 = vshrl.u32 %v5047, 7
        %v5049 = vsub.s32 1, %v5048
        %v5050 = vrot.slane %v3759, %v5049
        %v5051 = vlaneseq
        %v5052 = vshrl.u32 %v5051, 7
        %v5053 = vsub.s32 0, %v5052
        %v5054 = vrot.slane %v3767, %v5053
        %v5055 = vlaneseq
        %v5056 = vshrl.u32 %v5055, 7
        %v5057 = vsub.s32 1, %v5056
        %v5058 = vrot.slane %v3767, %v5057
        %v5059 = vlaneseq
        %v5060 = vshrl.u32 %v5059, 7
        %v5061 = vsub.s32 0, %v5060
        %v5062 = vrot.slane %v3769, %v5061
        %v5063 = vlaneseq
        %v5064 = vshrl.u32 %v5063, 7
        %v5065 = vsub.s32 1, %v5064
        %v5066 = vrot.slane %v3769, %v5065
        %v5067 = vlaneseq
        %v5068 = vshrl.u32 %v5067, 7
        %v5069 = vsub.s32 0, %v5068
        %v5070 = vrot.slane %v3752, %v5069
        %v5071 = vlaneseq
        %v5072 = vshrl.u32 %v5071, 7
        %v5073 = vsub.s32 1, %v5072
        %v5074 = vrot.slane %v3752, %v5073
        %v5075 = vlaneseq
        %v5076 = vshrl.u32 %v5075, 7
        %v5077 = vsub.s32 0, %v5076
        %v5078 = vrot.slane %v3766, %v5077
        %v5079 = vlaneseq
        %v5080 = vshrl.u32 %v5079, 7
        %v5081 = vsub.s32 1, %v5080
        %v5082 = vrot.slane %v3766, %v5081
        %v5083 = vlaneseq
        %v5084 = vshrl.u32 %v5083, 7
        %v5085 = vsub.s32 0, %v5084
        %v5086 = vrot.slane %v3768, %v5085
        %v5087 = vlaneseq
        %v5088 = vshrl.u32 %v5087, 7
        %v5089 = vsub.s32 1, %v5088
        %v5090 = vrot.slane %v3768, %v5089
        %v5091 = vlaneseq
        %v5092 = vshrl.u32 %v5091, 7
        %v5093 = vsub.s32 0, %v5092
        %v5094 = vrot.slane %v3770, %v5093
        %v5095 = vlaneseq
        %v5096 = vshrl.u32 %v5095, 7
        %v5097 = vsub.s32 1, %v5096
        %v5098 = vrot.slane %v3770, %v5097
        %v5099 = vlaneseq
        %v5100 = vshrl.u32 %v5099, 7
        %v5101 = vsub.s32 0, %v5100
        %v5102 = vrot.slane %v3795, %v5101
        %v5103 = vlaneseq
        %v5104 = vshrl.u32 %v5103, 7
        %v5105 = vsub.s32 1, %v5104
        %v5106 = vrot.slane %v3795, %v5105
        %v5107 = vlaneseq
        %v5108 = vshrl.u32 %v5107, 7
        %v5109 = vsub.s32 0, %v5108
        %v5110 = vrot.slane %v3809, %v5109
        %v5111 = vlaneseq
        %v5112 = vshrl.u32 %v5111, 7
        %v5113 = vsub.s32 1, %v5112
        %v5114 = vrot.slane %v3809, %v5113
        %v5115 = vlaneseq
        %v5116 = vshrl.u32 %v5115, 7
        %v5117 = vsub.s32 0, %v5116
        %v5118 = vrot.slane %v3817, %v5117
        %v5119 = vlaneseq
        %v5120 = vshrl.u32 %v5119, 7
        %v5121 = vsub.s32 1, %v5120
        %v5122 = vrot.slane %v3817, %v5121
        %v5123 = vlaneseq
        %v5124 = vshrl.u32 %v5123, 7
        %v5125 = vsub.s32 0, %v5124
        %v5126 = vrot.slane %v3819, %v5125
        %v5127 = vlaneseq
        %v5128 = vshrl.u32 %v5127, 7
        %v5129 = vsub.s32 1, %v5128
        %v5130 = vrot.slane %v3819, %v5129
        %v5131 = vlaneseq
        %v5132 = vshrl.u32 %v5131, 7
        %v5133 = vsub.s32 0, %v5132
        %v5134 = vrot.slane %v3802, %v5133
        %v5135 = vlaneseq
        %v5136 = vshrl.u32 %v5135, 7
        %v5137 = vsub.s32 1, %v5136
        %v5138 = vrot.slane %v3802, %v5137
        %v5139 = vlaneseq
        %v5140 = vshrl.u32 %v5139, 7
        %v5141 = vsub.s32 0, %v5140
        %v5142 = vrot.slane %v3816, %v5141
        %v5143 = vlaneseq
        %v5144 = vshrl.u32 %v5143, 7
        %v5145 = vsub.s32 1, %v5144
        %v5146 = vrot.slane %v3816, %v5145
        %v5147 = vlaneseq
        %v5148 = vshrl.u32 %v5147, 7
        %v5149 = vsub.s32 0, %v5148
        %v5150 = vrot.slane %v3818, %v5149
        %v5151 = vlaneseq
        %v5152 = vshrl.u32 %v5151, 7
        %v5153 = vsub.s32 1, %v5152
        %v5154 = vrot.slane %v3818, %v5153
        %v5155 = vlaneseq
        %v5156 = vshrl.u32 %v5155, 7
        %v5157 = vsub.s32 0, %v5156
        %v5158 = vrot.slane %v3820, %v5157
        %v5159 = vlaneseq
        %v5160 = vshrl.u32 %v5159, 7
        %v5161 = vsub.s32 1, %v5160
        %v5162 = vrot.slane %v3820, %v5161
        %v5163 = vlaneseq
        %v5164 = vshrl.u32 %v5163, 7
        %v5165 = vsub.s32 0, %v5164
        %v5166 = vrot.slane %v3845, %v5165
        %v5167 = vlaneseq
        %v5168 = vshrl.u32 %v5167, 7
        %v5169 = vsub.s32 1, %v5168
        %v5170 = vrot.slane %v3845, %v5169
        %v5171 = vlaneseq
        %v5172 = vshrl.u32 %v5171, 7
        %v5173 = vsub.s32 0, %v5172
        %v5174 = vrot.slane %v3859, %v5173
        %v5175 = vlaneseq
        %v5176 = vshrl.u32 %v5175, 7
        %v5177 = vsub.s32 1, %v5176
        %v5178 = vrot.slane %v3859, %v5177
        %v5179 = vlaneseq
        %v5180 = vshrl.u32 %v5179, 7
        %v5181 = vsub.s32 0, %v5180
        %v5182 = vrot.slane %v3867, %v5181
        %v5183 = vlaneseq
        %v5184 = vshrl.u32 %v5183, 7
        %v5185 = vsub.s32 1, %v5184
        %v5186 = vrot.slane %v3867, %v5185
        %v5187 = vlaneseq
        %v5188 = vshrl.u32 %v5187, 7
        %v5189 = vsub.s32 0, %v5188
        %v5190 = vrot.slane %v3869, %v5189
        %v5191 = vlaneseq
        %v5192 = vshrl.u32 %v5191, 7
        %v5193 = vsub.s32 1, %v5192
        %v5194 = vrot.slane %v3869, %v5193
        %v5195 = vlaneseq
        %v5196 = vshrl.u32 %v5195, 7
        %v5197 = vsub.s32 0, %v5196
        %v5198 = vrot.slane %v3852, %v5197
        %v5199 = vlaneseq
        %v5200 = vshrl.u32 %v5199, 7
        %v5201 = vsub.s32 1, %v5200
        %v5202 = vrot.slane %v3852, %v5201
        %v5203 = vlaneseq
        %v5204 = vshrl.u32 %v5203, 7
        %v5205 = vsub.s32 0, %v5204
        %v5206 = vrot.slane %v3866, %v5205
        %v5207 = vlaneseq
        %v5208 = vshrl.u32 %v5207, 7
        %v5209 = vsub.s32 1, %v5208
        %v5210 = vrot.slane %v3866, %v5209
        %v5211 = vlaneseq
        %v5212 = vshrl.u32 %v5211, 7
        %v5213 = vsub.s32 0, %v5212
        %v5214 = vrot.slane %v3868, %v5213
        %v5215 = vlaneseq
        %v5216 = vshrl.u32 %v5215, 7
        %v5217 = vsub.s32 1, %v5216
        %v5218 = vrot.slane %v3868, %v5217
        %v5219 = vlaneseq
        %v5220 = vshrl.u32 %v5219, 7
        %v5221 = vsub.s32 0, %v5220
        %v5222 = vrot.slane %v3870, %v5221
        %v5223 = vlaneseq
        %v5224 = vshrl.u32 %v5223, 7
        %v5225 = vsub.s32 1, %v5224
        %v5226 = vrot.slane %v3870, %v5225
        %v5227 = vlaneseq
        %v5228 = vshrl.u32 %v5227, 7
        %v5229 = vsub.s32 0, %v5228
        %v5230 = vrot.slane %v3895, %v5229
        %v5231 = vlaneseq
        %v5232 = vshrl.u32 %v5231, 7
        %v5233 = vsub.s32 1, %v5232
        %v5234 = vrot.slane %v3895, %v5233
        %v5235 = vlaneseq
        %v5236 = vshrl.u32 %v5235, 7
        %v5237 = vsub.s32 0, %v5236
        %v5238 = vrot.slane %v3909, %v5237
        %v5239 = vlaneseq
        %v5240 = vshrl.u32 %v5239, 7
        %v5241 = vsub.s32 1, %v5240
        %v5242 = vrot.slane %v3909, %v5241
        %v5243 = vlaneseq
        %v5244 = vshrl.u32 %v5243, 7
        %v5245 = vsub.s32 0, %v5244
        %v5246 = vrot.slane %v3917, %v5245
        %v5247 = vlaneseq
        %v5248 = vshrl.u32 %v5247, 7
        %v5249 = vsub.s32 1, %v5248
        %v5250 = vrot.slane %v3917, %v5249
        %v5251 = vlaneseq
        %v5252 = vshrl.u32 %v5251, 7
        %v5253 = vsub.s32 0, %v5252
        %v5254 = vrot.slane %v3919, %v5253
        %v5255 = vlaneseq
        %v5256 = vshrl.u32 %v5255, 7
        %v5257 = vsub.s32 1, %v5256
        %v5258 = vrot.slane %v3919, %v5257
        %v5259 = vlaneseq
        %v5260 = vshrl.u32 %v5259, 7
        %v5261 = vsub.s32 0, %v5260
        %v5262 = vrot.slane %v3902, %v5261
        %v5263 = vlaneseq
        %v5264 = vshrl.u32 %v5263, 7
        %v5265 = vsub.s32 1, %v5264
        %v5266 = vrot.slane %v3902, %v5265
        %v5267 = vlaneseq
        %v5268 = vshrl.u32 %v5267, 7
        %v5269 = vsub.s32 0, %v5268
        %v5270 = vrot.slane %v3916, %v5269
        %v5271 = vlaneseq
        %v5272 = vshrl.u32 %v5271, 7
        %v5273 = vsub.s32 1, %v5272
        %v5274 = vrot.slane %v3916, %v5273
        %v5275 = vlaneseq
        %v5276 = vshrl.u32 %v5275, 7
        %v5277 = vsub.s32 0, %v5276
        %v5278 = vrot.slane %v3918, %v5277
        %v5279 = vlaneseq
        %v5280 = vshrl.u32 %v5279, 7
        %v5281 = vsub.s32 1, %v5280
        %v5282 = vrot.slane %v3918, %v5281
        %v5283 = vlaneseq
        %v5284 = vshrl.u32 %v5283, 7
        %v5285 = vsub.s32 0, %v5284
        %v5286 = vrot.slane %v3920, %v5285
        %v5287 = vlaneseq
        %v5288 = vshrl.u32 %v5287, 7
        %v5289 = vsub.s32 1, %v5288
        %v5290 = vrot.slane %v3920, %v5289
        %v5291 = vlaneseq
        %v5292 = vshrl.u32 %v5291, 7
        %v5293 = vsub.s32 0, %v5292
        %v5294 = vrot.slane %v3945, %v5293
        %v5295 = vlaneseq
        %v5296 = vshrl.u32 %v5295, 7
        %v5297 = vsub.s32 1, %v5296
        %v5298 = vrot.slane %v3945, %v5297
        %v5299 = vlaneseq
        %v5300 = vshrl.u32 %v5299, 7
        %v5301 = vsub.s32 0, %v5300
        %v5302 = vrot.slane %v3959, %v5301
        %v5303 = vlaneseq
        %v5304 = vshrl.u32 %v5303, 7
        %v5305 = vsub.s32 1, %v5304
        %v5306 = vrot.slane %v3959, %v5305
        %v5307 = vlaneseq
        %v5308 = vshrl.u32 %v5307, 7
        %v5309 = vsub.s32 0, %v5308
        %v5310 = vrot.slane %v3967, %v5309
        %v5311 = vlaneseq
        %v5312 = vshrl.u32 %v5311, 7
        %v5313 = vsub.s32 1, %v5312
        %v5314 = vrot.slane %v3967, %v5313
        %v5315 = vlaneseq
        %v5316 = vshrl.u32 %v5315, 7
        %v5317 = vsub.s32 0, %v5316
        %v5318 = vrot.slane %v3969, %v5317
        %v5319 = vlaneseq
        %v5320 = vshrl.u32 %v5319, 7
        %v5321 = vsub.s32 1, %v5320
        %v5322 = vrot.slane %v3969, %v5321
        %v5323 = vlaneseq
        %v5324 = vshrl.u32 %v5323, 7
        %v5325 = vsub.s32 0, %v5324
        %v5326 = vrot.slane %v3952, %v5325
        %v5327 = vlaneseq
        %v5328 = vshrl.u32 %v5327, 7
        %v5329 = vsub.s32 1, %v5328
        %v5330 = vrot.slane %v3952, %v5329
        %v5331 = vlaneseq
        %v5332 = vshrl.u32 %v5331, 7
        %v5333 = vsub.s32 0, %v5332
        %v5334 = vrot.slane %v3966, %v5333
        %v5335 = vlaneseq
        %v5336 = vshrl.u32 %v5335, 7
        %v5337 = vsub.s32 1, %v5336
        %v5338 = vrot.slane %v3966, %v5337
        %v5339 = vlaneseq
        %v5340 = vshrl.u32 %v5339, 7
        %v5341 = vsub.s32 0, %v5340
        %v5342 = vrot.slane %v3968, %v5341
        %v5343 = vlaneseq
        %v5344 = vshrl.u32 %v5343, 7
        %v5345 = vsub.s32 1, %v5344
        %v5346 = vrot.slane %v3968, %v5345
        %v5347 = vlaneseq
        %v5348 = vshrl.u32 %v5347, 7
        %v5349 = vsub.s32 0, %v5348
        %v5350 = vrot.slane %v3970, %v5349
        %v5351 = vlaneseq
        %v5352 = vshrl.u32 %v5351, 7
        %v5353 = vsub.s32 1, %v5352
        %v5354 = vrot.slane %v3970, %v5353
        %v5355 = vlaneseq
        %v5356 = vshrl.u32 %v5355, 7
        %v5357 = vsub.s32 0, %v5356
        %v5358 = vrot.slane %v3995, %v5357
        %v5359 = vlaneseq
        %v5360 = vshrl.u32 %v5359, 7
        %v5361 = vsub.s32 1, %v5360
        %v5362 = vrot.slane %v3995, %v5361
        %v5363 = vlaneseq
        %v5364 = vshrl.u32 %v5363, 7
        %v5365 = vsub.s32 0, %v5364
        %v5366 = vrot.slane %v4009, %v5365
        %v5367 = vlaneseq
        %v5368 = vshrl.u32 %v5367, 7
        %v5369 = vsub.s32 1, %v5368
        %v5370 = vrot.slane %v4009, %v5369
        %v5371 = vlaneseq
        %v5372 = vshrl.u32 %v5371, 7
        %v5373 = vsub.s32 0, %v5372
        %v5374 = vrot.slane %v4017, %v5373
        %v5375 = vlaneseq
        %v5376 = vshrl.u32 %v5375, 7
        %v5377 = vsub.s32 1, %v5376
        %v5378 = vrot.slane %v4017, %v5377
        %v5379 = vlaneseq
        %v5380 = vshrl.u32 %v5379, 7
        %v5381 = vsub.s32 0, %v5380
        %v5382 = vrot.slane %v4019, %v5381
        %v5383 = vlaneseq
        %v5384 = vshrl.u32 %v5383, 7
        %v5385 = vsub.s32 1, %v5384
        %v5386 = vrot.slane %v4019, %v5385
        %v5387 = vlaneseq
        %v5388 = vshrl.u32 %v5387, 7
        %v5389 = vsub.s32 0, %v5388
        %v5390 = vrot.slane %v4002, %v5389
        %v5391 = vlaneseq
        %v5392 = vshrl.u32 %v5391, 7
        %v5393 = vsub.s32 1, %v5392
        %v5394 = vrot.slane %v4002, %v5393
        %v5395 = vlaneseq
        %v5396 = vshrl.u32 %v5395, 7
        %v5397 = vsub.s32 0, %v5396
        %v5398 = vrot.slane %v4016, %v5397
        %v5399 = vlaneseq
        %v5400 = vshrl.u32 %v5399, 7
        %v5401 = vsub.s32 1, %v5400
        %v5402 = vrot.slane %v4016, %v5401
        %v5403 = vlaneseq
        %v5404 = vshrl.u32 %v5403, 7
        %v5405 = vsub.s32 0, %v5404
        %v5406 = vrot.slane %v4018, %v5405
        %v5407 = vlaneseq
        %v5408 = vshrl.u32 %v5407, 7
        %v5409 = vsub.s32 1, %v5408
        %v5410 = vrot.slane %v4018, %v5409
        %v5411 = vlaneseq
        %v5412 = vshrl.u32 %v5411, 7
        %v5413 = vsub.s32 0, %v5412
        %v5414 = vrot.slane %v4020, %v5413
        %v5415 = vlaneseq
        %v5416 = vshrl.u32 %v5415, 7
        %v5417 = vsub.s32 1, %v5416
        %v5418 = vrot.slane %v4020, %v5417
        %v5419 = vlaneseq
        %v5420 = vshrl.u32 %v5419, 7
        %v5421 = vsub.s32 0, %v5420
        %v5422 = vrot.slane %v4045, %v5421
        %v5423 = vlaneseq
        %v5424 = vshrl.u32 %v5423, 7
        %v5425 = vsub.s32 1, %v5424
        %v5426 = vrot.slane %v4045, %v5425
        %v5427 = vlaneseq
        %v5428 = vshrl.u32 %v5427, 7
        %v5429 = vsub.s32 0, %v5428
        %v5430 = vrot.slane %v4059, %v5429
        %v5431 = vlaneseq
        %v5432 = vshrl.u32 %v5431, 7
        %v5433 = vsub.s32 1, %v5432
        %v5434 = vrot.slane %v4059, %v5433
        %v5435 = vlaneseq
        %v5436 = vshrl.u32 %v5435, 7
        %v5437 = vsub.s32 0, %v5436
        %v5438 = vrot.slane %v4067, %v5437
        %v5439 = vlaneseq
        %v5440 = vshrl.u32 %v5439, 7
        %v5441 = vsub.s32 1, %v5440
        %v5442 = vrot.slane %v4067, %v5441
        %v5443 = vlaneseq
        %v5444 = vshrl.u32 %v5443, 7
        %v5445 = vsub.s32 0, %v5444
        %v5446 = vrot.slane %v4069, %v5445
        %v5447 = vlaneseq
        %v5448 = vshrl.u32 %v5447, 7
        %v5449 = vsub.s32 1, %v5448
        %v5450 = vrot.slane %v4069, %v5449
        %v5451 = vlaneseq
        %v5452 = vshrl.u32 %v5451, 7
        %v5453 = vsub.s32 0, %v5452
        %v5454 = vrot.slane %v4052, %v5453
        %v5455 = vlaneseq
        %v5456 = vshrl.u32 %v5455, 7
        %v5457 = vsub.s32 1, %v5456
        %v5458 = vrot.slane %v4052, %v5457
        %v5459 = vlaneseq
        %v5460 = vshrl.u32 %v5459, 7
        %v5461 = vsub.s32 0, %v5460
        %v5462 = vrot.slane %v4066, %v5461
        %v5463 = vlaneseq
        %v5464 = vshrl.u32 %v5463, 7
        %v5465 = vsub.s32 1, %v5464
        %v5466 = vrot.slane %v4066, %v5465
        %v5467 = vlaneseq
        %v5468 = vshrl.u32 %v5467, 7
        %v5469 = vsub.s32 0, %v5468
        %v5470 = vrot.slane %v4068, %v5469
        %v5471 = vlaneseq
        %v5472 = vshrl.u32 %v5471, 7
        %v5473 = vsub.s32 1, %v5472
        %v5474 = vrot.slane %v4068, %v5473
        %v5475 = vlaneseq
        %v5476 = vshrl.u32 %v5475, 7
        %v5477 = vsub.s32 0, %v5476
        %v5478 = vrot.slane %v4070, %v5477
        %v5479 = vlaneseq
        %v5480 = vshrl.u32 %v5479, 7
        %v5481 = vsub.s32 1, %v5480
        %v5482 = vrot.slane %v4070, %v5481
        %v5483 = vlaneseq
        %v5484 = vshrl.u32 %v5483, 7
        %v5485 = vsub.s32 0, %v5484
        %v5486 = vrot.slane %v4095, %v5485
        %v5487 = vlaneseq
        %v5488 = vshrl.u32 %v5487, 7
        %v5489 = vsub.s32 1, %v5488
        %v5490 = vrot.slane %v4095, %v5489
        %v5491 = vlaneseq
        %v5492 = vshrl.u32 %v5491, 7
        %v5493 = vsub.s32 0, %v5492
        %v5494 = vrot.slane %v4109, %v5493
        %v5495 = vlaneseq
        %v5496 = vshrl.u32 %v5495, 7
        %v5497 = vsub.s32 1, %v5496
        %v5498 = vrot.slane %v4109, %v5497
        %v5499 = vlaneseq
        %v5500 = vshrl.u32 %v5499, 7
        %v5501 = vsub.s32 0, %v5500
        %v5502 = vrot.slane %v4117, %v5501
        %v5503 = vlaneseq
        %v5504 = vshrl.u32 %v5503, 7
        %v5505 = vsub.s32 1, %v5504
        %v5506 = vrot.slane %v4117, %v5505
        %v5507 = vlaneseq
        %v5508 = vshrl.u32 %v5507, 7
        %v5509 = vsub.s32 0, %v5508
        %v5510 = vrot.slane %v4119, %v5509
        %v5511 = vlaneseq
        %v5512 = vshrl.u32 %v5511, 7
        %v5513 = vsub.s32 1, %v5512
        %v5514 = vrot.slane %v4119, %v5513
        %v5515 = vlaneseq
        %v5516 = vshrl.u32 %v5515, 7
        %v5517 = vsub.s32 0, %v5516
        %v5518 = vrot.slane %v4102, %v5517
        %v5519 = vlaneseq
        %v5520 = vshrl.u32 %v5519, 7
        %v5521 = vsub.s32 1, %v5520
        %v5522 = vrot.slane %v4102, %v5521
        %v5523 = vlaneseq
        %v5524 = vshrl.u32 %v5523, 7
        %v5525 = vsub.s32 0, %v5524
        %v5526 = vrot.slane %v4116, %v5525
        %v5527 = vlaneseq
        %v5528 = vshrl.u32 %v5527, 7
        %v5529 = vsub.s32 1, %v5528
        %v5530 = vrot.slane %v4116, %v5529
        %v5531 = vlaneseq
        %v5532 = vshrl.u32 %v5531, 7
        %v5533 = vsub.s32 0, %v5532
        %v5534 = vrot.slane %v4118, %v5533
        %v5535 = vlaneseq
        %v5536 = vshrl.u32 %v5535, 7
        %v5537 = vsub.s32 1, %v5536
        %v5538 = vrot.slane %v4118, %v5537
        %v5539 = vlaneseq
        %v5540 = vshrl.u32 %v5539, 7
        %v5541 = vsub.s32 0, %v5540
        %v5542 = vrot.slane %v4120, %v5541
        %v5543 = vlaneseq
        %v5544 = vshrl.u32 %v5543, 7
        %v5545 = vsub.s32 1, %v5544
        %v5546 = vrot.slane %v4120, %v5545
        %v5547 = vlaneseq
        %v5548 = vshrl.u32 %v5547, 7
        %v5549 = vsub.s32 0, %v5548
        %v5550 = vrot.slane %v4145, %v5549
        %v5551 = vlaneseq
        %v5552 = vshrl.u32 %v5551, 7
        %v5553 = vsub.s32 1, %v5552
        %v5554 = vrot.slane %v4145, %v5553
        %v5555 = vlaneseq
        %v5556 = vshrl.u32 %v5555, 7
        %v5557 = vsub.s32 0, %v5556
        %v5558 = vrot.slane %v4159, %v5557
        %v5559 = vlaneseq
        %v5560 = vshrl.u32 %v5559, 7
        %v5561 = vsub.s32 1, %v5560
        %v5562 = vrot.slane %v4159, %v5561
        %v5563 = vlaneseq
        %v5564 = vshrl.u32 %v5563, 7
        %v5565 = vsub.s32 0, %v5564
        %v5566 = vrot.slane %v4167, %v5565
        %v5567 = vlaneseq
        %v5568 = vshrl.u32 %v5567, 7
        %v5569 = vsub.s32 1, %v5568
        %v5570 = vrot.slane %v4167, %v5569
        %v5571 = vlaneseq
        %v5572 = vshrl.u32 %v5571, 7
        %v5573 = vsub.s32 0, %v5572
        %v5574 = vrot.slane %v4169, %v5573
        %v5575 = vlaneseq
        %v5576 = vshrl.u32 %v5575, 7
        %v5577 = vsub.s32 1, %v5576
        %v5578 = vrot.slane %v4169, %v5577
        %v5579 = vlaneseq
        %v5580 = vshrl.u32 %v5579, 7
        %v5581 = vsub.s32 0, %v5580
        %v5582 = vrot.slane %v4152, %v5581
        %v5583 = vlaneseq
        %v5584 = vshrl.u32 %v5583, 7
        %v5585 = vsub.s32 1, %v5584
        %v5586 = vrot.slane %v4152, %v5585
        %v5587 = vlaneseq
        %v5588 = vshrl.u32 %v5587, 7
        %v5589 = vsub.s32 0, %v5588
        %v5590 = vrot.slane %v4166, %v5589
        %v5591 = vlaneseq
        %v5592 = vshrl.u32 %v5591, 7
        %v5593 = vsub.s32 1, %v5592
        %v5594 = vrot.slane %v4166, %v5593
        %v5595 = vlaneseq
        %v5596 = vshrl.u32 %v5595, 7
        %v5597 = vsub.s32 0, %v5596
        %v5598 = vrot.slane %v4168, %v5597
        %v5599 = vlaneseq
        %v5600 = vshrl.u32 %v5599, 7
        %v5601 = vsub.s32 1, %v5600
        %v5602 = vrot.slane %v4168, %v5601
        %v5603 = vlaneseq
        %v5604 = vshrl.u32 %v5603, 7
        %v5605 = vsub.s32 0, %v5604
        %v5606 = vrot.slane %v4170, %v5605
        %v5607 = vlaneseq
        %v5608 = vshrl.u32 %v5607, 7
        %v5609 = vsub.s32 1, %v5608
        %v5610 = vrot.slane %v4170, %v5609
        %v5771 = vsel %vm1555, %v4174, %v4974
        %v5772 = vsel %vm1555, %v4178, %v4978
        %v5773 = vsel %vm1555, %v4182, %v4982
        %v5774 = vsel %vm1555, %v4186, %v4986
        %v5775 = vsel %vm1555, %v4190, %v4990
        %v5776 = vsel %vm1555, %v4194, %v4994
        %v5777 = vsel %vm1555, %v4198, %v4998
        %v5778 = vsel %vm1555, %v4202, %v5002
        %v5779 = vsel %vm1555, %v4206, %v5006
        %v5780 = vsel %vm1555, %v4210, %v5010
        %v5781 = vsel %vm1555, %v4214, %v5014
        %v5782 = vsel %vm1555, %v4218, %v5018
        %v5783 = vsel %vm1555, %v4222, %v5022
        %v5784 = vsel %vm1555, %v4226, %v5026
        %v5785 = vsel %vm1555, %v4230, %v5030
        %v5786 = vsel %vm1555, %v4234, %v5034
        %v5787 = vsel %vm1555, %v4238, %v5038
        %v5788 = vsel %vm1555, %v4242, %v5042
        %v5789 = vsel %vm1555, %v4246, %v5046
        %v5790 = vsel %vm1555, %v4250, %v5050
        %v5791 = vsel %vm1555, %v4254, %v5054
        %v5792 = vsel %vm1555, %v4258, %v5058
        %v5793 = vsel %vm1555, %v4262, %v5062
        %v5794 = vsel %vm1555, %v4266, %v5066
        %v5795 = vsel %vm1555, %v4270, %v5070
        %v5796 = vsel %vm1555, %v4274, %v5074
        %v5797 = vsel %vm1555, %v4278, %v5078
        %v5798 = vsel %vm1555, %v4282, %v5082
        %v5799 = vsel %vm1555, %v4286, %v5086
        %v5800 = vsel %vm1555, %v4290, %v5090
        %v5801 = vsel %vm1555, %v4294, %v5094
        %v5802 = vsel %vm1555, %v4298, %v5098
        %v5803 = vsel %vm1555, %v4302, %v5102
        %v5804 = vsel %vm1555, %v4306, %v5106
        %v5805 = vsel %vm1555, %v4310, %v5110
        %v5806 = vsel %vm1555, %v4314, %v5114
        %v5807 = vsel %vm1555, %v4318, %v5118
        %v5808 = vsel %vm1555, %v4322, %v5122
        %v5809 = vsel %vm1555, %v4326, %v5126
        %v5810 = vsel %vm1555, %v4330, %v5130
        %v5811 = vsel %vm1555, %v4334, %v5134
        %v5812 = vsel %vm1555, %v4338, %v5138
        %v5813 = vsel %vm1555, %v4342, %v5142
        %v5814 = vsel %vm1555, %v4346, %v5146
        %v5815 = vsel %vm1555, %v4350, %v5150
        %v5816 = vsel %vm1555, %v4354, %v5154
        %v5817 = vsel %vm1555, %v4358, %v5158
        %v5818 = vsel %vm1555, %v4362, %v5162
        %v5819 = vsel %vm1555, %v4366, %v5166
        %v5820 = vsel %vm1555, %v4370, %v5170
        %v5821 = vsel %vm1555, %v4374, %v5174
        %v5822 = vsel %vm1555, %v4378, %v5178
        %v5823 = vsel %vm1555, %v4382, %v5182
        %v5824 = vsel %vm1555, %v4386, %v5186
        %v5825 = vsel %vm1555, %v4390, %v5190
        %v5826 = vsel %vm1555, %v4394, %v5194
        %v5827 = vsel %vm1555, %v4398, %v5198
        %v5828 = vsel %vm1555, %v4402, %v5202
        %v5829 = vsel %vm1555, %v4406, %v5206
        %v5830 = vsel %vm1555, %v4410, %v5210
        %v5831 = vsel %vm1555, %v4414, %v5214
        %v5832 = vsel %vm1555, %v4418, %v5218
        %v5833 = vsel %vm1555, %v4422, %v5222
        %v5834 = vsel %vm1555, %v4426, %v5226
        %v5835 = vsel %vm1555, %v4430, %v5230
        %v5836 = vsel %vm1555, %v4434, %v5234
        %v5837 = vsel %vm1555, %v4438, %v5238
        %v5838 = vsel %vm1555, %v4442, %v5242
        %v5839 = vsel %vm1555, %v4446, %v5246
        %v5840 = vsel %vm1555, %v4450, %v5250
        %v5841 = vsel %vm1555, %v4454, %v5254
        %v5842 = vsel %vm1555, %v4458, %v5258
        %v5843 = vsel %vm1555, %v4462, %v5262
        %v5844 = vsel %vm1555, %v4466, %v5266
        %v5845 = vsel %vm1555, %v4470, %v5270
        %v5846 = vsel %vm1555, %v4474, %v5274
        %v5847 = vsel %vm1555, %v4478, %v5278
        %v5848 = vsel %vm1555, %v4482, %v5282
        %v5849 = vsel %vm1555, %v4486, %v5286
        %v5850 = vsel %vm1555, %v4490, %v5290
        %v5851 = vsel %vm1555, %v4494, %v5294
        %v5852 = vsel %vm1555, %v4498, %v5298
        %v5853 = vsel %vm1555, %v4502, %v5302
        %v5854 = vsel %vm1555, %v4506, %v5306
        %v5855 = vsel %vm1555, %v4510, %v5310
        %v5856 = vsel %vm1555, %v4514, %v5314
        %v5857 = vsel %vm1555, %v4518, %v5318
        %v5858 = vsel %vm1555, %v4522, %v5322
        %v5859 = vsel %vm1555, %v4526, %v5326
        %v5860 = vsel %vm1555, %v4530, %v5330
        %v5861 = vsel %vm1555, %v4534, %v5334
        %v5862 = vsel %vm1555, %v4538, %v5338
        %v5863 = vsel %vm1555, %v4542, %v5342
        %v5864 = vsel %vm1555, %v4546, %v5346
        %v5865 = vsel %vm1555, %v4550, %v5350
        %v5866 = vsel %vm1555, %v4554, %v5354
        %v5867 = vsel %vm1555, %v4558, %v5358
        %v5868 = vsel %vm1555, %v4562, %v5362
        %v5869 = vsel %vm1555, %v4566, %v5366
        %v5870 = vsel %vm1555, %v4570, %v5370
        %v5871 = vsel %vm1555, %v4574, %v5374
        %v5872 = vsel %vm1555, %v4578, %v5378
        %v5873 = vsel %vm1555, %v4582, %v5382
        %v5874 = vsel %vm1555, %v4586, %v5386
        %v5875 = vsel %vm1555, %v4590, %v5390
        %v5876 = vsel %vm1555, %v4594, %v5394
        %v5877 = vsel %vm1555, %v4598, %v5398
        %v5878 = vsel %vm1555, %v4602, %v5402
        %v5879 = vsel %vm1555, %v4606, %v5406
        %v5880 = vsel %vm1555, %v4610, %v5410
        %v5881 = vsel %vm1555, %v4614, %v5414
        %v5882 = vsel %vm1555, %v4618, %v5418
        %v5883 = vsel %vm1555, %v4622, %v5422
        %v5884 = vsel %vm1555, %v4626, %v5426
        %v5885 = vsel %vm1555, %v4630, %v5430
        %v5886 = vsel %vm1555, %v4634, %v5434
        %v5887 = vsel %vm1555, %v4638, %v5438
        %v5888 = vsel %vm1555, %v4642, %v5442
        %v5889 = vsel %vm1555, %v4646, %v5446
        %v5890 = vsel %vm1555, %v4650, %v5450
        %v5891 = vsel %vm1555, %v4654, %v5454
        %v5892 = vsel %vm1555, %v4658, %v5458
        %v5893 = vsel %vm1555, %v4662, %v5462
        %v5894 = vsel %vm1555, %v4666, %v5466
        %v5895 = vsel %vm1555, %v4670, %v5470
        %v5896 = vsel %vm1555, %v4674, %v5474
        %v5897 = vsel %vm1555, %v4678, %v5478
        %v5898 = vsel %vm1555, %v4682, %v5482
        %v5899 = vsel %vm1555, %v4686, %v5486
        %v5900 = vsel %vm1555, %v4690, %v5490
        %v5901 = vsel %vm1555, %v4694, %v5494
        %v5902 = vsel %vm1555, %v4698, %v5498
        %v5903 = vsel %vm1555, %v4702, %v5502
        %v5904 = vsel %vm1555, %v4706, %v5506
        %v5905 = vsel %vm1555, %v4710, %v5510
        %v5906 = vsel %vm1555, %v4714, %v5514
        %v5907 = vsel %vm1555, %v4718, %v5518
        %v5908 = vsel %vm1555, %v4722, %v5522
        %v5909 = vsel %vm1555, %v4726, %v5526
        %v5910 = vsel %vm1555, %v4730, %v5530
        %v5911 = vsel %vm1555, %v4734, %v5534
        %v5912 = vsel %vm1555, %v4738, %v5538
        %v5913 = vsel %vm1555, %v4742, %v5542
        %v5914 = vsel %vm1555, %v4746, %v5546
        %v5915 = vsel %vm1555, %v4750, %v5550
        %v5916 = vsel %vm1555, %v4754, %v5554
        %v5917 = vsel %vm1555, %v4758, %v5558
        %v5918 = vsel %vm1555, %v4762, %v5562
        %v5919 = vsel %vm1555, %v4766, %v5566
        %v5920 = vsel %vm1555, %v4770, %v5570
        %v5921 = vsel %vm1555, %v4774, %v5574
        %v5922 = vsel %vm1555, %v4778, %v5578
        %v5923 = vsel %vm1555, %v4782, %v5582
        %v5924 = vsel %vm1555, %v4786, %v5586
        %v5925 = vsel %vm1555, %v4790, %v5590
        %v5926 = vsel %vm1555, %v4794, %v5594
        %v5927 = vsel %vm1555, %v4798, %v5598
        %v5928 = vsel %vm1555, %v4802, %v5602
        %v5929 = vsel %vm1555, %v4806, %v5606
        %v5930 = vsel %vm1555, %v4810, %v5610
        %v6091 = vcombine.low %v5771, %v5772
        %v6093 = vunpack.c.l.s4 1983009808
        %v6094 = vunpack.c.0.s8 %v6093
        %v6095 = vlaneseq
        %v6096 = vshrl.u32 %v6095, 7
        %v6097 = vsub.s32 %v6094, %v6096
        %v6098 = vrot.slane %v6091, %v6097
        %v6099 = vcombine.low %v5773, %v5774
        %v6101 = vunpack.c.l.s4 1983009808
        %v6102 = vunpack.c.0.s8 %v6101
        %v6103 = vlaneseq
        %v6104 = vshrl.u32 %v6103, 7
        %v6105 = vsub.s32 %v6102, %v6104
        %v6106 = vrot.slane %v6099, %v6105
        %v6107 = vcombine.low %v5775, %v5776
        %v6109 = vunpack.c.l.s4 1983009808
        %v6110 = vunpack.c.0.s8 %v6109
        %v6111 = vlaneseq
        %v6112 = vshrl.u32 %v6111, 7
        %v6113 = vsub.s32 %v6110, %v6112
        %v6114 = vrot.slane %v6107, %v6113
        %v6115 = vcombine.low %v5777, %v5778
        %v6117 = vunpack.c.l.s4 1983009808
        %v6118 = vunpack.c.0.s8 %v6117
        %v6119 = vlaneseq
        %v6120 = vshrl.u32 %v6119, 7
        %v6121 = vsub.s32 %v6118, %v6120
        %v6122 = vrot.slane %v6115, %v6121
        %v6123 = vcombine.low %v5779, %v5780
        %v6125 = vunpack.c.l.s4 1983009808
        %v6126 = vunpack.c.0.s8 %v6125
        %v6127 = vlaneseq
        %v6128 = vshrl.u32 %v6127, 7
        %v6129 = vsub.s32 %v6126, %v6128
        %v6130 = vrot.slane %v6123, %v6129
        %v6131 = vcombine.low %v5781, %v5782
        %v6133 = vunpack.c.l.s4 1983009808
        %v6134 = vunpack.c.0.s8 %v6133
        %v6135 = vlaneseq
        %v6136 = vshrl.u32 %v6135, 7
        %v6137 = vsub.s32 %v6134, %v6136
        %v6138 = vrot.slane %v6131, %v6137
        %v6139 = vcombine.low %v5783, %v5784
        %v6141 = vunpack.c.l.s4 1983009808
        %v6142 = vunpack.c.0.s8 %v6141
        %v6143 = vlaneseq
        %v6144 = vshrl.u32 %v6143, 7
        %v6145 = vsub.s32 %v6142, %v6144
        %v6146 = vrot.slane %v6139, %v6145
        %v6147 = vcombine.low %v5785, %v5786
        %v6149 = vunpack.c.l.s4 1983009808
        %v6150 = vunpack.c.0.s8 %v6149
        %v6151 = vlaneseq
        %v6152 = vshrl.u32 %v6151, 7
        %v6153 = vsub.s32 %v6150, %v6152
        %v6154 = vrot.slane %v6147, %v6153
        %v6155 = vcombine.low %v5787, %v5788
        %v6157 = vunpack.c.l.s4 1983009808
        %v6158 = vunpack.c.0.s8 %v6157
        %v6159 = vlaneseq
        %v6160 = vshrl.u32 %v6159, 7
        %v6161 = vsub.s32 %v6158, %v6160
        %v6162 = vrot.slane %v6155, %v6161
        %v6163 = vcombine.low %v5789, %v5790
        %v6165 = vunpack.c.l.s4 1983009808
        %v6166 = vunpack.c.0.s8 %v6165
        %v6167 = vlaneseq
        %v6168 = vshrl.u32 %v6167, 7
        %v6169 = vsub.s32 %v6166, %v6168
        %v6170 = vrot.slane %v6163, %v6169
        %v6171 = vcombine.low %v5791, %v5792
        %v6173 = vunpack.c.l.s4 1983009808
        %v6174 = vunpack.c.0.s8 %v6173
        %v6175 = vlaneseq
        %v6176 = vshrl.u32 %v6175, 7
        %v6177 = vsub.s32 %v6174, %v6176
        %v6178 = vrot.slane %v6171, %v6177
        %v6179 = vcombine.low %v5793, %v5794
        %v6181 = vunpack.c.l.s4 1983009808
        %v6182 = vunpack.c.0.s8 %v6181
        %v6183 = vlaneseq
        %v6184 = vshrl.u32 %v6183, 7
        %v6185 = vsub.s32 %v6182, %v6184
        %v6186 = vrot.slane %v6179, %v6185
        %v6187 = vcombine.low %v5795, %v5796
        %v6189 = vunpack.c.l.s4 1983009808
        %v6190 = vunpack.c.0.s8 %v6189
        %v6191 = vlaneseq
        %v6192 = vshrl.u32 %v6191, 7
        %v6193 = vsub.s32 %v6190, %v6192
        %v6194 = vrot.slane %v6187, %v6193
        %v6195 = vcombine.low %v5797, %v5798
        %v6197 = vunpack.c.l.s4 1983009808
        %v6198 = vunpack.c.0.s8 %v6197
        %v6199 = vlaneseq
        %v6200 = vshrl.u32 %v6199, 7
        %v6201 = vsub.s32 %v6198, %v6200
        %v6202 = vrot.slane %v6195, %v6201
        %v6203 = vcombine.low %v5799, %v5800
        %v6205 = vunpack.c.l.s4 1983009808
        %v6206 = vunpack.c.0.s8 %v6205
        %v6207 = vlaneseq
        %v6208 = vshrl.u32 %v6207, 7
        %v6209 = vsub.s32 %v6206, %v6208
        %v6210 = vrot.slane %v6203, %v6209
        %v6211 = vcombine.low %v5801, %v5802
        %v6213 = vunpack.c.l.s4 1983009808
        %v6214 = vunpack.c.0.s8 %v6213
        %v6215 = vlaneseq
        %v6216 = vshrl.u32 %v6215, 7
        %v6217 = vsub.s32 %v6214, %v6216
        %v6218 = vrot.slane %v6211, %v6217
        %v6219 = vcombine.low %v5803, %v5804
        %v6221 = vunpack.c.l.s4 1983009808
        %v6222 = vunpack.c.0.s8 %v6221
        %v6223 = vlaneseq
        %v6224 = vshrl.u32 %v6223, 7
        %v6225 = vsub.s32 %v6222, %v6224
        %v6226 = vrot.slane %v6219, %v6225
        %v6227 = vcombine.low %v5805, %v5806
        %v6229 = vunpack.c.l.s4 1983009808
        %v6230 = vunpack.c.0.s8 %v6229
        %v6231 = vlaneseq
        %v6232 = vshrl.u32 %v6231, 7
        %v6233 = vsub.s32 %v6230, %v6232
        %v6234 = vrot.slane %v6227, %v6233
        %v6235 = vcombine.low %v5807, %v5808
        %v6237 = vunpack.c.l.s4 1983009808
        %v6238 = vunpack.c.0.s8 %v6237
        %v6239 = vlaneseq
        %v6240 = vshrl.u32 %v6239, 7
        %v6241 = vsub.s32 %v6238, %v6240
        %v6242 = vrot.slane %v6235, %v6241
        %v6243 = vcombine.low %v5809, %v5810
        %v6245 = vunpack.c.l.s4 1983009808
        %v6246 = vunpack.c.0.s8 %v6245
        %v6247 = vlaneseq
        %v6248 = vshrl.u32 %v6247, 7
        %v6249 = vsub.s32 %v6246, %v6248
        %v6250 = vrot.slane %v6243, %v6249
        %v6251 = vcombine.low %v5811, %v5812
        %v6253 = vunpack.c.l.s4 1983009808
        %v6254 = vunpack.c.0.s8 %v6253
        %v6255 = vlaneseq
        %v6256 = vshrl.u32 %v6255, 7
        %v6257 = vsub.s32 %v6254, %v6256
        %v6258 = vrot.slane %v6251, %v6257
        %v6259 = vcombine.low %v5813, %v5814
        %v6261 = vunpack.c.l.s4 1983009808
        %v6262 = vunpack.c.0.s8 %v6261
        %v6263 = vlaneseq
        %v6264 = vshrl.u32 %v6263, 7
        %v6265 = vsub.s32 %v6262, %v6264
        %v6266 = vrot.slane %v6259, %v6265
        %v6267 = vcombine.low %v5815, %v5816
        %v6269 = vunpack.c.l.s4 1983009808
        %v6270 = vunpack.c.0.s8 %v6269
        %v6271 = vlaneseq
        %v6272 = vshrl.u32 %v6271, 7
        %v6273 = vsub.s32 %v6270, %v6272
        %v6274 = vrot.slane %v6267, %v6273
        %v6275 = vcombine.low %v5817, %v5818
        %v6277 = vunpack.c.l.s4 1983009808
        %v6278 = vunpack.c.0.s8 %v6277
        %v6279 = vlaneseq
        %v6280 = vshrl.u32 %v6279, 7
        %v6281 = vsub.s32 %v6278, %v6280
        %v6282 = vrot.slane %v6275, %v6281
        %v6283 = vcombine.low %v5819, %v5820
        %v6285 = vunpack.c.l.s4 1983009808
        %v6286 = vunpack.c.0.s8 %v6285
        %v6287 = vlaneseq
        %v6288 = vshrl.u32 %v6287, 7
        %v6289 = vsub.s32 %v6286, %v6288
        %v6290 = vrot.slane %v6283, %v6289
        %v6291 = vcombine.low %v5821, %v5822
        %v6293 = vunpack.c.l.s4 1983009808
        %v6294 = vunpack.c.0.s8 %v6293
        %v6295 = vlaneseq
        %v6296 = vshrl.u32 %v6295, 7
        %v6297 = vsub.s32 %v6294, %v6296
        %v6298 = vrot.slane %v6291, %v6297
        %v6299 = vcombine.low %v5823, %v5824
        %v6301 = vunpack.c.l.s4 1983009808
        %v6302 = vunpack.c.0.s8 %v6301
        %v6303 = vlaneseq
        %v6304 = vshrl.u32 %v6303, 7
        %v6305 = vsub.s32 %v6302, %v6304
        %v6306 = vrot.slane %v6299, %v6305
        %v6307 = vcombine.low %v5825, %v5826
        %v6309 = vunpack.c.l.s4 1983009808
        %v6310 = vunpack.c.0.s8 %v6309
        %v6311 = vlaneseq
        %v6312 = vshrl.u32 %v6311, 7
        %v6313 = vsub.s32 %v6310, %v6312
        %v6314 = vrot.slane %v6307, %v6313
        %v6315 = vcombine.low %v5827, %v5828
        %v6317 = vunpack.c.l.s4 1983009808
        %v6318 = vunpack.c.0.s8 %v6317
        %v6319 = vlaneseq
        %v6320 = vshrl.u32 %v6319, 7
        %v6321 = vsub.s32 %v6318, %v6320
        %v6322 = vrot.slane %v6315, %v6321
        %v6323 = vcombine.low %v5829, %v5830
        %v6325 = vunpack.c.l.s4 1983009808
        %v6326 = vunpack.c.0.s8 %v6325
        %v6327 = vlaneseq
        %v6328 = vshrl.u32 %v6327, 7
        %v6329 = vsub.s32 %v6326, %v6328
        %v6330 = vrot.slane %v6323, %v6329
        %v6331 = vcombine.low %v5831, %v5832
        %v6333 = vunpack.c.l.s4 1983009808
        %v6334 = vunpack.c.0.s8 %v6333
        %v6335 = vlaneseq
        %v6336 = vshrl.u32 %v6335, 7
        %v6337 = vsub.s32 %v6334, %v6336
        %v6338 = vrot.slane %v6331, %v6337
        %v6339 = vcombine.low %v5833, %v5834
        %v6341 = vunpack.c.l.s4 1983009808
        %v6342 = vunpack.c.0.s8 %v6341
        %v6343 = vlaneseq
        %v6344 = vshrl.u32 %v6343, 7
        %v6345 = vsub.s32 %v6342, %v6344
        %v6346 = vrot.slane %v6339, %v6345
        %v6347 = vcombine.low %v5835, %v5836
        %v6349 = vunpack.c.l.s4 1983009808
        %v6350 = vunpack.c.0.s8 %v6349
        %v6351 = vlaneseq
        %v6352 = vshrl.u32 %v6351, 7
        %v6353 = vsub.s32 %v6350, %v6352
        %v6354 = vrot.slane %v6347, %v6353
        %v6355 = vcombine.low %v5837, %v5838
        %v6357 = vunpack.c.l.s4 1983009808
        %v6358 = vunpack.c.0.s8 %v6357
        %v6359 = vlaneseq
        %v6360 = vshrl.u32 %v6359, 7
        %v6361 = vsub.s32 %v6358, %v6360
        %v6362 = vrot.slane %v6355, %v6361
        %v6363 = vcombine.low %v5839, %v5840
        %v6365 = vunpack.c.l.s4 1983009808
        %v6366 = vunpack.c.0.s8 %v6365
        %v6367 = vlaneseq
        %v6368 = vshrl.u32 %v6367, 7
        %v6369 = vsub.s32 %v6366, %v6368
        %v6370 = vrot.slane %v6363, %v6369
        %v6371 = vcombine.low %v5841, %v5842
        %v6373 = vunpack.c.l.s4 1983009808
        %v6374 = vunpack.c.0.s8 %v6373
        %v6375 = vlaneseq
        %v6376 = vshrl.u32 %v6375, 7
        %v6377 = vsub.s32 %v6374, %v6376
        %v6378 = vrot.slane %v6371, %v6377
        %v6379 = vcombine.low %v5843, %v5844
        %v6381 = vunpack.c.l.s4 1983009808
        %v6382 = vunpack.c.0.s8 %v6381
        %v6383 = vlaneseq
        %v6384 = vshrl.u32 %v6383, 7
        %v6385 = vsub.s32 %v6382, %v6384
        %v6386 = vrot.slane %v6379, %v6385
        %v6387 = vcombine.low %v5845, %v5846
        %v6389 = vunpack.c.l.s4 1983009808
        %v6390 = vunpack.c.0.s8 %v6389
        %v6391 = vlaneseq
        %v6392 = vshrl.u32 %v6391, 7
        %v6393 = vsub.s32 %v6390, %v6392
        %v6394 = vrot.slane %v6387, %v6393
        %v6395 = vcombine.low %v5847, %v5848
        %v6397 = vunpack.c.l.s4 1983009808
        %v6398 = vunpack.c.0.s8 %v6397
        %v6399 = vlaneseq
        %v6400 = vshrl.u32 %v6399, 7
        %v6401 = vsub.s32 %v6398, %v6400
        %v6402 = vrot.slane %v6395, %v6401
        %v6403 = vcombine.low %v5849, %v5850
        %v6405 = vunpack.c.l.s4 1983009808
        %v6406 = vunpack.c.0.s8 %v6405
        %v6407 = vlaneseq
        %v6408 = vshrl.u32 %v6407, 7
        %v6409 = vsub.s32 %v6406, %v6408
        %v6410 = vrot.slane %v6403, %v6409
        %v6411 = vcombine.low %v5851, %v5852
        %v6413 = vunpack.c.l.s4 1983009808
        %v6414 = vunpack.c.0.s8 %v6413
        %v6415 = vlaneseq
        %v6416 = vshrl.u32 %v6415, 7
        %v6417 = vsub.s32 %v6414, %v6416
        %v6418 = vrot.slane %v6411, %v6417
        %v6419 = vcombine.low %v5853, %v5854
        %v6421 = vunpack.c.l.s4 1983009808
        %v6422 = vunpack.c.0.s8 %v6421
        %v6423 = vlaneseq
        %v6424 = vshrl.u32 %v6423, 7
        %v6425 = vsub.s32 %v6422, %v6424
        %v6426 = vrot.slane %v6419, %v6425
        %v6427 = vcombine.low %v5855, %v5856
        %v6429 = vunpack.c.l.s4 1983009808
        %v6430 = vunpack.c.0.s8 %v6429
        %v6431 = vlaneseq
        %v6432 = vshrl.u32 %v6431, 7
        %v6433 = vsub.s32 %v6430, %v6432
        %v6434 = vrot.slane %v6427, %v6433
        %v6435 = vcombine.low %v5857, %v5858
        %v6437 = vunpack.c.l.s4 1983009808
        %v6438 = vunpack.c.0.s8 %v6437
        %v6439 = vlaneseq
        %v6440 = vshrl.u32 %v6439, 7
        %v6441 = vsub.s32 %v6438, %v6440
        %v6442 = vrot.slane %v6435, %v6441
        %v6443 = vcombine.low %v5859, %v5860
        %v6445 = vunpack.c.l.s4 1983009808
        %v6446 = vunpack.c.0.s8 %v6445
        %v6447 = vlaneseq
        %v6448 = vshrl.u32 %v6447, 7
        %v6449 = vsub.s32 %v6446, %v6448
        %v6450 = vrot.slane %v6443, %v6449
        %v6451 = vcombine.low %v5861, %v5862
        %v6453 = vunpack.c.l.s4 1983009808
        %v6454 = vunpack.c.0.s8 %v6453
        %v6455 = vlaneseq
        %v6456 = vshrl.u32 %v6455, 7
        %v6457 = vsub.s32 %v6454, %v6456
        %v6458 = vrot.slane %v6451, %v6457
        %v6459 = vcombine.low %v5863, %v5864
        %v6461 = vunpack.c.l.s4 1983009808
        %v6462 = vunpack.c.0.s8 %v6461
        %v6463 = vlaneseq
        %v6464 = vshrl.u32 %v6463, 7
        %v6465 = vsub.s32 %v6462, %v6464
        %v6466 = vrot.slane %v6459, %v6465
        %v6467 = vcombine.low %v5865, %v5866
        %v6469 = vunpack.c.l.s4 1983009808
        %v6470 = vunpack.c.0.s8 %v6469
        %v6471 = vlaneseq
        %v6472 = vshrl.u32 %v6471, 7
        %v6473 = vsub.s32 %v6470, %v6472
        %v6474 = vrot.slane %v6467, %v6473
        %v6475 = vcombine.low %v5867, %v5868
        %v6477 = vunpack.c.l.s4 1983009808
        %v6478 = vunpack.c.0.s8 %v6477
        %v6479 = vlaneseq
        %v6480 = vshrl.u32 %v6479, 7
        %v6481 = vsub.s32 %v6478, %v6480
        %v6482 = vrot.slane %v6475, %v6481
        %v6483 = vcombine.low %v5869, %v5870
        %v6485 = vunpack.c.l.s4 1983009808
        %v6486 = vunpack.c.0.s8 %v6485
        %v6487 = vlaneseq
        %v6488 = vshrl.u32 %v6487, 7
        %v6489 = vsub.s32 %v6486, %v6488
        %v6490 = vrot.slane %v6483, %v6489
        %v6491 = vcombine.low %v5871, %v5872
        %v6493 = vunpack.c.l.s4 1983009808
        %v6494 = vunpack.c.0.s8 %v6493
        %v6495 = vlaneseq
        %v6496 = vshrl.u32 %v6495, 7
        %v6497 = vsub.s32 %v6494, %v6496
        %v6498 = vrot.slane %v6491, %v6497
        %v6499 = vcombine.low %v5873, %v5874
        %v6501 = vunpack.c.l.s4 1983009808
        %v6502 = vunpack.c.0.s8 %v6501
        %v6503 = vlaneseq
        %v6504 = vshrl.u32 %v6503, 7
        %v6505 = vsub.s32 %v6502, %v6504
        %v6506 = vrot.slane %v6499, %v6505
        %v6507 = vcombine.low %v5875, %v5876
        %v6509 = vunpack.c.l.s4 1983009808
        %v6510 = vunpack.c.0.s8 %v6509
        %v6511 = vlaneseq
        %v6512 = vshrl.u32 %v6511, 7
        %v6513 = vsub.s32 %v6510, %v6512
        %v6514 = vrot.slane %v6507, %v6513
        %v6515 = vcombine.low %v5877, %v5878
        %v6517 = vunpack.c.l.s4 1983009808
        %v6518 = vunpack.c.0.s8 %v6517
        %v6519 = vlaneseq
        %v6520 = vshrl.u32 %v6519, 7
        %v6521 = vsub.s32 %v6518, %v6520
        %v6522 = vrot.slane %v6515, %v6521
        %v6523 = vcombine.low %v5879, %v5880
        %v6525 = vunpack.c.l.s4 1983009808
        %v6526 = vunpack.c.0.s8 %v6525
        %v6527 = vlaneseq
        %v6528 = vshrl.u32 %v6527, 7
        %v6529 = vsub.s32 %v6526, %v6528
        %v6530 = vrot.slane %v6523, %v6529
        %v6531 = vcombine.low %v5881, %v5882
        %v6533 = vunpack.c.l.s4 1983009808
        %v6534 = vunpack.c.0.s8 %v6533
        %v6535 = vlaneseq
        %v6536 = vshrl.u32 %v6535, 7
        %v6537 = vsub.s32 %v6534, %v6536
        %v6538 = vrot.slane %v6531, %v6537
        %v6539 = vcombine.low %v5883, %v5884
        %v6541 = vunpack.c.l.s4 1983009808
        %v6542 = vunpack.c.0.s8 %v6541
        %v6543 = vlaneseq
        %v6544 = vshrl.u32 %v6543, 7
        %v6545 = vsub.s32 %v6542, %v6544
        %v6546 = vrot.slane %v6539, %v6545
        %v6547 = vcombine.low %v5885, %v5886
        %v6549 = vunpack.c.l.s4 1983009808
        %v6550 = vunpack.c.0.s8 %v6549
        %v6551 = vlaneseq
        %v6552 = vshrl.u32 %v6551, 7
        %v6553 = vsub.s32 %v6550, %v6552
        %v6554 = vrot.slane %v6547, %v6553
        %v6555 = vcombine.low %v5887, %v5888
        %v6557 = vunpack.c.l.s4 1983009808
        %v6558 = vunpack.c.0.s8 %v6557
        %v6559 = vlaneseq
        %v6560 = vshrl.u32 %v6559, 7
        %v6561 = vsub.s32 %v6558, %v6560
        %v6562 = vrot.slane %v6555, %v6561
        %v6563 = vcombine.low %v5889, %v5890
        %v6565 = vunpack.c.l.s4 1983009808
        %v6566 = vunpack.c.0.s8 %v6565
        %v6567 = vlaneseq
        %v6568 = vshrl.u32 %v6567, 7
        %v6569 = vsub.s32 %v6566, %v6568
        %v6570 = vrot.slane %v6563, %v6569
        %v6571 = vcombine.low %v5891, %v5892
        %v6573 = vunpack.c.l.s4 1983009808
        %v6574 = vunpack.c.0.s8 %v6573
        %v6575 = vlaneseq
        %v6576 = vshrl.u32 %v6575, 7
        %v6577 = vsub.s32 %v6574, %v6576
        %v6578 = vrot.slane %v6571, %v6577
        %v6579 = vcombine.low %v5893, %v5894
        %v6581 = vunpack.c.l.s4 1983009808
        %v6582 = vunpack.c.0.s8 %v6581
        %v6583 = vlaneseq
        %v6584 = vshrl.u32 %v6583, 7
        %v6585 = vsub.s32 %v6582, %v6584
        %v6586 = vrot.slane %v6579, %v6585
        %v6587 = vcombine.low %v5895, %v5896
        %v6589 = vunpack.c.l.s4 1983009808
        %v6590 = vunpack.c.0.s8 %v6589
        %v6591 = vlaneseq
        %v6592 = vshrl.u32 %v6591, 7
        %v6593 = vsub.s32 %v6590, %v6592
        %v6594 = vrot.slane %v6587, %v6593
        %v6595 = vcombine.low %v5897, %v5898
        %v6597 = vunpack.c.l.s4 1983009808
        %v6598 = vunpack.c.0.s8 %v6597
        %v6599 = vlaneseq
        %v6600 = vshrl.u32 %v6599, 7
        %v6601 = vsub.s32 %v6598, %v6600
        %v6602 = vrot.slane %v6595, %v6601
        %v6603 = vcombine.low %v5899, %v5900
        %v6605 = vunpack.c.l.s4 1983009808
        %v6606 = vunpack.c.0.s8 %v6605
        %v6607 = vlaneseq
        %v6608 = vshrl.u32 %v6607, 7
        %v6609 = vsub.s32 %v6606, %v6608
        %v6610 = vrot.slane %v6603, %v6609
        %v6611 = vcombine.low %v5901, %v5902
        %v6613 = vunpack.c.l.s4 1983009808
        %v6614 = vunpack.c.0.s8 %v6613
        %v6615 = vlaneseq
        %v6616 = vshrl.u32 %v6615, 7
        %v6617 = vsub.s32 %v6614, %v6616
        %v6618 = vrot.slane %v6611, %v6617
        %v6619 = vcombine.low %v5903, %v5904
        %v6621 = vunpack.c.l.s4 1983009808
        %v6622 = vunpack.c.0.s8 %v6621
        %v6623 = vlaneseq
        %v6624 = vshrl.u32 %v6623, 7
        %v6625 = vsub.s32 %v6622, %v6624
        %v6626 = vrot.slane %v6619, %v6625
        %v6627 = vcombine.low %v5905, %v5906
        %v6629 = vunpack.c.l.s4 1983009808
        %v6630 = vunpack.c.0.s8 %v6629
        %v6631 = vlaneseq
        %v6632 = vshrl.u32 %v6631, 7
        %v6633 = vsub.s32 %v6630, %v6632
        %v6634 = vrot.slane %v6627, %v6633
        %v6635 = vcombine.low %v5907, %v5908
        %v6637 = vunpack.c.l.s4 1983009808
        %v6638 = vunpack.c.0.s8 %v6637
        %v6639 = vlaneseq
        %v6640 = vshrl.u32 %v6639, 7
        %v6641 = vsub.s32 %v6638, %v6640
        %v6642 = vrot.slane %v6635, %v6641
        %v6643 = vcombine.low %v5909, %v5910
        %v6645 = vunpack.c.l.s4 1983009808
        %v6646 = vunpack.c.0.s8 %v6645
        %v6647 = vlaneseq
        %v6648 = vshrl.u32 %v6647, 7
        %v6649 = vsub.s32 %v6646, %v6648
        %v6650 = vrot.slane %v6643, %v6649
        %v6651 = vcombine.low %v5911, %v5912
        %v6653 = vunpack.c.l.s4 1983009808
        %v6654 = vunpack.c.0.s8 %v6653
        %v6655 = vlaneseq
        %v6656 = vshrl.u32 %v6655, 7
        %v6657 = vsub.s32 %v6654, %v6656
        %v6658 = vrot.slane %v6651, %v6657
        %v6659 = vcombine.low %v5913, %v5914
        %v6661 = vunpack.c.l.s4 1983009808
        %v6662 = vunpack.c.0.s8 %v6661
        %v6663 = vlaneseq
        %v6664 = vshrl.u32 %v6663, 7
        %v6665 = vsub.s32 %v6662, %v6664
        %v6666 = vrot.slane %v6659, %v6665
        %v6667 = vcombine.low %v5915, %v5916
        %v6669 = vunpack.c.l.s4 1983009808
        %v6670 = vunpack.c.0.s8 %v6669
        %v6671 = vlaneseq
        %v6672 = vshrl.u32 %v6671, 7
        %v6673 = vsub.s32 %v6670, %v6672
        %v6674 = vrot.slane %v6667, %v6673
        %v6675 = vcombine.low %v5917, %v5918
        %v6677 = vunpack.c.l.s4 1983009808
        %v6678 = vunpack.c.0.s8 %v6677
        %v6679 = vlaneseq
        %v6680 = vshrl.u32 %v6679, 7
        %v6681 = vsub.s32 %v6678, %v6680
        %v6682 = vrot.slane %v6675, %v6681
        %v6683 = vcombine.low %v5919, %v5920
        %v6685 = vunpack.c.l.s4 1983009808
        %v6686 = vunpack.c.0.s8 %v6685
        %v6687 = vlaneseq
        %v6688 = vshrl.u32 %v6687, 7
        %v6689 = vsub.s32 %v6686, %v6688
        %v6690 = vrot.slane %v6683, %v6689
        %v6691 = vcombine.low %v5921, %v5922
        %v6693 = vunpack.c.l.s4 1983009808
        %v6694 = vunpack.c.0.s8 %v6693
        %v6695 = vlaneseq
        %v6696 = vshrl.u32 %v6695, 7
        %v6697 = vsub.s32 %v6694, %v6696
        %v6698 = vrot.slane %v6691, %v6697
        %v6699 = vcombine.low %v5923, %v5924
        %v6701 = vunpack.c.l.s4 1983009808
        %v6702 = vunpack.c.0.s8 %v6701
        %v6703 = vlaneseq
        %v6704 = vshrl.u32 %v6703, 7
        %v6705 = vsub.s32 %v6702, %v6704
        %v6706 = vrot.slane %v6699, %v6705
        %v6707 = vcombine.low %v5925, %v5926
        %v6709 = vunpack.c.l.s4 1983009808
        %v6710 = vunpack.c.0.s8 %v6709
        %v6711 = vlaneseq
        %v6712 = vshrl.u32 %v6711, 7
        %v6713 = vsub.s32 %v6710, %v6712
        %v6714 = vrot.slane %v6707, %v6713
        %v6715 = vcombine.low %v5927, %v5928
        %v6717 = vunpack.c.l.s4 1983009808
        %v6718 = vunpack.c.0.s8 %v6717
        %v6719 = vlaneseq
        %v6720 = vshrl.u32 %v6719, 7
        %v6721 = vsub.s32 %v6718, %v6720
        %v6722 = vrot.slane %v6715, %v6721
        %v6723 = vcombine.low %v5929, %v5930
        %v6725 = vunpack.c.l.s4 1983009808
        %v6726 = vunpack.c.0.s8 %v6725
        %v6727 = vlaneseq
        %v6728 = vshrl.u32 %v6727, 7
        %v6729 = vsub.s32 %v6726, %v6728
        %v6730 = vrot.slane %v6723, %v6729
        %vm6731 = vcmask 1044484
        %vm6732 = vsmask.f32 4352
        %vm6733 = vmand %vm6731, %vm6732
        %vm6734 = vmor %vm6733, %vm1598
        %v6735 = vld [vmem:[#allocation3] sm:$0x11]
        %v6736 = vsel %vm6734, 0, %v6735
        %6737 = vst [vmem:[#allocation3] sm:$0x11] %v6736
        %v6738 = vcombine.low %v6098, %v6106
        %v6739 = vcombine.low %v6114, %v6122
        %v6741 = vunpack.c.l.s4 1983009808
        %v6742 = vunpack.c.0.s8 %v6741
        %v6743 = vlaneseq
        %v6744 = vshrl.u32 %v6743, 7
        %v6745 = vsub.s32 %v6742, %v6744
        %v6746 = vrot.slane %v6738, %v6745
        %v6748 = vunpack.c.l.s4 1983009808
        %v6749 = vunpack.c.0.s8 %v6748
        %v6750 = vlaneseq
        %v6751 = vshrl.u32 %v6750, 7
        %v6752 = vsub.s32 %v6749, %v6751
        %v6753 = vrot.slane %v6739, %v6752
        %v6754 = vcombine.low %v6746, %v6753
        %v6755 = vcombine.high %v6746, %v6753
        %v6756 = vcombine.low %v6130, %v6138
        %v6757 = vcombine.low %v6146, %v6154
        %v6759 = vunpack.c.l.s4 1983009808
        %v6760 = vunpack.c.0.s8 %v6759
        %v6761 = vlaneseq
        %v6762 = vshrl.u32 %v6761, 7
        %v6763 = vsub.s32 %v6760, %v6762
        %v6764 = vrot.slane %v6756, %v6763
        %v6766 = vunpack.c.l.s4 1983009808
        %v6767 = vunpack.c.0.s8 %v6766
        %v6768 = vlaneseq
        %v6769 = vshrl.u32 %v6768, 7
        %v6770 = vsub.s32 %v6767, %v6769
        %v6771 = vrot.slane %v6757, %v6770
        %v6772 = vcombine.low %v6764, %v6771
        %v6773 = vcombine.high %v6764, %v6771
        %v6774 = vcombine.low %v6162, %v6170
        %v6775 = vcombine.low %v6178, %v6186
        %v6777 = vunpack.c.l.s4 1983009808
        %v6778 = vunpack.c.0.s8 %v6777
        %v6779 = vlaneseq
        %v6780 = vshrl.u32 %v6779, 7
        %v6781 = vsub.s32 %v6778, %v6780
        %v6782 = vrot.slane %v6774, %v6781
        %v6784 = vunpack.c.l.s4 1983009808
        %v6785 = vunpack.c.0.s8 %v6784
        %v6786 = vlaneseq
        %v6787 = vshrl.u32 %v6786, 7
        %v6788 = vsub.s32 %v6785, %v6787
        %v6789 = vrot.slane %v6775, %v6788
        %v6790 = vcombine.low %v6782, %v6789
        %v6791 = vcombine.high %v6782, %v6789
        %v6792 = vcombine.low %v6194, %v6202
        %v6793 = vcombine.low %v6210, %v6218
        %v6795 = vunpack.c.l.s4 1983009808
        %v6796 = vunpack.c.0.s8 %v6795
        %v6797 = vlaneseq
        %v6798 = vshrl.u32 %v6797, 7
        %v6799 = vsub.s32 %v6796, %v6798
        %v6800 = vrot.slane %v6792, %v6799
        %v6802 = vunpack.c.l.s4 1983009808
        %v6803 = vunpack.c.0.s8 %v6802
        %v6804 = vlaneseq
        %v6805 = vshrl.u32 %v6804, 7
        %v6806 = vsub.s32 %v6803, %v6805
        %v6807 = vrot.slane %v6793, %v6806
        %v6808 = vcombine.low %v6800, %v6807
        %v6809 = vcombine.high %v6800, %v6807
        %v6810 = vcombine.low %v6226, %v6234
        %v6811 = vcombine.low %v6242, %v6250
        %v6813 = vunpack.c.l.s4 1983009808
        %v6814 = vunpack.c.0.s8 %v6813
        %v6815 = vlaneseq
        %v6816 = vshrl.u32 %v6815, 7
        %v6817 = vsub.s32 %v6814, %v6816
        %v6818 = vrot.slane %v6810, %v6817
        %v6820 = vunpack.c.l.s4 1983009808
        %v6821 = vunpack.c.0.s8 %v6820
        %v6822 = vlaneseq
        %v6823 = vshrl.u32 %v6822, 7
        %v6824 = vsub.s32 %v6821, %v6823
        %v6825 = vrot.slane %v6811, %v6824
        %v6826 = vcombine.low %v6818, %v6825
        %v6827 = vcombine.high %v6818, %v6825
        %v6828 = vcombine.low %v6258, %v6266
        %v6829 = vcombine.low %v6274, %v6282
        %v6831 = vunpack.c.l.s4 1983009808
        %v6832 = vunpack.c.0.s8 %v6831
        %v6833 = vlaneseq
        %v6834 = vshrl.u32 %v6833, 7
        %v6835 = vsub.s32 %v6832, %v6834
        %v6836 = vrot.slane %v6828, %v6835
        %v6838 = vunpack.c.l.s4 1983009808
        %v6839 = vunpack.c.0.s8 %v6838
        %v6840 = vlaneseq
        %v6841 = vshrl.u32 %v6840, 7
        %v6842 = vsub.s32 %v6839, %v6841
        %v6843 = vrot.slane %v6829, %v6842
        %v6844 = vcombine.low %v6836, %v6843
        %v6845 = vcombine.high %v6836, %v6843
        %v6846 = vcombine.low %v6290, %v6298
        %v6847 = vcombine.low %v6306, %v6314
        %v6849 = vunpack.c.l.s4 1983009808
        %v6850 = vunpack.c.0.s8 %v6849
        %v6851 = vlaneseq
        %v6852 = vshrl.u32 %v6851, 7
        %v6853 = vsub.s32 %v6850, %v6852
        %v6854 = vrot.slane %v6846, %v6853
        %v6856 = vunpack.c.l.s4 1983009808
        %v6857 = vunpack.c.0.s8 %v6856
        %v6858 = vlaneseq
        %v6859 = vshrl.u32 %v6858, 7
        %v6860 = vsub.s32 %v6857, %v6859
        %v6861 = vrot.slane %v6847, %v6860
        %v6862 = vcombine.low %v6854, %v6861
        %v6863 = vcombine.high %v6854, %v6861
        %v6864 = vcombine.low %v6322, %v6330
        %v6865 = vcombine.low %v6338, %v6346
        %v6867 = vunpack.c.l.s4 1983009808
        %v6868 = vunpack.c.0.s8 %v6867
        %v6869 = vlaneseq
        %v6870 = vshrl.u32 %v6869, 7
        %v6871 = vsub.s32 %v6868, %v6870
        %v6872 = vrot.slane %v6864, %v6871
        %v6874 = vunpack.c.l.s4 1983009808
        %v6875 = vunpack.c.0.s8 %v6874
        %v6876 = vlaneseq
        %v6877 = vshrl.u32 %v6876, 7
        %v6878 = vsub.s32 %v6875, %v6877
        %v6879 = vrot.slane %v6865, %v6878
        %v6880 = vcombine.low %v6872, %v6879
        %v6881 = vcombine.high %v6872, %v6879
        %v6882 = vcombine.low %v6354, %v6362
        %v6883 = vcombine.low %v6370, %v6378
        %v6885 = vunpack.c.l.s4 1983009808
        %v6886 = vunpack.c.0.s8 %v6885
        %v6887 = vlaneseq
        %v6888 = vshrl.u32 %v6887, 7
        %v6889 = vsub.s32 %v6886, %v6888
        %v6890 = vrot.slane %v6882, %v6889
        %v6892 = vunpack.c.l.s4 1983009808
        %v6893 = vunpack.c.0.s8 %v6892
        %v6894 = vlaneseq
        %v6895 = vshrl.u32 %v6894, 7
        %v6896 = vsub.s32 %v6893, %v6895
        %v6897 = vrot.slane %v6883, %v6896
        %v6898 = vcombine.low %v6890, %v6897
        %v6899 = vcombine.high %v6890, %v6897
        %v6900 = vcombine.low %v6386, %v6394
        %v6901 = vcombine.low %v6402, %v6410
        %v6903 = vunpack.c.l.s4 1983009808
        %v6904 = vunpack.c.0.s8 %v6903
        %v6905 = vlaneseq
        %v6906 = vshrl.u32 %v6905, 7
        %v6907 = vsub.s32 %v6904, %v6906
        %v6908 = vrot.slane %v6900, %v6907
        %v6910 = vunpack.c.l.s4 1983009808
        %v6911 = vunpack.c.0.s8 %v6910
        %v6912 = vlaneseq
        %v6913 = vshrl.u32 %v6912, 7
        %v6914 = vsub.s32 %v6911, %v6913
        %v6915 = vrot.slane %v6901, %v6914
        %v6916 = vcombine.low %v6908, %v6915
        %v6917 = vcombine.high %v6908, %v6915
        %v6918 = vcombine.low %v6418, %v6426
        %v6919 = vcombine.low %v6434, %v6442
        %v6921 = vunpack.c.l.s4 1983009808
        %v6922 = vunpack.c.0.s8 %v6921
        %v6923 = vlaneseq
        %v6924 = vshrl.u32 %v6923, 7
        %v6925 = vsub.s32 %v6922, %v6924
        %v6926 = vrot.slane %v6918, %v6925
        %v6928 = vunpack.c.l.s4 1983009808
        %v6929 = vunpack.c.0.s8 %v6928
        %v6930 = vlaneseq
        %v6931 = vshrl.u32 %v6930, 7
        %v6932 = vsub.s32 %v6929, %v6931
        %v6933 = vrot.slane %v6919, %v6932
        %v6934 = vcombine.low %v6926, %v6933
        %v6935 = vcombine.high %v6926, %v6933
        %v6936 = vcombine.low %v6450, %v6458
        %v6937 = vcombine.low %v6466, %v6474
        %v6939 = vunpack.c.l.s4 1983009808
        %v6940 = vunpack.c.0.s8 %v6939
        %v6941 = vlaneseq
        %v6942 = vshrl.u32 %v6941, 7
        %v6943 = vsub.s32 %v6940, %v6942
        %v6944 = vrot.slane %v6936, %v6943
        %v6946 = vunpack.c.l.s4 1983009808
        %v6947 = vunpack.c.0.s8 %v6946
        %v6948 = vlaneseq
        %v6949 = vshrl.u32 %v6948, 7
        %v6950 = vsub.s32 %v6947, %v6949
        %v6951 = vrot.slane %v6937, %v6950
        %v6952 = vcombine.low %v6944, %v6951
        %v6953 = vcombine.high %v6944, %v6951
        %v6954 = vcombine.low %v6482, %v6490
        %v6955 = vcombine.low %v6498, %v6506
        %v6957 = vunpack.c.l.s4 1983009808
        %v6958 = vunpack.c.0.s8 %v6957
        %v6959 = vlaneseq
        %v6960 = vshrl.u32 %v6959, 7
        %v6961 = vsub.s32 %v6958, %v6960
        %v6962 = vrot.slane %v6954, %v6961
        %v6964 = vunpack.c.l.s4 1983009808
        %v6965 = vunpack.c.0.s8 %v6964
        %v6966 = vlaneseq
        %v6967 = vshrl.u32 %v6966, 7
        %v6968 = vsub.s32 %v6965, %v6967
        %v6969 = vrot.slane %v6955, %v6968
        %v6970 = vcombine.low %v6962, %v6969
        %v6971 = vcombine.high %v6962, %v6969
        %v6972 = vcombine.low %v6514, %v6522
        %v6973 = vcombine.low %v6530, %v6538
        %v6975 = vunpack.c.l.s4 1983009808
        %v6976 = vunpack.c.0.s8 %v6975
        %v6977 = vlaneseq
        %v6978 = vshrl.u32 %v6977, 7
        %v6979 = vsub.s32 %v6976, %v6978
        %v6980 = vrot.slane %v6972, %v6979
        %v6982 = vunpack.c.l.s4 1983009808
        %v6983 = vunpack.c.0.s8 %v6982
        %v6984 = vlaneseq
        %v6985 = vshrl.u32 %v6984, 7
        %v6986 = vsub.s32 %v6983, %v6985
        %v6987 = vrot.slane %v6973, %v6986
        %v6988 = vcombine.low %v6980, %v6987
        %v6989 = vcombine.high %v6980, %v6987
        %v6990 = vcombine.low %v6546, %v6554
        %v6991 = vcombine.low %v6562, %v6570
        %v6993 = vunpack.c.l.s4 1983009808
        %v6994 = vunpack.c.0.s8 %v6993
        %v6995 = vlaneseq
        %v6996 = vshrl.u32 %v6995, 7
        %v6997 = vsub.s32 %v6994, %v6996
        %v6998 = vrot.slane %v6990, %v6997
        %v7000 = vunpack.c.l.s4 1983009808
        %v7001 = vunpack.c.0.s8 %v7000
        %v7002 = vlaneseq
        %v7003 = vshrl.u32 %v7002, 7
        %v7004 = vsub.s32 %v7001, %v7003
        %v7005 = vrot.slane %v6991, %v7004
        %v7006 = vcombine.low %v6998, %v7005
        %v7007 = vcombine.high %v6998, %v7005
        %v7008 = vcombine.low %v6578, %v6586
        %v7009 = vcombine.low %v6594, %v6602
        %v7011 = vunpack.c.l.s4 1983009808
        %v7012 = vunpack.c.0.s8 %v7011
        %v7013 = vlaneseq
        %v7014 = vshrl.u32 %v7013, 7
        %v7015 = vsub.s32 %v7012, %v7014
        %v7016 = vrot.slane %v7008, %v7015
        %v7018 = vunpack.c.l.s4 1983009808
        %v7019 = vunpack.c.0.s8 %v7018
        %v7020 = vlaneseq
        %v7021 = vshrl.u32 %v7020, 7
        %v7022 = vsub.s32 %v7019, %v7021
        %v7023 = vrot.slane %v7009, %v7022
        %v7024 = vcombine.low %v7016, %v7023
        %v7025 = vcombine.high %v7016, %v7023
        %v7026 = vcombine.low %v6610, %v6618
        %v7027 = vcombine.low %v6626, %v6634
        %v7029 = vunpack.c.l.s4 1983009808
        %v7030 = vunpack.c.0.s8 %v7029
        %v7031 = vlaneseq
        %v7032 = vshrl.u32 %v7031, 7
        %v7033 = vsub.s32 %v7030, %v7032
        %v7034 = vrot.slane %v7026, %v7033
        %v7036 = vunpack.c.l.s4 1983009808
        %v7037 = vunpack.c.0.s8 %v7036
        %v7038 = vlaneseq
        %v7039 = vshrl.u32 %v7038, 7
        %v7040 = vsub.s32 %v7037, %v7039
        %v7041 = vrot.slane %v7027, %v7040
        %v7042 = vcombine.low %v7034, %v7041
        %v7043 = vcombine.high %v7034, %v7041
        %v7044 = vcombine.low %v6642, %v6650
        %v7045 = vcombine.low %v6658, %v6666
        %v7047 = vunpack.c.l.s4 1983009808
        %v7048 = vunpack.c.0.s8 %v7047
        %v7049 = vlaneseq
        %v7050 = vshrl.u32 %v7049, 7
        %v7051 = vsub.s32 %v7048, %v7050
        %v7052 = vrot.slane %v7044, %v7051
        %v7054 = vunpack.c.l.s4 1983009808
        %v7055 = vunpack.c.0.s8 %v7054
        %v7056 = vlaneseq
        %v7057 = vshrl.u32 %v7056, 7
        %v7058 = vsub.s32 %v7055, %v7057
        %v7059 = vrot.slane %v7045, %v7058
        %v7060 = vcombine.low %v7052, %v7059
        %v7061 = vcombine.high %v7052, %v7059
        %v7062 = vcombine.low %v6674, %v6682
        %v7063 = vcombine.low %v6690, %v6698
        %v7065 = vunpack.c.l.s4 1983009808
        %v7066 = vunpack.c.0.s8 %v7065
        %v7067 = vlaneseq
        %v7068 = vshrl.u32 %v7067, 7
        %v7069 = vsub.s32 %v7066, %v7068
        %v7070 = vrot.slane %v7062, %v7069
        %v7072 = vunpack.c.l.s4 1983009808
        %v7073 = vunpack.c.0.s8 %v7072
        %v7074 = vlaneseq
        %v7075 = vshrl.u32 %v7074, 7
        %v7076 = vsub.s32 %v7073, %v7075
        %v7077 = vrot.slane %v7063, %v7076
        %v7078 = vcombine.low %v7070, %v7077
        %v7079 = vcombine.high %v7070, %v7077
        %v7080 = vcombine.low %v6706, %v6714
        %v7081 = vcombine.low %v6722, %v6730
        %v7083 = vunpack.c.l.s4 1983009808
        %v7084 = vunpack.c.0.s8 %v7083
        %v7085 = vlaneseq
        %v7086 = vshrl.u32 %v7085, 7
        %v7087 = vsub.s32 %v7084, %v7086
        %v7088 = vrot.slane %v7080, %v7087
        %v7090 = vunpack.c.l.s4 1983009808
        %v7091 = vunpack.c.0.s8 %v7090
        %v7092 = vlaneseq
        %v7093 = vshrl.u32 %v7092, 7
        %v7094 = vsub.s32 %v7091, %v7093
        %v7095 = vrot.slane %v7081, %v7094
        %v7096 = vcombine.low %v7088, %v7095
        %v7097 = vcombine.high %v7088, %v7095
        %v7138 = vpack.c.bf16 %v6772, %v6754
        %v7139 = vpack.c.bf16 %v6773, %v6755
        %v7140 = vpack.c.bf16 %v6808, %v6790
        %v7141 = vpack.c.bf16 %v6809, %v6791
        %v7142 = vpack.c.bf16 %v6844, %v6826
        %v7143 = vpack.c.bf16 %v6845, %v6827
        %v7144 = vpack.c.bf16 %v6880, %v6862
        %v7145 = vpack.c.bf16 %v6881, %v6863
        %v7146 = vpack.c.bf16 %v6916, %v6898
        %v7147 = vpack.c.bf16 %v6917, %v6899
        %v7148 = vpack.c.bf16 %v6952, %v6934
        %v7149 = vpack.c.bf16 %v6953, %v6935
        %v7150 = vpack.c.bf16 %v6988, %v6970
        %v7151 = vpack.c.bf16 %v6989, %v6971
        %v7152 = vpack.c.bf16 %v7024, %v7006
        %v7153 = vpack.c.bf16 %v7025, %v7007
        %v7154 = vpack.c.bf16 %v7060, %v7042
        %v7155 = vpack.c.bf16 %v7061, %v7043
        %v7156 = vpack.c.bf16 %v7096, %v7078
        %v7157 = vpack.c.bf16 %v7097, %v7079
        %v7178 = vunpack.c.l.b16 %v7138
        %v7179 = vunpack.c.l.b16 %v7139
        %v7180 = vunpack.c.h.b16 %v7138
        %v7181 = vunpack.c.h.b16 %v7139
        %v7182 = vunpack.c.l.b16 %v7140
        %v7183 = vunpack.c.l.b16 %v7141
        %v7184 = vunpack.c.h.b16 %v7140
        %v7185 = vunpack.c.h.b16 %v7141
        %v7186 = vunpack.c.l.b16 %v7142
        %v7187 = vunpack.c.l.b16 %v7143
        %v7188 = vunpack.c.h.b16 %v7142
        %v7189 = vunpack.c.h.b16 %v7143
        %v7190 = vunpack.c.l.b16 %v7144
        %v7191 = vunpack.c.l.b16 %v7145
        %v7192 = vunpack.c.h.b16 %v7144
        %v7193 = vunpack.c.h.b16 %v7145
        %v7194 = vunpack.c.l.b16 %v7146
        %v7195 = vunpack.c.l.b16 %v7147
        %v7196 = vunpack.c.h.b16 %v7146
        %v7197 = vunpack.c.h.b16 %v7147
        %v7198 = vunpack.c.l.b16 %v7148
        %v7199 = vunpack.c.l.b16 %v7149
        %v7200 = vunpack.c.h.b16 %v7148
        %v7201 = vunpack.c.h.b16 %v7149
        %v7202 = vunpack.c.l.b16 %v7150
        %v7203 = vunpack.c.l.b16 %v7151
        %v7204 = vunpack.c.h.b16 %v7150
        %v7205 = vunpack.c.h.b16 %v7151
        %v7206 = vunpack.c.l.b16 %v7152
        %v7207 = vunpack.c.l.b16 %v7153
        %v7208 = vunpack.c.h.b16 %v7152
        %v7209 = vunpack.c.h.b16 %v7153
        %v7210 = vunpack.c.l.b16 %v7154
        %v7211 = vunpack.c.l.b16 %v7155
        %v7212 = vunpack.c.h.b16 %v7154
        %v7213 = vunpack.c.h.b16 %v7155
        %v7214 = vunpack.c.l.b16 %v7156
        %v7215 = vunpack.c.l.b16 %v7157
        %v7216 = vunpack.c.h.b16 %v7156
        %v7217 = vunpack.c.h.b16 %v7157
        %v7218 = vpack.c.b16 %v7179, %v7178
        %v7219 = vpack.c.b16 %v7181, %v7180
        %v7220 = vpack.c.b16 %v7183, %v7182
        %v7221 = vpack.c.b16 %v7185, %v7184
        %v7222 = vpack.c.b16 %v7187, %v7186
        %v7223 = vpack.c.b16 %v7189, %v7188
        %v7224 = vpack.c.b16 %v7191, %v7190
        %v7225 = vpack.c.b16 %v7193, %v7192
        %v7226 = vpack.c.b16 %v7195, %v7194
        %v7227 = vpack.c.b16 %v7197, %v7196
        %v7228 = vpack.c.b16 %v7199, %v7198
        %v7229 = vpack.c.b16 %v7201, %v7200
        %v7230 = vpack.c.b16 %v7203, %v7202
        %v7231 = vpack.c.b16 %v7205, %v7204
        %v7232 = vpack.c.b16 %v7207, %v7206
        %v7233 = vpack.c.b16 %v7209, %v7208
        %v7234 = vpack.c.b16 %v7211, %v7210
        %v7235 = vpack.c.b16 %v7213, %v7212
        %v7236 = vpack.c.b16 %v7215, %v7214
        %v7237 = vpack.c.b16 %v7217, %v7216
        %v7239 = vshrl.u32 %v7218, 16
        %v7241 = vrot.slane %v7239, 7
        %v7242 = vshll.u32 %v7218, 16
        %v7244 = vor.u32 %v7241, %v7242
        %v7245 = vrot.slane %v7241, 4
        %v7247 = vshrl.u32 %v7219, 16
        %v7249 = vrot.slane %v7247, 7
        %v7250 = vshll.u32 %v7219, 16
        %v7252 = vor.u32 %v7249, %v7250
        %v7253 = vsel %vm1853, %v7245, %v7252
        %v7254 = vrot.slane %v7249, 4
        %v7256 = vshrl.u32 %v7220, 16
        %v7258 = vrot.slane %v7256, 7
        %v7259 = vshll.u32 %v7220, 16
        %v7261 = vor.u32 %v7258, %v7259
        %v7262 = vsel %vm1853, %v7254, %v7261
        %v7263 = vrot.slane %v7258, 4
        %v7265 = vshrl.u32 %v7221, 16
        %v7267 = vrot.slane %v7265, 7
        %v7268 = vshll.u32 %v7221, 16
        %v7270 = vor.u32 %v7267, %v7268
        %v7271 = vsel %vm1853, %v7263, %v7270
        %v7272 = vrot.slane %v7267, 4
        %v7274 = vshrl.u32 %v7222, 16
        %v7276 = vrot.slane %v7274, 7
        %v7277 = vshll.u32 %v7222, 16
        %v7279 = vor.u32 %v7276, %v7277
        %v7280 = vsel %vm1853, %v7272, %v7279
        %v7281 = vrot.slane %v7276, 4
        %v7283 = vshrl.u32 %v7223, 16
        %v7285 = vrot.slane %v7283, 7
        %v7286 = vshll.u32 %v7223, 16
        %v7288 = vor.u32 %v7285, %v7286
        %v7289 = vsel %vm1853, %v7281, %v7288
        %v7290 = vrot.slane %v7285, 4
        %v7292 = vshrl.u32 %v7224, 16
        %v7294 = vrot.slane %v7292, 7
        %v7295 = vshll.u32 %v7224, 16
        %v7297 = vor.u32 %v7294, %v7295
        %v7298 = vsel %vm1853, %v7290, %v7297
        %v7299 = vrot.slane %v7294, 4
        %v7301 = vshrl.u32 %v7225, 16
        %v7303 = vrot.slane %v7301, 7
        %v7304 = vshll.u32 %v7225, 16
        %v7306 = vor.u32 %v7303, %v7304
        %v7307 = vsel %vm1853, %v7299, %v7306
        %v7308 = vrot.slane %v7303, 4
        %v7310 = vshrl.u32 %v7226, 16
        %v7312 = vrot.slane %v7310, 7
        %v7313 = vshll.u32 %v7226, 16
        %v7315 = vor.u32 %v7312, %v7313
        %v7316 = vsel %vm1853, %v7308, %v7315
        %v7317 = vrot.slane %v7312, 4
        %v7319 = vshrl.u32 %v7227, 16
        %v7321 = vrot.slane %v7319, 7
        %v7322 = vshll.u32 %v7227, 16
        %v7324 = vor.u32 %v7321, %v7322
        %v7325 = vsel %vm1853, %v7317, %v7324
        %v7326 = vrot.slane %v7321, 4
        %v7328 = vshrl.u32 %v7228, 16
        %v7330 = vrot.slane %v7328, 7
        %v7331 = vshll.u32 %v7228, 16
        %v7333 = vor.u32 %v7330, %v7331
        %v7334 = vsel %vm1853, %v7326, %v7333
        %v7335 = vrot.slane %v7330, 4
        %v7337 = vshrl.u32 %v7229, 16
        %v7339 = vrot.slane %v7337, 7
        %v7340 = vshll.u32 %v7229, 16
        %v7342 = vor.u32 %v7339, %v7340
        %v7343 = vsel %vm1853, %v7335, %v7342
        %v7344 = vrot.slane %v7339, 4
        %v7346 = vshrl.u32 %v7230, 16
        %v7348 = vrot.slane %v7346, 7
        %v7349 = vshll.u32 %v7230, 16
        %v7351 = vor.u32 %v7348, %v7349
        %v7352 = vsel %vm1853, %v7344, %v7351
        %v7353 = vrot.slane %v7348, 4
        %v7355 = vshrl.u32 %v7231, 16
        %v7357 = vrot.slane %v7355, 7
        %v7358 = vshll.u32 %v7231, 16
        %v7360 = vor.u32 %v7357, %v7358
        %v7361 = vsel %vm1853, %v7353, %v7360
        %v7362 = vrot.slane %v7357, 4
        %v7364 = vshrl.u32 %v7232, 16
        %v7366 = vrot.slane %v7364, 7
        %v7367 = vshll.u32 %v7232, 16
        %v7369 = vor.u32 %v7366, %v7367
        %v7370 = vsel %vm1853, %v7362, %v7369
        %v7371 = vrot.slane %v7366, 4
        %v7373 = vshrl.u32 %v7233, 16
        %v7375 = vrot.slane %v7373, 7
        %v7376 = vshll.u32 %v7233, 16
        %v7378 = vor.u32 %v7375, %v7376
        %v7379 = vsel %vm1853, %v7371, %v7378
        %v7380 = vrot.slane %v7375, 4
        %v7382 = vshrl.u32 %v7234, 16
        %v7384 = vrot.slane %v7382, 7
        %v7385 = vshll.u32 %v7234, 16
        %v7387 = vor.u32 %v7384, %v7385
        %v7388 = vsel %vm1853, %v7380, %v7387
        %v7389 = vrot.slane %v7384, 4
        %v7391 = vshrl.u32 %v7235, 16
        %v7393 = vrot.slane %v7391, 7
        %v7394 = vshll.u32 %v7235, 16
        %v7396 = vor.u32 %v7393, %v7394
        %v7397 = vsel %vm1853, %v7389, %v7396
        %v7398 = vrot.slane %v7393, 4
        %v7400 = vshrl.u32 %v7236, 16
        %v7402 = vrot.slane %v7400, 7
        %v7403 = vshll.u32 %v7236, 16
        %v7405 = vor.u32 %v7402, %v7403
        %v7406 = vsel %vm1853, %v7398, %v7405
        %v7407 = vrot.slane %v7402, 4
        %v7409 = vshrl.u32 %v7237, 16
        %v7411 = vrot.slane %v7409, 7
        %v7412 = vshll.u32 %v7237, 16
        %v7414 = vor.u32 %v7411, %v7412
        %v7415 = vsel %vm1853, %v7407, %v7414
        %v7416 = vrot.slane %v7411, 4
        %vm7438 = vcmask 1047556
        %vm7439 = vsmask.f32 7954
        %vm7440 = vmand %vm7438, %vm7439
        %vm7441 = vmor %vm7440, %vm1956
        %v7442 = vld [vmem:[#allocation3] sm:$0xff]
        %v7443 = vsel %vm7441, %v7244, %v7442
        %7444 = vst [vmem:[#allocation3] sm:$0xff] %v7443
        %7445 = vst [vmem:[#allocation3 + $0x8] sm:$0xff] %v7253
        %7446 = vst [vmem:[#allocation3 + $0x10] sm:$0xff] %v7262
        %7447 = vst [vmem:[#allocation3 + $0x18] sm:$0xff] %v7271
        %7448 = vst [vmem:[#allocation3 + $0x20] sm:$0xff] %v7280
        %7449 = vst [vmem:[#allocation3 + $0x28] sm:$0xff] %v7289
        %7450 = vst [vmem:[#allocation3 + $0x30] sm:$0xff] %v7298
        %7451 = vst [vmem:[#allocation3 + $0x38] sm:$0xff] %v7307
        %7452 = vst [vmem:[#allocation3 + $0x40] sm:$0xff] %v7316
        %7453 = vst [vmem:[#allocation3 + $0x48] sm:$0xff] %v7325
        %7454 = vst [vmem:[#allocation3 + $0x50] sm:$0xff] %v7334
        %7455 = vst [vmem:[#allocation3 + $0x58] sm:$0xff] %v7343
        %7456 = vst [vmem:[#allocation3 + $0x60] sm:$0xff] %v7352
        %7457 = vst [vmem:[#allocation3 + $0x68] sm:$0xff] %v7361
        %7458 = vst [vmem:[#allocation3 + $0x70] sm:$0xff] %v7370
        %7459 = vst [vmem:[#allocation3 + $0x78] sm:$0xff] %v7379
        %7460 = vst [vmem:[#allocation3 + $0x80] sm:$0xff] %v7388
        %7461 = vst [vmem:[#allocation3 + $0x88] sm:$0xff] %v7397
        %7462 = vst [vmem:[#allocation3 + $0x90] sm:$0xff] %v7406
        %7463 = vst [vmem:[#allocation3 + $0x98] sm:$0xff] %v7415
        %v7464 = vld [vmem:[#allocation3 + $0xa0] sm:$0x11]
        %v7465 = vsel %vm6734, %v7416, %v7464
        %7466 = vst [vmem:[#allocation3 + $0xa0] sm:$0x11] %v7465
        %vm7467 = vmand %vm6731, %vm7439
        %vm7468 = vmor %vm7467, %vm1972
        %v7469 = vld [vmem:[#allocation3 + $0xa0] sm:$0x11]
        %v7470 = vsel %vm7468, 0, %v7469
        %7471 = vst [vmem:[#allocation3 + $0xa0] sm:$0x11] %v7470
        %v7472 = vld [vmem:[#allocation3] sm:$0xff]
        %v7473 = vld [vmem:[#allocation3 + $0x8] sm:$0xff]
        %v7474 = vld [vmem:[#allocation3 + $0x10] sm:$0xff]
        %v7475 = vld [vmem:[#allocation3 + $0x18] sm:$0xff]
        %v7476 = vld [vmem:[#allocation3 + $0x20] sm:$0xff]
        %v7477 = vld [vmem:[#allocation3 + $0x28] sm:$0xff]
        %v7478 = vld [vmem:[#allocation3 + $0x30] sm:$0xff]
        %v7479 = vld [vmem:[#allocation3 + $0x38] sm:$0xff]
        %v7480 = vld [vmem:[#allocation3 + $0x40] sm:$0xff]
        %v7481 = vld [vmem:[#allocation3 + $0x48] sm:$0xff]
        %v7482 = vld [vmem:[#allocation3 + $0x50] sm:$0xff]
        %v7483 = vld [vmem:[#allocation3 + $0x58] sm:$0xff]
        %v7484 = vld [vmem:[#allocation3 + $0x60] sm:$0xff]
        %v7485 = vld [vmem:[#allocation3 + $0x68] sm:$0xff]
        %v7486 = vld [vmem:[#allocation3 + $0x70] sm:$0xff]
        %v7487 = vld [vmem:[#allocation3 + $0x78] sm:$0xff]
        %v7488 = vld [vmem:[#allocation3 + $0x80] sm:$0xff]
        %v7489 = vld [vmem:[#allocation3 + $0x88] sm:$0xff]
        %v7490 = vld [vmem:[#allocation3 + $0x90] sm:$0xff]
        %v7491 = vld [vmem:[#allocation3 + $0x98] sm:$0xff]
        %v7492 = vld [vmem:[#allocation3 + $0xa0] sm:$0x11]
        %v7493 = vld [vmem:[#allocation7] sm:$0xff]
        %v7494 = vld [vmem:[#allocation7 + $0x8] sm:$0xff]
        %v7495 = vld [vmem:[#allocation7 + $0x10] sm:$0xff]
        %v7496 = vld [vmem:[#allocation7 + $0x18] sm:$0xff]
        %v7497 = vld [vmem:[#allocation7 + $0x20] sm:$0xff]
        %v7498 = vld [vmem:[#allocation7 + $0x28] sm:$0xff]
        %v7499 = vld [vmem:[#allocation7 + $0x30] sm:$0xff]
        %v7500 = vld [vmem:[#allocation7 + $0x38] sm:$0xff]
        %v7501 = vld [vmem:[#allocation7 + $0x40] sm:$0xff]
        %v7502 = vld [vmem:[#allocation7 + $0x48] sm:$0xff]
        %v7503 = vld [vmem:[#allocation7 + $0x50] sm:$0xff]
        %v7504 = vld [vmem:[#allocation7 + $0x58] sm:$0xff]
        %v7505 = vld [vmem:[#allocation7 + $0x60] sm:$0xff]
        %v7506 = vld [vmem:[#allocation7 + $0x68] sm:$0xff]
        %v7507 = vld [vmem:[#allocation7 + $0x70] sm:$0xff]
        %v7508 = vld [vmem:[#allocation7 + $0x78] sm:$0xff]
        %v7509 = vld [vmem:[#allocation7 + $0x80] sm:$0xff]
        %v7510 = vld [vmem:[#allocation7 + $0x88] sm:$0xff]
        %v7511 = vld [vmem:[#allocation7 + $0x90] sm:$0xff]
        %v7512 = vld [vmem:[#allocation7 + $0x98] sm:$0xff]
        %v7513 = vld [vmem:[#allocation7 + $0xa0] sm:$0xff]
        %v7514 = vld [vmem:[#allocation7 + $0xa8] sm:$0xff]
        %v7515 = vld [vmem:[#allocation7 + $0xb0] sm:$0xff]
        %v7516 = vld [vmem:[#allocation7 + $0xb8] sm:$0xff]
        %v7517 = vld [vmem:[#allocation7 + $0xc0] sm:$0xff]
        %v7518 = vld [vmem:[#allocation7 + $0xc8] sm:$0xff]
        %v7519 = vld [vmem:[#allocation7 + $0xd0] sm:$0xff]
        %v7520 = vld [vmem:[#allocation7 + $0xd8] sm:$0xff]
        %v7521 = vld [vmem:[#allocation7 + $0xe0] sm:$0xff]
        %v7522 = vld [vmem:[#allocation7 + $0xe8] sm:$0xff]
        %v7523 = vld [vmem:[#allocation7 + $0xf0] sm:$0xff]
        %v7524 = vld [vmem:[#allocation7 + $0xf8] sm:$0xff]
        %s7525 = scalar_lea.vmem [#allocation7], 256
        %v7526 = vld [vmem:[%s7525] sm:$0xff]
        %v7527 = vld [vmem:[%s7525 + $0x8] sm:$0xff]
        %v7528 = vld [vmem:[%s7525 + $0x10] sm:$0xff]
        %v7529 = vld [vmem:[%s7525 + $0x18] sm:$0xff]
        %v7530 = vld [vmem:[%s7525 + $0x20] sm:$0xff]
        %v7531 = vld [vmem:[%s7525 + $0x28] sm:$0xff]
        %v7532 = vld [vmem:[%s7525 + $0x30] sm:$0xff]
        %v7533 = vld [vmem:[%s7525 + $0x38] sm:$0xff]
        %v7534 = vld [vmem:[%s7525 + $0x40] sm:$0xff]
        %v7535 = vld [vmem:[%s7525 + $0x48] sm:$0xff]
        %v7536 = vld [vmem:[%s7525 + $0x50] sm:$0xff]
        %v7537 = vld [vmem:[%s7525 + $0x58] sm:$0xff]
        %v7538 = vld [vmem:[%s7525 + $0x60] sm:$0xff]
        %v7539 = vld [vmem:[%s7525 + $0x68] sm:$0xff]
        %v7540 = vld [vmem:[%s7525 + $0x70] sm:$0xff]
        %v7541 = vld [vmem:[%s7525 + $0x78] sm:$0xff]
        %v7542 = vld [vmem:[%s7525 + $0x80] sm:$0xff]
        %v7543 = vld [vmem:[%s7525 + $0x88] sm:$0xff]
        %v7544 = vld [vmem:[%s7525 + $0x90] sm:$0xff]
        %v7545 = vld [vmem:[%s7525 + $0x98] sm:$0xff]
        %v7546 = vld [vmem:[%s7525 + $0xa0] sm:$0xff]
        %v7547 = vld [vmem:[%s7525 + $0xa8] sm:$0xff]
        %v7548 = vld [vmem:[%s7525 + $0xb0] sm:$0xff]
        %v7549 = vld [vmem:[%s7525 + $0xb8] sm:$0xff]
        %v7550 = vld [vmem:[%s7525 + $0xc0] sm:$0xff]
        %v7551 = vld [vmem:[%s7525 + $0xc8] sm:$0xff]
        %v7552 = vld [vmem:[%s7525 + $0xd0] sm:$0xff]
        %v7553 = vld [vmem:[%s7525 + $0xd8] sm:$0xff]
        %v7554 = vld [vmem:[%s7525 + $0xe0] sm:$0xff]
        %v7555 = vld [vmem:[%s7525 + $0xe8] sm:$0xff]
        %v7556 = vld [vmem:[%s7525 + $0xf0] sm:$0xff]
        %v7557 = vld [vmem:[%s7525 + $0xf8] sm:$0xff]
        %v7579 = vunpack.c.l.b16 %v7472
        %v7580 = vunpack.c.h.b16 %v7472
        %v7581 = vunpack.c.l.b16 %v7473
        %v7582 = vunpack.c.h.b16 %v7473
        %v7583 = vunpack.c.l.b16 %v7474
        %v7584 = vunpack.c.h.b16 %v7474
        %v7585 = vunpack.c.l.b16 %v7475
        %v7586 = vunpack.c.h.b16 %v7475
        %v7587 = vunpack.c.l.b16 %v7476
        %v7588 = vunpack.c.h.b16 %v7476
        %v7589 = vunpack.c.l.b16 %v7477
        %v7590 = vunpack.c.h.b16 %v7477
        %v7591 = vunpack.c.l.b16 %v7478
        %v7592 = vunpack.c.h.b16 %v7478
        %v7593 = vunpack.c.l.b16 %v7479
        %v7594 = vunpack.c.h.b16 %v7479
        %v7595 = vunpack.c.l.b16 %v7480
        %v7596 = vunpack.c.h.b16 %v7480
        %v7597 = vunpack.c.l.b16 %v7481
        %v7598 = vunpack.c.h.b16 %v7481
        %v7599 = vunpack.c.l.b16 %v7482
        %v7600 = vunpack.c.h.b16 %v7482
        %v7601 = vunpack.c.l.b16 %v7483
        %v7602 = vunpack.c.h.b16 %v7483
        %v7603 = vunpack.c.l.b16 %v7484
        %v7604 = vunpack.c.h.b16 %v7484
        %v7605 = vunpack.c.l.b16 %v7485
        %v7606 = vunpack.c.h.b16 %v7485
        %v7607 = vunpack.c.l.b16 %v7486
        %v7608 = vunpack.c.h.b16 %v7486
        %v7609 = vunpack.c.l.b16 %v7487
        %v7610 = vunpack.c.h.b16 %v7487
        %v7611 = vunpack.c.l.b16 %v7488
        %v7612 = vunpack.c.h.b16 %v7488
        %v7613 = vunpack.c.l.b16 %v7489
        %v7614 = vunpack.c.h.b16 %v7489
        %v7615 = vunpack.c.l.b16 %v7490
        %v7616 = vunpack.c.h.b16 %v7490
        %v7617 = vunpack.c.l.b16 %v7491
        %v7618 = vunpack.c.h.b16 %v7491
        %v7619 = vunpack.c.l.b16 %v7492
        %v7620 = vunpack.c.h.b16 %v7492
        %v7621 = vpack.c.b16 %v7581, %v7579
        %v7622 = vpack.c.b16 %v7582, %v7580
        %v7623 = vpack.c.b16 %v7585, %v7583
        %v7624 = vpack.c.b16 %v7586, %v7584
        %v7625 = vpack.c.b16 %v7589, %v7587
        %v7626 = vpack.c.b16 %v7590, %v7588
        %v7627 = vpack.c.b16 %v7593, %v7591
        %v7628 = vpack.c.b16 %v7594, %v7592
        %v7629 = vpack.c.b16 %v7597, %v7595
        %v7630 = vpack.c.b16 %v7598, %v7596
        %v7631 = vpack.c.b16 %v7601, %v7599
        %v7632 = vpack.c.b16 %v7602, %v7600
        %v7633 = vpack.c.b16 %v7605, %v7603
        %v7634 = vpack.c.b16 %v7606, %v7604
        %v7635 = vpack.c.b16 %v7609, %v7607
        %v7636 = vpack.c.b16 %v7610, %v7608
        %v7637 = vpack.c.b16 %v7613, %v7611
        %v7638 = vpack.c.b16 %v7614, %v7612
        %v7639 = vpack.c.b16 %v7617, %v7615
        %v7640 = vpack.c.b16 %v7618, %v7616
        %v7641 = vpack.c.b16 %v7619, %v7619
        %v7642 = vpack.c.b16 %v7620, %v7620
        %v7644 = vshrl.u32 %v7621, 16
        %v7646 = vshll.u32 %v7621, 16
        %v7648 = vrot.slane %v7646, 1
        %v7649 = vor.u32 %v7644, %v7648
        %v7651 = vshll.u32 %v7623, 16
        %v7653 = vrot.slane %v7651, 1
        %v7654 = vsel %vm520, %v7649, %v7653
        %v7656 = vshrl.u32 %v7622, 16
        %v7658 = vshll.u32 %v7622, 16
        %v7660 = vrot.slane %v7658, 1
        %v7661 = vor.u32 %v7656, %v7660
        %v7663 = vshll.u32 %v7624, 16
        %v7665 = vrot.slane %v7663, 1
        %v7666 = vsel %vm520, %v7661, %v7665
        %v7667 = vshrl.u32 %v7623, 16
        %v7669 = vor.u32 %v7667, %v7653
        %v7671 = vshll.u32 %v7625, 16
        %v7673 = vrot.slane %v7671, 1
        %v7674 = vsel %vm520, %v7669, %v7673
        %v7675 = vshrl.u32 %v7624, 16
        %v7677 = vor.u32 %v7675, %v7665
        %v7679 = vshll.u32 %v7626, 16
        %v7681 = vrot.slane %v7679, 1
        %v7682 = vsel %vm520, %v7677, %v7681
        %v7683 = vshrl.u32 %v7625, 16
        %v7685 = vor.u32 %v7683, %v7673
        %v7687 = vshll.u32 %v7627, 16
        %v7689 = vrot.slane %v7687, 1
        %v7690 = vsel %vm520, %v7685, %v7689
        %v7691 = vshrl.u32 %v7626, 16
        %v7693 = vor.u32 %v7691, %v7681
        %v7695 = vshll.u32 %v7628, 16
        %v7697 = vrot.slane %v7695, 1
        %v7698 = vsel %vm520, %v7693, %v7697
        %v7699 = vshrl.u32 %v7627, 16
        %v7701 = vor.u32 %v7699, %v7689
        %v7703 = vshll.u32 %v7629, 16
        %v7705 = vrot.slane %v7703, 1
        %v7706 = vsel %vm520, %v7701, %v7705
        %v7707 = vshrl.u32 %v7628, 16
        %v7709 = vor.u32 %v7707, %v7697
        %v7711 = vshll.u32 %v7630, 16
        %v7713 = vrot.slane %v7711, 1
        %v7714 = vsel %vm520, %v7709, %v7713
        %v7715 = vshrl.u32 %v7629, 16
        %v7717 = vor.u32 %v7715, %v7705
        %v7719 = vshll.u32 %v7631, 16
        %v7721 = vrot.slane %v7719, 1
        %v7722 = vsel %vm520, %v7717, %v7721
        %v7723 = vshrl.u32 %v7630, 16
        %v7725 = vor.u32 %v7723, %v7713
        %v7727 = vshll.u32 %v7632, 16
        %v7729 = vrot.slane %v7727, 1
        %v7730 = vsel %vm520, %v7725, %v7729
        %v7731 = vshrl.u32 %v7631, 16
        %v7733 = vor.u32 %v7731, %v7721
        %v7735 = vshll.u32 %v7633, 16
        %v7737 = vrot.slane %v7735, 1
        %v7738 = vsel %vm520, %v7733, %v7737
        %v7739 = vshrl.u32 %v7632, 16
        %v7741 = vor.u32 %v7739, %v7729
        %v7743 = vshll.u32 %v7634, 16
        %v7745 = vrot.slane %v7743, 1
        %v7746 = vsel %vm520, %v7741, %v7745
        %v7747 = vshrl.u32 %v7633, 16
        %v7749 = vor.u32 %v7747, %v7737
        %v7751 = vshll.u32 %v7635, 16
        %v7753 = vrot.slane %v7751, 1
        %v7754 = vsel %vm520, %v7749, %v7753
        %v7755 = vshrl.u32 %v7634, 16
        %v7757 = vor.u32 %v7755, %v7745
        %v7759 = vshll.u32 %v7636, 16
        %v7761 = vrot.slane %v7759, 1
        %v7762 = vsel %vm520, %v7757, %v7761
        %v7763 = vshrl.u32 %v7635, 16
        %v7765 = vor.u32 %v7763, %v7753
        %v7767 = vshll.u32 %v7637, 16
        %v7769 = vrot.slane %v7767, 1
        %v7770 = vsel %vm520, %v7765, %v7769
        %v7771 = vshrl.u32 %v7636, 16
        %v7773 = vor.u32 %v7771, %v7761
        %v7775 = vshll.u32 %v7638, 16
        %v7777 = vrot.slane %v7775, 1
        %v7778 = vsel %vm520, %v7773, %v7777
        %v7779 = vshrl.u32 %v7637, 16
        %v7781 = vor.u32 %v7779, %v7769
        %v7783 = vshll.u32 %v7639, 16
        %v7785 = vrot.slane %v7783, 1
        %v7786 = vsel %vm520, %v7781, %v7785
        %v7787 = vshrl.u32 %v7638, 16
        %v7789 = vor.u32 %v7787, %v7777
        %v7791 = vshll.u32 %v7640, 16
        %v7793 = vrot.slane %v7791, 1
        %v7794 = vsel %vm520, %v7789, %v7793
        %v7795 = vshrl.u32 %v7639, 16
        %v7797 = vor.u32 %v7795, %v7785
        %v7799 = vshll.u32 %v7641, 16
        %v7801 = vrot.slane %v7799, 1
        %v7802 = vsel %vm520, %v7797, %v7801
        %v7803 = vshrl.u32 %v7640, 16
        %v7805 = vor.u32 %v7803, %v7793
        %v7807 = vshll.u32 %v7642, 16
        %v7809 = vrot.slane %v7807, 1
        %v7810 = vsel %vm520, %v7805, %v7809
        %v7863 = vunpack.c.l.b16 %v7526
        %v7864 = vunpack.c.h.b16 %v7526
        %v7865 = vunpack.c.l.b16 %v7527
        %v7866 = vunpack.c.h.b16 %v7527
        %v7867 = vunpack.c.l.b16 %v7528
        %v7868 = vunpack.c.h.b16 %v7528
        %v7869 = vunpack.c.l.b16 %v7529
        %v7870 = vunpack.c.h.b16 %v7529
        %v7871 = vunpack.c.l.b16 %v7530
        %v7872 = vunpack.c.h.b16 %v7530
        %v7873 = vunpack.c.l.b16 %v7531
        %v7874 = vunpack.c.h.b16 %v7531
        %v7875 = vunpack.c.l.b16 %v7532
        %v7876 = vunpack.c.h.b16 %v7532
        %v7877 = vunpack.c.l.b16 %v7533
        %v7878 = vunpack.c.h.b16 %v7533
        %v7879 = vunpack.c.l.b16 %v7534
        %v7880 = vunpack.c.h.b16 %v7534
        %v7881 = vunpack.c.l.b16 %v7535
        %v7882 = vunpack.c.h.b16 %v7535
        %v7883 = vunpack.c.l.b16 %v7536
        %v7884 = vunpack.c.h.b16 %v7536
        %v7885 = vunpack.c.l.b16 %v7537
        %v7886 = vunpack.c.h.b16 %v7537
        %v7887 = vunpack.c.l.b16 %v7538
        %v7888 = vunpack.c.h.b16 %v7538
        %v7889 = vunpack.c.l.b16 %v7539
        %v7890 = vunpack.c.h.b16 %v7539
        %v7891 = vunpack.c.l.b16 %v7540
        %v7892 = vunpack.c.h.b16 %v7540
        %v7893 = vunpack.c.l.b16 %v7541
        %v7894 = vunpack.c.h.b16 %v7541
        %v7895 = vunpack.c.l.b16 %v7542
        %v7896 = vunpack.c.h.b16 %v7542
        %v7897 = vunpack.c.l.b16 %v7543
        %v7898 = vunpack.c.h.b16 %v7543
        %v7899 = vunpack.c.l.b16 %v7544
        %v7900 = vunpack.c.h.b16 %v7544
        %v7901 = vunpack.c.l.b16 %v7545
        %v7902 = vunpack.c.h.b16 %v7545
        %v7903 = vunpack.c.l.b16 %v7546
        %v7904 = vunpack.c.h.b16 %v7546
        %v7905 = vunpack.c.l.b16 %v7547
        %v7906 = vunpack.c.h.b16 %v7547
        %v7907 = vunpack.c.l.b16 %v7548
        %v7908 = vunpack.c.h.b16 %v7548
        %v7909 = vunpack.c.l.b16 %v7549
        %v7910 = vunpack.c.h.b16 %v7549
        %v7911 = vunpack.c.l.b16 %v7550
        %v7912 = vunpack.c.h.b16 %v7550
        %v7913 = vunpack.c.l.b16 %v7551
        %v7914 = vunpack.c.h.b16 %v7551
        %v7915 = vunpack.c.l.b16 %v7552
        %v7916 = vunpack.c.h.b16 %v7552
        %v7917 = vunpack.c.l.b16 %v7553
        %v7918 = vunpack.c.h.b16 %v7553
        %v7919 = vunpack.c.l.b16 %v7554
        %v7920 = vunpack.c.h.b16 %v7554
        %v7921 = vunpack.c.l.b16 %v7555
        %v7922 = vunpack.c.h.b16 %v7555
        %v7923 = vunpack.c.l.b16 %v7556
        %v7924 = vunpack.c.h.b16 %v7556
        %v7925 = vunpack.c.l.b16 %v7557
        %v7926 = vunpack.c.h.b16 %v7557
        %v7927 = vpack.c.b16 %v7865, %v7863
        %v7928 = vpack.c.b16 %v7866, %v7864
        %v7929 = vpack.c.b16 %v7869, %v7867
        %v7930 = vpack.c.b16 %v7870, %v7868
        %v7931 = vpack.c.b16 %v7873, %v7871
        %v7932 = vpack.c.b16 %v7874, %v7872
        %v7933 = vpack.c.b16 %v7877, %v7875
        %v7934 = vpack.c.b16 %v7878, %v7876
        %v7935 = vpack.c.b16 %v7881, %v7879
        %v7936 = vpack.c.b16 %v7882, %v7880
        %v7937 = vpack.c.b16 %v7885, %v7883
        %v7938 = vpack.c.b16 %v7886, %v7884
        %v7939 = vpack.c.b16 %v7889, %v7887
        %v7940 = vpack.c.b16 %v7890, %v7888
        %v7941 = vpack.c.b16 %v7893, %v7891
        %v7942 = vpack.c.b16 %v7894, %v7892
        %v7943 = vpack.c.b16 %v7897, %v7895
        %v7944 = vpack.c.b16 %v7898, %v7896
        %v7945 = vpack.c.b16 %v7901, %v7899
        %v7946 = vpack.c.b16 %v7902, %v7900
        %v7947 = vpack.c.b16 %v7905, %v7903
        %v7948 = vpack.c.b16 %v7906, %v7904
        %v7949 = vpack.c.b16 %v7909, %v7907
        %v7950 = vpack.c.b16 %v7910, %v7908
        %v7951 = vpack.c.b16 %v7913, %v7911
        %v7952 = vpack.c.b16 %v7914, %v7912
        %v7953 = vpack.c.b16 %v7917, %v7915
        %v7954 = vpack.c.b16 %v7918, %v7916
        %v7955 = vpack.c.b16 %v7921, %v7919
        %v7956 = vpack.c.b16 %v7922, %v7920
        %v7957 = vpack.c.b16 %v7925, %v7923
        %v7958 = vpack.c.b16 %v7926, %v7924
        %7991 = vmatprep.subr.bf16.mxu0 %v7928
        %7992 = vmatpush1.bf16.msra.mxu0 %v7927
        %7993 = vmatprep.subr.bf16.mxu0 %v7930
        %7994 = vmatpush1.bf16.msra.mxu0 %v7929
        %7995 = vmatprep.subr.bf16.mxu0 %v7932
        %7996 = vmatpush1.bf16.msra.mxu0 %v7931
        %7997 = vmatprep.subr.bf16.mxu0 %v7934
        %7998 = vmatpush1.bf16.msra.mxu0 %v7933
        %7999 = vmatprep.subr.bf16.mxu0 %v7936
        %8000 = vmatpush1.bf16.msra.mxu0 %v7935
        %8001 = vmatprep.subr.bf16.mxu0 %v7938
        %8002 = vmatpush1.bf16.msra.mxu0 %v7937
        %8003 = vmatprep.subr.bf16.mxu0 %v7940
        %8004 = vmatpush1.bf16.msra.mxu0 %v7939
        %8005 = vmatprep.subr.bf16.mxu0 %v7942
        %8006 = vmatpush1.bf16.msra.mxu0 %v7941
        %8007 = vmatprep.subr.bf16.mxu0 %v7944
        %8008 = vmatpush1.bf16.msra.mxu0 %v7943
        %8009 = vmatprep.subr.bf16.mxu0 %v7946
        %8010 = vmatpush1.bf16.msra.mxu0 %v7945
        %8011 = vmatprep.subr.bf16.mxu0 %v7948
        %8012 = vmatpush1.bf16.msra.mxu0 %v7947
        %8013 = vmatprep.subr.bf16.mxu0 %v7950
        %8014 = vmatpush1.bf16.msra.mxu0 %v7949
        %8015 = vmatprep.subr.bf16.mxu0 %v7952
        %8016 = vmatpush1.bf16.msra.mxu0 %v7951
        %8017 = vmatprep.subr.bf16.mxu0 %v7954
        %8018 = vmatpush1.bf16.msra.mxu0 %v7953
        %8019 = vmatprep.subr.bf16.mxu0 %v7956
        %8020 = vmatpush1.bf16.msra.mxu0 %v7955
        %8021 = vmatprep.subr.bf16.mxu0 %v7958
        %8022 = vmatpush1.bf16.msra.mxu0 %v7957
        %8023 = vmatprep.mubr.bf16.mxu0 %v7666
        %8024 = vmatmul.mubr.bf16.gmra.mrb[0].mxu0 %v7654
        %v8025 = vpop.f32.mrb[0].mxu0
        %v8026 = vadd.f32 0.0, %v8025
        %v8027 = vpop.f32.mrb[0].mxu0
        %v8028 = vadd.f32 0.0, %v8027
        %v8029 = vpop.f32.mrb[0].mxu0
        %v8030 = vadd.f32 0.0, %v8029
        %v8031 = vpop.f32.mrb[0].mxu0
        %v8032 = vadd.f32 0.0, %v8031
        %8033 = vmatprep.mubr.bf16.mxu0 %v7682
        %8034 = vmatmul.mubr.bf16.gmra.mrb[0].mxu0 %v7674
        %v8035 = vpop.f32.mrb[0].mxu0
        %v8036 = vadd.f32 0.0, %v8035
        %v8037 = vpop.f32.mrb[0].mxu0
        %v8038 = vadd.f32 0.0, %v8037
        %v8039 = vpop.f32.mrb[0].mxu0
        %v8040 = vadd.f32 0.0, %v8039
        %v8041 = vpop.f32.mrb[0].mxu0
        %v8042 = vadd.f32 0.0, %v8041
        %8043 = vmatprep.mubr.bf16.mxu0 %v7698
        %8044 = vmatmul.mubr.bf16.gmra.mrb[0].mxu0 %v7690
        %v8045 = vpop.f32.mrb[0].mxu0
        %v8046 = vadd.f32 0.0, %v8045
        %v8047 = vpop.f32.mrb[0].mxu0
        %v8048 = vadd.f32 0.0, %v8047
        %v8049 = vpop.f32.mrb[0].mxu0
        %v8050 = vadd.f32 0.0, %v8049
        %v8051 = vpop.f32.mrb[0].mxu0
        %v8052 = vadd.f32 0.0, %v8051
        %8053 = vmatprep.mubr.bf16.mxu0 %v7714
        %8054 = vmatmul.mubr.bf16.gmra.mrb[0].mxu0 %v7706
        %v8055 = vpop.f32.mrb[0].mxu0
        %v8056 = vadd.f32 0.0, %v8055
        %v8057 = vpop.f32.mrb[0].mxu0
        %v8058 = vadd.f32 0.0, %v8057
        %v8059 = vpop.f32.mrb[0].mxu0
        %v8060 = vadd.f32 0.0, %v8059
        %v8061 = vpop.f32.mrb[0].mxu0
        %v8062 = vadd.f32 0.0, %v8061
        %8063 = vmatprep.mubr.bf16.mxu0 %v7730
        %8064 = vmatmul.mubr.bf16.gmra.mrb[0].mxu0 %v7722
        %v8065 = vpop.f32.mrb[0].mxu0
        %v8066 = vadd.f32 0.0, %v8065
        %v8067 = vpop.f32.mrb[0].mxu0
        %v8068 = vadd.f32 0.0, %v8067
        %v8069 = vpop.f32.mrb[0].mxu0
        %v8070 = vadd.f32 0.0, %v8069
        %v8071 = vpop.f32.mrb[0].mxu0
        %v8072 = vadd.f32 0.0, %v8071
        %8073 = vmatprep.mubr.bf16.mxu0 %v7746
        %8074 = vmatmul.mubr.bf16.gmra.mrb[0].mxu0 %v7738
        %v8075 = vpop.f32.mrb[0].mxu0
        %v8076 = vadd.f32 0.0, %v8075
        %v8077 = vpop.f32.mrb[0].mxu0
        %v8078 = vadd.f32 0.0, %v8077
        %v8079 = vpop.f32.mrb[0].mxu0
        %v8080 = vadd.f32 0.0, %v8079
        %v8081 = vpop.f32.mrb[0].mxu0
        %v8082 = vadd.f32 0.0, %v8081
        %8083 = vmatprep.mubr.bf16.mxu0 %v7762
        %8084 = vmatmul.mubr.bf16.gmra.mrb[0].mxu0 %v7754
        %v8085 = vpop.f32.mrb[0].mxu0
        %v8086 = vadd.f32 0.0, %v8085
        %v8087 = vpop.f32.mrb[0].mxu0
        %v8088 = vadd.f32 0.0, %v8087
        %v8089 = vpop.f32.mrb[0].mxu0
        %v8090 = vadd.f32 0.0, %v8089
        %v8091 = vpop.f32.mrb[0].mxu0
        %v8092 = vadd.f32 0.0, %v8091
        %8093 = vmatprep.mubr.bf16.mxu0 %v7778
        %8094 = vmatmul.mubr.bf16.gmra.mrb[0].mxu0 %v7770
        %v8095 = vpop.f32.mrb[0].mxu0
        %v8096 = vadd.f32 0.0, %v8095
        %v8097 = vpop.f32.mrb[0].mxu0
        %v8098 = vadd.f32 0.0, %v8097
        %v8099 = vpop.f32.mrb[0].mxu0
        %v8100 = vadd.f32 0.0, %v8099
        %v8101 = vpop.f32.mrb[0].mxu0
        %v8102 = vadd.f32 0.0, %v8101
        %8103 = vmatprep.mubr.bf16.mxu0 %v7794
        %8104 = vmatmul.mubr.bf16.gmra.mrb[0].mxu0 %v7786
        %v8105 = vpop.f32.mrb[0].mxu0
        %v8106 = vadd.f32 0.0, %v8105
        %v8107 = vpop.f32.mrb[0].mxu0
        %v8108 = vadd.f32 0.0, %v8107
        %v8109 = vpop.f32.mrb[0].mxu0
        %v8110 = vadd.f32 0.0, %v8109
        %v8111 = vpop.f32.mrb[0].mxu0
        %v8112 = vadd.f32 0.0, %v8111
        %8113 = vmatprep.mubr.bf16.mxu0 %v7810
        %8114 = vmatmul.mubr.bf16.gmra.mrb[0].mxu0 %v7802
        %v8115 = vpop.f32.mrb[0].mxu0
        %v8116 = vadd.f32 0.0, %v8115
        %v8117 = vpop.f32.mrb[0].mxu0
        %v8118 = vadd.f32 0.0, %v8117
        %v8119 = vpop.f32.mrb[0].mxu0
        %v8120 = vadd.f32 0.0, %v8119
        %v8121 = vpop.f32.mrb[0].mxu0
        %v8122 = vadd.f32 0.0, %v8121
        %8123 = vdwg.mxu0
        %v8176 = vunpack.c.l.b16 %v7493
        %v8177 = vunpack.c.h.b16 %v7493
        %v8178 = vunpack.c.l.b16 %v7494
        %v8179 = vunpack.c.h.b16 %v7494
        %v8180 = vunpack.c.l.b16 %v7495
        %v8181 = vunpack.c.h.b16 %v7495
        %v8182 = vunpack.c.l.b16 %v7496
        %v8183 = vunpack.c.h.b16 %v7496
        %v8184 = vunpack.c.l.b16 %v7497
        %v8185 = vunpack.c.h.b16 %v7497
        %v8186 = vunpack.c.l.b16 %v7498
        %v8187 = vunpack.c.h.b16 %v7498
        %v8188 = vunpack.c.l.b16 %v7499
        %v8189 = vunpack.c.h.b16 %v7499
        %v8190 = vunpack.c.l.b16 %v7500
        %v8191 = vunpack.c.h.b16 %v7500
        %v8192 = vunpack.c.l.b16 %v7501
        %v8193 = vunpack.c.h.b16 %v7501
        %v8194 = vunpack.c.l.b16 %v7502
        %v8195 = vunpack.c.h.b16 %v7502
        %v8196 = vunpack.c.l.b16 %v7503
        %v8197 = vunpack.c.h.b16 %v7503
        %v8198 = vunpack.c.l.b16 %v7504
        %v8199 = vunpack.c.h.b16 %v7504
        %v8200 = vunpack.c.l.b16 %v7505
        %v8201 = vunpack.c.h.b16 %v7505
        %v8202 = vunpack.c.l.b16 %v7506
        %v8203 = vunpack.c.h.b16 %v7506
        %v8204 = vunpack.c.l.b16 %v7507
        %v8205 = vunpack.c.h.b16 %v7507
        %v8206 = vunpack.c.l.b16 %v7508
        %v8207 = vunpack.c.h.b16 %v7508
        %v8208 = vunpack.c.l.b16 %v7509
        %v8209 = vunpack.c.h.b16 %v7509
        %v8210 = vunpack.c.l.b16 %v7510
        %v8211 = vunpack.c.h.b16 %v7510
        %v8212 = vunpack.c.l.b16 %v7511
        %v8213 = vunpack.c.h.b16 %v7511
        %v8214 = vunpack.c.l.b16 %v7512
        %v8215 = vunpack.c.h.b16 %v7512
        %v8216 = vunpack.c.l.b16 %v7513
        %v8217 = vunpack.c.h.b16 %v7513
        %v8218 = vunpack.c.l.b16 %v7514
        %v8219 = vunpack.c.h.b16 %v7514
        %v8220 = vunpack.c.l.b16 %v7515
        %v8221 = vunpack.c.h.b16 %v7515
        %v8222 = vunpack.c.l.b16 %v7516
        %v8223 = vunpack.c.h.b16 %v7516
        %v8224 = vunpack.c.l.b16 %v7517
        %v8225 = vunpack.c.h.b16 %v7517
        %v8226 = vunpack.c.l.b16 %v7518
        %v8227 = vunpack.c.h.b16 %v7518
        %v8228 = vunpack.c.l.b16 %v7519
        %v8229 = vunpack.c.h.b16 %v7519
        %v8230 = vunpack.c.l.b16 %v7520
        %v8231 = vunpack.c.h.b16 %v7520
        %v8232 = vunpack.c.l.b16 %v7521
        %v8233 = vunpack.c.h.b16 %v7521
        %v8234 = vunpack.c.l.b16 %v7522
        %v8235 = vunpack.c.h.b16 %v7522
        %v8236 = vunpack.c.l.b16 %v7523
        %v8237 = vunpack.c.h.b16 %v7523
        %v8238 = vunpack.c.l.b16 %v7524
        %v8239 = vunpack.c.h.b16 %v7524
        %v8240 = vpack.c.b16 %v8178, %v8176
        %v8241 = vpack.c.b16 %v8179, %v8177
        %v8242 = vpack.c.b16 %v8182, %v8180
        %v8243 = vpack.c.b16 %v8183, %v8181
        %v8244 = vpack.c.b16 %v8186, %v8184
        %v8245 = vpack.c.b16 %v8187, %v8185
        %v8246 = vpack.c.b16 %v8190, %v8188
        %v8247 = vpack.c.b16 %v8191, %v8189
        %v8248 = vpack.c.b16 %v8194, %v8192
        %v8249 = vpack.c.b16 %v8195, %v8193
        %v8250 = vpack.c.b16 %v8198, %v8196
        %v8251 = vpack.c.b16 %v8199, %v8197
        %v8252 = vpack.c.b16 %v8202, %v8200
        %v8253 = vpack.c.b16 %v8203, %v8201
        %v8254 = vpack.c.b16 %v8206, %v8204
        %v8255 = vpack.c.b16 %v8207, %v8205
        %v8256 = vpack.c.b16 %v8210, %v8208
        %v8257 = vpack.c.b16 %v8211, %v8209
        %v8258 = vpack.c.b16 %v8214, %v8212
        %v8259 = vpack.c.b16 %v8215, %v8213
        %v8260 = vpack.c.b16 %v8218, %v8216
        %v8261 = vpack.c.b16 %v8219, %v8217
        %v8262 = vpack.c.b16 %v8222, %v8220
        %v8263 = vpack.c.b16 %v8223, %v8221
        %v8264 = vpack.c.b16 %v8226, %v8224
        %v8265 = vpack.c.b16 %v8227, %v8225
        %v8266 = vpack.c.b16 %v8230, %v8228
        %v8267 = vpack.c.b16 %v8231, %v8229
        %v8268 = vpack.c.b16 %v8234, %v8232
        %v8269 = vpack.c.b16 %v8235, %v8233
        %v8270 = vpack.c.b16 %v8238, %v8236
        %v8271 = vpack.c.b16 %v8239, %v8237
        %8304 = vmatprep.subr.bf16.mxu0 %v8241
        %8305 = vmatpush1.bf16.msra.mxu0 %v8240
        %8306 = vmatprep.subr.bf16.mxu0 %v8243
        %8307 = vmatpush1.bf16.msra.mxu0 %v8242
        %8308 = vmatprep.subr.bf16.mxu0 %v8245
        %8309 = vmatpush1.bf16.msra.mxu0 %v8244
        %8310 = vmatprep.subr.bf16.mxu0 %v8247
        %8311 = vmatpush1.bf16.msra.mxu0 %v8246
        %8312 = vmatprep.subr.bf16.mxu0 %v8249
        %8313 = vmatpush1.bf16.msra.mxu0 %v8248
        %8314 = vmatprep.subr.bf16.mxu0 %v8251
        %8315 = vmatpush1.bf16.msra.mxu0 %v8250
        %8316 = vmatprep.subr.bf16.mxu0 %v8253
        %8317 = vmatpush1.bf16.msra.mxu0 %v8252
        %8318 = vmatprep.subr.bf16.mxu0 %v8255
        %8319 = vmatpush1.bf16.msra.mxu0 %v8254
        %8320 = vmatprep.subr.bf16.mxu0 %v8257
        %8321 = vmatpush1.bf16.msra.mxu0 %v8256
        %8322 = vmatprep.subr.bf16.mxu0 %v8259
        %8323 = vmatpush1.bf16.msra.mxu0 %v8258
        %8324 = vmatprep.subr.bf16.mxu0 %v8261
        %8325 = vmatpush1.bf16.msra.mxu0 %v8260
        %8326 = vmatprep.subr.bf16.mxu0 %v8263
        %8327 = vmatpush1.bf16.msra.mxu0 %v8262
        %8328 = vmatprep.subr.bf16.mxu0 %v8265
        %8329 = vmatpush1.bf16.msra.mxu0 %v8264
        %8330 = vmatprep.subr.bf16.mxu0 %v8267
        %8331 = vmatpush1.bf16.msra.mxu0 %v8266
        %8332 = vmatprep.subr.bf16.mxu0 %v8269
        %8333 = vmatpush1.bf16.msra.mxu0 %v8268
        %8334 = vmatprep.subr.bf16.mxu0 %v8271
        %8335 = vmatpush1.bf16.msra.mxu0 %v8270
        %8336 = vmatprep.mubr.bf16.mxu0 %v7622
        %8337 = vmatmul.mubr.bf16.gmra.mrb[0].mxu0 %v7621
        %v8338 = vpop.f32.mrb[0].mxu0
        %v8339 = vadd.f32 %v8026, %v8338
        %v8340 = vpop.f32.mrb[0].mxu0
        %v8341 = vadd.f32 %v8028, %v8340
        %v8342 = vpop.f32.mrb[0].mxu0
        %v8343 = vadd.f32 %v8030, %v8342
        %v8344 = vpop.f32.mrb[0].mxu0
        %v8345 = vadd.f32 %v8032, %v8344
        %8346 = vmatprep.mubr.bf16.mxu0 %v7624
        %8347 = vmatmul.mubr.bf16.gmra.mrb[0].mxu0 %v7623
        %v8348 = vpop.f32.mrb[0].mxu0
        %v8349 = vadd.f32 %v8036, %v8348
        %v8350 = vpop.f32.mrb[0].mxu0
        %v8351 = vadd.f32 %v8038, %v8350
        %v8352 = vpop.f32.mrb[0].mxu0
        %v8353 = vadd.f32 %v8040, %v8352
        %v8354 = vpop.f32.mrb[0].mxu0
        %v8355 = vadd.f32 %v8042, %v8354
        %8356 = vmatprep.mubr.bf16.mxu0 %v7626
        %8357 = vmatmul.mubr.bf16.gmra.mrb[0].mxu0 %v7625
        %v8358 = vpop.f32.mrb[0].mxu0
        %v8359 = vadd.f32 %v8046, %v8358
        %v8360 = vpop.f32.mrb[0].mxu0
        %v8361 = vadd.f32 %v8048, %v8360
        %v8362 = vpop.f32.mrb[0].mxu0
        %v8363 = vadd.f32 %v8050, %v8362
        %v8364 = vpop.f32.mrb[0].mxu0
        %v8365 = vadd.f32 %v8052, %v8364
        %8366 = vmatprep.mubr.bf16.mxu0 %v7628
        %8367 = vmatmul.mubr.bf16.gmra.mrb[0].mxu0 %v7627
        %v8368 = vpop.f32.mrb[0].mxu0
        %v8369 = vadd.f32 %v8056, %v8368
        %v8370 = vpop.f32.mrb[0].mxu0
        %v8371 = vadd.f32 %v8058, %v8370
        %v8372 = vpop.f32.mrb[0].mxu0
        %v8373 = vadd.f32 %v8060, %v8372
        %v8374 = vpop.f32.mrb[0].mxu0
        %v8375 = vadd.f32 %v8062, %v8374
        %8376 = vmatprep.mubr.bf16.mxu0 %v7630
        %8377 = vmatmul.mubr.bf16.gmra.mrb[0].mxu0 %v7629
        %v8378 = vpop.f32.mrb[0].mxu0
        %v8379 = vadd.f32 %v8066, %v8378
        %v8380 = vpop.f32.mrb[0].mxu0
        %v8381 = vadd.f32 %v8068, %v8380
        %v8382 = vpop.f32.mrb[0].mxu0
        %v8383 = vadd.f32 %v8070, %v8382
        %v8384 = vpop.f32.mrb[0].mxu0
        %v8385 = vadd.f32 %v8072, %v8384
        %8386 = vmatprep.mubr.bf16.mxu0 %v7632
        %8387 = vmatmul.mubr.bf16.gmra.mrb[0].mxu0 %v7631
        %v8388 = vpop.f32.mrb[0].mxu0
        %v8389 = vadd.f32 %v8076, %v8388
        %v8390 = vpop.f32.mrb[0].mxu0
        %v8391 = vadd.f32 %v8078, %v8390
        %v8392 = vpop.f32.mrb[0].mxu0
        %v8393 = vadd.f32 %v8080, %v8392
        %v8394 = vpop.f32.mrb[0].mxu0
        %v8395 = vadd.f32 %v8082, %v8394
        %8396 = vmatprep.mubr.bf16.mxu0 %v7634
        %8397 = vmatmul.mubr.bf16.gmra.mrb[0].mxu0 %v7633
        %v8398 = vpop.f32.mrb[0].mxu0
        %v8399 = vadd.f32 %v8086, %v8398
        %v8400 = vpop.f32.mrb[0].mxu0
        %v8401 = vadd.f32 %v8088, %v8400
        %v8402 = vpop.f32.mrb[0].mxu0
        %v8403 = vadd.f32 %v8090, %v8402
        %v8404 = vpop.f32.mrb[0].mxu0
        %v8405 = vadd.f32 %v8092, %v8404
        %8406 = vmatprep.mubr.bf16.mxu0 %v7636
        %8407 = vmatmul.mubr.bf16.gmra.mrb[0].mxu0 %v7635
        %v8408 = vpop.f32.mrb[0].mxu0
        %v8409 = vadd.f32 %v8096, %v8408
        %v8410 = vpop.f32.mrb[0].mxu0
        %v8411 = vadd.f32 %v8098, %v8410
        %v8412 = vpop.f32.mrb[0].mxu0
        %v8413 = vadd.f32 %v8100, %v8412
        %v8414 = vpop.f32.mrb[0].mxu0
        %v8415 = vadd.f32 %v8102, %v8414
        %8416 = vmatprep.mubr.bf16.mxu0 %v7638
        %8417 = vmatmul.mubr.bf16.gmra.mrb[0].mxu0 %v7637
        %v8418 = vpop.f32.mrb[0].mxu0
        %v8419 = vadd.f32 %v8106, %v8418
        %v8420 = vpop.f32.mrb[0].mxu0
        %v8421 = vadd.f32 %v8108, %v8420
        %v8422 = vpop.f32.mrb[0].mxu0
        %v8423 = vadd.f32 %v8110, %v8422
        %v8424 = vpop.f32.mrb[0].mxu0
        %v8425 = vadd.f32 %v8112, %v8424
        %8426 = vmatprep.mubr.bf16.mxu0 %v7640
        %8427 = vmatmul.mubr.bf16.gmra.mrb[0].mxu0 %v7639
        %v8428 = vpop.f32.mrb[0].mxu0
        %v8429 = vadd.f32 %v8116, %v8428
        %v8430 = vpop.f32.mrb[0].mxu0
        %v8431 = vadd.f32 %v8118, %v8430
        %v8432 = vpop.f32.mrb[0].mxu0
        %v8433 = vadd.f32 %v8120, %v8432
        %v8434 = vpop.f32.mrb[0].mxu0
        %v8435 = vadd.f32 %v8122, %v8434
        %8436 = vdwg.mxu0
        %s8437 = scalar_lea.vmem [#allocation7], 512
        %v8438 = vld [vmem:[%s8437] sm:$0xff]
        %v8439 = vld [vmem:[%s8437 + $0x8] sm:$0xff]
        %v8440 = vld [vmem:[%s8437 + $0x10] sm:$0xff]
        %v8441 = vld [vmem:[%s8437 + $0x18] sm:$0xff]
        %v8442 = vld [vmem:[%s8437 + $0x20] sm:$0xff]
        %v8443 = vld [vmem:[%s8437 + $0x28] sm:$0xff]
        %v8444 = vld [vmem:[%s8437 + $0x30] sm:$0xff]
        %v8445 = vld [vmem:[%s8437 + $0x38] sm:$0xff]
        %v8446 = vld [vmem:[%s8437 + $0x40] sm:$0xff]
        %v8447 = vld [vmem:[%s8437 + $0x48] sm:$0xff]
        %v8448 = vld [vmem:[%s8437 + $0x50] sm:$0xff]
        %v8449 = vld [vmem:[%s8437 + $0x58] sm:$0xff]
        %v8450 = vld [vmem:[%s8437 + $0x60] sm:$0xff]
        %v8451 = vld [vmem:[%s8437 + $0x68] sm:$0xff]
        %v8452 = vld [vmem:[%s8437 + $0x70] sm:$0xff]
        %v8453 = vld [vmem:[%s8437 + $0x78] sm:$0xff]
        %v8454 = vld [vmem:[%s8437 + $0x80] sm:$0xff]
        %v8455 = vld [vmem:[%s8437 + $0x88] sm:$0xff]
        %v8456 = vld [vmem:[%s8437 + $0x90] sm:$0xff]
        %v8457 = vld [vmem:[%s8437 + $0x98] sm:$0xff]
        %v8458 = vld [vmem:[%s8437 + $0xa0] sm:$0xff]
        %v8459 = vld [vmem:[%s8437 + $0xa8] sm:$0xff]
        %v8460 = vld [vmem:[%s8437 + $0xb0] sm:$0xff]
        %v8461 = vld [vmem:[%s8437 + $0xb8] sm:$0xff]
        %v8462 = vld [vmem:[%s8437 + $0xc0] sm:$0xff]
        %v8463 = vld [vmem:[%s8437 + $0xc8] sm:$0xff]
        %v8464 = vld [vmem:[%s8437 + $0xd0] sm:$0xff]
        %v8465 = vld [vmem:[%s8437 + $0xd8] sm:$0xff]
        %v8466 = vld [vmem:[%s8437 + $0xe0] sm:$0xff]
        %v8467 = vld [vmem:[%s8437 + $0xe8] sm:$0xff]
        %v8468 = vld [vmem:[%s8437 + $0xf0] sm:$0xff]
        %v8469 = vld [vmem:[%s8437 + $0xf8] sm:$0xff]
        %v8470 = vrot.slane %v7621, 1
        %v8471 = vrot.slane %v7623, 1
        %v8472 = vsel %vm717, %v8470, %v8471
        %v8473 = vrot.slane %v7622, 1
        %v8474 = vrot.slane %v7624, 1
        %v8475 = vsel %vm717, %v8473, %v8474
        %v8476 = vrot.slane %v7625, 1
        %v8477 = vsel %vm717, %v8471, %v8476
        %v8478 = vrot.slane %v7626, 1
        %v8479 = vsel %vm717, %v8474, %v8478
        %v8480 = vrot.slane %v7627, 1
        %v8481 = vsel %vm717, %v8476, %v8480
        %v8482 = vrot.slane %v7628, 1
        %v8483 = vsel %vm717, %v8478, %v8482
        %v8484 = vrot.slane %v7629, 1
        %v8485 = vsel %vm717, %v8480, %v8484
        %v8486 = vrot.slane %v7630, 1
        %v8487 = vsel %vm717, %v8482, %v8486
        %v8488 = vrot.slane %v7631, 1
        %v8489 = vsel %vm717, %v8484, %v8488
        %v8490 = vrot.slane %v7632, 1
        %v8491 = vsel %vm717, %v8486, %v8490
        %v8492 = vrot.slane %v7633, 1
        %v8493 = vsel %vm717, %v8488, %v8492
        %v8494 = vrot.slane %v7634, 1
        %v8495 = vsel %vm717, %v8490, %v8494
        %v8496 = vrot.slane %v7635, 1
        %v8497 = vsel %vm717, %v8492, %v8496
        %v8498 = vrot.slane %v7636, 1
        %v8499 = vsel %vm717, %v8494, %v8498
        %v8500 = vrot.slane %v7637, 1
        %v8501 = vsel %vm717, %v8496, %v8500
        %v8502 = vrot.slane %v7638, 1
        %v8503 = vsel %vm717, %v8498, %v8502
        %v8504 = vrot.slane %v7639, 1
        %v8505 = vsel %vm717, %v8500, %v8504
        %v8506 = vrot.slane %v7640, 1
        %v8507 = vsel %vm717, %v8502, %v8506
        %v8508 = vrot.slane %v7641, 1
        %v8509 = vsel %vm717, %v8504, %v8508
        %v8510 = vrot.slane %v7642, 1
        %v8511 = vsel %vm717, %v8506, %v8510
        %v8564 = vunpack.c.l.b16 %v8438
        %v8565 = vunpack.c.h.b16 %v8438
        %v8566 = vunpack.c.l.b16 %v8439
        %v8567 = vunpack.c.h.b16 %v8439
        %v8568 = vunpack.c.l.b16 %v8440
        %v8569 = vunpack.c.h.b16 %v8440
        %v8570 = vunpack.c.l.b16 %v8441
        %v8571 = vunpack.c.h.b16 %v8441
        %v8572 = vunpack.c.l.b16 %v8442
        %v8573 = vunpack.c.h.b16 %v8442
        %v8574 = vunpack.c.l.b16 %v8443
        %v8575 = vunpack.c.h.b16 %v8443
        %v8576 = vunpack.c.l.b16 %v8444
        %v8577 = vunpack.c.h.b16 %v8444
        %v8578 = vunpack.c.l.b16 %v8445
        %v8579 = vunpack.c.h.b16 %v8445
        %v8580 = vunpack.c.l.b16 %v8446
        %v8581 = vunpack.c.h.b16 %v8446
        %v8582 = vunpack.c.l.b16 %v8447
        %v8583 = vunpack.c.h.b16 %v8447
        %v8584 = vunpack.c.l.b16 %v8448
        %v8585 = vunpack.c.h.b16 %v8448
        %v8586 = vunpack.c.l.b16 %v8449
        %v8587 = vunpack.c.h.b16 %v8449
        %v8588 = vunpack.c.l.b16 %v8450
        %v8589 = vunpack.c.h.b16 %v8450
        %v8590 = vunpack.c.l.b16 %v8451
        %v8591 = vunpack.c.h.b16 %v8451
        %v8592 = vunpack.c.l.b16 %v8452
        %v8593 = vunpack.c.h.b16 %v8452
        %v8594 = vunpack.c.l.b16 %v8453
        %v8595 = vunpack.c.h.b16 %v8453
        %v8596 = vunpack.c.l.b16 %v8454
        %v8597 = vunpack.c.h.b16 %v8454
        %v8598 = vunpack.c.l.b16 %v8455
        %v8599 = vunpack.c.h.b16 %v8455
        %v8600 = vunpack.c.l.b16 %v8456
        %v8601 = vunpack.c.h.b16 %v8456
        %v8602 = vunpack.c.l.b16 %v8457
        %v8603 = vunpack.c.h.b16 %v8457
        %v8604 = vunpack.c.l.b16 %v8458
        %v8605 = vunpack.c.h.b16 %v8458
        %v8606 = vunpack.c.l.b16 %v8459
        %v8607 = vunpack.c.h.b16 %v8459
        %v8608 = vunpack.c.l.b16 %v8460
        %v8609 = vunpack.c.h.b16 %v8460
        %v8610 = vunpack.c.l.b16 %v8461
        %v8611 = vunpack.c.h.b16 %v8461
        %v8612 = vunpack.c.l.b16 %v8462
        %v8613 = vunpack.c.h.b16 %v8462
        %v8614 = vunpack.c.l.b16 %v8463
        %v8615 = vunpack.c.h.b16 %v8463
        %v8616 = vunpack.c.l.b16 %v8464
        %v8617 = vunpack.c.h.b16 %v8464
        %v8618 = vunpack.c.l.b16 %v8465
        %v8619 = vunpack.c.h.b16 %v8465
        %v8620 = vunpack.c.l.b16 %v8466
        %v8621 = vunpack.c.h.b16 %v8466
        %v8622 = vunpack.c.l.b16 %v8467
        %v8623 = vunpack.c.h.b16 %v8467
        %v8624 = vunpack.c.l.b16 %v8468
        %v8625 = vunpack.c.h.b16 %v8468
        %v8626 = vunpack.c.l.b16 %v8469
        %v8627 = vunpack.c.h.b16 %v8469
        %v8628 = vpack.c.b16 %v8566, %v8564
        %v8629 = vpack.c.b16 %v8567, %v8565
        %v8630 = vpack.c.b16 %v8570, %v8568
        %v8631 = vpack.c.b16 %v8571, %v8569
        %v8632 = vpack.c.b16 %v8574, %v8572
        %v8633 = vpack.c.b16 %v8575, %v8573
        %v8634 = vpack.c.b16 %v8578, %v8576
        %v8635 = vpack.c.b16 %v8579, %v8577
        %v8636 = vpack.c.b16 %v8582, %v8580
        %v8637 = vpack.c.b16 %v8583, %v8581
        %v8638 = vpack.c.b16 %v8586, %v8584
        %v8639 = vpack.c.b16 %v8587, %v8585
        %v8640 = vpack.c.b16 %v8590, %v8588
        %v8641 = vpack.c.b16 %v8591, %v8589
        %v8642 = vpack.c.b16 %v8594, %v8592
        %v8643 = vpack.c.b16 %v8595, %v8593
        %v8644 = vpack.c.b16 %v8598, %v8596
        %v8645 = vpack.c.b16 %v8599, %v8597
        %v8646 = vpack.c.b16 %v8602, %v8600
        %v8647 = vpack.c.b16 %v8603, %v8601
        %v8648 = vpack.c.b16 %v8606, %v8604
        %v8649 = vpack.c.b16 %v8607, %v8605
        %v8650 = vpack.c.b16 %v8610, %v8608
        %v8651 = vpack.c.b16 %v8611, %v8609
        %v8652 = vpack.c.b16 %v8614, %v8612
        %v8653 = vpack.c.b16 %v8615, %v8613
        %v8654 = vpack.c.b16 %v8618, %v8616
        %v8655 = vpack.c.b16 %v8619, %v8617
        %v8656 = vpack.c.b16 %v8622, %v8620
        %v8657 = vpack.c.b16 %v8623, %v8621
        %v8658 = vpack.c.b16 %v8626, %v8624
        %v8659 = vpack.c.b16 %v8627, %v8625
        %8692 = vmatprep.subr.bf16.mxu0 %v8629
        %8693 = vmatpush1.bf16.msra.mxu0 %v8628
        %8694 = vmatprep.subr.bf16.mxu0 %v8631
        %8695 = vmatpush1.bf16.msra.mxu0 %v8630
        %8696 = vmatprep.subr.bf16.mxu0 %v8633
        %8697 = vmatpush1.bf16.msra.mxu0 %v8632
        %8698 = vmatprep.subr.bf16.mxu0 %v8635
        %8699 = vmatpush1.bf16.msra.mxu0 %v8634
        %8700 = vmatprep.subr.bf16.mxu0 %v8637
        %8701 = vmatpush1.bf16.msra.mxu0 %v8636
        %8702 = vmatprep.subr.bf16.mxu0 %v8639
        %8703 = vmatpush1.bf16.msra.mxu0 %v8638
        %8704 = vmatprep.subr.bf16.mxu0 %v8641
        %8705 = vmatpush1.bf16.msra.mxu0 %v8640
        %8706 = vmatprep.subr.bf16.mxu0 %v8643
        %8707 = vmatpush1.bf16.msra.mxu0 %v8642
        %8708 = vmatprep.subr.bf16.mxu0 %v8645
        %8709 = vmatpush1.bf16.msra.mxu0 %v8644
        %8710 = vmatprep.subr.bf16.mxu0 %v8647
        %8711 = vmatpush1.bf16.msra.mxu0 %v8646
        %8712 = vmatprep.subr.bf16.mxu0 %v8649
        %8713 = vmatpush1.bf16.msra.mxu0 %v8648
        %8714 = vmatprep.subr.bf16.mxu0 %v8651
        %8715 = vmatpush1.bf16.msra.mxu0 %v8650
        %8716 = vmatprep.subr.bf16.mxu0 %v8653
        %8717 = vmatpush1.bf16.msra.mxu0 %v8652
        %8718 = vmatprep.subr.bf16.mxu0 %v8655
        %8719 = vmatpush1.bf16.msra.mxu0 %v8654
        %8720 = vmatprep.subr.bf16.mxu0 %v8657
        %8721 = vmatpush1.bf16.msra.mxu0 %v8656
        %8722 = vmatprep.subr.bf16.mxu0 %v8659
        %8723 = vmatpush1.bf16.msra.mxu0 %v8658
        %8724 = vmatprep.mubr.bf16.mxu0 %v8475
        %8725 = vmatmul.mubr.bf16.gmra.mrb[0].mxu0 %v8472
        %v8726 = vpop.f32.mrb[0].mxu0
        %v8727 = vadd.f32 0.0, %v8726
        %v8728 = vpop.f32.mrb[0].mxu0
        %v8729 = vadd.f32 0.0, %v8728
        %v8730 = vpop.f32.mrb[0].mxu0
        %v8731 = vadd.f32 0.0, %v8730
        %v8732 = vpop.f32.mrb[0].mxu0
        %v8733 = vadd.f32 0.0, %v8732
        %8734 = vmatprep.mubr.bf16.mxu0 %v8479
        %8735 = vmatmul.mubr.bf16.gmra.mrb[0].mxu0 %v8477
        %v8736 = vpop.f32.mrb[0].mxu0
        %v8737 = vadd.f32 0.0, %v8736
        %v8738 = vpop.f32.mrb[0].mxu0
        %v8739 = vadd.f32 0.0, %v8738
        %v8740 = vpop.f32.mrb[0].mxu0
        %v8741 = vadd.f32 0.0, %v8740
        %v8742 = vpop.f32.mrb[0].mxu0
        %v8743 = vadd.f32 0.0, %v8742
        %8744 = vmatprep.mubr.bf16.mxu0 %v8483
        %8745 = vmatmul.mubr.bf16.gmra.mrb[0].mxu0 %v8481
        %v8746 = vpop.f32.mrb[0].mxu0
        %v8747 = vadd.f32 0.0, %v8746
        %v8748 = vpop.f32.mrb[0].mxu0
        %v8749 = vadd.f32 0.0, %v8748
        %v8750 = vpop.f32.mrb[0].mxu0
        %v8751 = vadd.f32 0.0, %v8750
        %v8752 = vpop.f32.mrb[0].mxu0
        %v8753 = vadd.f32 0.0, %v8752
        %8754 = vmatprep.mubr.bf16.mxu0 %v8487
        %8755 = vmatmul.mubr.bf16.gmra.mrb[0].mxu0 %v8485
        %v8756 = vpop.f32.mrb[0].mxu0
        %v8757 = vadd.f32 0.0, %v8756
        %v8758 = vpop.f32.mrb[0].mxu0
        %v8759 = vadd.f32 0.0, %v8758
        %v8760 = vpop.f32.mrb[0].mxu0
        %v8761 = vadd.f32 0.0, %v8760
        %v8762 = vpop.f32.mrb[0].mxu0
        %v8763 = vadd.f32 0.0, %v8762
        %8764 = vmatprep.mubr.bf16.mxu0 %v8491
        %8765 = vmatmul.mubr.bf16.gmra.mrb[0].mxu0 %v8489
        %v8766 = vpop.f32.mrb[0].mxu0
        %v8767 = vadd.f32 0.0, %v8766
        %v8768 = vpop.f32.mrb[0].mxu0
        %v8769 = vadd.f32 0.0, %v8768
        %v8770 = vpop.f32.mrb[0].mxu0
        %v8771 = vadd.f32 0.0, %v8770
        %v8772 = vpop.f32.mrb[0].mxu0
        %v8773 = vadd.f32 0.0, %v8772
        %8774 = vmatprep.mubr.bf16.mxu0 %v8495
        %8775 = vmatmul.mubr.bf16.gmra.mrb[0].mxu0 %v8493
        %v8776 = vpop.f32.mrb[0].mxu0
        %v8777 = vadd.f32 0.0, %v8776
        %v8778 = vpop.f32.mrb[0].mxu0
        %v8779 = vadd.f32 0.0, %v8778
        %v8780 = vpop.f32.mrb[0].mxu0
        %v8781 = vadd.f32 0.0, %v8780
        %v8782 = vpop.f32.mrb[0].mxu0
        %v8783 = vadd.f32 0.0, %v8782
        %8784 = vmatprep.mubr.bf16.mxu0 %v8499
        %8785 = vmatmul.mubr.bf16.gmra.mrb[0].mxu0 %v8497
        %v8786 = vpop.f32.mrb[0].mxu0
        %v8787 = vadd.f32 0.0, %v8786
        %v8788 = vpop.f32.mrb[0].mxu0
        %v8789 = vadd.f32 0.0, %v8788
        %v8790 = vpop.f32.mrb[0].mxu0
        %v8791 = vadd.f32 0.0, %v8790
        %v8792 = vpop.f32.mrb[0].mxu0
        %v8793 = vadd.f32 0.0, %v8792
        %8794 = vmatprep.mubr.bf16.mxu0 %v8503
        %8795 = vmatmul.mubr.bf16.gmra.mrb[0].mxu0 %v8501
        %v8796 = vpop.f32.mrb[0].mxu0
        %v8797 = vadd.f32 0.0, %v8796
        %v8798 = vpop.f32.mrb[0].mxu0
        %v8799 = vadd.f32 0.0, %v8798
        %v8800 = vpop.f32.mrb[0].mxu0
        %v8801 = vadd.f32 0.0, %v8800
        %v8802 = vpop.f32.mrb[0].mxu0
        %v8803 = vadd.f32 0.0, %v8802
        %8804 = vmatprep.mubr.bf16.mxu0 %v8507
        %8805 = vmatmul.mubr.bf16.gmra.mrb[0].mxu0 %v8505
        %v8806 = vpop.f32.mrb[0].mxu0
        %v8807 = vadd.f32 0.0, %v8806
        %v8808 = vpop.f32.mrb[0].mxu0
        %v8809 = vadd.f32 0.0, %v8808
        %v8810 = vpop.f32.mrb[0].mxu0
        %v8811 = vadd.f32 0.0, %v8810
        %v8812 = vpop.f32.mrb[0].mxu0
        %v8813 = vadd.f32 0.0, %v8812
        %8814 = vmatprep.mubr.bf16.mxu0 %v8511
        %8815 = vmatmul.mubr.bf16.gmra.mrb[0].mxu0 %v8509
        %v8816 = vpop.f32.mrb[0].mxu0
        %v8817 = vadd.f32 0.0, %v8816
        %v8818 = vpop.f32.mrb[0].mxu0
        %v8819 = vadd.f32 0.0, %v8818
        %v8820 = vpop.f32.mrb[0].mxu0
        %v8821 = vadd.f32 0.0, %v8820
        %v8822 = vpop.f32.mrb[0].mxu0
        %v8823 = vadd.f32 0.0, %v8822
        %8824 = vdwg.mxu0
        %v8825 = vadd.f32 %v8339, %v8727
        %v8826 = vadd.f32 %v8341, %v8729
        %v8827 = vadd.f32 %v8343, %v8731
        %v8828 = vadd.f32 %v8345, %v8733
        %v8829 = vadd.f32 %v8349, %v8737
        %v8830 = vadd.f32 %v8351, %v8739
        %v8831 = vadd.f32 %v8353, %v8741
        %v8832 = vadd.f32 %v8355, %v8743
        %v8833 = vadd.f32 %v8359, %v8747
        %v8834 = vadd.f32 %v8361, %v8749
        %v8835 = vadd.f32 %v8363, %v8751
        %v8836 = vadd.f32 %v8365, %v8753
        %v8837 = vadd.f32 %v8369, %v8757
        %v8838 = vadd.f32 %v8371, %v8759
        %v8839 = vadd.f32 %v8373, %v8761
        %v8840 = vadd.f32 %v8375, %v8763
        %v8841 = vadd.f32 %v8379, %v8767
        %v8842 = vadd.f32 %v8381, %v8769
        %v8843 = vadd.f32 %v8383, %v8771
        %v8844 = vadd.f32 %v8385, %v8773
        %v8845 = vadd.f32 %v8389, %v8777
        %v8846 = vadd.f32 %v8391, %v8779
        %v8847 = vadd.f32 %v8393, %v8781
        %v8848 = vadd.f32 %v8395, %v8783
        %v8849 = vadd.f32 %v8399, %v8787
        %v8850 = vadd.f32 %v8401, %v8789
        %v8851 = vadd.f32 %v8403, %v8791
        %v8852 = vadd.f32 %v8405, %v8793
        %v8853 = vadd.f32 %v8409, %v8797
        %v8854 = vadd.f32 %v8411, %v8799
        %v8855 = vadd.f32 %v8413, %v8801
        %v8856 = vadd.f32 %v8415, %v8803
        %v8857 = vadd.f32 %v8419, %v8807
        %v8858 = vadd.f32 %v8421, %v8809
        %v8859 = vadd.f32 %v8423, %v8811
        %v8860 = vadd.f32 %v8425, %v8813
        %v8861 = vadd.f32 %v8429, %v8817
        %v8862 = vadd.f32 %v8431, %v8819
        %v8863 = vadd.f32 %v8433, %v8821
        %v8864 = vadd.f32 %v8435, %v8823
        %v8865 = vld [vmem:[%s6] sm:$0x3]
        %v8867 = vlaneseq
        %v8868 = vshrl.u32 %v8867, 7
        %v8869 = vsub.s32 0, %v8868
        %v8870 = vrot.slane %v8865, %v8869
        %v8871 = vlaneseq
        %v8872 = vshrl.u32 %v8871, 7
        %v8873 = vsub.s32 1, %v8872
        %v8874 = vrot.slane %v8865, %v8873
        %v8877 = vadd.f32 %v8825, %v8870
        %v8878 = vadd.f32 %v8826, %v8874
        %v8879 = vadd.f32 %v8827, %v8870
        %v8880 = vadd.f32 %v8828, %v8874
        %v8881 = vadd.f32 %v8829, %v8870
        %v8882 = vadd.f32 %v8830, %v8874
        %v8883 = vadd.f32 %v8831, %v8870
        %v8884 = vadd.f32 %v8832, %v8874
        %v8885 = vadd.f32 %v8833, %v8870
        %v8886 = vadd.f32 %v8834, %v8874
        %v8887 = vadd.f32 %v8835, %v8870
        %v8888 = vadd.f32 %v8836, %v8874
        %v8889 = vadd.f32 %v8837, %v8870
        %v8890 = vadd.f32 %v8838, %v8874
        %v8891 = vadd.f32 %v8839, %v8870
        %v8892 = vadd.f32 %v8840, %v8874
        %v8893 = vadd.f32 %v8841, %v8870
        %v8894 = vadd.f32 %v8842, %v8874
        %v8895 = vadd.f32 %v8843, %v8870
        %v8896 = vadd.f32 %v8844, %v8874
        %v8897 = vadd.f32 %v8845, %v8870
        %v8898 = vadd.f32 %v8846, %v8874
        %v8899 = vadd.f32 %v8847, %v8870
        %v8900 = vadd.f32 %v8848, %v8874
        %v8901 = vadd.f32 %v8849, %v8870
        %v8902 = vadd.f32 %v8850, %v8874
        %v8903 = vadd.f32 %v8851, %v8870
        %v8904 = vadd.f32 %v8852, %v8874
        %v8905 = vadd.f32 %v8853, %v8870
        %v8906 = vadd.f32 %v8854, %v8874
        %v8907 = vadd.f32 %v8855, %v8870
        %v8908 = vadd.f32 %v8856, %v8874
        %v8909 = vadd.f32 %v8857, %v8870
        %v8910 = vadd.f32 %v8858, %v8874
        %v8911 = vadd.f32 %v8859, %v8870
        %v8912 = vadd.f32 %v8860, %v8874
        %v8913 = vadd.f32 %v8861, %v8870
        %v8914 = vadd.f32 %v8862, %v8874
        %v8915 = vadd.f32 %v8863, %v8870
        %v8916 = vadd.f32 %v8864, %v8874
        %8917 = vst [vmem:[%s301] sm:$0xff] %v8877
        %8918 = vst [vmem:[%s301 + $0x8] sm:$0xff] %v8878
        %8919 = vst [vmem:[%s301 + $0x10] sm:$0xff] %v8879
        %8920 = vst [vmem:[%s301 + $0x18] sm:$0xff] %v8880
        %8921 = vst [vmem:[%s301 + $0x20] sm:$0xff] %v8881
        %8922 = vst [vmem:[%s301 + $0x28] sm:$0xff] %v8882
        %8923 = vst [vmem:[%s301 + $0x30] sm:$0xff] %v8883
        %8924 = vst [vmem:[%s301 + $0x38] sm:$0xff] %v8884
        %8925 = vst [vmem:[%s301 + $0x40] sm:$0xff] %v8885
        %8926 = vst [vmem:[%s301 + $0x48] sm:$0xff] %v8886
        %8927 = vst [vmem:[%s301 + $0x50] sm:$0xff] %v8887
        %8928 = vst [vmem:[%s301 + $0x58] sm:$0xff] %v8888
        %8929 = vst [vmem:[%s301 + $0x60] sm:$0xff] %v8889
        %8930 = vst [vmem:[%s301 + $0x68] sm:$0xff] %v8890
        %8931 = vst [vmem:[%s301 + $0x70] sm:$0xff] %v8891
        %8932 = vst [vmem:[%s301 + $0x78] sm:$0xff] %v8892
        %8933 = vst [vmem:[%s301 + $0x80] sm:$0xff] %v8893
        %8934 = vst [vmem:[%s301 + $0x88] sm:$0xff] %v8894
        %8935 = vst [vmem:[%s301 + $0x90] sm:$0xff] %v8895
        %8936 = vst [vmem:[%s301 + $0x98] sm:$0xff] %v8896
        %8937 = vst [vmem:[%s301 + $0xa0] sm:$0xff] %v8897
        %8938 = vst [vmem:[%s301 + $0xa8] sm:$0xff] %v8898
        %8939 = vst [vmem:[%s301 + $0xb0] sm:$0xff] %v8899
        %8940 = vst [vmem:[%s301 + $0xb8] sm:$0xff] %v8900
        %8941 = vst [vmem:[%s301 + $0xc0] sm:$0xff] %v8901
        %8942 = vst [vmem:[%s301 + $0xc8] sm:$0xff] %v8902
        %8943 = vst [vmem:[%s301 + $0xd0] sm:$0xff] %v8903
        %8944 = vst [vmem:[%s301 + $0xd8] sm:$0xff] %v8904
        %8945 = vst [vmem:[%s301 + $0xe0] sm:$0xff] %v8905
        %8946 = vst [vmem:[%s301 + $0xe8] sm:$0xff] %v8906
        %8947 = vst [vmem:[%s301 + $0xf0] sm:$0xff] %v8907
        %8948 = vst [vmem:[%s301 + $0xf8] sm:$0xff] %v8908
        %8949 = vst [vmem:[%s301 + $0x100] sm:$0xff] %v8909
        %8950 = vst [vmem:[%s301 + $0x108] sm:$0xff] %v8910
        %8951 = vst [vmem:[%s301 + $0x110] sm:$0xff] %v8911
        %8952 = vst [vmem:[%s301 + $0x118] sm:$0xff] %v8912
        %8953 = vst [vmem:[%s301 + $0x120] sm:$0xff] %v8913
        %8954 = vst [vmem:[%s301 + $0x128] sm:$0xff] %v8914
        %8955 = vst [vmem:[%s301 + $0x130] sm:$0xff] %v8915
        %8956 = vst [vmem:[%s301 + $0x138] sm:$0xff] %v8916
        %s8957 = sand.u32 %s183, 1
        %s8958 = scalar_lea.sflag [#allocation6], %s8957
        %s8959 = sand.u32 %s183, 1
        %s8960 = smul.addr %s8959, 320
        %s8961 = scalar_lea.vmem [#allocation9], %s8960
        // Predicated region
        $region57: #{tpu_custom_call.1} parent=47 // pred_check
          %p8962 = pneg %p193
        $region58: #{tpu_custom_call.1} parent=47 // pred_check_branch
          %8964 = sbr.rel (%p8962) target = $region60
        $region59: #{tpu_custom_call.1} parent=47 // pred_region
          %s8966 = ssub.s32 5120, 5120
          %8967 = vsyncadd %s8958, %s8966
          %s8968 = smul.addr %s23, 40
          %s8969 = smul.addr %s8968, 128
          %s8970 = scalar_lea.hbm %s7, %s8969
          %s8971 = sshll.u32 %s8961, 4
          %s8972 = int_to_ptr.vmem [resolvable:$true] %s8971
          %8977 = dma.vmem_to_hbm [thread:$0]  %s8972, 5120, %s8970, %s8958, 256, 256, 16
        $region60: #{tpu_custom_call.1} parent=47 // pred_fallthru
          _
      $region48: #{tpu_custom_call.1} parent=5 // pred_fallthru
        _
      %p8978 = scmp.le.s32.totalorder 2, %s18
      // Predicated region
      $region61: #{tpu_custom_call.1} parent=5 // pred_check
        %p8979 = pneg %p8978
      $region62: #{tpu_custom_call.1} parent=5 // pred_check_branch
        %8981 = sbr.rel (%p8979) target = $region64
      $region63: #{tpu_custom_call.1} parent=5 // pred_region
        %s8982 = ssub.s32 %s18, 2
        // Predicated region
        $region65: #{tpu_custom_call.1} parent=63 // pred_check
          %p8983 = pneg %p199
        $region66: #{tpu_custom_call.1} parent=63 // pred_check_branch
          %8985 = sbr.rel (%p8983) target = $region68
        $region67: #{tpu_custom_call.1} parent=63 // pred_region
          %s8986 = sand.u32 %s184, 1
          %s8987 = scalar_lea.sflag [#allocation6], %s8986
          %s8988 = sand.u32 %s184, 1
          %s8989 = smul.addr %s8988, 320
          %s8990 = scalar_lea.vmem [#allocation9], %s8989
          %8991 = dma.done %s8987, 5120
        $region68: #{tpu_custom_call.1} parent=63 // pred_fallthru
          _
      $region64: #{tpu_custom_call.1} parent=5 // pred_fallthru
        _
    $region6: #{tpu_custom_call.1} parent=1 // loop_footer
      %s22 = sadd.s32 1, %s18
    $region7: #{tpu_custom_call.1} parent=1 // loop_footer_branch
      %17 = sbr.rel target = $region3
    $region8: #{tpu_custom_call.1} parent=1 // loop_exit
      _
    %8992 = vsyncpa [#allocation5], 1
    %s8993 = scalar_lea.sflag [#allocation5], 1
    %8994 = vsyncpa %s8993, 1
    %8995 = vsyncpa [#allocation8], 1
    %8996 = vsyncpa [#allocation6], 1
    %s8997 = scalar_lea.sflag [#allocation6], 1
    %8998 = vsyncpa %s8997, 1

</llo_original>
